<compile_context>
chip_gen: v5e
topology: v5e:2x2
jax: 0.10.0
libtpu: 0.0.40
codegen_flags: <defaults>
</compile_context>

<pallas_src>
import math
import jax
import jax.numpy as jnp
from jax.experimental import pallas as pl
from jax.experimental.pallas import tpu as pltpu

# ---- small ViT-B-32-like configuration (scaled down for the demo) ----
IMG = 32
PATCH = 8
IN_CH = 3
WIDTH = 32                         # transformer width
HEADS = 4
HEAD_DIM = WIDTH // HEADS
LAYERS = 2
MLP_DIM = 4 * WIDTH                # 128
OUT_DIM = 32                       # model.visual.output_dim
N_CLASSES = 4
PROMPT_LEN = 5
EMBED_DIM = 32                     # token_embedding.embedding_dim (text side, unused)
NUM_PATCHES = (IMG // PATCH) ** 2  # 16
SEQ = NUM_PATCHES + 1              # 17
S_PAD = 32                         # padded seq (mult of 8/16 sublane tiles; BB*S_PAD = 128 MXU rows)
PATCH_DIM = IN_CH * PATCH * PATCH  # 192
LN_EPS = 1e-5
LANE = 128                         # lane-dense classifier width (padded from N_CLASSES)
QKV_PAD = 128                      # 3*WIDTH = 96 padded to 128 output lanes
BB = 4                             # images per grid step (batch block)
ROWS = BB * S_PAD                  # 128 slab rows per grid step

# ---- packed-parameter row offsets (static) ----
# w32 blob: all weights with 32 output lanes, bf16, shape (W32_ROWS, WIDTH)
W32_CONV = 0
W32_PROJ = W32_CONV + PATCH_DIM                  # + WIDTH * layer
W32_FC2 = W32_PROJ + LAYERS * WIDTH              # + MLP_DIM * layer
W32_VPROJ = W32_FC2 + LAYERS * MLP_DIM
W32_ROWS = W32_VPROJ + WIDTH                     # 544

# w128 blob: all weights with 128 output lanes, bf16, shape (W128_ROWS, 128)
W128_QKV = 0                                     # + WIDTH * layer (cols 0:96 valid)
W128_FC1 = W128_QKV + LAYERS * WIDTH             # + WIDTH * layer
W128_CLS = W128_FC1 + LAYERS * WIDTH
W128_ROWS = W128_CLS + WIDTH                     # 160

# vec32 table: all width-32 vectors, f32, shape (VEC32_ROWS, WIDTH)
ROW_CLS_POS = 0                                  # S_PAD rows (cls+pos embedding, padded)
ROW_LN_PRE_G = S_PAD
ROW_LN_PRE_B = S_PAD + 1
ROW_LN_POST_G = S_PAD + 2
ROW_LN_POST_B = S_PAD + 3
ROW_LAYER = S_PAD + 4                            # + 6*layer: ln1_g, ln1_b, ln2_g, ln2_b, proj_b, fc2_b
VEC32_ROWS = ROW_LAYER + 6 * LAYERS              # 48

# vec128 table: all width-128 bias vectors, f32, shape (VEC128_ROWS, 128)
V128_QKV_B = 0                                   # + layer (cols 0:96 valid)
V128_FC1_B = LAYERS                              # + layer
V128_CLS_B = 2 * LAYERS
VEC128_ROWS = 2 * LAYERS + 1                     # 5


# ------------------------------------------------------------------ fused kernel

def _fused_forward_kernel(patches_ref, w32_ref, w128_ref, vec32_ref, vec128_ref, out_ref):
    """Full PromptTunedCLIP forward for BB images; weights + activations stay in VMEM."""

    def ln(x, g, b):
        mu = jnp.mean(x, axis=-1, keepdims=True)
        var = jnp.mean((x - mu) ** 2, axis=-1, keepdims=True)
        return (x - mu) * jax.lax.rsqrt(var + LN_EPS) * g + b

    # key-padding bias (pad key rows >= SEQ masked with -1e30); hoisted, reused every layer/head
    key_pos = jax.lax.broadcasted_iota(jnp.int32, (S_PAD, S_PAD), 1)
    key_bias = jnp.where(key_pos >= SEQ, -1e30, 0.0).astype(jnp.float32)

    # ---- patch embedding (conv as matmul over the 128-row slab) ----
    patches = patches_ref[...].reshape(ROWS, PATCH_DIM)                         # bf16
    conv_w = w32_ref[W32_CONV:W32_CONV + PATCH_DIM, :]                          # (192, 32) bf16
    x = jnp.dot(patches, conv_w, preferred_element_type=jnp.float32)            # (ROWS, W) f32

    # ---- + class / positional embedding (row 0 of each image = CLS) ----
    cls_pos = vec32_ref[ROW_CLS_POS:ROW_CLS_POS + S_PAD, :]                     # (S_PAD, W) f32
    x = (x.reshape(BB, S_PAD, WIDTH) + cls_pos[None]).reshape(ROWS, WIDTH)

    # ---- ln_pre ----
    x = ln(x, vec32_ref[ROW_LN_PRE_G], vec32_ref[ROW_LN_PRE_B])

    # ---- transformer resblocks (static unroll) ----
    for l in range(LAYERS):
        base = ROW_LAYER + 6 * l

        # --- multi-head self-attention (pre-LN) ---
        h = ln(x, vec32_ref[base + 0], vec32_ref[base + 1])
        qkv_w = w128_ref[W128_QKV + l * WIDTH:W128_QKV + (l + 1) * WIDTH, :]    # (32,128) bf16
        qkv = jnp.dot(h.astype(jnp.bfloat16), qkv_w,
                      preferred_element_type=jnp.float32) + vec128_ref[V128_QKV_B + l]
        qkv3 = qkv.astype(jnp.bfloat16).reshape(BB, S_PAD, QKV_PAD)

        head_outs = []
        for hd in range(HEADS):
            q = qkv3[:, :, hd * HEAD_DIM:(hd + 1) * HEAD_DIM]                   # (BB,S,Dh)
            k = qkv3[:, :, WIDTH + hd * HEAD_DIM:WIDTH + (hd + 1) * HEAD_DIM]
            v = qkv3[:, :, 2 * WIDTH + hd * HEAD_DIM:2 * WIDTH + (hd + 1) * HEAD_DIM]
            # softmax scale already folded into the Q columns of qkv_w / qkv_b at pack time
            s = jnp.einsum('bqd,bkd->bqk', q, k,
                           preferred_element_type=jnp.float32) + key_bias        # (BB,S,S) f32
            m = jnp.max(s, axis=-1, keepdims=True)
            e = jnp.exp(s - m)
            p = e / jnp.sum(e, axis=-1, keepdims=True)                            # exact softmax
            head_outs.append(jnp.einsum('bqk,bkd->bqd', p.astype(jnp.bfloat16), v,
                                        preferred_element_type=jnp.float32))      # (BB,S,Dh) f32
        attn = jnp.concatenate(head_outs, axis=-1).reshape(ROWS, WIDTH)           # (ROWS, W) f32

        proj_w = w32_ref[W32_PROJ + l * WIDTH:W32_PROJ + (l + 1) * WIDTH, :]      # (32,32) bf16
        x = x + jnp.dot(attn.astype(jnp.bfloat16), proj_w,
                        preferred_element_type=jnp.float32) + vec32_ref[base + 4]

        # --- MLP (pre-LN) ---
        h = ln(x, vec32_ref[base + 2], vec32_ref[base + 3])
        fc1_w = w128_ref[W128_FC1 + l * WIDTH:W128_FC1 + (l + 1) * WIDTH, :]      # (32,128) bf16
        h = jnp.dot(h.astype(jnp.bfloat16), fc1_w,
                    preferred_element_type=jnp.float32) + vec128_ref[V128_FC1_B + l]
        # TODO(synk): torch nn.GELU defaults to exact erf; tanh approximation used here.
        h = jax.nn.gelu(h, approximate=True)
        fc2_w = w32_ref[W32_FC2 + l * MLP_DIM:W32_FC2 + (l + 1) * MLP_DIM, :]     # (128,32) bf16
        x = x + jnp.dot(h.astype(jnp.bfloat16), fc2_w,
                        preferred_element_type=jnp.float32) + vec32_ref[base + 5]

    # ---- CLS token per image -> ln_post -> visual projection ----
    cls_rows = jnp.concatenate(
        [x[b * S_PAD:b * S_PAD + 1, :] for b in range(BB)], axis=0)               # (BB, W)
    cls_tok = ln(cls_rows, vec32_ref[ROW_LN_POST_G], vec32_ref[ROW_LN_POST_B])
    vproj = w32_ref[W32_VPROJ:W32_VPROJ + WIDTH, :]                               # (32,32) bf16
    feats = jnp.dot(cls_tok.astype(jnp.bfloat16), vproj,
                    preferred_element_type=jnp.float32)                           # (BB, OUT_DIM)

    # ---- L2 normalize (x / x.norm(dim=-1), exact division) ----
    feats = feats / jnp.sqrt(jnp.sum(feats * feats, axis=-1, keepdims=True))

    # ---- classifier (weights zero-padded to 128 lanes -> lane-dense store) ----
    cls_w = w128_ref[W128_CLS:W128_CLS + WIDTH, :]                                # (32,128) bf16
    logits = jnp.dot(feats.astype(jnp.bfloat16), cls_w,
                     preferred_element_type=jnp.float32) + vec128_ref[V128_CLS_B]
    out_ref[...] = logits.astype(out_ref.dtype)


def _const_spec(shape):
    """Full-array block with a constant index map (weights resident across grid steps)."""
    nd = len(shape)
    return pl.BlockSpec(shape, lambda i, _nd=nd: (0,) * _nd)


# ------------------------------------------------------------------ parameter init / packing

def init_params(key):
    """Synthetic parameters with the same roles as the PyTorch module (no laion2b ckpt)."""
    def nrm(k, shape, std=0.02):
        return (std * jax.random.normal(k, shape)).astype(jnp.float32)

    keys = iter(jax.random.split(key, 16))
    return {
        "conv_w": nrm(next(keys), (PATCH_DIM, WIDTH)),     # Conv2d(k=stride=PATCH, no bias) as matmul
        "class_embedding": nrm(next(keys), (WIDTH,)),
        "pos_embedding": nrm(next(keys), (SEQ, WIDTH)),
        "ln_pre_g": jnp.ones((WIDTH,), jnp.float32),
        "ln_pre_b": jnp.zeros((WIDTH,), jnp.float32),
        "ln_post_g": jnp.ones((WIDTH,), jnp.float32),
        "ln_post_b": jnp.zeros((WIDTH,), jnp.float32),
        "visual_proj": nrm(next(keys), (WIDTH, OUT_DIM)),
        "cls_w_t": nrm(next(keys), (OUT_DIM, N_CLASSES)),  # nn.Linear(OUT_DIM, N_CLASSES) weight^T
        "cls_b": jnp.zeros((N_CLASSES,), jnp.float32),
        "ln1_g": jnp.ones((LAYERS, WIDTH), jnp.float32),
        "ln1_b": jnp.zeros((LAYERS, WIDTH), jnp.float32),
        "ln2_g": jnp.ones((LAYERS, WIDTH), jnp.float32),
        "ln2_b": jnp.zeros((LAYERS, WIDTH), jnp.float32),
        "qkv_w": nrm(next(keys), (LAYERS, WIDTH, 3 * WIDTH)),
        "qkv_b": jnp.zeros((LAYERS, 3 * WIDTH), jnp.float32),
        "proj_w": nrm(next(keys), (LAYERS, WIDTH, WIDTH)),
        "proj_b": jnp.zeros((LAYERS, WIDTH), jnp.float32),
        "fc1_w": nrm(next(keys), (LAYERS, WIDTH, MLP_DIM)),
        "fc1_b": jnp.zeros((LAYERS, MLP_DIM), jnp.float32),
        "fc2_w": nrm(next(keys), (LAYERS, MLP_DIM, WIDTH)),
        "fc2_b": jnp.zeros((LAYERS, WIDTH), jnp.float32),
        # frozen text branch (unused by forward, kept for parity with the module)
        "prompt_embed": jax.random.normal(
            next(keys), (N_CLASSES, PROMPT_LEN, EMBED_DIM)).astype(jnp.float32),
    }
    # TODO(synk): tokenizer / tokenized_prompts (text branch) have no role in this forward pass.


def pack_params(p):
    """One-time padding / bf16 cast / packing of parameters into 4 VMEM-resident blobs."""
    scale = 1.0 / math.sqrt(HEAD_DIM)
    # fold the attention softmax scale into the Q columns of the QKV weight & bias
    qkv_w = p["qkv_w"].at[:, :, :WIDTH].multiply(scale)                 # (L, W, 3W)
    qkv_b = p["qkv_b"].at[:, :WIDTH].multiply(scale)                    # (L, 3W)

    # weights with 32 output lanes  -> (544, 32) bf16
    w32 = jnp.concatenate([
        p["conv_w"],
        p["proj_w"].reshape(LAYERS * WIDTH, WIDTH),
        p["fc2_w"].reshape(LAYERS * MLP_DIM, WIDTH),
        p["visual_proj"],
    ], axis=0).astype(jnp.bfloat16)

    # weights with 128 output lanes -> (160, 128) bf16
    qkv_w_pad = jnp.pad(qkv_w, ((0, 0), (0, 0), (0, QKV_PAD - 3 * WIDTH)))
    cls_w_pad = jnp.pad(p["cls_w_t"], ((0, 0), (0, LANE - N_CLASSES)))
    w128 = jnp.concatenate([
        qkv_w_pad.reshape(LAYERS * WIDTH, QKV_PAD),
        p["fc1_w"].reshape(LAYERS * WIDTH, MLP_DIM),
        cls_w_pad,
    ], axis=0).astype(jnp.bfloat16)

    # width-32 vector table (f32): cls+pos embedding (padded to S_PAD rows) + LN params + biases
    cls_pos = p["pos_embedding"].at[0].add(p["class_embedding"])        # row 0 = class + pos[0]
    cls_pos = jnp.pad(cls_pos, ((0, S_PAD - SEQ), (0, 0)))              # (S_PAD, W)
    layer_rows = jnp.stack([p["ln1_g"], p["ln1_b"], p["ln2_g"], p["ln2_b"],
                            p["proj_b"], p["fc2_b"]], axis=1)           # (L, 6, W)
    vec32 = jnp.concatenate([
        cls_pos,
        p["ln_pre_g"][None], p["ln_pre_b"][None],
        p["ln_post_g"][None], p["ln_post_b"][None],
        layer_rows.reshape(LAYERS * 6, WIDTH),
    ], axis=0).astype(jnp.float32)

    # width-128 bias table (f32)
    qkv_b_pad = jnp.pad(qkv_b, ((0, 0), (0, QKV_PAD - 3 * WIDTH)))
    cls_b_pad = jnp.pad(p["cls_b"], (0, LANE - N_CLASSES))[None]
    vec128 = jnp.concatenate([qkv_b_pad, p["fc1_b"], cls_b_pad], axis=0).astype(jnp.float32)

    assert w32.shape == (W32_ROWS, WIDTH) and w128.shape == (W128_ROWS, QKV_PAD)
    assert vec32.shape == (VEC32_ROWS, WIDTH) and vec128.shape == (VEC128_ROWS, QKV_PAD)
    return {"w32": w32, "w128": w128, "vec32": vec32, "vec128": vec128}


# ------------------------------------------------------------------ forward (wrapper)

@jax.jit
def prompt_tuned_clip_forward(packed, images):
    """images: (B, 3, IMG, IMG) NCHW fp32  ->  logits: (B, N_CLASSES) fp32."""
    B = images.shape[0]
    nsteps = -(-B // BB)               # cdiv, host-side
    b_pad = nsteps * BB

    # patchify NCHW -> (B, Np, C*P*P) in (C, P, P) flatten order (matches Conv2d weight flatten);
    # row 0 of each sequence is reserved for the CLS token, rows SEQ..S_PAD-1 are padding.
    x = images.reshape(B, IN_CH, IMG // PATCH, PATCH, IMG // PATCH, PATCH)
    x = x.transpose(0, 2, 4, 1, 3, 5).reshape(B, NUM_PATCHES, PATCH_DIM)
    patches = jnp.zeros((b_pad, S_PAD, PATCH_DIM), jnp.bfloat16)
    patches = patches.at[:B, 1:SEQ, :].set(x.astype(jnp.bfloat16))

    out = pl.pallas_call(
        _fused_forward_kernel,
        grid=(nsteps,),
        in_specs=[
            pl.BlockSpec((BB, S_PAD, PATCH_DIM), lambda i: (i, 0, 0)),
            _const_spec((W32_ROWS, WIDTH)),
            _const_spec((W128_ROWS, QKV_PAD)),
            _const_spec((VEC32_ROWS, WIDTH)),
            _const_spec((VEC128_ROWS, QKV_PAD)),
        ],
        out_specs=pl.BlockSpec((None, BB, LANE), lambda i: (i, 0, 0)),
        out_shape=jax.ShapeDtypeStruct((nsteps, BB, LANE), jnp.float32),
        compiler_params=pltpu.CompilerParams(
            dimension_semantics=("parallel",)),        # v7x: 2 TCs split the >=2 grid steps
    )(patches, packed["w32"], packed["w128"], packed["vec32"], packed["vec128"])

    return out.reshape(b_pad, LANE)[:B, :N_CLASSES]


if __name__ == "__main__":
    key = jax.random.PRNGKey(0)
    pkey, xkey = jax.random.split(key)
    params = init_params(pkey)
    packed = pack_params(params)       # one-time packing, hoisted out of the per-call forward
    images = jax.random.normal(xkey, (8, IN_CH, IMG, IMG), dtype=jnp.float32)   # NCHW
    logits = prompt_tuned_clip_forward(packed, images)
    jax.block_until_ready(logits)
    assert logits.shape == (8, N_CLASSES) and logits.dtype == jnp.float32
    assert bool(jnp.all(jnp.isfinite(logits)))
    print("KERNEL_OK")
</pallas_src>

<mosaic_0001>
module attributes {stable_mosaic.version = 11 : i64} {
  func.func @_fused_forward_kernel(%arg0: i32, %arg1: memref<4x32x192xbf16, #tpu.memory_space<vmem>>, %arg2: memref<544x32xbf16, #tpu.memory_space<vmem>>, %arg3: memref<160x128xbf16, #tpu.memory_space<vmem>>, %arg4: memref<48x32xf32, #tpu.memory_space<vmem>>, %arg5: memref<5x128xf32, #tpu.memory_space<vmem>>, %arg6: memref<1x4x128xf32, #tpu.memory_space<vmem>>) attributes {dimension_semantics = [#tpu.dimension_semantics<parallel>], iteration_bounds = array<i64: 2>, scalar_prefetch = 0 : i64, scratch_operands = 0 : i64, tpu.core_type = #tpu.core_type<tc>, window_params = [{transform_indices = @transform_0, window_bounds = array<i64: 4, 32, 192>}, {pipeline_mode = #tpu.pipeline_mode<synchronous>, transform_indices = @transform_1, window_bounds = array<i64: 544, 32>}, {pipeline_mode = #tpu.pipeline_mode<synchronous>, transform_indices = @transform_2, window_bounds = array<i64: 160, 128>}, {pipeline_mode = #tpu.pipeline_mode<synchronous>, transform_indices = @transform_3, window_bounds = array<i64: 48, 32>}, {pipeline_mode = #tpu.pipeline_mode<synchronous>, transform_indices = @transform_4, window_bounds = array<i64: 5, 128>}, {transform_indices = @transform_5, window_bounds = array<i64: 1, 4, 128>}]} {
    %0 = tpu.iota {dimensions = array<i32: 1>} : vector<32x32xi32>
    %c17_i32 = arith.constant 17 : i32
    %1 = vector.broadcast %c17_i32 : i32 to vector<32x32xi32>
    %2 = arith.cmpi sge, %0, %1 : vector<32x32xi32>
    %cst = arith.constant -1.000000e+30 : f32
    %cst_0 = arith.constant 0.000000e+00 : f32
    %3 = vector.broadcast %cst : f32 to vector<32x32xf32>
    %4 = vector.broadcast %cst_0 : f32 to vector<32x32xf32>
    %5 = arith.select %2, %3, %4 : vector<32x32xi1>, vector<32x32xf32>
    %c0 = arith.constant 0 : index
    %c0_1 = arith.constant 0 : index
    %c0_2 = arith.constant 0 : index
    %6 = vector.load %arg1[%c0, %c0_1, %c0_2] : memref<4x32x192xbf16, #tpu.memory_space<vmem>>, vector<4x32x192xbf16>
    %7 = vector.shape_cast %6 : vector<4x32x192xbf16> to vector<128x192xbf16>
    %c0_3 = arith.constant 0 : index
    %c0_4 = arith.constant 0 : index
    %8 = vector.load %arg2[%c0_3, %c0_4] : memref<544x32xbf16, #tpu.memory_space<vmem>>, vector<192x32xbf16>
    %cst_5 = arith.constant dense<0.000000e+00> : vector<128x32xf32>
    %9 = tpu.matmul %7, %8, %cst_5 {dimension_numbers = #tpu.dot_dimension_numbers<[1], [0], [0], [1], [0, 0, 1, 1], [], []>} : vector<128x192xbf16>, vector<192x32xbf16>, vector<128x32xf32> -> vector<128x32xf32>
    %c0_6 = arith.constant 0 : index
    %c0_7 = arith.constant 0 : index
    %10 = vector.load %arg4[%c0_6, %c0_7] : memref<48x32xf32, #tpu.memory_space<vmem>>, vector<32x32xf32>
    %11 = vector.shape_cast %9 : vector<128x32xf32> to vector<4x32x32xf32>
    %12 = vector.shape_cast %10 : vector<32x32xf32> to vector<1x32x32xf32>
    %13 = vector.broadcast %12 : vector<1x32x32xf32> to vector<4x32x32xf32>
    %14 = arith.addf %11, %13 : vector<4x32x32xf32>
    %15 = vector.shape_cast %14 : vector<4x32x32xf32> to vector<128x32xf32>
    %c32 = arith.constant 32 : index
    %c0_8 = arith.constant 0 : index
    %16 = vector.load %arg4[%c32, %c0_8] : memref<48x32xf32, #tpu.memory_space<vmem>>, vector<1x32xf32>
    %17 = vector.shape_cast %16 : vector<1x32xf32> to vector<32xf32>
    %c33 = arith.constant 33 : index
    %c0_9 = arith.constant 0 : index
    %18 = vector.load %arg4[%c33, %c0_9] : memref<48x32xf32, #tpu.memory_space<vmem>>, vector<1x32xf32>
    %19 = vector.shape_cast %18 : vector<1x32xf32> to vector<32xf32>
    %cst_10 = arith.constant dense<0.000000e+00> : vector<128xf32>
    %20 = vector.multi_reduction <add>, %15, %cst_10 [1] : vector<128x32xf32> to vector<128xf32>
    %21 = vector.shape_cast %20 : vector<128xf32> to vector<128x1xf32>
    %cst_11 = arith.constant 3.200000e+01 : f32
    %22 = vector.broadcast %cst_11 : f32 to vector<128x1xf32>
    %23 = arith.divf %21, %22 : vector<128x1xf32>
    %24 = vector.broadcast %23 : vector<128x1xf32> to vector<128x32xf32>
    %25 = arith.subf %15, %24 : vector<128x32xf32>
    %26 = arith.mulf %25, %25 : vector<128x32xf32>
    %cst_12 = arith.constant dense<0.000000e+00> : vector<128xf32>
    %27 = vector.multi_reduction <add>, %26, %cst_12 [1] : vector<128x32xf32> to vector<128xf32>
    %28 = vector.shape_cast %27 : vector<128xf32> to vector<128x1xf32>
    %cst_13 = arith.constant 3.200000e+01 : f32
    %29 = vector.broadcast %cst_13 : f32 to vector<128x1xf32>
    %30 = arith.divf %28, %29 : vector<128x1xf32>
    %31 = vector.broadcast %23 : vector<128x1xf32> to vector<128x32xf32>
    %32 = arith.subf %15, %31 : vector<128x32xf32>
    %cst_14 = arith.constant 9.99999974E-6 : f32
    %33 = vector.broadcast %cst_14 : f32 to vector<128x1xf32>
    %34 = arith.addf %30, %33 : vector<128x1xf32>
    %35 = math.rsqrt %34 : vector<128x1xf32>
    %36 = vector.broadcast %35 : vector<128x1xf32> to vector<128x32xf32>
    %37 = arith.mulf %32, %36 : vector<128x32xf32>
    %38 = vector.shape_cast %17 : vector<32xf32> to vector<1x32xf32>
    %39 = vector.broadcast %38 : vector<1x32xf32> to vector<128x32xf32>
    %40 = arith.mulf %37, %39 : vector<128x32xf32>
    %41 = vector.shape_cast %19 : vector<32xf32> to vector<1x32xf32>
    %42 = vector.broadcast %41 : vector<1x32xf32> to vector<128x32xf32>
    %43 = arith.addf %40, %42 : vector<128x32xf32>
    %c36 = arith.constant 36 : index
    %c0_15 = arith.constant 0 : index
    %44 = vector.load %arg4[%c36, %c0_15] : memref<48x32xf32, #tpu.memory_space<vmem>>, vector<1x32xf32>
    %45 = vector.shape_cast %44 : vector<1x32xf32> to vector<32xf32>
    %c37 = arith.constant 37 : index
    %c0_16 = arith.constant 0 : index
    %46 = vector.load %arg4[%c37, %c0_16] : memref<48x32xf32, #tpu.memory_space<vmem>>, vector<1x32xf32>
    %47 = vector.shape_cast %46 : vector<1x32xf32> to vector<32xf32>
    %cst_17 = arith.constant dense<0.000000e+00> : vector<128xf32>
    %48 = vector.multi_reduction <add>, %43, %cst_17 [1] : vector<128x32xf32> to vector<128xf32>
    %49 = vector.shape_cast %48 : vector<128xf32> to vector<128x1xf32>
    %cst_18 = arith.constant 3.200000e+01 : f32
    %50 = vector.broadcast %cst_18 : f32 to vector<128x1xf32>
    %51 = arith.divf %49, %50 : vector<128x1xf32>
    %52 = vector.broadcast %51 : vector<128x1xf32> to vector<128x32xf32>
    %53 = arith.subf %43, %52 : vector<128x32xf32>
    %54 = arith.mulf %53, %53 : vector<128x32xf32>
    %cst_19 = arith.constant dense<0.000000e+00> : vector<128xf32>
    %55 = vector.multi_reduction <add>, %54, %cst_19 [1] : vector<128x32xf32> to vector<128xf32>
    %56 = vector.shape_cast %55 : vector<128xf32> to vector<128x1xf32>
    %cst_20 = arith.constant 3.200000e+01 : f32
    %57 = vector.broadcast %cst_20 : f32 to vector<128x1xf32>
    %58 = arith.divf %56, %57 : vector<128x1xf32>
    %59 = vector.broadcast %51 : vector<128x1xf32> to vector<128x32xf32>
    %60 = arith.subf %43, %59 : vector<128x32xf32>
    %cst_21 = arith.constant 9.99999974E-6 : f32
    %61 = vector.broadcast %cst_21 : f32 to vector<128x1xf32>
    %62 = arith.addf %58, %61 : vector<128x1xf32>
    %63 = math.rsqrt %62 : vector<128x1xf32>
    %64 = vector.broadcast %63 : vector<128x1xf32> to vector<128x32xf32>
    %65 = arith.mulf %60, %64 : vector<128x32xf32>
    %66 = vector.shape_cast %45 : vector<32xf32> to vector<1x32xf32>
    %67 = vector.broadcast %66 : vector<1x32xf32> to vector<128x32xf32>
    %68 = arith.mulf %65, %67 : vector<128x32xf32>
    %69 = vector.shape_cast %47 : vector<32xf32> to vector<1x32xf32>
    %70 = vector.broadcast %69 : vector<1x32xf32> to vector<128x32xf32>
    %71 = arith.addf %68, %70 : vector<128x32xf32>
    %c0_22 = arith.constant 0 : index
    %c0_23 = arith.constant 0 : index
    %72 = vector.load %arg3[%c0_22, %c0_23] : memref<160x128xbf16, #tpu.memory_space<vmem>>, vector<32x128xbf16>
    %73 = arith.truncf %71 : vector<128x32xf32> to vector<128x32xbf16>
    %cst_24 = arith.constant dense<0.000000e+00> : vector<128x128xf32>
    %74 = tpu.matmul %73, %72, %cst_24 {dimension_numbers = #tpu.dot_dimension_numbers<[1], [0], [0], [1], [0, 0, 1, 1], [], []>} : vector<128x32xbf16>, vector<32x128xbf16>, vector<128x128xf32> -> vector<128x128xf32>
    %c0_25 = arith.constant 0 : index
    %c0_26 = arith.constant 0 : index
    %75 = vector.load %arg5[%c0_25, %c0_26] : memref<5x128xf32, #tpu.memory_space<vmem>>, vector<1x128xf32>
    %76 = vector.shape_cast %75 : vector<1x128xf32> to vector<128xf32>
    %77 = vector.shape_cast %76 : vector<128xf32> to vector<1x128xf32>
    %78 = vector.broadcast %77 : vector<1x128xf32> to vector<128x128xf32>
    %79 = arith.addf %74, %78 : vector<128x128xf32>
    %80 = arith.truncf %79 : vector<128x128xf32> to vector<128x128xbf16>
    %81 = vector.shape_cast %80 : vector<128x128xbf16> to vector<4x32x128xbf16>
    %82 = vector.extract_strided_slice %81 {offsets = [0, 0, 0], sizes = [4, 32, 8], strides = [1, 1, 1]} : vector<4x32x128xbf16> to vector<4x32x8xbf16>
    %83 = vector.extract_strided_slice %81 {offsets = [0, 0, 32], sizes = [4, 32, 8], strides = [1, 1, 1]} : vector<4x32x128xbf16> to vector<4x32x8xbf16>
    %84 = vector.extract_strided_slice %81 {offsets = [0, 0, 64], sizes = [4, 32, 8], strides = [1, 1, 1]} : vector<4x32x128xbf16> to vector<4x32x8xbf16>
    "tpu.trace_start"() <{level = 10 : i32, message = "bqd,bkd->bqk"}> : () -> ()
    %cst_27 = arith.constant dense<0.000000e+00> : vector<4x32x32xf32>
    %85 = tpu.matmul %82, %83, %cst_27 {dimension_numbers = #tpu.dot_dimension_numbers<[2], [2], [1], [1], [0, 0, 0, 1, 1, 1], [0], [0]>} : vector<4x32x8xbf16>, vector<4x32x8xbf16>, vector<4x32x32xf32> -> vector<4x32x32xf32>
    "tpu.trace_stop"() : () -> ()
    %86 = vector.shape_cast %5 : vector<32x32xf32> to vector<1x32x32xf32>
    %87 = vector.broadcast %86 : vector<1x32x32xf32> to vector<4x32x32xf32>
    %88 = arith.addf %85, %87 : vector<4x32x32xf32>
    %cst_28 = arith.constant dense<0xFF800000> : vector<4x32xf32>
    %89 = vector.multi_reduction <maximumf>, %88, %cst_28 [2] : vector<4x32x32xf32> to vector<4x32xf32>
    %90 = vector.shape_cast %89 : vector<4x32xf32> to vector<4x32x1xf32>
    %91 = vector.broadcast %90 : vector<4x32x1xf32> to vector<4x32x32xf32>
    %92 = arith.subf %88, %91 : vector<4x32x32xf32>
    %93 = math.exp %92 : vector<4x32x32xf32>
    %cst_29 = arith.constant dense<0.000000e+00> : vector<4x32xf32>
    %94 = vector.multi_reduction <add>, %93, %cst_29 [2] : vector<4x32x32xf32> to vector<4x32xf32>
    %95 = vector.shape_cast %94 : vector<4x32xf32> to vector<4x32x1xf32>
    %96 = vector.broadcast %95 : vector<4x32x1xf32> to vector<4x32x32xf32>
    %97 = arith.divf %93, %96 : vector<4x32x32xf32>
    %98 = arith.truncf %97 : vector<4x32x32xf32> to vector<4x32x32xbf16>
    "tpu.trace_start"() <{level = 10 : i32, message = "bqk,bkd->bqd"}> : () -> ()
    %cst_30 = arith.constant dense<0.000000e+00> : vector<4x32x8xf32>
    %99 = tpu.matmul %98, %84, %cst_30 {dimension_numbers = #tpu.dot_dimension_numbers<[2], [1], [1], [2], [0, 0, 0, 1, 1, 2], [0], [0]>} : vector<4x32x32xbf16>, vector<4x32x8xbf16>, vector<4x32x8xf32> -> vector<4x32x8xf32>
    "tpu.trace_stop"() : () -> ()
    %100 = vector.extract_strided_slice %81 {offsets = [0, 0, 8], sizes = [4, 32, 8], strides = [1, 1, 1]} : vector<4x32x128xbf16> to vector<4x32x8xbf16>
    %101 = vector.extract_strided_slice %81 {offsets = [0, 0, 40], sizes = [4, 32, 8], strides = [1, 1, 1]} : vector<4x32x128xbf16> to vector<4x32x8xbf16>
    %102 = vector.extract_strided_slice %81 {offsets = [0, 0, 72], sizes = [4, 32, 8], strides = [1, 1, 1]} : vector<4x32x128xbf16> to vector<4x32x8xbf16>
    "tpu.trace_start"() <{level = 10 : i32, message = "bqd,bkd->bqk"}> : () -> ()
    %cst_31 = arith.constant dense<0.000000e+00> : vector<4x32x32xf32>
    %103 = tpu.matmul %100, %101, %cst_31 {dimension_numbers = #tpu.dot_dimension_numbers<[2], [2], [1], [1], [0, 0, 0, 1, 1, 1], [0], [0]>} : vector<4x32x8xbf16>, vector<4x32x8xbf16>, vector<4x32x32xf32> -> vector<4x32x32xf32>
    "tpu.trace_stop"() : () -> ()
    %104 = vector.shape_cast %5 : vector<32x32xf32> to vector<1x32x32xf32>
    %105 = vector.broadcast %104 : vector<1x32x32xf32> to vector<4x32x32xf32>
    %106 = arith.addf %103, %105 : vector<4x32x32xf32>
    %cst_32 = arith.constant dense<0xFF800000> : vector<4x32xf32>
    %107 = vector.multi_reduction <maximumf>, %106, %cst_32 [2] : vector<4x32x32xf32> to vector<4x32xf32>
    %108 = vector.shape_cast %107 : vector<4x32xf32> to vector<4x32x1xf32>
    %109 = vector.broadcast %108 : vector<4x32x1xf32> to vector<4x32x32xf32>
    %110 = arith.subf %106, %109 : vector<4x32x32xf32>
    %111 = math.exp %110 : vector<4x32x32xf32>
    %cst_33 = arith.constant dense<0.000000e+00> : vector<4x32xf32>
    %112 = vector.multi_reduction <add>, %111, %cst_33 [2] : vector<4x32x32xf32> to vector<4x32xf32>
    %113 = vector.shape_cast %112 : vector<4x32xf32> to vector<4x32x1xf32>
    %114 = vector.broadcast %113 : vector<4x32x1xf32> to vector<4x32x32xf32>
    %115 = arith.divf %111, %114 : vector<4x32x32xf32>
    %116 = arith.truncf %115 : vector<4x32x32xf32> to vector<4x32x32xbf16>
    "tpu.trace_start"() <{level = 10 : i32, message = "bqk,bkd->bqd"}> : () -> ()
    %cst_34 = arith.constant dense<0.000000e+00> : vector<4x32x8xf32>
    %117 = tpu.matmul %116, %102, %cst_34 {dimension_numbers = #tpu.dot_dimension_numbers<[2], [1], [1], [2], [0, 0, 0, 1, 1, 2], [0], [0]>} : vector<4x32x32xbf16>, vector<4x32x8xbf16>, vector<4x32x8xf32> -> vector<4x32x8xf32>
    "tpu.trace_stop"() : () -> ()
    %118 = vector.extract_strided_slice %81 {offsets = [0, 0, 16], sizes = [4, 32, 8], strides = [1, 1, 1]} : vector<4x32x128xbf16> to vector<4x32x8xbf16>
    %119 = vector.extract_strided_slice %81 {offsets = [0, 0, 48], sizes = [4, 32, 8], strides = [1, 1, 1]} : vector<4x32x128xbf16> to vector<4x32x8xbf16>
    %120 = vector.extract_strided_slice %81 {offsets = [0, 0, 80], sizes = [4, 32, 8], strides = [1, 1, 1]} : vector<4x32x128xbf16> to vector<4x32x8xbf16>
    "tpu.trace_start"() <{level = 10 : i32, message = "bqd,bkd->bqk"}> : () -> ()
    %cst_35 = arith.constant dense<0.000000e+00> : vector<4x32x32xf32>
    %121 = tpu.matmul %118, %119, %cst_35 {dimension_numbers = #tpu.dot_dimension_numbers<[2], [2], [1], [1], [0, 0, 0, 1, 1, 1], [0], [0]>} : vector<4x32x8xbf16>, vector<4x32x8xbf16>, vector<4x32x32xf32> -> vector<4x32x32xf32>
    "tpu.trace_stop"() : () -> ()
    %122 = vector.shape_cast %5 : vector<32x32xf32> to vector<1x32x32xf32>
    %123 = vector.broadcast %122 : vector<1x32x32xf32> to vector<4x32x32xf32>
    %124 = arith.addf %121, %123 : vector<4x32x32xf32>
    %cst_36 = arith.constant dense<0xFF800000> : vector<4x32xf32>
    %125 = vector.multi_reduction <maximumf>, %124, %cst_36 [2] : vector<4x32x32xf32> to vector<4x32xf32>
    %126 = vector.shape_cast %125 : vector<4x32xf32> to vector<4x32x1xf32>
    %127 = vector.broadcast %126 : vector<4x32x1xf32> to vector<4x32x32xf32>
    %128 = arith.subf %124, %127 : vector<4x32x32xf32>
    %129 = math.exp %128 : vector<4x32x32xf32>
    %cst_37 = arith.constant dense<0.000000e+00> : vector<4x32xf32>
    %130 = vector.multi_reduction <add>, %129, %cst_37 [2] : vector<4x32x32xf32> to vector<4x32xf32>
    %131 = vector.shape_cast %130 : vector<4x32xf32> to vector<4x32x1xf32>
    %132 = vector.broadcast %131 : vector<4x32x1xf32> to vector<4x32x32xf32>
    %133 = arith.divf %129, %132 : vector<4x32x32xf32>
    %134 = arith.truncf %133 : vector<4x32x32xf32> to vector<4x32x32xbf16>
    "tpu.trace_start"() <{level = 10 : i32, message = "bqk,bkd->bqd"}> : () -> ()
    %cst_38 = arith.constant dense<0.000000e+00> : vector<4x32x8xf32>
    %135 = tpu.matmul %134, %120, %cst_38 {dimension_numbers = #tpu.dot_dimension_numbers<[2], [1], [1], [2], [0, 0, 0, 1, 1, 2], [0], [0]>} : vector<4x32x32xbf16>, vector<4x32x8xbf16>, vector<4x32x8xf32> -> vector<4x32x8xf32>
    "tpu.trace_stop"() : () -> ()
    %136 = vector.extract_strided_slice %81 {offsets = [0, 0, 24], sizes = [4, 32, 8], strides = [1, 1, 1]} : vector<4x32x128xbf16> to vector<4x32x8xbf16>
    %137 = vector.extract_strided_slice %81 {offsets = [0, 0, 56], sizes = [4, 32, 8], strides = [1, 1, 1]} : vector<4x32x128xbf16> to vector<4x32x8xbf16>
    %138 = vector.extract_strided_slice %81 {offsets = [0, 0, 88], sizes = [4, 32, 8], strides = [1, 1, 1]} : vector<4x32x128xbf16> to vector<4x32x8xbf16>
    "tpu.trace_start"() <{level = 10 : i32, message = "bqd,bkd->bqk"}> : () -> ()
    %cst_39 = arith.constant dense<0.000000e+00> : vector<4x32x32xf32>
    %139 = tpu.matmul %136, %137, %cst_39 {dimension_numbers = #tpu.dot_dimension_numbers<[2], [2], [1], [1], [0, 0, 0, 1, 1, 1], [0], [0]>} : vector<4x32x8xbf16>, vector<4x32x8xbf16>, vector<4x32x32xf32> -> vector<4x32x32xf32>
    "tpu.trace_stop"() : () -> ()
    %140 = vector.shape_cast %5 : vector<32x32xf32> to vector<1x32x32xf32>
    %141 = vector.broadcast %140 : vector<1x32x32xf32> to vector<4x32x32xf32>
    %142 = arith.addf %139, %141 : vector<4x32x32xf32>
    %cst_40 = arith.constant dense<0xFF800000> : vector<4x32xf32>
    %143 = vector.multi_reduction <maximumf>, %142, %cst_40 [2] : vector<4x32x32xf32> to vector<4x32xf32>
    %144 = vector.shape_cast %143 : vector<4x32xf32> to vector<4x32x1xf32>
    %145 = vector.broadcast %144 : vector<4x32x1xf32> to vector<4x32x32xf32>
    %146 = arith.subf %142, %145 : vector<4x32x32xf32>
    %147 = math.exp %146 : vector<4x32x32xf32>
    %cst_41 = arith.constant dense<0.000000e+00> : vector<4x32xf32>
    %148 = vector.multi_reduction <add>, %147, %cst_41 [2] : vector<4x32x32xf32> to vector<4x32xf32>
    %149 = vector.shape_cast %148 : vector<4x32xf32> to vector<4x32x1xf32>
    %150 = vector.broadcast %149 : vector<4x32x1xf32> to vector<4x32x32xf32>
    %151 = arith.divf %147, %150 : vector<4x32x32xf32>
    %152 = arith.truncf %151 : vector<4x32x32xf32> to vector<4x32x32xbf16>
    "tpu.trace_start"() <{level = 10 : i32, message = "bqk,bkd->bqd"}> : () -> ()
    %cst_42 = arith.constant dense<0.000000e+00> : vector<4x32x8xf32>
    %153 = tpu.matmul %152, %138, %cst_42 {dimension_numbers = #tpu.dot_dimension_numbers<[2], [1], [1], [2], [0, 0, 0, 1, 1, 2], [0], [0]>} : vector<4x32x32xbf16>, vector<4x32x8xbf16>, vector<4x32x8xf32> -> vector<4x32x8xf32>
    "tpu.trace_stop"() : () -> ()
    %154 = tpu.concatenate %99, %117, %135, %153 in 2 : vector<4x32x8xf32>, vector<4x32x8xf32>, vector<4x32x8xf32>, vector<4x32x8xf32> -> vector<4x32x32xf32>
    %155 = vector.shape_cast %154 : vector<4x32x32xf32> to vector<128x32xf32>
    %c192 = arith.constant 192 : index
    %c0_43 = arith.constant 0 : index
    %156 = vector.load %arg2[%c192, %c0_43] : memref<544x32xbf16, #tpu.memory_space<vmem>>, vector<32x32xbf16>
    %157 = arith.truncf %155 : vector<128x32xf32> to vector<128x32xbf16>
    %cst_44 = arith.constant dense<0.000000e+00> : vector<128x32xf32>
    %158 = tpu.matmul %157, %156, %cst_44 {dimension_numbers = #tpu.dot_dimension_numbers<[1], [0], [0], [1], [0, 0, 1, 1], [], []>} : vector<128x32xbf16>, vector<32x32xbf16>, vector<128x32xf32> -> vector<128x32xf32>
    %159 = arith.addf %43, %158 : vector<128x32xf32>
    %c40 = arith.constant 40 : index
    %c0_45 = arith.constant 0 : index
    %160 = vector.load %arg4[%c40, %c0_45] : memref<48x32xf32, #tpu.memory_space<vmem>>, vector<1x32xf32>
    %161 = vector.shape_cast %160 : vector<1x32xf32> to vector<32xf32>
    %162 = vector.shape_cast %161 : vector<32xf32> to vector<1x32xf32>
    %163 = vector.broadcast %162 : vector<1x32xf32> to vector<128x32xf32>
    %164 = arith.addf %159, %163 : vector<128x32xf32>
    %c38 = arith.constant 38 : index
    %c0_46 = arith.constant 0 : index
    %165 = vector.load %arg4[%c38, %c0_46] : memref<48x32xf32, #tpu.memory_space<vmem>>, vector<1x32xf32>
    %166 = vector.shape_cast %165 : vector<1x32xf32> to vector<32xf32>
    %c39 = arith.constant 39 : index
    %c0_47 = arith.constant 0 : index
    %167 = vector.load %arg4[%c39, %c0_47] : memref<48x32xf32, #tpu.memory_space<vmem>>, vector<1x32xf32>
    %168 = vector.shape_cast %167 : vector<1x32xf32> to vector<32xf32>
    %cst_48 = arith.constant dense<0.000000e+00> : vector<128xf32>
    %169 = vector.multi_reduction <add>, %164, %cst_48 [1] : vector<128x32xf32> to vector<128xf32>
    %170 = vector.shape_cast %169 : vector<128xf32> to vector<128x1xf32>
    %cst_49 = arith.constant 3.200000e+01 : f32
    %171 = vector.broadcast %cst_49 : f32 to vector<128x1xf32>
    %172 = arith.divf %170, %171 : vector<128x1xf32>
    %173 = vector.broadcast %172 : vector<128x1xf32> to vector<128x32xf32>
    %174 = arith.subf %164, %173 : vector<128x32xf32>
    %175 = arith.mulf %174, %174 : vector<128x32xf32>
    %cst_50 = arith.constant dense<0.000000e+00> : vector<128xf32>
    %176 = vector.multi_reduction <add>, %175, %cst_50 [1] : vector<128x32xf32> to vector<128xf32>
    %177 = vector.shape_cast %176 : vector<128xf32> to vector<128x1xf32>
    %cst_51 = arith.constant 3.200000e+01 : f32
    %178 = vector.broadcast %cst_51 : f32 to vector<128x1xf32>
    %179 = arith.divf %177, %178 : vector<128x1xf32>
    %180 = vector.broadcast %172 : vector<128x1xf32> to vector<128x32xf32>
    %181 = arith.subf %164, %180 : vector<128x32xf32>
    %cst_52 = arith.constant 9.99999974E-6 : f32
    %182 = vector.broadcast %cst_52 : f32 to vector<128x1xf32>
    %183 = arith.addf %179, %182 : vector<128x1xf32>
    %184 = math.rsqrt %183 : vector<128x1xf32>
    %185 = vector.broadcast %184 : vector<128x1xf32> to vector<128x32xf32>
    %186 = arith.mulf %181, %185 : vector<128x32xf32>
    %187 = vector.shape_cast %166 : vector<32xf32> to vector<1x32xf32>
    %188 = vector.broadcast %187 : vector<1x32xf32> to vector<128x32xf32>
    %189 = arith.mulf %186, %188 : vector<128x32xf32>
    %190 = vector.shape_cast %168 : vector<32xf32> to vector<1x32xf32>
    %191 = vector.broadcast %190 : vector<1x32xf32> to vector<128x32xf32>
    %192 = arith.addf %189, %191 : vector<128x32xf32>
    %c64 = arith.constant 64 : index
    %c0_53 = arith.constant 0 : index
    %193 = vector.load %arg3[%c64, %c0_53] : memref<160x128xbf16, #tpu.memory_space<vmem>>, vector<32x128xbf16>
    %194 = arith.truncf %192 : vector<128x32xf32> to vector<128x32xbf16>
    %cst_54 = arith.constant dense<0.000000e+00> : vector<128x128xf32>
    %195 = tpu.matmul %194, %193, %cst_54 {dimension_numbers = #tpu.dot_dimension_numbers<[1], [0], [0], [1], [0, 0, 1, 1], [], []>} : vector<128x32xbf16>, vector<32x128xbf16>, vector<128x128xf32> -> vector<128x128xf32>
    %c2 = arith.constant 2 : index
    %c0_55 = arith.constant 0 : index
    %196 = vector.load %arg5[%c2, %c0_55] : memref<5x128xf32, #tpu.memory_space<vmem>>, vector<1x128xf32>
    %197 = vector.shape_cast %196 : vector<1x128xf32> to vector<128xf32>
    %198 = vector.shape_cast %197 : vector<128xf32> to vector<1x128xf32>
    %199 = vector.broadcast %198 : vector<1x128xf32> to vector<128x128xf32>
    %200 = arith.addf %195, %199 : vector<128x128xf32>
    %201 = arith.mulf %200, %200 : vector<128x128xf32>
    %202 = arith.mulf %200, %201 : vector<128x128xf32>
    %cst_56 = arith.constant 4.471500e-02 : f32
    %203 = vector.broadcast %cst_56 : f32 to vector<128x128xf32>
    %204 = arith.mulf %203, %202 : vector<128x128xf32>
    %205 = arith.addf %200, %204 : vector<128x128xf32>
    %cst_57 = arith.constant 0.797884583 : f32
    %206 = vector.broadcast %cst_57 : f32 to vector<128x128xf32>
    %207 = arith.mulf %206, %205 : vector<128x128xf32>
    %208 = math.tanh %207 : vector<128x128xf32>
    %cst_58 = arith.constant 1.000000e+00 : f32
    %209 = vector.broadcast %cst_58 : f32 to vector<128x128xf32>
    %210 = arith.addf %209, %208 : vector<128x128xf32>
    %cst_59 = arith.constant 5.000000e-01 : f32
    %211 = vector.broadcast %cst_59 : f32 to vector<128x128xf32>
    %212 = arith.mulf %211, %210 : vector<128x128xf32>
    %213 = arith.mulf %200, %212 : vector<128x128xf32>
    %c256 = arith.constant 256 : index
    %c0_60 = arith.constant 0 : index
    %214 = vector.load %arg2[%c256, %c0_60] : memref<544x32xbf16, #tpu.memory_space<vmem>>, vector<128x32xbf16>
    %215 = arith.truncf %213 : vector<128x128xf32> to vector<128x128xbf16>
    %cst_61 = arith.constant dense<0.000000e+00> : vector<128x32xf32>
    %216 = tpu.matmul %215, %214, %cst_61 {dimension_numbers = #tpu.dot_dimension_numbers<[1], [0], [0], [1], [0, 0, 1, 1], [], []>} : vector<128x128xbf16>, vector<128x32xbf16>, vector<128x32xf32> -> vector<128x32xf32>
    %217 = arith.addf %164, %216 : vector<128x32xf32>
    %c41 = arith.constant 41 : index
    %c0_62 = arith.constant 0 : index
    %218 = vector.load %arg4[%c41, %c0_62] : memref<48x32xf32, #tpu.memory_space<vmem>>, vector<1x32xf32>
    %219 = vector.shape_cast %218 : vector<1x32xf32> to vector<32xf32>
    %220 = vector.shape_cast %219 : vector<32xf32> to vector<1x32xf32>
    %221 = vector.broadcast %220 : vector<1x32xf32> to vector<128x32xf32>
    %222 = arith.addf %217, %221 : vector<128x32xf32>
    %c42 = arith.constant 42 : index
    %c0_63 = arith.constant 0 : index
    %223 = vector.load %arg4[%c42, %c0_63] : memref<48x32xf32, #tpu.memory_space<vmem>>, vector<1x32xf32>
    %224 = vector.shape_cast %223 : vector<1x32xf32> to vector<32xf32>
    %c43 = arith.constant 43 : index
    %c0_64 = arith.constant 0 : index
    %225 = vector.load %arg4[%c43, %c0_64] : memref<48x32xf32, #tpu.memory_space<vmem>>, vector<1x32xf32>
    %226 = vector.shape_cast %225 : vector<1x32xf32> to vector<32xf32>
    %cst_65 = arith.constant dense<0.000000e+00> : vector<128xf32>
    %227 = vector.multi_reduction <add>, %222, %cst_65 [1] : vector<128x32xf32> to vector<128xf32>
    %228 = vector.shape_cast %227 : vector<128xf32> to vector<128x1xf32>
    %cst_66 = arith.constant 3.200000e+01 : f32
    %229 = vector.broadcast %cst_66 : f32 to vector<128x1xf32>
    %230 = arith.divf %228, %229 : vector<128x1xf32>
    %231 = vector.broadcast %230 : vector<128x1xf32> to vector<128x32xf32>
    %232 = arith.subf %222, %231 : vector<128x32xf32>
    %233 = arith.mulf %232, %232 : vector<128x32xf32>
    %cst_67 = arith.constant dense<0.000000e+00> : vector<128xf32>
    %234 = vector.multi_reduction <add>, %233, %cst_67 [1] : vector<128x32xf32> to vector<128xf32>
    %235 = vector.shape_cast %234 : vector<128xf32> to vector<128x1xf32>
    %cst_68 = arith.constant 3.200000e+01 : f32
    %236 = vector.broadcast %cst_68 : f32 to vector<128x1xf32>
    %237 = arith.divf %235, %236 : vector<128x1xf32>
    %238 = vector.broadcast %230 : vector<128x1xf32> to vector<128x32xf32>
    %239 = arith.subf %222, %238 : vector<128x32xf32>
    %cst_69 = arith.constant 9.99999974E-6 : f32
    %240 = vector.broadcast %cst_69 : f32 to vector<128x1xf32>
    %241 = arith.addf %237, %240 : vector<128x1xf32>
    %242 = math.rsqrt %241 : vector<128x1xf32>
    %243 = vector.broadcast %242 : vector<128x1xf32> to vector<128x32xf32>
    %244 = arith.mulf %239, %243 : vector<128x32xf32>
    %245 = vector.shape_cast %224 : vector<32xf32> to vector<1x32xf32>
    %246 = vector.broadcast %245 : vector<1x32xf32> to vector<128x32xf32>
    %247 = arith.mulf %244, %246 : vector<128x32xf32>
    %248 = vector.shape_cast %226 : vector<32xf32> to vector<1x32xf32>
    %249 = vector.broadcast %248 : vector<1x32xf32> to vector<128x32xf32>
    %250 = arith.addf %247, %249 : vector<128x32xf32>
    %c32_70 = arith.constant 32 : index
    %c0_71 = arith.constant 0 : index
    %251 = vector.load %arg3[%c32_70, %c0_71] : memref<160x128xbf16, #tpu.memory_space<vmem>>, vector<32x128xbf16>
    %252 = arith.truncf %250 : vector<128x32xf32> to vector<128x32xbf16>
    %cst_72 = arith.constant dense<0.000000e+00> : vector<128x128xf32>
    %253 = tpu.matmul %252, %251, %cst_72 {dimension_numbers = #tpu.dot_dimension_numbers<[1], [0], [0], [1], [0, 0, 1, 1], [], []>} : vector<128x32xbf16>, vector<32x128xbf16>, vector<128x128xf32> -> vector<128x128xf32>
    %c1 = arith.constant 1 : index
    %c0_73 = arith.constant 0 : index
    %254 = vector.load %arg5[%c1, %c0_73] : memref<5x128xf32, #tpu.memory_space<vmem>>, vector<1x128xf32>
    %255 = vector.shape_cast %254 : vector<1x128xf32> to vector<128xf32>
    %256 = vector.shape_cast %255 : vector<128xf32> to vector<1x128xf32>
    %257 = vector.broadcast %256 : vector<1x128xf32> to vector<128x128xf32>
    %258 = arith.addf %253, %257 : vector<128x128xf32>
    %259 = arith.truncf %258 : vector<128x128xf32> to vector<128x128xbf16>
    %260 = vector.shape_cast %259 : vector<128x128xbf16> to vector<4x32x128xbf16>
    %261 = vector.extract_strided_slice %260 {offsets = [0, 0, 0], sizes = [4, 32, 8], strides = [1, 1, 1]} : vector<4x32x128xbf16> to vector<4x32x8xbf16>
    %262 = vector.extract_strided_slice %260 {offsets = [0, 0, 32], sizes = [4, 32, 8], strides = [1, 1, 1]} : vector<4x32x128xbf16> to vector<4x32x8xbf16>
    %263 = vector.extract_strided_slice %260 {offsets = [0, 0, 64], sizes = [4, 32, 8], strides = [1, 1, 1]} : vector<4x32x128xbf16> to vector<4x32x8xbf16>
    "tpu.trace_start"() <{level = 10 : i32, message = "bqd,bkd->bqk"}> : () -> ()
    %cst_74 = arith.constant dense<0.000000e+00> : vector<4x32x32xf32>
    %264 = tpu.matmul %261, %262, %cst_74 {dimension_numbers = #tpu.dot_dimension_numbers<[2], [2], [1], [1], [0, 0, 0, 1, 1, 1], [0], [0]>} : vector<4x32x8xbf16>, vector<4x32x8xbf16>, vector<4x32x32xf32> -> vector<4x32x32xf32>
    "tpu.trace_stop"() : () -> ()
    %265 = vector.shape_cast %5 : vector<32x32xf32> to vector<1x32x32xf32>
    %266 = vector.broadcast %265 : vector<1x32x32xf32> to vector<4x32x32xf32>
    %267 = arith.addf %264, %266 : vector<4x32x32xf32>
    %cst_75 = arith.constant dense<0xFF800000> : vector<4x32xf32>
    %268 = vector.multi_reduction <maximumf>, %267, %cst_75 [2] : vector<4x32x32xf32> to vector<4x32xf32>
    %269 = vector.shape_cast %268 : vector<4x32xf32> to vector<4x32x1xf32>
    %270 = vector.broadcast %269 : vector<4x32x1xf32> to vector<4x32x32xf32>
    %271 = arith.subf %267, %270 : vector<4x32x32xf32>
    %272 = math.exp %271 : vector<4x32x32xf32>
    %cst_76 = arith.constant dense<0.000000e+00> : vector<4x32xf32>
    %273 = vector.multi_reduction <add>, %272, %cst_76 [2] : vector<4x32x32xf32> to vector<4x32xf32>
    %274 = vector.shape_cast %273 : vector<4x32xf32> to vector<4x32x1xf32>
    %275 = vector.broadcast %274 : vector<4x32x1xf32> to vector<4x32x32xf32>
    %276 = arith.divf %272, %275 : vector<4x32x32xf32>
    %277 = arith.truncf %276 : vector<4x32x32xf32> to vector<4x32x32xbf16>
    "tpu.trace_start"() <{level = 10 : i32, message = "bqk,bkd->bqd"}> : () -> ()
    %cst_77 = arith.constant dense<0.000000e+00> : vector<4x32x8xf32>
    %278 = tpu.matmul %277, %263, %cst_77 {dimension_numbers = #tpu.dot_dimension_numbers<[2], [1], [1], [2], [0, 0, 0, 1, 1, 2], [0], [0]>} : vector<4x32x32xbf16>, vector<4x32x8xbf16>, vector<4x32x8xf32> -> vector<4x32x8xf32>
    "tpu.trace_stop"() : () -> ()
    %279 = vector.extract_strided_slice %260 {offsets = [0, 0, 8], sizes = [4, 32, 8], strides = [1, 1, 1]} : vector<4x32x128xbf16> to vector<4x32x8xbf16>
    %280 = vector.extract_strided_slice %260 {offsets = [0, 0, 40], sizes = [4, 32, 8], strides = [1, 1, 1]} : vector<4x32x128xbf16> to vector<4x32x8xbf16>
    %281 = vector.extract_strided_slice %260 {offsets = [0, 0, 72], sizes = [4, 32, 8], strides = [1, 1, 1]} : vector<4x32x128xbf16> to vector<4x32x8xbf16>
    "tpu.trace_start"() <{level = 10 : i32, message = "bqd,bkd->bqk"}> : () -> ()
    %cst_78 = arith.constant dense<0.000000e+00> : vector<4x32x32xf32>
    %282 = tpu.matmul %279, %280, %cst_78 {dimension_numbers = #tpu.dot_dimension_numbers<[2], [2], [1], [1], [0, 0, 0, 1, 1, 1], [0], [0]>} : vector<4x32x8xbf16>, vector<4x32x8xbf16>, vector<4x32x32xf32> -> vector<4x32x32xf32>
    "tpu.trace_stop"() : () -> ()
    %283 = vector.shape_cast %5 : vector<32x32xf32> to vector<1x32x32xf32>
    %284 = vector.broadcast %283 : vector<1x32x32xf32> to vector<4x32x32xf32>
    %285 = arith.addf %282, %284 : vector<4x32x32xf32>
    %cst_79 = arith.constant dense<0xFF800000> : vector<4x32xf32>
    %286 = vector.multi_reduction <maximumf>, %285, %cst_79 [2] : vector<4x32x32xf32> to vector<4x32xf32>
    %287 = vector.shape_cast %286 : vector<4x32xf32> to vector<4x32x1xf32>
    %288 = vector.broadcast %287 : vector<4x32x1xf32> to vector<4x32x32xf32>
    %289 = arith.subf %285, %288 : vector<4x32x32xf32>
    %290 = math.exp %289 : vector<4x32x32xf32>
    %cst_80 = arith.constant dense<0.000000e+00> : vector<4x32xf32>
    %291 = vector.multi_reduction <add>, %290, %cst_80 [2] : vector<4x32x32xf32> to vector<4x32xf32>
    %292 = vector.shape_cast %291 : vector<4x32xf32> to vector<4x32x1xf32>
    %293 = vector.broadcast %292 : vector<4x32x1xf32> to vector<4x32x32xf32>
    %294 = arith.divf %290, %293 : vector<4x32x32xf32>
    %295 = arith.truncf %294 : vector<4x32x32xf32> to vector<4x32x32xbf16>
    "tpu.trace_start"() <{level = 10 : i32, message = "bqk,bkd->bqd"}> : () -> ()
    %cst_81 = arith.constant dense<0.000000e+00> : vector<4x32x8xf32>
    %296 = tpu.matmul %295, %281, %cst_81 {dimension_numbers = #tpu.dot_dimension_numbers<[2], [1], [1], [2], [0, 0, 0, 1, 1, 2], [0], [0]>} : vector<4x32x32xbf16>, vector<4x32x8xbf16>, vector<4x32x8xf32> -> vector<4x32x8xf32>
    "tpu.trace_stop"() : () -> ()
    %297 = vector.extract_strided_slice %260 {offsets = [0, 0, 16], sizes = [4, 32, 8], strides = [1, 1, 1]} : vector<4x32x128xbf16> to vector<4x32x8xbf16>
    %298 = vector.extract_strided_slice %260 {offsets = [0, 0, 48], sizes = [4, 32, 8], strides = [1, 1, 1]} : vector<4x32x128xbf16> to vector<4x32x8xbf16>
    %299 = vector.extract_strided_slice %260 {offsets = [0, 0, 80], sizes = [4, 32, 8], strides = [1, 1, 1]} : vector<4x32x128xbf16> to vector<4x32x8xbf16>
    "tpu.trace_start"() <{level = 10 : i32, message = "bqd,bkd->bqk"}> : () -> ()
    %cst_82 = arith.constant dense<0.000000e+00> : vector<4x32x32xf32>
    %300 = tpu.matmul %297, %298, %cst_82 {dimension_numbers = #tpu.dot_dimension_numbers<[2], [2], [1], [1], [0, 0, 0, 1, 1, 1], [0], [0]>} : vector<4x32x8xbf16>, vector<4x32x8xbf16>, vector<4x32x32xf32> -> vector<4x32x32xf32>
    "tpu.trace_stop"() : () -> ()
    %301 = vector.shape_cast %5 : vector<32x32xf32> to vector<1x32x32xf32>
    %302 = vector.broadcast %301 : vector<1x32x32xf32> to vector<4x32x32xf32>
    %303 = arith.addf %300, %302 : vector<4x32x32xf32>
    %cst_83 = arith.constant dense<0xFF800000> : vector<4x32xf32>
    %304 = vector.multi_reduction <maximumf>, %303, %cst_83 [2] : vector<4x32x32xf32> to vector<4x32xf32>
    %305 = vector.shape_cast %304 : vector<4x32xf32> to vector<4x32x1xf32>
    %306 = vector.broadcast %305 : vector<4x32x1xf32> to vector<4x32x32xf32>
    %307 = arith.subf %303, %306 : vector<4x32x32xf32>
    %308 = math.exp %307 : vector<4x32x32xf32>
    %cst_84 = arith.constant dense<0.000000e+00> : vector<4x32xf32>
    %309 = vector.multi_reduction <add>, %308, %cst_84 [2] : vector<4x32x32xf32> to vector<4x32xf32>
    %310 = vector.shape_cast %309 : vector<4x32xf32> to vector<4x32x1xf32>
    %311 = vector.broadcast %310 : vector<4x32x1xf32> to vector<4x32x32xf32>
    %312 = arith.divf %308, %311 : vector<4x32x32xf32>
    %313 = arith.truncf %312 : vector<4x32x32xf32> to vector<4x32x32xbf16>
    "tpu.trace_start"() <{level = 10 : i32, message = "bqk,bkd->bqd"}> : () -> ()
    %cst_85 = arith.constant dense<0.000000e+00> : vector<4x32x8xf32>
    %314 = tpu.matmul %313, %299, %cst_85 {dimension_numbers = #tpu.dot_dimension_numbers<[2], [1], [1], [2], [0, 0, 0, 1, 1, 2], [0], [0]>} : vector<4x32x32xbf16>, vector<4x32x8xbf16>, vector<4x32x8xf32> -> vector<4x32x8xf32>
    "tpu.trace_stop"() : () -> ()
    %315 = vector.extract_strided_slice %260 {offsets = [0, 0, 24], sizes = [4, 32, 8], strides = [1, 1, 1]} : vector<4x32x128xbf16> to vector<4x32x8xbf16>
    %316 = vector.extract_strided_slice %260 {offsets = [0, 0, 56], sizes = [4, 32, 8], strides = [1, 1, 1]} : vector<4x32x128xbf16> to vector<4x32x8xbf16>
    %317 = vector.extract_strided_slice %260 {offsets = [0, 0, 88], sizes = [4, 32, 8], strides = [1, 1, 1]} : vector<4x32x128xbf16> to vector<4x32x8xbf16>
    "tpu.trace_start"() <{level = 10 : i32, message = "bqd,bkd->bqk"}> : () -> ()
    %cst_86 = arith.constant dense<0.000000e+00> : vector<4x32x32xf32>
    %318 = tpu.matmul %315, %316, %cst_86 {dimension_numbers = #tpu.dot_dimension_numbers<[2], [2], [1], [1], [0, 0, 0, 1, 1, 1], [0], [0]>} : vector<4x32x8xbf16>, vector<4x32x8xbf16>, vector<4x32x32xf32> -> vector<4x32x32xf32>
    "tpu.trace_stop"() : () -> ()
    %319 = vector.shape_cast %5 : vector<32x32xf32> to vector<1x32x32xf32>
    %320 = vector.broadcast %319 : vector<1x32x32xf32> to vector<4x32x32xf32>
    %321 = arith.addf %318, %320 : vector<4x32x32xf32>
    %cst_87 = arith.constant dense<0xFF800000> : vector<4x32xf32>
    %322 = vector.multi_reduction <maximumf>, %321, %cst_87 [2] : vector<4x32x32xf32> to vector<4x32xf32>
    %323 = vector.shape_cast %322 : vector<4x32xf32> to vector<4x32x1xf32>
    %324 = vector.broadcast %323 : vector<4x32x1xf32> to vector<4x32x32xf32>
    %325 = arith.subf %321, %324 : vector<4x32x32xf32>
    %326 = math.exp %325 : vector<4x32x32xf32>
    %cst_88 = arith.constant dense<0.000000e+00> : vector<4x32xf32>
    %327 = vector.multi_reduction <add>, %326, %cst_88 [2] : vector<4x32x32xf32> to vector<4x32xf32>
    %328 = vector.shape_cast %327 : vector<4x32xf32> to vector<4x32x1xf32>
    %329 = vector.broadcast %328 : vector<4x32x1xf32> to vector<4x32x32xf32>
    %330 = arith.divf %326, %329 : vector<4x32x32xf32>
    %331 = arith.truncf %330 : vector<4x32x32xf32> to vector<4x32x32xbf16>
    "tpu.trace_start"() <{level = 10 : i32, message = "bqk,bkd->bqd"}> : () -> ()
    %cst_89 = arith.constant dense<0.000000e+00> : vector<4x32x8xf32>
    %332 = tpu.matmul %331, %317, %cst_89 {dimension_numbers = #tpu.dot_dimension_numbers<[2], [1], [1], [2], [0, 0, 0, 1, 1, 2], [0], [0]>} : vector<4x32x32xbf16>, vector<4x32x8xbf16>, vector<4x32x8xf32> -> vector<4x32x8xf32>
    "tpu.trace_stop"() : () -> ()
    %333 = tpu.concatenate %278, %296, %314, %332 in 2 : vector<4x32x8xf32>, vector<4x32x8xf32>, vector<4x32x8xf32>, vector<4x32x8xf32> -> vector<4x32x32xf32>
    %334 = vector.shape_cast %333 : vector<4x32x32xf32> to vector<128x32xf32>
    %c224 = arith.constant 224 : index
    %c0_90 = arith.constant 0 : index
    %335 = vector.load %arg2[%c224, %c0_90] : memref<544x32xbf16, #tpu.memory_space<vmem>>, vector<32x32xbf16>
    %336 = arith.truncf %334 : vector<128x32xf32> to vector<128x32xbf16>
    %cst_91 = arith.constant dense<0.000000e+00> : vector<128x32xf32>
    %337 = tpu.matmul %336, %335, %cst_91 {dimension_numbers = #tpu.dot_dimension_numbers<[1], [0], [0], [1], [0, 0, 1, 1], [], []>} : vector<128x32xbf16>, vector<32x32xbf16>, vector<128x32xf32> -> vector<128x32xf32>
    %338 = arith.addf %222, %337 : vector<128x32xf32>
    %c46 = arith.constant 46 : index
    %c0_92 = arith.constant 0 : index
    %339 = vector.load %arg4[%c46, %c0_92] : memref<48x32xf32, #tpu.memory_space<vmem>>, vector<1x32xf32>
    %340 = vector.shape_cast %339 : vector<1x32xf32> to vector<32xf32>
    %341 = vector.shape_cast %340 : vector<32xf32> to vector<1x32xf32>
    %342 = vector.broadcast %341 : vector<1x32xf32> to vector<128x32xf32>
    %343 = arith.addf %338, %342 : vector<128x32xf32>
    %c44 = arith.constant 44 : index
    %c0_93 = arith.constant 0 : index
    %344 = vector.load %arg4[%c44, %c0_93] : memref<48x32xf32, #tpu.memory_space<vmem>>, vector<1x32xf32>
    %345 = vector.shape_cast %344 : vector<1x32xf32> to vector<32xf32>
    %c45 = arith.constant 45 : index
    %c0_94 = arith.constant 0 : index
    %346 = vector.load %arg4[%c45, %c0_94] : memref<48x32xf32, #tpu.memory_space<vmem>>, vector<1x32xf32>
    %347 = vector.shape_cast %346 : vector<1x32xf32> to vector<32xf32>
    %cst_95 = arith.constant dense<0.000000e+00> : vector<128xf32>
    %348 = vector.multi_reduction <add>, %343, %cst_95 [1] : vector<128x32xf32> to vector<128xf32>
    %349 = vector.shape_cast %348 : vector<128xf32> to vector<128x1xf32>
    %cst_96 = arith.constant 3.200000e+01 : f32
    %350 = vector.broadcast %cst_96 : f32 to vector<128x1xf32>
    %351 = arith.divf %349, %350 : vector<128x1xf32>
    %352 = vector.broadcast %351 : vector<128x1xf32> to vector<128x32xf32>
    %353 = arith.subf %343, %352 : vector<128x32xf32>
    %354 = arith.mulf %353, %353 : vector<128x32xf32>
    %cst_97 = arith.constant dense<0.000000e+00> : vector<128xf32>
    %355 = vector.multi_reduction <add>, %354, %cst_97 [1] : vector<128x32xf32> to vector<128xf32>
    %356 = vector.shape_cast %355 : vector<128xf32> to vector<128x1xf32>
    %cst_98 = arith.constant 3.200000e+01 : f32
    %357 = vector.broadcast %cst_98 : f32 to vector<128x1xf32>
    %358 = arith.divf %356, %357 : vector<128x1xf32>
    %359 = vector.broadcast %351 : vector<128x1xf32> to vector<128x32xf32>
    %360 = arith.subf %343, %359 : vector<128x32xf32>
    %cst_99 = arith.constant 9.99999974E-6 : f32
    %361 = vector.broadcast %cst_99 : f32 to vector<128x1xf32>
    %362 = arith.addf %358, %361 : vector<128x1xf32>
    %363 = math.rsqrt %362 : vector<128x1xf32>
    %364 = vector.broadcast %363 : vector<128x1xf32> to vector<128x32xf32>
    %365 = arith.mulf %360, %364 : vector<128x32xf32>
    %366 = vector.shape_cast %345 : vector<32xf32> to vector<1x32xf32>
    %367 = vector.broadcast %366 : vector<1x32xf32> to vector<128x32xf32>
    %368 = arith.mulf %365, %367 : vector<128x32xf32>
    %369 = vector.shape_cast %347 : vector<32xf32> to vector<1x32xf32>
    %370 = vector.broadcast %369 : vector<1x32xf32> to vector<128x32xf32>
    %371 = arith.addf %368, %370 : vector<128x32xf32>
    %c96 = arith.constant 96 : index
    %c0_100 = arith.constant 0 : index
    %372 = vector.load %arg3[%c96, %c0_100] : memref<160x128xbf16, #tpu.memory_space<vmem>>, vector<32x128xbf16>
    %373 = arith.truncf %371 : vector<128x32xf32> to vector<128x32xbf16>
    %cst_101 = arith.constant dense<0.000000e+00> : vector<128x128xf32>
    %374 = tpu.matmul %373, %372, %cst_101 {dimension_numbers = #tpu.dot_dimension_numbers<[1], [0], [0], [1], [0, 0, 1, 1], [], []>} : vector<128x32xbf16>, vector<32x128xbf16>, vector<128x128xf32> -> vector<128x128xf32>
    %c3 = arith.constant 3 : index
    %c0_102 = arith.constant 0 : index
    %375 = vector.load %arg5[%c3, %c0_102] : memref<5x128xf32, #tpu.memory_space<vmem>>, vector<1x128xf32>
    %376 = vector.shape_cast %375 : vector<1x128xf32> to vector<128xf32>
    %377 = vector.shape_cast %376 : vector<128xf32> to vector<1x128xf32>
    %378 = vector.broadcast %377 : vector<1x128xf32> to vector<128x128xf32>
    %379 = arith.addf %374, %378 : vector<128x128xf32>
    %380 = arith.mulf %379, %379 : vector<128x128xf32>
    %381 = arith.mulf %379, %380 : vector<128x128xf32>
    %cst_103 = arith.constant 4.471500e-02 : f32
    %382 = vector.broadcast %cst_103 : f32 to vector<128x128xf32>
    %383 = arith.mulf %382, %381 : vector<128x128xf32>
    %384 = arith.addf %379, %383 : vector<128x128xf32>
    %cst_104 = arith.constant 0.797884583 : f32
    %385 = vector.broadcast %cst_104 : f32 to vector<128x128xf32>
    %386 = arith.mulf %385, %384 : vector<128x128xf32>
    %387 = math.tanh %386 : vector<128x128xf32>
    %cst_105 = arith.constant 1.000000e+00 : f32
    %388 = vector.broadcast %cst_105 : f32 to vector<128x128xf32>
    %389 = arith.addf %388, %387 : vector<128x128xf32>
    %cst_106 = arith.constant 5.000000e-01 : f32
    %390 = vector.broadcast %cst_106 : f32 to vector<128x128xf32>
    %391 = arith.mulf %390, %389 : vector<128x128xf32>
    %392 = arith.mulf %379, %391 : vector<128x128xf32>
    %c384 = arith.constant 384 : index
    %c0_107 = arith.constant 0 : index
    %393 = vector.load %arg2[%c384, %c0_107] : memref<544x32xbf16, #tpu.memory_space<vmem>>, vector<128x32xbf16>
    %394 = arith.truncf %392 : vector<128x128xf32> to vector<128x128xbf16>
    %cst_108 = arith.constant dense<0.000000e+00> : vector<128x32xf32>
    %395 = tpu.matmul %394, %393, %cst_108 {dimension_numbers = #tpu.dot_dimension_numbers<[1], [0], [0], [1], [0, 0, 1, 1], [], []>} : vector<128x128xbf16>, vector<128x32xbf16>, vector<128x32xf32> -> vector<128x32xf32>
    %396 = arith.addf %343, %395 : vector<128x32xf32>
    %c47 = arith.constant 47 : index
    %c0_109 = arith.constant 0 : index
    %397 = vector.load %arg4[%c47, %c0_109] : memref<48x32xf32, #tpu.memory_space<vmem>>, vector<1x32xf32>
    %398 = vector.shape_cast %397 : vector<1x32xf32> to vector<32xf32>
    %399 = vector.shape_cast %398 : vector<32xf32> to vector<1x32xf32>
    %400 = vector.broadcast %399 : vector<1x32xf32> to vector<128x32xf32>
    %401 = arith.addf %396, %400 : vector<128x32xf32>
    %402 = vector.extract_strided_slice %401 {offsets = [0, 0], sizes = [1, 32], strides = [1, 1]} : vector<128x32xf32> to vector<1x32xf32>
    %403 = vector.extract_strided_slice %401 {offsets = [32, 0], sizes = [1, 32], strides = [1, 1]} : vector<128x32xf32> to vector<1x32xf32>
    %404 = vector.extract_strided_slice %401 {offsets = [64, 0], sizes = [1, 32], strides = [1, 1]} : vector<128x32xf32> to vector<1x32xf32>
    %405 = vector.extract_strided_slice %401 {offsets = [96, 0], sizes = [1, 32], strides = [1, 1]} : vector<128x32xf32> to vector<1x32xf32>
    %406 = tpu.concatenate %402, %403, %404, %405 in 0 : vector<1x32xf32>, vector<1x32xf32>, vector<1x32xf32>, vector<1x32xf32> -> vector<4x32xf32>
    %c34 = arith.constant 34 : index
    %c0_110 = arith.constant 0 : index
    %407 = vector.load %arg4[%c34, %c0_110] : memref<48x32xf32, #tpu.memory_space<vmem>>, vector<1x32xf32>
    %408 = vector.shape_cast %407 : vector<1x32xf32> to vector<32xf32>
    %c35 = arith.constant 35 : index
    %c0_111 = arith.constant 0 : index
    %409 = vector.load %arg4[%c35, %c0_111] : memref<48x32xf32, #tpu.memory_space<vmem>>, vector<1x32xf32>
    %410 = vector.shape_cast %409 : vector<1x32xf32> to vector<32xf32>
    %cst_112 = arith.constant dense<0.000000e+00> : vector<4xf32>
    %411 = vector.multi_reduction <add>, %406, %cst_112 [1] : vector<4x32xf32> to vector<4xf32>
    %412 = vector.shape_cast %411 : vector<4xf32> to vector<4x1xf32>
    %cst_113 = arith.constant 3.200000e+01 : f32
    %413 = vector.broadcast %cst_113 : f32 to vector<4x1xf32>
    %414 = arith.divf %412, %413 : vector<4x1xf32>
    %415 = vector.broadcast %414 : vector<4x1xf32> to vector<4x32xf32>
    %416 = arith.subf %406, %415 : vector<4x32xf32>
    %417 = arith.mulf %416, %416 : vector<4x32xf32>
    %cst_114 = arith.constant dense<0.000000e+00> : vector<4xf32>
    %418 = vector.multi_reduction <add>, %417, %cst_114 [1] : vector<4x32xf32> to vector<4xf32>
    %419 = vector.shape_cast %418 : vector<4xf32> to vector<4x1xf32>
    %cst_115 = arith.constant 3.200000e+01 : f32
    %420 = vector.broadcast %cst_115 : f32 to vector<4x1xf32>
    %421 = arith.divf %419, %420 : vector<4x1xf32>
    %422 = vector.broadcast %414 : vector<4x1xf32> to vector<4x32xf32>
    %423 = arith.subf %406, %422 : vector<4x32xf32>
    %cst_116 = arith.constant 9.99999974E-6 : f32
    %424 = vector.broadcast %cst_116 : f32 to vector<4x1xf32>
    %425 = arith.addf %421, %424 : vector<4x1xf32>
    %426 = math.rsqrt %425 : vector<4x1xf32>
    %427 = vector.broadcast %426 : vector<4x1xf32> to vector<4x32xf32>
    %428 = arith.mulf %423, %427 : vector<4x32xf32>
    %429 = vector.shape_cast %408 : vector<32xf32> to vector<1x32xf32>
    %430 = vector.broadcast %429 : vector<1x32xf32> to vector<4x32xf32>
    %431 = arith.mulf %428, %430 : vector<4x32xf32>
    %432 = vector.shape_cast %410 : vector<32xf32> to vector<1x32xf32>
    %433 = vector.broadcast %432 : vector<1x32xf32> to vector<4x32xf32>
    %434 = arith.addf %431, %433 : vector<4x32xf32>
    %c512 = arith.constant 512 : index
    %c0_117 = arith.constant 0 : index
    %435 = vector.load %arg2[%c512, %c0_117] : memref<544x32xbf16, #tpu.memory_space<vmem>>, vector<32x32xbf16>
    %436 = arith.truncf %434 : vector<4x32xf32> to vector<4x32xbf16>
    %cst_118 = arith.constant dense<0.000000e+00> : vector<4x32xf32>
    %437 = tpu.matmul %436, %435, %cst_118 {dimension_numbers = #tpu.dot_dimension_numbers<[1], [0], [0], [1], [0, 0, 1, 1], [], []>} : vector<4x32xbf16>, vector<32x32xbf16>, vector<4x32xf32> -> vector<4x32xf32>
    %438 = arith.mulf %437, %437 : vector<4x32xf32>
    %cst_119 = arith.constant dense<0.000000e+00> : vector<4xf32>
    %439 = vector.multi_reduction <add>, %438, %cst_119 [1] : vector<4x32xf32> to vector<4xf32>
    %440 = vector.shape_cast %439 : vector<4xf32> to vector<4x1xf32>
    %441 = math.sqrt %440 : vector<4x1xf32>
    %442 = vector.broadcast %441 : vector<4x1xf32> to vector<4x32xf32>
    %443 = arith.divf %437, %442 : vector<4x32xf32>
    %c128 = arith.constant 128 : index
    %c0_120 = arith.constant 0 : index
    %444 = vector.load %arg3[%c128, %c0_120] : memref<160x128xbf16, #tpu.memory_space<vmem>>, vector<32x128xbf16>
    %445 = arith.truncf %443 : vector<4x32xf32> to vector<4x32xbf16>
    %cst_121 = arith.constant dense<0.000000e+00> : vector<4x128xf32>
    %446 = tpu.matmul %445, %444, %cst_121 {dimension_numbers = #tpu.dot_dimension_numbers<[1], [0], [0], [1], [0, 0, 1, 1], [], []>} : vector<4x32xbf16>, vector<32x128xbf16>, vector<4x128xf32> -> vector<4x128xf32>
    %c4 = arith.constant 4 : index
    %c0_122 = arith.constant 0 : index
    %447 = vector.load %arg5[%c4, %c0_122] : memref<5x128xf32, #tpu.memory_space<vmem>>, vector<1x128xf32>
    %448 = vector.shape_cast %447 : vector<1x128xf32> to vector<128xf32>
    %449 = vector.shape_cast %448 : vector<128xf32> to vector<1x128xf32>
    %450 = vector.broadcast %449 : vector<1x128xf32> to vector<4x128xf32>
    %451 = arith.addf %446, %450 : vector<4x128xf32>
    %c0_123 = arith.constant 0 : index
    %c0_124 = arith.constant 0 : index
    %c0_125 = arith.constant 0 : index
    %452 = vector.load %arg6[%c0_123, %c0_124, %c0_125] : memref<1x4x128xf32, #tpu.memory_space<vmem>>, vector<1x4x128xf32>
    %453 = vector.shape_cast %452 : vector<1x4x128xf32> to vector<4x128xf32>
    %454 = vector.shape_cast %451 : vector<4x128xf32> to vector<1x4x128xf32>
    tpu.vector_store %arg6[%c0_123, %c0_124, %c0_125], %454 {strides = array<i32>} : memref<1x4x128xf32, #tpu.memory_space<vmem>>, vector<1x4x128xf32>,
    return
  }
  func.func @transform_0(%arg0: i32) -> (i32, i32, i32) {
    %c0_i32 = arith.constant 0 : i32
    %c0_i32_0 = arith.constant 0 : i32
    %c0_i32_1 = arith.constant 0 : i32
    return %arg0, %c0_i32, %c0_i32_0 : i32, i32, i32
  }
  func.func @transform_1(%arg0: i32) -> (i32, i32) {
    %c0_i32 = arith.constant 0 : i32
    %c0_i32_0 = arith.constant 0 : i32
    %c0_i32_1 = arith.constant 0 : i32
    return %c0_i32, %c0_i32_0 : i32, i32
  }
  func.func @transform_2(%arg0: i32) -> (i32, i32) {
    %c0_i32 = arith.constant 0 : i32
    %c0_i32_0 = arith.constant 0 : i32
    %c0_i32_1 = arith.constant 0 : i32
    return %c0_i32, %c0_i32_0 : i32, i32
  }
  func.func @transform_3(%arg0: i32) -> (i32, i32) {
    %c0_i32 = arith.constant 0 : i32
    %c0_i32_0 = arith.constant 0 : i32
    %c0_i32_1 = arith.constant 0 : i32
    return %c0_i32, %c0_i32_0 : i32, i32
  }
  func.func @transform_4(%arg0: i32) -> (i32, i32) {
    %c0_i32 = arith.constant 0 : i32
    %c0_i32_0 = arith.constant 0 : i32
    %c0_i32_1 = arith.constant 0 : i32
    return %c0_i32, %c0_i32_0 : i32, i32
  }
  func.func @transform_5(%arg0: i32) -> (i32, i32, i32) {
    %c0_i32 = arith.constant 0 : i32
    %c0_i32_0 = arith.constant 0 : i32
    %c0_i32_1 = arith.constant 0 : i32
    return %arg0, %c0_i32, %c0_i32_0 : i32, i32, i32
  }
}

</mosaic_0001>

<llo_original>
// kernel: prompt_tuned_clip_forward.1
$region0: #{prompt_tuned_clip_forward.1}
  #allocation0 [shape = 'u32[]', space=smem, size = 0x4, offset = 0x4, fixed_abs, tag = 'smem constant byte address 0x4 - core index']
  #allocation1 [shape = 'u32[72,128]{1,0:T(1,128)}', space=vmem, size = 0x9000, scoped, tag = 'internal scratch']
  %s0 = inlined_call_operand.vmem [shape: bf16[8,32,192], index: 0, kind: input, shape index: {}]
  %s1 = inlined_call_operand.vmem [shape: bf16[544,32], index: 1, kind: input, shape index: {}]
  %s2 = inlined_call_operand.vmem [shape: bf16[160,128], index: 2, kind: input, shape index: {}]
  %s3 = inlined_call_operand.vmem [shape: f32[48,32], index: 3, kind: input, shape index: {}]
  %s4 = inlined_call_operand.vmem [shape: f32[5,128], index: 4, kind: input, shape index: {}]
  %s5 = inlined_call_operand.vmem [shape: f32[2,4,128], index: 5, kind: output, shape index: {}]
  %s6 = sld [smem:[#allocation0]]
  $region53: #{prompt_tuned_clip_forward.1} parent=0
    _
  %s8 = ssub.s32 1, %s6
  %s9 = scalar_select 0, %s8, %s6
  loop: start=0, step=1, limit=4
  $region2: #{prompt_tuned_clip_forward.1} parent=0 // loop_pre_header
    _
  $region3: #{prompt_tuned_clip_forward.1} parent=0 // loop_header
    %s11 = sphi 0, %s15
    %p12 = scmp.ge.s32.totalorder %s11, 4
    %s21 = sphi 0, %s23
    %s24 = sphi 0, %s21
    %s25 = sphi 0, %s24
    %s41 = sphi 0, %s25
    %s45 = sphi 0, %s45
    %s47 = sphi 0, %s45
    %s48 = sphi 0, %s47
    %s62 = sphi 0, %s48
    %s66 = sphi 0, %s66
    %s68 = sphi 0, %s66
    %s69 = sphi 0, %s68
    %s83 = sphi 0, %s69
    %s87 = sphi 0, %s87
    %s89 = sphi 0, %s87
    %s90 = sphi 0, %s89
    %s104 = sphi 0, %s90
    %s108 = sphi 0, %s108
    %s110 = sphi 0, %s108
    %s111 = sphi 0, %s110
    %s125 = sphi 0, %s111
    %s131 = sphi 0, %s133
    %s134 = sphi 0, %s131
    %s135 = sphi 0, %s134
    %s151 = sphi 0, %s135
  $region4: #{prompt_tuned_clip_forward.1} parent=0 // loop_header_branch
    %14 = sbr.rel (%p12) target = $region8
  $region5: #{prompt_tuned_clip_forward.1} parent=0 // loop_body
    %s16 = ssub.s32 %s11, 1
    %s17 = ssub.s32 %s11, 2
    %s18 = sadd.s32 %s11, 1
    %s19 = ssub.s32 %s11, %s18
    %p20 = scmp.eq.s32.totalorder %s19, 0
    %s22 = sadd.s32 %s21, 1
    %s23 = scalar_select %p20, %s21, %s22
    %p26 = pneg %p20
    %p27 = scmp.eq.s32.totalorder %s11, 1
    %p28 = por %p26, %p27
    %p29 = scmp.ne.s32.totalorder %s21, %s24
    %p30 = scmp.eq.s32.totalorder %s11, 0
    %p31 = por %p29, %p30
    %p32 = scmp.ne.s32.totalorder %s21, %s24
    %p33 = scmp.eq.s32.totalorder %s16, 1
    %p34 = por %p32, %p33
    %p35 = scmp.ne.s32.totalorder %s24, %s25
    %p36 = scmp.eq.s32.totalorder %s16, 0
    %p37 = por %p35, %p36
    %p38 = scmp.ne.s32.totalorder %s24, %s25
    %p39 = scmp.eq.s32.totalorder %s17, 1
    %p40 = por %p38, %p39
    %p42 = scmp.ne.s32.totalorder %s25, %s41
    %p43 = scmp.eq.s32.totalorder %s17, 0
    %p44 = por %p42, %p43
    %s46 = sadd.s32 %s45, 1
    %p49 = scmp.eq.s32.totalorder %s11, 1
    %p50 = scmp.ne.s32.totalorder %s45, %s47
    %p51 = scmp.eq.s32.totalorder %s11, 0
    %p52 = por %p50, %p51
    %p53 = scmp.ne.s32.totalorder %s45, %s47
    %p54 = scmp.eq.s32.totalorder %s16, 1
    %p55 = por %p53, %p54
    %p56 = scmp.ne.s32.totalorder %s47, %s48
    %p57 = scmp.eq.s32.totalorder %s16, 0
    %p58 = por %p56, %p57
    %p59 = scmp.ne.s32.totalorder %s47, %s48
    %p60 = scmp.eq.s32.totalorder %s17, 1
    %p61 = por %p59, %p60
    %p63 = scmp.ne.s32.totalorder %s48, %s62
    %p64 = scmp.eq.s32.totalorder %s17, 0
    %p65 = por %p63, %p64
    %s67 = sadd.s32 %s66, 1
    %p70 = scmp.eq.s32.totalorder %s11, 1
    %p71 = scmp.ne.s32.totalorder %s66, %s68
    %p72 = scmp.eq.s32.totalorder %s11, 0
    %p73 = por %p71, %p72
    %p74 = scmp.ne.s32.totalorder %s66, %s68
    %p75 = scmp.eq.s32.totalorder %s16, 1
    %p76 = por %p74, %p75
    %p77 = scmp.ne.s32.totalorder %s68, %s69
    %p78 = scmp.eq.s32.totalorder %s16, 0
    %p79 = por %p77, %p78
    %p80 = scmp.ne.s32.totalorder %s68, %s69
    %p81 = scmp.eq.s32.totalorder %s17, 1
    %p82 = por %p80, %p81
    %p84 = scmp.ne.s32.totalorder %s69, %s83
    %p85 = scmp.eq.s32.totalorder %s17, 0
    %p86 = por %p84, %p85
    %s88 = sadd.s32 %s87, 1
    %p91 = scmp.eq.s32.totalorder %s11, 1
    %p92 = scmp.ne.s32.totalorder %s87, %s89
    %p93 = scmp.eq.s32.totalorder %s11, 0
    %p94 = por %p92, %p93
    %p95 = scmp.ne.s32.totalorder %s87, %s89
    %p96 = scmp.eq.s32.totalorder %s16, 1
    %p97 = por %p95, %p96
    %p98 = scmp.ne.s32.totalorder %s89, %s90
    %p99 = scmp.eq.s32.totalorder %s16, 0
    %p100 = por %p98, %p99
    %p101 = scmp.ne.s32.totalorder %s89, %s90
    %p102 = scmp.eq.s32.totalorder %s17, 1
    %p103 = por %p101, %p102
    %p105 = scmp.ne.s32.totalorder %s90, %s104
    %p106 = scmp.eq.s32.totalorder %s17, 0
    %p107 = por %p105, %p106
    %s109 = sadd.s32 %s108, 1
    %p112 = scmp.eq.s32.totalorder %s11, 1
    %p113 = scmp.ne.s32.totalorder %s108, %s110
    %p114 = scmp.eq.s32.totalorder %s11, 0
    %p115 = por %p113, %p114
    %p116 = scmp.ne.s32.totalorder %s108, %s110
    %p117 = scmp.eq.s32.totalorder %s16, 1
    %p118 = por %p116, %p117
    %p119 = scmp.ne.s32.totalorder %s110, %s111
    %p120 = scmp.eq.s32.totalorder %s16, 0
    %p121 = por %p119, %p120
    %p122 = scmp.ne.s32.totalorder %s110, %s111
    %p123 = scmp.eq.s32.totalorder %s17, 1
    %p124 = por %p122, %p123
    %p126 = scmp.ne.s32.totalorder %s111, %s125
    %p127 = scmp.eq.s32.totalorder %s17, 0
    %p128 = por %p126, %p127
    %s129 = ssub.s32 %s11, %s18
    %p130 = scmp.eq.s32.totalorder %s129, 0
    %s132 = sadd.s32 %s131, 1
    %s133 = scalar_select %p130, %s131, %s132
    %p136 = pneg %p130
    %p137 = scmp.eq.s32.totalorder %s11, 1
    %p138 = por %p136, %p137
    %p139 = scmp.ne.s32.totalorder %s131, %s134
    %p140 = scmp.eq.s32.totalorder %s11, 0
    %p141 = por %p139, %p140
    %p142 = scmp.ne.s32.totalorder %s131, %s134
    %p143 = scmp.eq.s32.totalorder %s16, 1
    %p144 = por %p142, %p143
    %p145 = scmp.ne.s32.totalorder %s134, %s135
    %p146 = scmp.eq.s32.totalorder %s16, 0
    %p147 = por %p145, %p146
    %p148 = scmp.ne.s32.totalorder %s134, %s135
    %p149 = scmp.eq.s32.totalorder %s17, 1
    %p150 = por %p148, %p149
    %p152 = scmp.ne.s32.totalorder %s135, %s151
    %p153 = scmp.eq.s32.totalorder %s17, 0
    %p154 = por %p152, %p153
    %p155 = scmp.le.s32.totalorder 1, %s11
    %p156 = scmp.lt.s32.totalorder %s11, 3
    %p157 = pnand %p155, %p156
    %p158 = pneg %p157
    // Predicated region
    $region9: #{prompt_tuned_clip_forward.1} parent=5 // pred_check
      _
    $region10: #{prompt_tuned_clip_forward.1} parent=5 // pred_check_branch
      %160 = sbr.rel (%p157) target = $region12
    $region11: #{prompt_tuned_clip_forward.1} parent=5 // pred_region
      %s161 = ssub.s32 %s11, 1
      // Predicated region
      $region13: #{prompt_tuned_clip_forward.1} parent=11 // pred_check
        %p162 = pneg %p58
      $region14: #{prompt_tuned_clip_forward.1} parent=11 // pred_check_branch
        %164 = sbr.rel (%p162) target = $region16
      $region15: #{prompt_tuned_clip_forward.1} parent=11 // pred_region
        _
      $region16: #{prompt_tuned_clip_forward.1} parent=11 // pred_fallthru
        _
      // Predicated region
      $region17: #{prompt_tuned_clip_forward.1} parent=11 // pred_check
        %p165 = pneg %p79
      $region18: #{prompt_tuned_clip_forward.1} parent=11 // pred_check_branch
        %167 = sbr.rel (%p165) target = $region20
      $region19: #{prompt_tuned_clip_forward.1} parent=11 // pred_region
        _
      $region20: #{prompt_tuned_clip_forward.1} parent=11 // pred_fallthru
        _
      // Predicated region
      $region21: #{prompt_tuned_clip_forward.1} parent=11 // pred_check
        %p168 = pneg %p100
      $region22: #{prompt_tuned_clip_forward.1} parent=11 // pred_check_branch
        %170 = sbr.rel (%p168) target = $region24
      $region23: #{prompt_tuned_clip_forward.1} parent=11 // pred_region
        _
      $region24: #{prompt_tuned_clip_forward.1} parent=11 // pred_fallthru
        _
      // Predicated region
      $region25: #{prompt_tuned_clip_forward.1} parent=11 // pred_check
        %p171 = pneg %p121
      $region26: #{prompt_tuned_clip_forward.1} parent=11 // pred_check_branch
        %173 = sbr.rel (%p171) target = $region28
      $region27: #{prompt_tuned_clip_forward.1} parent=11 // pred_region
        _
      $region28: #{prompt_tuned_clip_forward.1} parent=11 // pred_fallthru
        _
    $region12: #{prompt_tuned_clip_forward.1} parent=5 // pred_fallthru
      _
    %p174 = scmp.lt.s32.totalorder %s11, 2
    // Predicated region
    $region29: #{prompt_tuned_clip_forward.1} parent=5 // pred_check
      %p175 = pneg %p174
    $region30: #{prompt_tuned_clip_forward.1} parent=5 // pred_check_branch
      %177 = sbr.rel (%p175) target = $region32
    $region31: #{prompt_tuned_clip_forward.1} parent=5 // pred_region
      // Predicated region
      $region33: #{prompt_tuned_clip_forward.1} parent=31 // pred_check
        %p178 = pneg %p31
      $region34: #{prompt_tuned_clip_forward.1} parent=31 // pred_check_branch
        %180 = sbr.rel (%p178) target = $region36
      $region35: #{prompt_tuned_clip_forward.1} parent=31 // pred_region
        %s181 = smul.u32 4, %s11
        %p182 = scmp.lt.s32.totalorder %s181, 7
        %s183 = scalar_select %p182, %s181, 7
        %s184 = smul.addr %s183, 8
        %s185 = smul.addr %s184, 4
        %s186 = scalar_lea.vmem %s0, %s185
        %s187 = smul.u32 4, %s11
      $region36: #{prompt_tuned_clip_forward.1} parent=31 // pred_fallthru
        _
    $region32: #{prompt_tuned_clip_forward.1} parent=5 // pred_fallthru
      _
    %p188 = scmp.le.s32.totalorder 1, %s11
    %p189 = scmp.lt.s32.totalorder %s11, 3
    %p190 = pnand %p188, %p189
    %p191 = pneg %p190
    // Predicated region
    $region37: #{prompt_tuned_clip_forward.1} parent=5 // pred_check
      _
    $region38: #{prompt_tuned_clip_forward.1} parent=5 // pred_check_branch
      %193 = sbr.rel (%p190) target = $region40
    $region39: #{prompt_tuned_clip_forward.1} parent=5 // pred_region
      %s194 = ssub.s32 %s11, 1
      %s195 = smul.u32 4, %s16
      %p196 = scmp.lt.s32.totalorder %s195, 7
      %s197 = scalar_select %p196, %s195, 7
      %s198 = smul.addr %s197, 8
      %s199 = smul.addr %s198, 4
      %s200 = scalar_lea.vmem %s0, %s199
      %p201 = pneg %p37
      %p202 = pneg %p34
      %p203 = pneg %p58
      %p204 = pneg %p55
      %p205 = pneg %p79
      %p206 = pneg %p76
      %p207 = pneg %p100
      %p208 = pneg %p97
      %p209 = pneg %p121
      %p210 = pneg %p118
      %p211 = pneg %p147
      %p212 = pneg %p144
      %p213 = scmp.lt.s32.totalorder %s16, 1
      %s214 = scalar_select %p213, %s16, 1
      %s215 = smul.addr %s214, 4
      %s216 = scalar_lea.vmem %s5, %s215
      %s217 = smul.u32 4, %s16
      %p218 = scmp.lt.s32.totalorder %s217, 7
      %s219 = scalar_select %p218, %s217, 7
      %s220 = smul.addr %s219, 8
      %s221 = smul.addr %s220, 4
      %s222 = scalar_lea.vmem %s0, %s221
      %s223 = smul.u32 4, %s16
      %p224 = scmp.lt.s32.totalorder %s16, 1
      %s225 = scalar_select %p224, %s16, 1
      %s226 = smul.addr %s225, 4
      %s227 = scalar_lea.vmem %s5, %s226
      %v229 = vlaneseq
      %v230 = vand.u32 %v229, 127
      %vm231 = vcmp.ge.s32.totalorder %v230, 17
      %v232 = vsel %vm231, -1e+30, 0.0
      %v233 = vld [vmem:[%s222] sm:$0xff]
      %v234 = vld [vmem:[%s222 + $0x8] sm:$0xff]
      %v235 = vld [vmem:[%s222 + $0x10] sm:$0xff]
      %v236 = vld [vmem:[%s222 + $0x18] sm:$0xff]
      %v237 = vld [vmem:[%s222 + $0x20] sm:$0xff]
      %v238 = vld [vmem:[%s222 + $0x28] sm:$0xff]
      %v239 = vld [vmem:[%s222 + $0x30] sm:$0xff]
      %v240 = vld [vmem:[%s222 + $0x38] sm:$0xff]
      %v241 = vld [vmem:[%s222 + $0x40] sm:$0xff]
      %v242 = vld [vmem:[%s222 + $0x48] sm:$0xff]
      %v243 = vld [vmem:[%s222 + $0x50] sm:$0xff]
      %v244 = vld [vmem:[%s222 + $0x58] sm:$0xff]
      %v245 = vld [vmem:[%s222 + $0x60] sm:$0xff]
      %v246 = vld [vmem:[%s222 + $0x68] sm:$0xff]
      %v247 = vld [vmem:[%s222 + $0x70] sm:$0xff]
      %v248 = vld [vmem:[%s222 + $0x78] sm:$0xff]
      %v249 = vld [vmem:[%s1] sm:$0xf]
      %v250 = vld [vmem:[%s1 + $0x4] sm:$0xf]
      %v251 = vld [vmem:[%s1 + $0x8] sm:$0xf]
      %v252 = vld [vmem:[%s1 + $0xc] sm:$0xf]
      %v253 = vld [vmem:[%s1 + $0x10] sm:$0xf]
      %v254 = vld [vmem:[%s1 + $0x14] sm:$0xf]
      %v255 = vld [vmem:[%s1 + $0x18] sm:$0xf]
      %v256 = vld [vmem:[%s1 + $0x1c] sm:$0xf]
      %v257 = vld [vmem:[%s1 + $0x20] sm:$0xf]
      %v258 = vld [vmem:[%s1 + $0x24] sm:$0xf]
      %v259 = vld [vmem:[%s1 + $0x28] sm:$0xf]
      %v260 = vld [vmem:[%s1 + $0x2c] sm:$0xf]
      %v261 = vld [vmem:[%s1 + $0x30] sm:$0xf]
      %v262 = vld [vmem:[%s1 + $0x34] sm:$0xf]
      %v263 = vld [vmem:[%s1 + $0x38] sm:$0xf]
      %v264 = vld [vmem:[%s1 + $0x3c] sm:$0xf]
      %v265 = vld [vmem:[%s1 + $0x40] sm:$0xf]
      %v266 = vld [vmem:[%s1 + $0x44] sm:$0xf]
      %v267 = vld [vmem:[%s1 + $0x48] sm:$0xf]
      %v268 = vld [vmem:[%s1 + $0x4c] sm:$0xf]
      %v269 = vld [vmem:[%s1 + $0x50] sm:$0xf]
      %v270 = vld [vmem:[%s1 + $0x54] sm:$0xf]
      %v271 = vld [vmem:[%s1 + $0x58] sm:$0xf]
      %v272 = vld [vmem:[%s1 + $0x5c] sm:$0xf]
      %v289 = vunpack.c.l.b16 %v233
      %v290 = vunpack.c.h.b16 %v233
      %v291 = vunpack.c.l.b16 %v234
      %v292 = vunpack.c.h.b16 %v234
      %v293 = vunpack.c.l.b16 %v235
      %v294 = vunpack.c.h.b16 %v235
      %v295 = vunpack.c.l.b16 %v236
      %v296 = vunpack.c.h.b16 %v236
      %v297 = vunpack.c.l.b16 %v237
      %v298 = vunpack.c.h.b16 %v237
      %v299 = vunpack.c.l.b16 %v238
      %v300 = vunpack.c.h.b16 %v238
      %v301 = vunpack.c.l.b16 %v239
      %v302 = vunpack.c.h.b16 %v239
      %v303 = vunpack.c.l.b16 %v240
      %v304 = vunpack.c.h.b16 %v240
      %v305 = vunpack.c.l.b16 %v241
      %v306 = vunpack.c.h.b16 %v241
      %v307 = vunpack.c.l.b16 %v242
      %v308 = vunpack.c.h.b16 %v242
      %v309 = vunpack.c.l.b16 %v243
      %v310 = vunpack.c.h.b16 %v243
      %v311 = vunpack.c.l.b16 %v244
      %v312 = vunpack.c.h.b16 %v244
      %v313 = vunpack.c.l.b16 %v245
      %v314 = vunpack.c.h.b16 %v245
      %v315 = vunpack.c.l.b16 %v246
      %v316 = vunpack.c.h.b16 %v246
      %v317 = vunpack.c.l.b16 %v247
      %v318 = vunpack.c.h.b16 %v247
      %v319 = vunpack.c.l.b16 %v248
      %v320 = vunpack.c.h.b16 %v248
      %v321 = vpack.c.b16 %v291, %v289
      %v322 = vpack.c.b16 %v292, %v290
      %v323 = vpack.c.b16 %v295, %v293
      %v324 = vpack.c.b16 %v296, %v294
      %v325 = vpack.c.b16 %v299, %v297
      %v326 = vpack.c.b16 %v300, %v298
      %v327 = vpack.c.b16 %v303, %v301
      %v328 = vpack.c.b16 %v304, %v302
      %v329 = vpack.c.b16 %v307, %v305
      %v330 = vpack.c.b16 %v308, %v306
      %v331 = vpack.c.b16 %v311, %v309
      %v332 = vpack.c.b16 %v312, %v310
      %v333 = vpack.c.b16 %v315, %v313
      %v334 = vpack.c.b16 %v316, %v314
      %v335 = vpack.c.b16 %v319, %v317
      %v336 = vpack.c.b16 %v320, %v318
      %v369 = vunpack.c.l.b16 %v249
      %v370 = vunpack.c.l.b16 %v250
      %v371 = vunpack.c.l.b16 %v251
      %v372 = vunpack.c.l.b16 %v252
      %v373 = vunpack.c.l.b16 %v253
      %v374 = vunpack.c.l.b16 %v254
      %v375 = vunpack.c.l.b16 %v255
      %v376 = vunpack.c.l.b16 %v256
      %v377 = vunpack.c.l.b16 %v257
      %v378 = vunpack.c.l.b16 %v258
      %v379 = vunpack.c.l.b16 %v259
      %v380 = vunpack.c.l.b16 %v260
      %v381 = vunpack.c.l.b16 %v261
      %v382 = vunpack.c.l.b16 %v262
      %v383 = vunpack.c.l.b16 %v263
      %v384 = vunpack.c.l.b16 %v264
      %v385 = vunpack.c.l.b16 %v265
      %v386 = vunpack.c.l.b16 %v266
      %v387 = vunpack.c.l.b16 %v267
      %v388 = vunpack.c.l.b16 %v268
      %v389 = vunpack.c.l.b16 %v269
      %v390 = vunpack.c.l.b16 %v270
      %v391 = vunpack.c.l.b16 %v271
      %v392 = vunpack.c.l.b16 %v272
      %v393 = vpack.c.b16 %v370, %v369
      %v394 = vpack.c.b16 %v372, %v371
      %v395 = vpack.c.b16 %v374, %v373
      %v396 = vpack.c.b16 %v376, %v375
      %v397 = vpack.c.b16 %v378, %v377
      %v398 = vpack.c.b16 %v380, %v379
      %v399 = vpack.c.b16 %v382, %v381
      %v400 = vpack.c.b16 %v384, %v383
      %v401 = vpack.c.b16 %v386, %v385
      %v402 = vpack.c.b16 %v388, %v387
      %v403 = vpack.c.b16 %v390, %v389
      %v404 = vpack.c.b16 %v392, %v391
      %vm417 = vcmask 523264
      %v419 = vsel %vm417, %v322, 0
      %v422 = vsel %vm417, %v324, 0
      %v425 = vsel %vm417, %v326, 0
      %v428 = vsel %vm417, %v328, 0
      %v431 = vsel %vm417, %v330, 0
      %v434 = vsel %vm417, %v332, 0
      %v437 = vsel %vm417, %v334, 0
      %v440 = vsel %vm417, %v336, 0
      %442 = vmatpush.bf16.msra.mxu0 %v400
      %443 = vmatpush.bf16.msra.mxu0 %v399
      %444 = vmatpush.bf16.msra.mxu0 %v398
      %445 = vmatpush.bf16.msra.mxu0 %v397
      %446 = vmatpush.bf16.msra.mxu0 %v396
      %447 = vmatpush.bf16.msra.mxu0 %v395
      %448 = vmatpush.bf16.msra.mxu0 %v394
      %449 = vmatpush.bf16.msra.mxu0 %v393
      %450 = vmatmul.bf16.gmra.mxu0 %v321
      %v451 = vpop.f32.mrf.mxu0
      %v452 = vadd.f32 0.0, %v451
      %v453 = vpop.f32.mrf.mxu0
      %v454 = vadd.f32 0.0, %v453
      %455 = vmatmul.bf16.gmra.mxu0 %v323
      %v456 = vpop.f32.mrf.mxu0
      %v457 = vadd.f32 0.0, %v456
      %v458 = vpop.f32.mrf.mxu0
      %v459 = vadd.f32 0.0, %v458
      %460 = vmatmul.bf16.gmra.mxu0 %v325
      %v461 = vpop.f32.mrf.mxu0
      %v462 = vadd.f32 0.0, %v461
      %v463 = vpop.f32.mrf.mxu0
      %v464 = vadd.f32 0.0, %v463
      %465 = vmatmul.bf16.gmra.mxu0 %v327
      %v466 = vpop.f32.mrf.mxu0
      %v467 = vadd.f32 0.0, %v466
      %v468 = vpop.f32.mrf.mxu0
      %v469 = vadd.f32 0.0, %v468
      %470 = vmatmul.bf16.gmra.mxu0 %v329
      %v471 = vpop.f32.mrf.mxu0
      %v472 = vadd.f32 0.0, %v471
      %v473 = vpop.f32.mrf.mxu0
      %v474 = vadd.f32 0.0, %v473
      %475 = vmatmul.bf16.gmra.mxu0 %v331
      %v476 = vpop.f32.mrf.mxu0
      %v477 = vadd.f32 0.0, %v476
      %v478 = vpop.f32.mrf.mxu0
      %v479 = vadd.f32 0.0, %v478
      %480 = vmatmul.bf16.gmra.mxu0 %v333
      %v481 = vpop.f32.mrf.mxu0
      %v482 = vadd.f32 0.0, %v481
      %v483 = vpop.f32.mrf.mxu0
      %v484 = vadd.f32 0.0, %v483
      %485 = vmatmul.bf16.gmra.mxu0 %v335
      %v486 = vpop.f32.mrf.mxu0
      %v487 = vadd.f32 0.0, %v486
      %v488 = vpop.f32.mrf.mxu0
      %v489 = vadd.f32 0.0, %v488
      %490 = vdwg.mxu0
      %491 = vmatpush.bf16.msra.mxu0 0
      %492 = vmatpush.bf16.msra.mxu0 0
      %493 = vmatpush.bf16.msra.mxu0 0
      %494 = vmatpush.bf16.msra.mxu0 0
      %495 = vmatpush.bf16.msra.mxu0 %v404
      %496 = vmatpush.bf16.msra.mxu0 %v403
      %497 = vmatpush.bf16.msra.mxu0 %v402
      %498 = vmatpush.bf16.msra.mxu0 %v401
      %499 = vmatmul.bf16.gmra.mxu0 %v419
      %v500 = vpop.f32.mrf.mxu0
      %v501 = vadd.f32 %v452, %v500
      %v502 = vpop.f32.mrf.mxu0
      %v503 = vadd.f32 %v454, %v502
      %504 = vmatmul.bf16.gmra.mxu0 %v422
      %v505 = vpop.f32.mrf.mxu0
      %v506 = vadd.f32 %v457, %v505
      %v507 = vpop.f32.mrf.mxu0
      %v508 = vadd.f32 %v459, %v507
      %509 = vmatmul.bf16.gmra.mxu0 %v425
      %v510 = vpop.f32.mrf.mxu0
      %v511 = vadd.f32 %v462, %v510
      %v512 = vpop.f32.mrf.mxu0
      %v513 = vadd.f32 %v464, %v512
      %514 = vmatmul.bf16.gmra.mxu0 %v428
      %v515 = vpop.f32.mrf.mxu0
      %v516 = vadd.f32 %v467, %v515
      %v517 = vpop.f32.mrf.mxu0
      %v518 = vadd.f32 %v469, %v517
      %519 = vmatmul.bf16.gmra.mxu0 %v431
      %v520 = vpop.f32.mrf.mxu0
      %v521 = vadd.f32 %v472, %v520
      %v522 = vpop.f32.mrf.mxu0
      %v523 = vadd.f32 %v474, %v522
      %524 = vmatmul.bf16.gmra.mxu0 %v434
      %v525 = vpop.f32.mrf.mxu0
      %v526 = vadd.f32 %v477, %v525
      %v527 = vpop.f32.mrf.mxu0
      %v528 = vadd.f32 %v479, %v527
      %529 = vmatmul.bf16.gmra.mxu0 %v437
      %v530 = vpop.f32.mrf.mxu0
      %v531 = vadd.f32 %v482, %v530
      %v532 = vpop.f32.mrf.mxu0
      %v533 = vadd.f32 %v484, %v532
      %534 = vmatmul.bf16.gmra.mxu0 %v440
      %v535 = vpop.f32.mrf.mxu0
      %v536 = vadd.f32 %v487, %v535
      %v537 = vpop.f32.mrf.mxu0
      %v538 = vadd.f32 %v489, %v537
      %539 = vdwg.mxu0
      %v540 = vld [vmem:[%s3] sm:$0xff]
      %v541 = vld [vmem:[%s3 + $0x8] sm:$0xff]
      %v542 = vld [vmem:[%s3 + $0x10] sm:$0xff]
      %v543 = vld [vmem:[%s3 + $0x18] sm:$0xff]
      %v544 = vadd.f32 %v501, %v540
      %v545 = vadd.f32 %v503, %v541
      %v546 = vadd.f32 %v506, %v542
      %v547 = vadd.f32 %v508, %v543
      %v548 = vadd.f32 %v511, %v540
      %v549 = vadd.f32 %v513, %v541
      %v550 = vadd.f32 %v516, %v542
      %v551 = vadd.f32 %v518, %v543
      %v552 = vadd.f32 %v521, %v540
      %v553 = vadd.f32 %v523, %v541
      %v554 = vadd.f32 %v526, %v542
      %v555 = vadd.f32 %v528, %v543
      %v556 = vadd.f32 %v531, %v540
      %v557 = vadd.f32 %v533, %v541
      %v558 = vadd.f32 %v536, %v542
      %v559 = vadd.f32 %v538, %v543
      %v560 = vld [vmem:[%s3 + $0x20] sm:$0x1]
      %v561 = vld [vmem:[%s3 + $0x21] sm:$0x1]
      %vm562 = vcmask 261120
      %v563 = vsel %vm562, %v544, 0.0
      %564 = vadd.xlane.f32.xlu0 %v563
      %v565 = vpop.xlane.xlu0 %564
      %v566 = vsel %vm562, %v545, 0.0
      %567 = vadd.xlane.f32.xlu0 %v566
      %v568 = vpop.xlane.xlu0 %567
      %v569 = vsel %vm562, %v546, 0.0
      %570 = vadd.xlane.f32.xlu0 %v569
      %v571 = vpop.xlane.xlu0 %570
      %v572 = vsel %vm562, %v547, 0.0
      %573 = vadd.xlane.f32.xlu0 %v572
      %v574 = vpop.xlane.xlu0 %573
      %v575 = vsel %vm562, %v548, 0.0
      %576 = vadd.xlane.f32.xlu0 %v575
      %v577 = vpop.xlane.xlu0 %576
      %v578 = vsel %vm562, %v549, 0.0
      %579 = vadd.xlane.f32.xlu0 %v578
      %v580 = vpop.xlane.xlu0 %579
      %v581 = vsel %vm562, %v550, 0.0
      %582 = vadd.xlane.f32.xlu0 %v581
      %v583 = vpop.xlane.xlu0 %582
      %v584 = vsel %vm562, %v551, 0.0
      %585 = vadd.xlane.f32.xlu0 %v584
      %v586 = vpop.xlane.xlu0 %585
      %v587 = vsel %vm562, %v552, 0.0
      %588 = vadd.xlane.f32.xlu0 %v587
      %v589 = vpop.xlane.xlu0 %588
      %v590 = vsel %vm562, %v553, 0.0
      %591 = vadd.xlane.f32.xlu0 %v590
      %v592 = vpop.xlane.xlu0 %591
      %v593 = vsel %vm562, %v554, 0.0
      %594 = vadd.xlane.f32.xlu0 %v593
      %v595 = vpop.xlane.xlu0 %594
      %v596 = vsel %vm562, %v555, 0.0
      %597 = vadd.xlane.f32.xlu0 %v596
      %v598 = vpop.xlane.xlu0 %597
      %v599 = vsel %vm562, %v556, 0.0
      %600 = vadd.xlane.f32.xlu0 %v599
      %v601 = vpop.xlane.xlu0 %600
      %v602 = vsel %vm562, %v557, 0.0
      %603 = vadd.xlane.f32.xlu0 %v602
      %v604 = vpop.xlane.xlu0 %603
      %v605 = vsel %vm562, %v558, 0.0
      %606 = vadd.xlane.f32.xlu0 %v605
      %v607 = vpop.xlane.xlu0 %606
      %v608 = vsel %vm562, %v559, 0.0
      %609 = vadd.xlane.f32.xlu0 %v608
      %v610 = vpop.xlane.xlu0 %609
      %v611 = vrcp.pop 32.0
      %v612 = vmul.f32 32.0, %v611
      %v613 = vsub.f32 1.0, %v612
      %v614 = vmul.f32 %v611, %v613
      %v615 = vadd.f32 %v611, %v614
      %vm616 = vweird.f32 %v611
      %v617 = vsel %vm616, %v611, %v615
      %v618 = vmul.f32 %v565, %v617
      %v619 = vmul.f32 %v568, %v617
      %v620 = vmul.f32 %v571, %v617
      %v621 = vmul.f32 %v574, %v617
      %v622 = vmul.f32 %v577, %v617
      %v623 = vmul.f32 %v580, %v617
      %v624 = vmul.f32 %v583, %v617
      %v625 = vmul.f32 %v586, %v617
      %v626 = vmul.f32 %v589, %v617
      %v627 = vmul.f32 %v592, %v617
      %v628 = vmul.f32 %v595, %v617
      %v629 = vmul.f32 %v598, %v617
      %v630 = vmul.f32 %v601, %v617
      %v631 = vmul.f32 %v604, %v617
      %v632 = vmul.f32 %v607, %v617
      %v633 = vmul.f32 %v610, %v617
      %v634 = vsub.f32 %v544, %v618
      %v635 = vsub.f32 %v545, %v619
      %v636 = vsub.f32 %v546, %v620
      %v637 = vsub.f32 %v547, %v621
      %v638 = vsub.f32 %v548, %v622
      %v639 = vsub.f32 %v549, %v623
      %v640 = vsub.f32 %v550, %v624
      %v641 = vsub.f32 %v551, %v625
      %v642 = vsub.f32 %v552, %v626
      %v643 = vsub.f32 %v553, %v627
      %v644 = vsub.f32 %v554, %v628
      %v645 = vsub.f32 %v555, %v629
      %v646 = vsub.f32 %v556, %v630
      %v647 = vsub.f32 %v557, %v631
      %v648 = vsub.f32 %v558, %v632
      %v649 = vsub.f32 %v559, %v633
      %v650 = vmul.f32 %v634, %v634
      %v651 = vmul.f32 %v635, %v635
      %v652 = vmul.f32 %v636, %v636
      %v653 = vmul.f32 %v637, %v637
      %v654 = vmul.f32 %v638, %v638
      %v655 = vmul.f32 %v639, %v639
      %v656 = vmul.f32 %v640, %v640
      %v657 = vmul.f32 %v641, %v641
      %v658 = vmul.f32 %v642, %v642
      %v659 = vmul.f32 %v643, %v643
      %v660 = vmul.f32 %v644, %v644
      %v661 = vmul.f32 %v645, %v645
      %v662 = vmul.f32 %v646, %v646
      %v663 = vmul.f32 %v647, %v647
      %v664 = vmul.f32 %v648, %v648
      %v665 = vmul.f32 %v649, %v649
      %v666 = vsel %vm562, %v650, 0.0
      %667 = vadd.xlane.f32.xlu0 %v666
      %v668 = vpop.xlane.xlu0 %667
      %v669 = vsel %vm562, %v651, 0.0
      %670 = vadd.xlane.f32.xlu0 %v669
      %v671 = vpop.xlane.xlu0 %670
      %v672 = vsel %vm562, %v652, 0.0
      %673 = vadd.xlane.f32.xlu0 %v672
      %v674 = vpop.xlane.xlu0 %673
      %v675 = vsel %vm562, %v653, 0.0
      %676 = vadd.xlane.f32.xlu0 %v675
      %v677 = vpop.xlane.xlu0 %676
      %v678 = vsel %vm562, %v654, 0.0
      %679 = vadd.xlane.f32.xlu0 %v678
      %v680 = vpop.xlane.xlu0 %679
      %v681 = vsel %vm562, %v655, 0.0
      %682 = vadd.xlane.f32.xlu0 %v681
      %v683 = vpop.xlane.xlu0 %682
      %v684 = vsel %vm562, %v656, 0.0
      %685 = vadd.xlane.f32.xlu0 %v684
      %v686 = vpop.xlane.xlu0 %685
      %v687 = vsel %vm562, %v657, 0.0
      %688 = vadd.xlane.f32.xlu0 %v687
      %v689 = vpop.xlane.xlu0 %688
      %v690 = vsel %vm562, %v658, 0.0
      %691 = vadd.xlane.f32.xlu0 %v690
      %v692 = vpop.xlane.xlu0 %691
      %v693 = vsel %vm562, %v659, 0.0
      %694 = vadd.xlane.f32.xlu0 %v693
      %v695 = vpop.xlane.xlu0 %694
      %v696 = vsel %vm562, %v660, 0.0
      %697 = vadd.xlane.f32.xlu0 %v696
      %v698 = vpop.xlane.xlu0 %697
      %v699 = vsel %vm562, %v661, 0.0
      %700 = vadd.xlane.f32.xlu0 %v699
      %v701 = vpop.xlane.xlu0 %700
      %v702 = vsel %vm562, %v662, 0.0
      %703 = vadd.xlane.f32.xlu0 %v702
      %v704 = vpop.xlane.xlu0 %703
      %v705 = vsel %vm562, %v663, 0.0
      %706 = vadd.xlane.f32.xlu0 %v705
      %v707 = vpop.xlane.xlu0 %706
      %v708 = vsel %vm562, %v664, 0.0
      %709 = vadd.xlane.f32.xlu0 %v708
      %v710 = vpop.xlane.xlu0 %709
      %v711 = vsel %vm562, %v665, 0.0
      %712 = vadd.xlane.f32.xlu0 %v711
      %v713 = vpop.xlane.xlu0 %712
      %v714 = vmul.f32 %v668, %v617
      %v715 = vmul.f32 %v671, %v617
      %v716 = vmul.f32 %v674, %v617
      %v717 = vmul.f32 %v677, %v617
      %v718 = vmul.f32 %v680, %v617
      %v719 = vmul.f32 %v683, %v617
      %v720 = vmul.f32 %v686, %v617
      %v721 = vmul.f32 %v689, %v617
      %v722 = vmul.f32 %v692, %v617
      %v723 = vmul.f32 %v695, %v617
      %v724 = vmul.f32 %v698, %v617
      %v725 = vmul.f32 %v701, %v617
      %v726 = vmul.f32 %v704, %v617
      %v727 = vmul.f32 %v707, %v617
      %v728 = vmul.f32 %v710, %v617
      %v729 = vmul.f32 %v713, %v617
      %v730 = vadd.f32 %v714, 1e-05
      %v731 = vadd.f32 %v715, 1e-05
      %v732 = vadd.f32 %v716, 1e-05
      %v733 = vadd.f32 %v717, 1e-05
      %v734 = vadd.f32 %v718, 1e-05
      %v735 = vadd.f32 %v719, 1e-05
      %v736 = vadd.f32 %v720, 1e-05
      %v737 = vadd.f32 %v721, 1e-05
      %v738 = vadd.f32 %v722, 1e-05
      %v739 = vadd.f32 %v723, 1e-05
      %v740 = vadd.f32 %v724, 1e-05
      %v741 = vadd.f32 %v725, 1e-05
      %v742 = vadd.f32 %v726, 1e-05
      %v743 = vadd.f32 %v727, 1e-05
      %v744 = vadd.f32 %v728, 1e-05
      %v745 = vadd.f32 %v729, 1e-05
      %v746 = vrsqrt.pop %v730
      %v747 = vmul.f32 %v746, %v730
      %v748 = vmul.f32 %v747, %v746
      %v749 = vmul.f32 0.5, %v748
      %v750 = vsub.f32 1.5, %v749
      %v751 = vmul.f32 %v746, %v750
      %vm752 = vweird.f32 %v730
      %vm753 = vweird.f32 %v746
      %vm754 = vmor %vm752, %vm753
      %v755 = vsel %vm754, %v746, %v751
      %v756 = vrsqrt.pop %v731
      %v757 = vmul.f32 %v756, %v731
      %v758 = vmul.f32 %v757, %v756
      %v759 = vmul.f32 0.5, %v758
      %v760 = vsub.f32 1.5, %v759
      %v761 = vmul.f32 %v756, %v760
      %vm762 = vweird.f32 %v731
      %vm763 = vweird.f32 %v756
      %vm764 = vmor %vm762, %vm763
      %v765 = vsel %vm764, %v756, %v761
      %v766 = vrsqrt.pop %v732
      %v767 = vmul.f32 %v766, %v732
      %v768 = vmul.f32 %v767, %v766
      %v769 = vmul.f32 0.5, %v768
      %v770 = vsub.f32 1.5, %v769
      %v771 = vmul.f32 %v766, %v770
      %vm772 = vweird.f32 %v732
      %vm773 = vweird.f32 %v766
      %vm774 = vmor %vm772, %vm773
      %v775 = vsel %vm774, %v766, %v771
      %v776 = vrsqrt.pop %v733
      %v777 = vmul.f32 %v776, %v733
      %v778 = vmul.f32 %v777, %v776
      %v779 = vmul.f32 0.5, %v778
      %v780 = vsub.f32 1.5, %v779
      %v781 = vmul.f32 %v776, %v780
      %vm782 = vweird.f32 %v733
      %vm783 = vweird.f32 %v776
      %vm784 = vmor %vm782, %vm783
      %v785 = vsel %vm784, %v776, %v781
      %v786 = vrsqrt.pop %v734
      %v787 = vmul.f32 %v786, %v734
      %v788 = vmul.f32 %v787, %v786
      %v789 = vmul.f32 0.5, %v788
      %v790 = vsub.f32 1.5, %v789
      %v791 = vmul.f32 %v786, %v790
      %vm792 = vweird.f32 %v734
      %vm793 = vweird.f32 %v786
      %vm794 = vmor %vm792, %vm793
      %v795 = vsel %vm794, %v786, %v791
      %v796 = vrsqrt.pop %v735
      %v797 = vmul.f32 %v796, %v735
      %v798 = vmul.f32 %v797, %v796
      %v799 = vmul.f32 0.5, %v798
      %v800 = vsub.f32 1.5, %v799
      %v801 = vmul.f32 %v796, %v800
      %vm802 = vweird.f32 %v735
      %vm803 = vweird.f32 %v796
      %vm804 = vmor %vm802, %vm803
      %v805 = vsel %vm804, %v796, %v801
      %v806 = vrsqrt.pop %v736
      %v807 = vmul.f32 %v806, %v736
      %v808 = vmul.f32 %v807, %v806
      %v809 = vmul.f32 0.5, %v808
      %v810 = vsub.f32 1.5, %v809
      %v811 = vmul.f32 %v806, %v810
      %vm812 = vweird.f32 %v736
      %vm813 = vweird.f32 %v806
      %vm814 = vmor %vm812, %vm813
      %v815 = vsel %vm814, %v806, %v811
      %v816 = vrsqrt.pop %v737
      %v817 = vmul.f32 %v816, %v737
      %v818 = vmul.f32 %v817, %v816
      %v819 = vmul.f32 0.5, %v818
      %v820 = vsub.f32 1.5, %v819
      %v821 = vmul.f32 %v816, %v820
      %vm822 = vweird.f32 %v737
      %vm823 = vweird.f32 %v816
      %vm824 = vmor %vm822, %vm823
      %v825 = vsel %vm824, %v816, %v821
      %v826 = vrsqrt.pop %v738
      %v827 = vmul.f32 %v826, %v738
      %v828 = vmul.f32 %v827, %v826
      %v829 = vmul.f32 0.5, %v828
      %v830 = vsub.f32 1.5, %v829
      %v831 = vmul.f32 %v826, %v830
      %vm832 = vweird.f32 %v738
      %vm833 = vweird.f32 %v826
      %vm834 = vmor %vm832, %vm833
      %v835 = vsel %vm834, %v826, %v831
      %v836 = vrsqrt.pop %v739
      %v837 = vmul.f32 %v836, %v739
      %v838 = vmul.f32 %v837, %v836
      %v839 = vmul.f32 0.5, %v838
      %v840 = vsub.f32 1.5, %v839
      %v841 = vmul.f32 %v836, %v840
      %vm842 = vweird.f32 %v739
      %vm843 = vweird.f32 %v836
      %vm844 = vmor %vm842, %vm843
      %v845 = vsel %vm844, %v836, %v841
      %v846 = vrsqrt.pop %v740
      %v847 = vmul.f32 %v846, %v740
      %v848 = vmul.f32 %v847, %v846
      %v849 = vmul.f32 0.5, %v848
      %v850 = vsub.f32 1.5, %v849
      %v851 = vmul.f32 %v846, %v850
      %vm852 = vweird.f32 %v740
      %vm853 = vweird.f32 %v846
      %vm854 = vmor %vm852, %vm853
      %v855 = vsel %vm854, %v846, %v851
      %v856 = vrsqrt.pop %v741
      %v857 = vmul.f32 %v856, %v741
      %v858 = vmul.f32 %v857, %v856
      %v859 = vmul.f32 0.5, %v858
      %v860 = vsub.f32 1.5, %v859
      %v861 = vmul.f32 %v856, %v860
      %vm862 = vweird.f32 %v741
      %vm863 = vweird.f32 %v856
      %vm864 = vmor %vm862, %vm863
      %v865 = vsel %vm864, %v856, %v861
      %v866 = vrsqrt.pop %v742
      %v867 = vmul.f32 %v866, %v742
      %v868 = vmul.f32 %v867, %v866
      %v869 = vmul.f32 0.5, %v868
      %v870 = vsub.f32 1.5, %v869
      %v871 = vmul.f32 %v866, %v870
      %vm872 = vweird.f32 %v742
      %vm873 = vweird.f32 %v866
      %vm874 = vmor %vm872, %vm873
      %v875 = vsel %vm874, %v866, %v871
      %v876 = vrsqrt.pop %v743
      %v877 = vmul.f32 %v876, %v743
      %v878 = vmul.f32 %v877, %v876
      %v879 = vmul.f32 0.5, %v878
      %v880 = vsub.f32 1.5, %v879
      %v881 = vmul.f32 %v876, %v880
      %vm882 = vweird.f32 %v743
      %vm883 = vweird.f32 %v876
      %vm884 = vmor %vm882, %vm883
      %v885 = vsel %vm884, %v876, %v881
      %v886 = vrsqrt.pop %v744
      %v887 = vmul.f32 %v886, %v744
      %v888 = vmul.f32 %v887, %v886
      %v889 = vmul.f32 0.5, %v888
      %v890 = vsub.f32 1.5, %v889
      %v891 = vmul.f32 %v886, %v890
      %vm892 = vweird.f32 %v744
      %vm893 = vweird.f32 %v886
      %vm894 = vmor %vm892, %vm893
      %v895 = vsel %vm894, %v886, %v891
      %v896 = vrsqrt.pop %v745
      %v897 = vmul.f32 %v896, %v745
      %v898 = vmul.f32 %v897, %v896
      %v899 = vmul.f32 0.5, %v898
      %v900 = vsub.f32 1.5, %v899
      %v901 = vmul.f32 %v896, %v900
      %vm902 = vweird.f32 %v745
      %vm903 = vweird.f32 %v896
      %vm904 = vmor %vm902, %vm903
      %v905 = vsel %vm904, %v896, %v901
      %v906 = vmul.f32 %v634, %v755
      %v907 = vmul.f32 %v635, %v765
      %v908 = vmul.f32 %v636, %v775
      %v909 = vmul.f32 %v637, %v785
      %v910 = vmul.f32 %v638, %v795
      %v911 = vmul.f32 %v639, %v805
      %v912 = vmul.f32 %v640, %v815
      %v913 = vmul.f32 %v641, %v825
      %v914 = vmul.f32 %v642, %v835
      %v915 = vmul.f32 %v643, %v845
      %v916 = vmul.f32 %v644, %v855
      %v917 = vmul.f32 %v645, %v865
      %v918 = vmul.f32 %v646, %v875
      %v919 = vmul.f32 %v647, %v885
      %v920 = vmul.f32 %v648, %v895
      %v921 = vmul.f32 %v649, %v905
      %v922 = vperm.slane %v560, 0
      %v923 = vmul.f32 %v906, %v922
      %v924 = vmul.f32 %v907, %v922
      %v925 = vmul.f32 %v908, %v922
      %v926 = vmul.f32 %v909, %v922
      %v927 = vmul.f32 %v910, %v922
      %v928 = vmul.f32 %v911, %v922
      %v929 = vmul.f32 %v912, %v922
      %v930 = vmul.f32 %v913, %v922
      %v931 = vmul.f32 %v914, %v922
      %v932 = vmul.f32 %v915, %v922
      %v933 = vmul.f32 %v916, %v922
      %v934 = vmul.f32 %v917, %v922
      %v935 = vmul.f32 %v918, %v922
      %v936 = vmul.f32 %v919, %v922
      %v937 = vmul.f32 %v920, %v922
      %v938 = vmul.f32 %v921, %v922
      %v939 = vperm.slane %v561, 0
      %v940 = vadd.f32 %v923, %v939
      %v941 = vadd.f32 %v924, %v939
      %v942 = vadd.f32 %v925, %v939
      %v943 = vadd.f32 %v926, %v939
      %v944 = vadd.f32 %v927, %v939
      %v945 = vadd.f32 %v928, %v939
      %v946 = vadd.f32 %v929, %v939
      %v947 = vadd.f32 %v930, %v939
      %v948 = vadd.f32 %v931, %v939
      %v949 = vadd.f32 %v932, %v939
      %v950 = vadd.f32 %v933, %v939
      %v951 = vadd.f32 %v934, %v939
      %v952 = vadd.f32 %v935, %v939
      %v953 = vadd.f32 %v936, %v939
      %v954 = vadd.f32 %v937, %v939
      %v955 = vadd.f32 %v938, %v939
      %v956 = vld [vmem:[%s3 + $0x24] sm:$0x1]
      %v957 = vld [vmem:[%s3 + $0x25] sm:$0x1]
      %v958 = vsel %vm562, %v940, 0.0
      %959 = vadd.xlane.f32.xlu0 %v958
      %v960 = vpop.xlane.xlu0 %959
      %v961 = vsel %vm562, %v941, 0.0
      %962 = vadd.xlane.f32.xlu0 %v961
      %v963 = vpop.xlane.xlu0 %962
      %v964 = vsel %vm562, %v942, 0.0
      %965 = vadd.xlane.f32.xlu0 %v964
      %v966 = vpop.xlane.xlu0 %965
      %v967 = vsel %vm562, %v943, 0.0
      %968 = vadd.xlane.f32.xlu0 %v967
      %v969 = vpop.xlane.xlu0 %968
      %v970 = vsel %vm562, %v944, 0.0
      %971 = vadd.xlane.f32.xlu0 %v970
      %v972 = vpop.xlane.xlu0 %971
      %v973 = vsel %vm562, %v945, 0.0
      %974 = vadd.xlane.f32.xlu0 %v973
      %v975 = vpop.xlane.xlu0 %974
      %v976 = vsel %vm562, %v946, 0.0
      %977 = vadd.xlane.f32.xlu0 %v976
      %v978 = vpop.xlane.xlu0 %977
      %v979 = vsel %vm562, %v947, 0.0
      %980 = vadd.xlane.f32.xlu0 %v979
      %v981 = vpop.xlane.xlu0 %980
      %v982 = vsel %vm562, %v948, 0.0
      %983 = vadd.xlane.f32.xlu0 %v982
      %v984 = vpop.xlane.xlu0 %983
      %v985 = vsel %vm562, %v949, 0.0
      %986 = vadd.xlane.f32.xlu0 %v985
      %v987 = vpop.xlane.xlu0 %986
      %v988 = vsel %vm562, %v950, 0.0
      %989 = vadd.xlane.f32.xlu0 %v988
      %v990 = vpop.xlane.xlu0 %989
      %v991 = vsel %vm562, %v951, 0.0
      %992 = vadd.xlane.f32.xlu0 %v991
      %v993 = vpop.xlane.xlu0 %992
      %v994 = vsel %vm562, %v952, 0.0
      %995 = vadd.xlane.f32.xlu0 %v994
      %v996 = vpop.xlane.xlu0 %995
      %v997 = vsel %vm562, %v953, 0.0
      %998 = vadd.xlane.f32.xlu0 %v997
      %v999 = vpop.xlane.xlu0 %998
      %v1000 = vsel %vm562, %v954, 0.0
      %1001 = vadd.xlane.f32.xlu0 %v1000
      %v1002 = vpop.xlane.xlu0 %1001
      %v1003 = vsel %vm562, %v955, 0.0
      %1004 = vadd.xlane.f32.xlu0 %v1003
      %v1005 = vpop.xlane.xlu0 %1004
      %v1006 = vmul.f32 %v960, %v617
      %v1007 = vmul.f32 %v963, %v617
      %v1008 = vmul.f32 %v966, %v617
      %v1009 = vmul.f32 %v969, %v617
      %v1010 = vmul.f32 %v972, %v617
      %v1011 = vmul.f32 %v975, %v617
      %v1012 = vmul.f32 %v978, %v617
      %v1013 = vmul.f32 %v981, %v617
      %v1014 = vmul.f32 %v984, %v617
      %v1015 = vmul.f32 %v987, %v617
      %v1016 = vmul.f32 %v990, %v617
      %v1017 = vmul.f32 %v993, %v617
      %v1018 = vmul.f32 %v996, %v617
      %v1019 = vmul.f32 %v999, %v617
      %v1020 = vmul.f32 %v1002, %v617
      %v1021 = vmul.f32 %v1005, %v617
      %v1022 = vsub.f32 %v940, %v1006
      %v1023 = vsub.f32 %v941, %v1007
      %v1024 = vsub.f32 %v942, %v1008
      %v1025 = vsub.f32 %v943, %v1009
      %v1026 = vsub.f32 %v944, %v1010
      %v1027 = vsub.f32 %v945, %v1011
      %v1028 = vsub.f32 %v946, %v1012
      %v1029 = vsub.f32 %v947, %v1013
      %v1030 = vsub.f32 %v948, %v1014
      %v1031 = vsub.f32 %v949, %v1015
      %v1032 = vsub.f32 %v950, %v1016
      %v1033 = vsub.f32 %v951, %v1017
      %v1034 = vsub.f32 %v952, %v1018
      %v1035 = vsub.f32 %v953, %v1019
      %v1036 = vsub.f32 %v954, %v1020
      %v1037 = vsub.f32 %v955, %v1021
      %v1038 = vmul.f32 %v1022, %v1022
      %v1039 = vmul.f32 %v1023, %v1023
      %v1040 = vmul.f32 %v1024, %v1024
      %v1041 = vmul.f32 %v1025, %v1025
      %v1042 = vmul.f32 %v1026, %v1026
      %v1043 = vmul.f32 %v1027, %v1027
      %v1044 = vmul.f32 %v1028, %v1028
      %v1045 = vmul.f32 %v1029, %v1029
      %v1046 = vmul.f32 %v1030, %v1030
      %v1047 = vmul.f32 %v1031, %v1031
      %v1048 = vmul.f32 %v1032, %v1032
      %v1049 = vmul.f32 %v1033, %v1033
      %v1050 = vmul.f32 %v1034, %v1034
      %v1051 = vmul.f32 %v1035, %v1035
      %v1052 = vmul.f32 %v1036, %v1036
      %v1053 = vmul.f32 %v1037, %v1037
      %v1054 = vsel %vm562, %v1038, 0.0
      %1055 = vadd.xlane.f32.xlu0 %v1054
      %v1056 = vpop.xlane.xlu0 %1055
      %v1057 = vsel %vm562, %v1039, 0.0
      %1058 = vadd.xlane.f32.xlu0 %v1057
      %v1059 = vpop.xlane.xlu0 %1058
      %v1060 = vsel %vm562, %v1040, 0.0
      %1061 = vadd.xlane.f32.xlu0 %v1060
      %v1062 = vpop.xlane.xlu0 %1061
      %v1063 = vsel %vm562, %v1041, 0.0
      %1064 = vadd.xlane.f32.xlu0 %v1063
      %v1065 = vpop.xlane.xlu0 %1064
      %v1066 = vsel %vm562, %v1042, 0.0
      %1067 = vadd.xlane.f32.xlu0 %v1066
      %v1068 = vpop.xlane.xlu0 %1067
      %v1069 = vsel %vm562, %v1043, 0.0
      %1070 = vadd.xlane.f32.xlu0 %v1069
      %v1071 = vpop.xlane.xlu0 %1070
      %v1072 = vsel %vm562, %v1044, 0.0
      %1073 = vadd.xlane.f32.xlu0 %v1072
      %v1074 = vpop.xlane.xlu0 %1073
      %v1075 = vsel %vm562, %v1045, 0.0
      %1076 = vadd.xlane.f32.xlu0 %v1075
      %v1077 = vpop.xlane.xlu0 %1076
      %v1078 = vsel %vm562, %v1046, 0.0
      %1079 = vadd.xlane.f32.xlu0 %v1078
      %v1080 = vpop.xlane.xlu0 %1079
      %v1081 = vsel %vm562, %v1047, 0.0
      %1082 = vadd.xlane.f32.xlu0 %v1081
      %v1083 = vpop.xlane.xlu0 %1082
      %v1084 = vsel %vm562, %v1048, 0.0
      %1085 = vadd.xlane.f32.xlu0 %v1084
      %v1086 = vpop.xlane.xlu0 %1085
      %v1087 = vsel %vm562, %v1049, 0.0
      %1088 = vadd.xlane.f32.xlu0 %v1087
      %v1089 = vpop.xlane.xlu0 %1088
      %v1090 = vsel %vm562, %v1050, 0.0
      %1091 = vadd.xlane.f32.xlu0 %v1090
      %v1092 = vpop.xlane.xlu0 %1091
      %v1093 = vsel %vm562, %v1051, 0.0
      %1094 = vadd.xlane.f32.xlu0 %v1093
      %v1095 = vpop.xlane.xlu0 %1094
      %v1096 = vsel %vm562, %v1052, 0.0
      %1097 = vadd.xlane.f32.xlu0 %v1096
      %v1098 = vpop.xlane.xlu0 %1097
      %v1099 = vsel %vm562, %v1053, 0.0
      %1100 = vadd.xlane.f32.xlu0 %v1099
      %v1101 = vpop.xlane.xlu0 %1100
      %v1102 = vmul.f32 %v1056, %v617
      %v1103 = vmul.f32 %v1059, %v617
      %v1104 = vmul.f32 %v1062, %v617
      %v1105 = vmul.f32 %v1065, %v617
      %v1106 = vmul.f32 %v1068, %v617
      %v1107 = vmul.f32 %v1071, %v617
      %v1108 = vmul.f32 %v1074, %v617
      %v1109 = vmul.f32 %v1077, %v617
      %v1110 = vmul.f32 %v1080, %v617
      %v1111 = vmul.f32 %v1083, %v617
      %v1112 = vmul.f32 %v1086, %v617
      %v1113 = vmul.f32 %v1089, %v617
      %v1114 = vmul.f32 %v1092, %v617
      %v1115 = vmul.f32 %v1095, %v617
      %v1116 = vmul.f32 %v1098, %v617
      %v1117 = vmul.f32 %v1101, %v617
      %v1118 = vadd.f32 %v1102, 1e-05
      %v1119 = vadd.f32 %v1103, 1e-05
      %v1120 = vadd.f32 %v1104, 1e-05
      %v1121 = vadd.f32 %v1105, 1e-05
      %v1122 = vadd.f32 %v1106, 1e-05
      %v1123 = vadd.f32 %v1107, 1e-05
      %v1124 = vadd.f32 %v1108, 1e-05
      %v1125 = vadd.f32 %v1109, 1e-05
      %v1126 = vadd.f32 %v1110, 1e-05
      %v1127 = vadd.f32 %v1111, 1e-05
      %v1128 = vadd.f32 %v1112, 1e-05
      %v1129 = vadd.f32 %v1113, 1e-05
      %v1130 = vadd.f32 %v1114, 1e-05
      %v1131 = vadd.f32 %v1115, 1e-05
      %v1132 = vadd.f32 %v1116, 1e-05
      %v1133 = vadd.f32 %v1117, 1e-05
      %v1134 = vrsqrt.pop %v1118
      %v1135 = vmul.f32 %v1134, %v1118
      %v1136 = vmul.f32 %v1135, %v1134
      %v1137 = vmul.f32 0.5, %v1136
      %v1138 = vsub.f32 1.5, %v1137
      %v1139 = vmul.f32 %v1134, %v1138
      %vm1140 = vweird.f32 %v1118
      %vm1141 = vweird.f32 %v1134
      %vm1142 = vmor %vm1140, %vm1141
      %v1143 = vsel %vm1142, %v1134, %v1139
      %v1144 = vrsqrt.pop %v1119
      %v1145 = vmul.f32 %v1144, %v1119
      %v1146 = vmul.f32 %v1145, %v1144
      %v1147 = vmul.f32 0.5, %v1146
      %v1148 = vsub.f32 1.5, %v1147
      %v1149 = vmul.f32 %v1144, %v1148
      %vm1150 = vweird.f32 %v1119
      %vm1151 = vweird.f32 %v1144
      %vm1152 = vmor %vm1150, %vm1151
      %v1153 = vsel %vm1152, %v1144, %v1149
      %v1154 = vrsqrt.pop %v1120
      %v1155 = vmul.f32 %v1154, %v1120
      %v1156 = vmul.f32 %v1155, %v1154
      %v1157 = vmul.f32 0.5, %v1156
      %v1158 = vsub.f32 1.5, %v1157
      %v1159 = vmul.f32 %v1154, %v1158
      %vm1160 = vweird.f32 %v1120
      %vm1161 = vweird.f32 %v1154
      %vm1162 = vmor %vm1160, %vm1161
      %v1163 = vsel %vm1162, %v1154, %v1159
      %v1164 = vrsqrt.pop %v1121
      %v1165 = vmul.f32 %v1164, %v1121
      %v1166 = vmul.f32 %v1165, %v1164
      %v1167 = vmul.f32 0.5, %v1166
      %v1168 = vsub.f32 1.5, %v1167
      %v1169 = vmul.f32 %v1164, %v1168
      %vm1170 = vweird.f32 %v1121
      %vm1171 = vweird.f32 %v1164
      %vm1172 = vmor %vm1170, %vm1171
      %v1173 = vsel %vm1172, %v1164, %v1169
      %v1174 = vrsqrt.pop %v1122
      %v1175 = vmul.f32 %v1174, %v1122
      %v1176 = vmul.f32 %v1175, %v1174
      %v1177 = vmul.f32 0.5, %v1176
      %v1178 = vsub.f32 1.5, %v1177
      %v1179 = vmul.f32 %v1174, %v1178
      %vm1180 = vweird.f32 %v1122
      %vm1181 = vweird.f32 %v1174
      %vm1182 = vmor %vm1180, %vm1181
      %v1183 = vsel %vm1182, %v1174, %v1179
      %v1184 = vrsqrt.pop %v1123
      %v1185 = vmul.f32 %v1184, %v1123
      %v1186 = vmul.f32 %v1185, %v1184
      %v1187 = vmul.f32 0.5, %v1186
      %v1188 = vsub.f32 1.5, %v1187
      %v1189 = vmul.f32 %v1184, %v1188
      %vm1190 = vweird.f32 %v1123
      %vm1191 = vweird.f32 %v1184
      %vm1192 = vmor %vm1190, %vm1191
      %v1193 = vsel %vm1192, %v1184, %v1189
      %v1194 = vrsqrt.pop %v1124
      %v1195 = vmul.f32 %v1194, %v1124
      %v1196 = vmul.f32 %v1195, %v1194
      %v1197 = vmul.f32 0.5, %v1196
      %v1198 = vsub.f32 1.5, %v1197
      %v1199 = vmul.f32 %v1194, %v1198
      %vm1200 = vweird.f32 %v1124
      %vm1201 = vweird.f32 %v1194
      %vm1202 = vmor %vm1200, %vm1201
      %v1203 = vsel %vm1202, %v1194, %v1199
      %v1204 = vrsqrt.pop %v1125
      %v1205 = vmul.f32 %v1204, %v1125
      %v1206 = vmul.f32 %v1205, %v1204
      %v1207 = vmul.f32 0.5, %v1206
      %v1208 = vsub.f32 1.5, %v1207
      %v1209 = vmul.f32 %v1204, %v1208
      %vm1210 = vweird.f32 %v1125
      %vm1211 = vweird.f32 %v1204
      %vm1212 = vmor %vm1210, %vm1211
      %v1213 = vsel %vm1212, %v1204, %v1209
      %v1214 = vrsqrt.pop %v1126
      %v1215 = vmul.f32 %v1214, %v1126
      %v1216 = vmul.f32 %v1215, %v1214
      %v1217 = vmul.f32 0.5, %v1216
      %v1218 = vsub.f32 1.5, %v1217
      %v1219 = vmul.f32 %v1214, %v1218
      %vm1220 = vweird.f32 %v1126
      %vm1221 = vweird.f32 %v1214
      %vm1222 = vmor %vm1220, %vm1221
      %v1223 = vsel %vm1222, %v1214, %v1219
      %v1224 = vrsqrt.pop %v1127
      %v1225 = vmul.f32 %v1224, %v1127
      %v1226 = vmul.f32 %v1225, %v1224
      %v1227 = vmul.f32 0.5, %v1226
      %v1228 = vsub.f32 1.5, %v1227
      %v1229 = vmul.f32 %v1224, %v1228
      %vm1230 = vweird.f32 %v1127
      %vm1231 = vweird.f32 %v1224
      %vm1232 = vmor %vm1230, %vm1231
      %v1233 = vsel %vm1232, %v1224, %v1229
      %v1234 = vrsqrt.pop %v1128
      %v1235 = vmul.f32 %v1234, %v1128
      %v1236 = vmul.f32 %v1235, %v1234
      %v1237 = vmul.f32 0.5, %v1236
      %v1238 = vsub.f32 1.5, %v1237
      %v1239 = vmul.f32 %v1234, %v1238
      %vm1240 = vweird.f32 %v1128
      %vm1241 = vweird.f32 %v1234
      %vm1242 = vmor %vm1240, %vm1241
      %v1243 = vsel %vm1242, %v1234, %v1239
      %v1244 = vrsqrt.pop %v1129
      %v1245 = vmul.f32 %v1244, %v1129
      %v1246 = vmul.f32 %v1245, %v1244
      %v1247 = vmul.f32 0.5, %v1246
      %v1248 = vsub.f32 1.5, %v1247
      %v1249 = vmul.f32 %v1244, %v1248
      %vm1250 = vweird.f32 %v1129
      %vm1251 = vweird.f32 %v1244
      %vm1252 = vmor %vm1250, %vm1251
      %v1253 = vsel %vm1252, %v1244, %v1249
      %v1254 = vrsqrt.pop %v1130
      %v1255 = vmul.f32 %v1254, %v1130
      %v1256 = vmul.f32 %v1255, %v1254
      %v1257 = vmul.f32 0.5, %v1256
      %v1258 = vsub.f32 1.5, %v1257
      %v1259 = vmul.f32 %v1254, %v1258
      %vm1260 = vweird.f32 %v1130
      %vm1261 = vweird.f32 %v1254
      %vm1262 = vmor %vm1260, %vm1261
      %v1263 = vsel %vm1262, %v1254, %v1259
      %v1264 = vrsqrt.pop %v1131
      %v1265 = vmul.f32 %v1264, %v1131
      %v1266 = vmul.f32 %v1265, %v1264
      %v1267 = vmul.f32 0.5, %v1266
      %v1268 = vsub.f32 1.5, %v1267
      %v1269 = vmul.f32 %v1264, %v1268
      %vm1270 = vweird.f32 %v1131
      %vm1271 = vweird.f32 %v1264
      %vm1272 = vmor %vm1270, %vm1271
      %v1273 = vsel %vm1272, %v1264, %v1269
      %v1274 = vrsqrt.pop %v1132
      %v1275 = vmul.f32 %v1274, %v1132
      %v1276 = vmul.f32 %v1275, %v1274
      %v1277 = vmul.f32 0.5, %v1276
      %v1278 = vsub.f32 1.5, %v1277
      %v1279 = vmul.f32 %v1274, %v1278
      %vm1280 = vweird.f32 %v1132
      %vm1281 = vweird.f32 %v1274
      %vm1282 = vmor %vm1280, %vm1281
      %v1283 = vsel %vm1282, %v1274, %v1279
      %v1284 = vrsqrt.pop %v1133
      %v1285 = vmul.f32 %v1284, %v1133
      %v1286 = vmul.f32 %v1285, %v1284
      %v1287 = vmul.f32 0.5, %v1286
      %v1288 = vsub.f32 1.5, %v1287
      %v1289 = vmul.f32 %v1284, %v1288
      %vm1290 = vweird.f32 %v1133
      %vm1291 = vweird.f32 %v1284
      %vm1292 = vmor %vm1290, %vm1291
      %v1293 = vsel %vm1292, %v1284, %v1289
      %v1294 = vmul.f32 %v1022, %v1143
      %v1295 = vmul.f32 %v1023, %v1153
      %v1296 = vmul.f32 %v1024, %v1163
      %v1297 = vmul.f32 %v1025, %v1173
      %v1298 = vmul.f32 %v1026, %v1183
      %v1299 = vmul.f32 %v1027, %v1193
      %v1300 = vmul.f32 %v1028, %v1203
      %v1301 = vmul.f32 %v1029, %v1213
      %v1302 = vmul.f32 %v1030, %v1223
      %v1303 = vmul.f32 %v1031, %v1233
      %v1304 = vmul.f32 %v1032, %v1243
      %v1305 = vmul.f32 %v1033, %v1253
      %v1306 = vmul.f32 %v1034, %v1263
      %v1307 = vmul.f32 %v1035, %v1273
      %v1308 = vmul.f32 %v1036, %v1283
      %v1309 = vmul.f32 %v1037, %v1293
      %v1310 = vperm.slane %v956, 0
      %v1311 = vmul.f32 %v1294, %v1310
      %v1312 = vmul.f32 %v1295, %v1310
      %v1313 = vmul.f32 %v1296, %v1310
      %v1314 = vmul.f32 %v1297, %v1310
      %v1315 = vmul.f32 %v1298, %v1310
      %v1316 = vmul.f32 %v1299, %v1310
      %v1317 = vmul.f32 %v1300, %v1310
      %v1318 = vmul.f32 %v1301, %v1310
      %v1319 = vmul.f32 %v1302, %v1310
      %v1320 = vmul.f32 %v1303, %v1310
      %v1321 = vmul.f32 %v1304, %v1310
      %v1322 = vmul.f32 %v1305, %v1310
      %v1323 = vmul.f32 %v1306, %v1310
      %v1324 = vmul.f32 %v1307, %v1310
      %v1325 = vmul.f32 %v1308, %v1310
      %v1326 = vmul.f32 %v1309, %v1310
      %v1327 = vperm.slane %v957, 0
      %v1328 = vadd.f32 %v1311, %v1327
      %v1329 = vadd.f32 %v1312, %v1327
      %v1330 = vadd.f32 %v1313, %v1327
      %v1331 = vadd.f32 %v1314, %v1327
      %v1332 = vadd.f32 %v1315, %v1327
      %v1333 = vadd.f32 %v1316, %v1327
      %v1334 = vadd.f32 %v1317, %v1327
      %v1335 = vadd.f32 %v1318, %v1327
      %v1336 = vadd.f32 %v1319, %v1327
      %v1337 = vadd.f32 %v1320, %v1327
      %v1338 = vadd.f32 %v1321, %v1327
      %v1339 = vadd.f32 %v1322, %v1327
      %v1340 = vadd.f32 %v1323, %v1327
      %v1341 = vadd.f32 %v1324, %v1327
      %v1342 = vadd.f32 %v1325, %v1327
      %v1343 = vadd.f32 %v1326, %v1327
      %v1344 = vld [vmem:[%s2] sm:$0xf]
      %v1345 = vld [vmem:[%s2 + $0x4] sm:$0xf]
      %v1346 = vld [vmem:[%s2 + $0x8] sm:$0xf]
      %v1347 = vld [vmem:[%s2 + $0xc] sm:$0xf]
      %v1348 = vpack.c.bf16 %v1329, %v1328
      %v1349 = vpack.c.bf16 %v1331, %v1330
      %v1350 = vpack.c.bf16 %v1333, %v1332
      %v1351 = vpack.c.bf16 %v1335, %v1334
      %v1352 = vpack.c.bf16 %v1337, %v1336
      %v1353 = vpack.c.bf16 %v1339, %v1338
      %v1354 = vpack.c.bf16 %v1341, %v1340
      %v1355 = vpack.c.bf16 %v1343, %v1342
      %v1356 = vld [vmem:[%s4] sm:$0x1]
      %v1357 = vperm.slane %v1356, 0
      %v1362 = vunpack.c.l.b16 %v1344
      %v1363 = vunpack.c.l.b16 %v1345
      %v1364 = vunpack.c.l.b16 %v1346
      %v1365 = vunpack.c.l.b16 %v1347
      %v1366 = vpack.c.b16 %v1363, %v1362
      %v1367 = vpack.c.b16 %v1365, %v1364
      %v1371 = vsel %vm562, %v1348, 0
      %v1374 = vsel %vm562, %v1349, 0
      %v1377 = vsel %vm562, %v1350, 0
      %v1380 = vsel %vm562, %v1351, 0
      %v1383 = vsel %vm562, %v1352, 0
      %v1386 = vsel %vm562, %v1353, 0
      %v1389 = vsel %vm562, %v1354, 0
      %v1392 = vsel %vm562, %v1355, 0
      %1394 = vmatpush.bf16.msra.mxu0 0
      %1395 = vmatpush.bf16.msra.mxu0 0
      %1396 = vmatpush.bf16.msra.mxu0 0
      %1397 = vmatpush.bf16.msra.mxu0 0
      %1398 = vmatpush.bf16.msra.mxu0 0
      %1399 = vmatpush.bf16.msra.mxu0 0
      %1400 = vmatpush.bf16.msra.mxu0 %v1367
      %1401 = vmatpush.bf16.msra.mxu0 %v1366
      %1402 = vmatmul.bf16.gmra.mxu0 %v1371
      %v1403 = vpop.f32.mrf.mxu0
      %v1404 = vadd.f32 %v1357, %v1403
      %v1405 = vpop.f32.mrf.mxu0
      %v1406 = vadd.f32 %v1357, %v1405
      %1407 = vmatmul.bf16.gmra.mxu0 %v1374
      %v1408 = vpop.f32.mrf.mxu0
      %v1409 = vadd.f32 %v1357, %v1408
      %v1410 = vpop.f32.mrf.mxu0
      %v1411 = vadd.f32 %v1357, %v1410
      %1412 = vmatmul.bf16.gmra.mxu0 %v1377
      %v1413 = vpop.f32.mrf.mxu0
      %v1414 = vadd.f32 %v1357, %v1413
      %v1415 = vpop.f32.mrf.mxu0
      %v1416 = vadd.f32 %v1357, %v1415
      %1417 = vmatmul.bf16.gmra.mxu0 %v1380
      %v1418 = vpop.f32.mrf.mxu0
      %v1419 = vadd.f32 %v1357, %v1418
      %v1420 = vpop.f32.mrf.mxu0
      %v1421 = vadd.f32 %v1357, %v1420
      %1422 = vmatmul.bf16.gmra.mxu0 %v1383
      %v1423 = vpop.f32.mrf.mxu0
      %v1424 = vadd.f32 %v1357, %v1423
      %v1425 = vpop.f32.mrf.mxu0
      %v1426 = vadd.f32 %v1357, %v1425
      %1427 = vmatmul.bf16.gmra.mxu0 %v1386
      %v1428 = vpop.f32.mrf.mxu0
      %v1429 = vadd.f32 %v1357, %v1428
      %v1430 = vpop.f32.mrf.mxu0
      %v1431 = vadd.f32 %v1357, %v1430
      %1432 = vmatmul.bf16.gmra.mxu0 %v1389
      %v1433 = vpop.f32.mrf.mxu0
      %v1434 = vadd.f32 %v1357, %v1433
      %v1435 = vpop.f32.mrf.mxu0
      %v1436 = vadd.f32 %v1357, %v1435
      %1437 = vmatmul.bf16.gmra.mxu0 %v1392
      %v1438 = vpop.f32.mrf.mxu0
      %v1439 = vadd.f32 %v1357, %v1438
      %v1440 = vpop.f32.mrf.mxu0
      %v1441 = vadd.f32 %v1357, %v1440
      %1442 = vdwg.mxu0
      %v1443 = vpack.c.bf16 %v1404, %v1404
      %v1444 = vpack.c.bf16 %v1406, %v1406
      %v1445 = vpack.c.bf16 %v1409, %v1409
      %v1446 = vpack.c.bf16 %v1411, %v1411
      %v1447 = vpack.c.bf16 %v1414, %v1414
      %v1448 = vpack.c.bf16 %v1416, %v1416
      %v1449 = vpack.c.bf16 %v1419, %v1419
      %v1450 = vpack.c.bf16 %v1421, %v1421
      %v1451 = vpack.c.bf16 %v1424, %v1424
      %v1452 = vpack.c.bf16 %v1426, %v1426
      %v1453 = vpack.c.bf16 %v1429, %v1429
      %v1454 = vpack.c.bf16 %v1431, %v1431
      %v1455 = vpack.c.bf16 %v1434, %v1434
      %v1456 = vpack.c.bf16 %v1436, %v1436
      %v1457 = vpack.c.bf16 %v1439, %v1439
      %v1458 = vpack.c.bf16 %v1441, %v1441
      %v1463 = vunpack.c.l.b16 %v1443
      %v1464 = vunpack.c.l.b16 %v1444
      %v1465 = vunpack.c.l.b16 %v1445
      %v1466 = vunpack.c.l.b16 %v1446
      %v1467 = vpack.c.b16 %v1464, %v1463
      %v1468 = vpack.c.b16 %v1466, %v1465
      %1469 = vrot.lane.b32.xlu0 %v1467, 96
      %v1470 = vpop.permute.xlu0 %1469
      %1471 = vrot.lane.b32.xlu0 %v1468, 96
      %v1472 = vpop.permute.xlu0 %1471
      %vm1473 = vcmask 64512
      %v1475 = vsel %vm1473, %v1467, 0
      %v1478 = vsel %vm1473, %v1468, 0
      %v1481 = vsel %vm1473, %v1470, 0
      %v1484 = vsel %vm1473, %v1472, 0
      %1486 = vmatpush.bf16.xpose.msra.mxu0 0
      %1487 = vmatpush.bf16.xpose.msra.mxu0 0
      %1488 = vmatpush.bf16.xpose.msra.mxu0 0
      %1489 = vmatpush.bf16.xpose.msra.mxu0 0
      %1490 = vmatpush.bf16.xpose.msra.mxu0 0
      %1491 = vmatpush.bf16.xpose.msra.mxu0 0
      %1492 = vmatpush.bf16.xpose.msra.mxu0 %v1484
      %1493 = vmatpush.bf16.xpose.msra.mxu0 %v1481
      %1494 = vmatmul.bf16.gmra.mxu0 %v1475
      %v1495 = vpop.f32.mrf.mxu0
      %v1496 = vadd.f32 %v232, %v1495
      %v1497 = vpop.f32.mrf.mxu0
      %v1498 = vadd.f32 %v232, %v1497
      %1499 = vmatmul.bf16.gmra.mxu0 %v1478
      %v1500 = vpop.f32.mrf.mxu0
      %v1501 = vadd.f32 %v232, %v1500
      %v1502 = vpop.f32.mrf.mxu0
      %v1503 = vadd.f32 %v232, %v1502
      %1504 = vdwg.mxu0
      %v1509 = vunpack.c.l.b16 %v1447
      %v1510 = vunpack.c.l.b16 %v1448
      %v1511 = vunpack.c.l.b16 %v1449
      %v1512 = vunpack.c.l.b16 %v1450
      %v1513 = vpack.c.b16 %v1510, %v1509
      %v1514 = vpack.c.b16 %v1512, %v1511
      %1515 = vrot.lane.b32.xlu0 %v1513, 96
      %v1516 = vpop.permute.xlu0 %1515
      %1517 = vrot.lane.b32.xlu0 %v1514, 96
      %v1518 = vpop.permute.xlu0 %1517
      %v1520 = vsel %vm1473, %v1513, 0
      %v1523 = vsel %vm1473, %v1514, 0
      %v1526 = vsel %vm1473, %v1516, 0
      %v1529 = vsel %vm1473, %v1518, 0
      %1531 = vmatpush.bf16.xpose.msra.mxu0 0
      %1532 = vmatpush.bf16.xpose.msra.mxu0 0
      %1533 = vmatpush.bf16.xpose.msra.mxu0 0
      %1534 = vmatpush.bf16.xpose.msra.mxu0 0
      %1535 = vmatpush.bf16.xpose.msra.mxu0 0
      %1536 = vmatpush.bf16.xpose.msra.mxu0 0
      %1537 = vmatpush.bf16.xpose.msra.mxu0 %v1529
      %1538 = vmatpush.bf16.xpose.msra.mxu0 %v1526
      %1539 = vmatmul.bf16.gmra.mxu0 %v1520
      %v1540 = vpop.f32.mrf.mxu0
      %v1541 = vadd.f32 %v232, %v1540
      %v1542 = vpop.f32.mrf.mxu0
      %v1543 = vadd.f32 %v232, %v1542
      %1544 = vmatmul.bf16.gmra.mxu0 %v1523
      %v1545 = vpop.f32.mrf.mxu0
      %v1546 = vadd.f32 %v232, %v1545
      %v1547 = vpop.f32.mrf.mxu0
      %v1548 = vadd.f32 %v232, %v1547
      %1549 = vdwg.mxu0
      %v1554 = vunpack.c.l.b16 %v1451
      %v1555 = vunpack.c.l.b16 %v1452
      %v1556 = vunpack.c.l.b16 %v1453
      %v1557 = vunpack.c.l.b16 %v1454
      %v1558 = vpack.c.b16 %v1555, %v1554
      %v1559 = vpack.c.b16 %v1557, %v1556
      %1560 = vrot.lane.b32.xlu0 %v1558, 96
      %v1561 = vpop.permute.xlu0 %1560
      %1562 = vrot.lane.b32.xlu0 %v1559, 96
      %v1563 = vpop.permute.xlu0 %1562
      %v1565 = vsel %vm1473, %v1558, 0
      %v1568 = vsel %vm1473, %v1559, 0
      %v1571 = vsel %vm1473, %v1561, 0
      %v1574 = vsel %vm1473, %v1563, 0
      %1576 = vmatpush.bf16.xpose.msra.mxu0 0
      %1577 = vmatpush.bf16.xpose.msra.mxu0 0
      %1578 = vmatpush.bf16.xpose.msra.mxu0 0
      %1579 = vmatpush.bf16.xpose.msra.mxu0 0
      %1580 = vmatpush.bf16.xpose.msra.mxu0 0
      %1581 = vmatpush.bf16.xpose.msra.mxu0 0
      %1582 = vmatpush.bf16.xpose.msra.mxu0 %v1574
      %1583 = vmatpush.bf16.xpose.msra.mxu0 %v1571
      %1584 = vmatmul.bf16.gmra.mxu0 %v1565
      %v1585 = vpop.f32.mrf.mxu0
      %v1586 = vadd.f32 %v232, %v1585
      %v1587 = vpop.f32.mrf.mxu0
      %v1588 = vadd.f32 %v232, %v1587
      %1589 = vmatmul.bf16.gmra.mxu0 %v1568
      %v1590 = vpop.f32.mrf.mxu0
      %v1591 = vadd.f32 %v232, %v1590
      %v1592 = vpop.f32.mrf.mxu0
      %v1593 = vadd.f32 %v232, %v1592
      %1594 = vdwg.mxu0
      %v1599 = vunpack.c.l.b16 %v1455
      %v1600 = vunpack.c.l.b16 %v1456
      %v1601 = vunpack.c.l.b16 %v1457
      %v1602 = vunpack.c.l.b16 %v1458
      %v1603 = vpack.c.b16 %v1600, %v1599
      %v1604 = vpack.c.b16 %v1602, %v1601
      %1605 = vrot.lane.b32.xlu0 %v1603, 96
      %v1606 = vpop.permute.xlu0 %1605
      %1607 = vrot.lane.b32.xlu0 %v1604, 96
      %v1608 = vpop.permute.xlu0 %1607
      %v1610 = vsel %vm1473, %v1603, 0
      %v1613 = vsel %vm1473, %v1604, 0
      %v1616 = vsel %vm1473, %v1606, 0
      %v1619 = vsel %vm1473, %v1608, 0
      %1621 = vmatpush.bf16.xpose.msra.mxu0 0
      %1622 = vmatpush.bf16.xpose.msra.mxu0 0
      %1623 = vmatpush.bf16.xpose.msra.mxu0 0
      %1624 = vmatpush.bf16.xpose.msra.mxu0 0
      %1625 = vmatpush.bf16.xpose.msra.mxu0 0
      %1626 = vmatpush.bf16.xpose.msra.mxu0 0
      %1627 = vmatpush.bf16.xpose.msra.mxu0 %v1619
      %1628 = vmatpush.bf16.xpose.msra.mxu0 %v1616
      %1629 = vmatmul.bf16.gmra.mxu0 %v1610
      %v1630 = vpop.f32.mrf.mxu0
      %v1631 = vadd.f32 %v232, %v1630
      %v1632 = vpop.f32.mrf.mxu0
      %v1633 = vadd.f32 %v232, %v1632
      %1634 = vmatmul.bf16.gmra.mxu0 %v1613
      %v1635 = vpop.f32.mrf.mxu0
      %v1636 = vadd.f32 %v232, %v1635
      %v1637 = vpop.f32.mrf.mxu0
      %v1638 = vadd.f32 %v232, %v1637
      %1639 = vdwg.mxu0
      %v1640 = vsel %vm562, %v1496, -inf
      %1641 = vmax.xlane.f32.xlu0 %v1640
      %v1642 = vpop.xlane.xlu0 %1641
      %v1643 = vsel %vm562, %v1498, -inf
      %1644 = vmax.xlane.f32.xlu0 %v1643
      %v1645 = vpop.xlane.xlu0 %1644
      %v1646 = vsel %vm562, %v1501, -inf
      %1647 = vmax.xlane.f32.xlu0 %v1646
      %v1648 = vpop.xlane.xlu0 %1647
      %v1649 = vsel %vm562, %v1503, -inf
      %1650 = vmax.xlane.f32.xlu0 %v1649
      %v1651 = vpop.xlane.xlu0 %1650
      %v1652 = vsel %vm562, %v1541, -inf
      %1653 = vmax.xlane.f32.xlu0 %v1652
      %v1654 = vpop.xlane.xlu0 %1653
      %v1655 = vsel %vm562, %v1543, -inf
      %1656 = vmax.xlane.f32.xlu0 %v1655
      %v1657 = vpop.xlane.xlu0 %1656
      %v1658 = vsel %vm562, %v1546, -inf
      %1659 = vmax.xlane.f32.xlu0 %v1658
      %v1660 = vpop.xlane.xlu0 %1659
      %v1661 = vsel %vm562, %v1548, -inf
      %1662 = vmax.xlane.f32.xlu0 %v1661
      %v1663 = vpop.xlane.xlu0 %1662
      %v1664 = vsel %vm562, %v1586, -inf
      %1665 = vmax.xlane.f32.xlu0 %v1664
      %v1666 = vpop.xlane.xlu0 %1665
      %v1667 = vsel %vm562, %v1588, -inf
      %1668 = vmax.xlane.f32.xlu0 %v1667
      %v1669 = vpop.xlane.xlu0 %1668
      %v1670 = vsel %vm562, %v1591, -inf
      %1671 = vmax.xlane.f32.xlu0 %v1670
      %v1672 = vpop.xlane.xlu0 %1671
      %v1673 = vsel %vm562, %v1593, -inf
      %1674 = vmax.xlane.f32.xlu0 %v1673
      %v1675 = vpop.xlane.xlu0 %1674
      %v1676 = vsel %vm562, %v1631, -inf
      %1677 = vmax.xlane.f32.xlu0 %v1676
      %v1678 = vpop.xlane.xlu0 %1677
      %v1679 = vsel %vm562, %v1633, -inf
      %1680 = vmax.xlane.f32.xlu0 %v1679
      %v1681 = vpop.xlane.xlu0 %1680
      %v1682 = vsel %vm562, %v1636, -inf
      %1683 = vmax.xlane.f32.xlu0 %v1682
      %v1684 = vpop.xlane.xlu0 %1683
      %v1685 = vsel %vm562, %v1638, -inf
      %1686 = vmax.xlane.f32.xlu0 %v1685
      %v1687 = vpop.xlane.xlu0 %1686
      %v1688 = vsub.f32 %v1496, %v1642
      %v1689 = vsub.f32 %v1498, %v1645
      %v1690 = vsub.f32 %v1501, %v1648
      %v1691 = vsub.f32 %v1503, %v1651
      %v1692 = vsub.f32 %v1541, %v1654
      %v1693 = vsub.f32 %v1543, %v1657
      %v1694 = vsub.f32 %v1546, %v1660
      %v1695 = vsub.f32 %v1548, %v1663
      %v1696 = vsub.f32 %v1586, %v1666
      %v1697 = vsub.f32 %v1588, %v1669
      %v1698 = vsub.f32 %v1591, %v1672
      %v1699 = vsub.f32 %v1593, %v1675
      %v1700 = vsub.f32 %v1631, %v1678
      %v1701 = vsub.f32 %v1633, %v1681
      %v1702 = vsub.f32 %v1636, %v1684
      %v1703 = vsub.f32 %v1638, %v1687
      %v1704 = vmul.f32 %v1688, 1.442695
      %v1705 = vpow.pop %v1704
      %v1706 = vmul.f32 %v1689, 1.442695
      %v1707 = vpow.pop %v1706
      %v1708 = vmul.f32 %v1690, 1.442695
      %v1709 = vpow.pop %v1708
      %v1710 = vmul.f32 %v1691, 1.442695
      %v1711 = vpow.pop %v1710
      %v1712 = vmul.f32 %v1692, 1.442695
      %v1713 = vpow.pop %v1712
      %v1714 = vmul.f32 %v1693, 1.442695
      %v1715 = vpow.pop %v1714
      %v1716 = vmul.f32 %v1694, 1.442695
      %v1717 = vpow.pop %v1716
      %v1718 = vmul.f32 %v1695, 1.442695
      %v1719 = vpow.pop %v1718
      %v1720 = vmul.f32 %v1696, 1.442695
      %v1721 = vpow.pop %v1720
      %v1722 = vmul.f32 %v1697, 1.442695
      %v1723 = vpow.pop %v1722
      %v1724 = vmul.f32 %v1698, 1.442695
      %v1725 = vpow.pop %v1724
      %v1726 = vmul.f32 %v1699, 1.442695
      %v1727 = vpow.pop %v1726
      %v1728 = vmul.f32 %v1700, 1.442695
      %v1729 = vpow.pop %v1728
      %v1730 = vmul.f32 %v1701, 1.442695
      %v1731 = vpow.pop %v1730
      %v1732 = vmul.f32 %v1702, 1.442695
      %v1733 = vpow.pop %v1732
      %v1734 = vmul.f32 %v1703, 1.442695
      %v1735 = vpow.pop %v1734
      %v1736 = vsel %vm562, %v1705, 0.0
      %1737 = vadd.xlane.f32.xlu0 %v1736
      %v1738 = vpop.xlane.xlu0 %1737
      %v1739 = vsel %vm562, %v1707, 0.0
      %1740 = vadd.xlane.f32.xlu0 %v1739
      %v1741 = vpop.xlane.xlu0 %1740
      %v1742 = vsel %vm562, %v1709, 0.0
      %1743 = vadd.xlane.f32.xlu0 %v1742
      %v1744 = vpop.xlane.xlu0 %1743
      %v1745 = vsel %vm562, %v1711, 0.0
      %1746 = vadd.xlane.f32.xlu0 %v1745
      %v1747 = vpop.xlane.xlu0 %1746
      %v1748 = vsel %vm562, %v1713, 0.0
      %1749 = vadd.xlane.f32.xlu0 %v1748
      %v1750 = vpop.xlane.xlu0 %1749
      %v1751 = vsel %vm562, %v1715, 0.0
      %1752 = vadd.xlane.f32.xlu0 %v1751
      %v1753 = vpop.xlane.xlu0 %1752
      %v1754 = vsel %vm562, %v1717, 0.0
      %1755 = vadd.xlane.f32.xlu0 %v1754
      %v1756 = vpop.xlane.xlu0 %1755
      %v1757 = vsel %vm562, %v1719, 0.0
      %1758 = vadd.xlane.f32.xlu0 %v1757
      %v1759 = vpop.xlane.xlu0 %1758
      %v1760 = vsel %vm562, %v1721, 0.0
      %1761 = vadd.xlane.f32.xlu0 %v1760
      %v1762 = vpop.xlane.xlu0 %1761
      %v1763 = vsel %vm562, %v1723, 0.0
      %1764 = vadd.xlane.f32.xlu0 %v1763
      %v1765 = vpop.xlane.xlu0 %1764
      %v1766 = vsel %vm562, %v1725, 0.0
      %1767 = vadd.xlane.f32.xlu0 %v1766
      %v1768 = vpop.xlane.xlu0 %1767
      %v1769 = vsel %vm562, %v1727, 0.0
      %1770 = vadd.xlane.f32.xlu0 %v1769
      %v1771 = vpop.xlane.xlu0 %1770
      %v1772 = vsel %vm562, %v1729, 0.0
      %1773 = vadd.xlane.f32.xlu0 %v1772
      %v1774 = vpop.xlane.xlu0 %1773
      %v1775 = vsel %vm562, %v1731, 0.0
      %1776 = vadd.xlane.f32.xlu0 %v1775
      %v1777 = vpop.xlane.xlu0 %1776
      %v1778 = vsel %vm562, %v1733, 0.0
      %1779 = vadd.xlane.f32.xlu0 %v1778
      %v1780 = vpop.xlane.xlu0 %1779
      %v1781 = vsel %vm562, %v1735, 0.0
      %1782 = vadd.xlane.f32.xlu0 %v1781
      %v1783 = vpop.xlane.xlu0 %1782
      %v1784 = vrcp.pop %v1738
      %v1785 = vmul.f32 %v1738, %v1784
      %v1786 = vsub.f32 1.0, %v1785
      %v1787 = vmul.f32 %v1784, %v1786
      %v1788 = vadd.f32 %v1784, %v1787
      %vm1789 = vweird.f32 %v1738
      %vm1790 = vweird.f32 %v1784
      %vm1791 = vmor %vm1789, %vm1790
      %v1792 = vsel %vm1791, %v1784, %v1788
      %v1793 = vand.u32 2147483647, %v1738
      %vm1794 = vcmp.eq.f32.partialorder %v1793, 8.507059e+37
      %v1795 = vand.u32 %v1738, 2147483648
      %v1796 = vor.u32 1.1754944e-38, %v1795
      %v1797 = vsel %vm1794, %v1796, %v1792
      %v1798 = vmul.f32 %v1705, %v1797
      %v1799 = vrcp.pop %v1741
      %v1800 = vmul.f32 %v1741, %v1799
      %v1801 = vsub.f32 1.0, %v1800
      %v1802 = vmul.f32 %v1799, %v1801
      %v1803 = vadd.f32 %v1799, %v1802
      %vm1804 = vweird.f32 %v1741
      %vm1805 = vweird.f32 %v1799
      %vm1806 = vmor %vm1804, %vm1805
      %v1807 = vsel %vm1806, %v1799, %v1803
      %v1808 = vand.u32 2147483647, %v1741
      %vm1809 = vcmp.eq.f32.partialorder %v1808, 8.507059e+37
      %v1810 = vand.u32 %v1741, 2147483648
      %v1811 = vor.u32 1.1754944e-38, %v1810
      %v1812 = vsel %vm1809, %v1811, %v1807
      %v1813 = vmul.f32 %v1707, %v1812
      %v1814 = vrcp.pop %v1744
      %v1815 = vmul.f32 %v1744, %v1814
      %v1816 = vsub.f32 1.0, %v1815
      %v1817 = vmul.f32 %v1814, %v1816
      %v1818 = vadd.f32 %v1814, %v1817
      %vm1819 = vweird.f32 %v1744
      %vm1820 = vweird.f32 %v1814
      %vm1821 = vmor %vm1819, %vm1820
      %v1822 = vsel %vm1821, %v1814, %v1818
      %v1823 = vand.u32 2147483647, %v1744
      %vm1824 = vcmp.eq.f32.partialorder %v1823, 8.507059e+37
      %v1825 = vand.u32 %v1744, 2147483648
      %v1826 = vor.u32 1.1754944e-38, %v1825
      %v1827 = vsel %vm1824, %v1826, %v1822
      %v1828 = vmul.f32 %v1709, %v1827
      %v1829 = vrcp.pop %v1747
      %v1830 = vmul.f32 %v1747, %v1829
      %v1831 = vsub.f32 1.0, %v1830
      %v1832 = vmul.f32 %v1829, %v1831
      %v1833 = vadd.f32 %v1829, %v1832
      %vm1834 = vweird.f32 %v1747
      %vm1835 = vweird.f32 %v1829
      %vm1836 = vmor %vm1834, %vm1835
      %v1837 = vsel %vm1836, %v1829, %v1833
      %v1838 = vand.u32 2147483647, %v1747
      %vm1839 = vcmp.eq.f32.partialorder %v1838, 8.507059e+37
      %v1840 = vand.u32 %v1747, 2147483648
      %v1841 = vor.u32 1.1754944e-38, %v1840
      %v1842 = vsel %vm1839, %v1841, %v1837
      %v1843 = vmul.f32 %v1711, %v1842
      %v1844 = vrcp.pop %v1750
      %v1845 = vmul.f32 %v1750, %v1844
      %v1846 = vsub.f32 1.0, %v1845
      %v1847 = vmul.f32 %v1844, %v1846
      %v1848 = vadd.f32 %v1844, %v1847
      %vm1849 = vweird.f32 %v1750
      %vm1850 = vweird.f32 %v1844
      %vm1851 = vmor %vm1849, %vm1850
      %v1852 = vsel %vm1851, %v1844, %v1848
      %v1853 = vand.u32 2147483647, %v1750
      %vm1854 = vcmp.eq.f32.partialorder %v1853, 8.507059e+37
      %v1855 = vand.u32 %v1750, 2147483648
      %v1856 = vor.u32 1.1754944e-38, %v1855
      %v1857 = vsel %vm1854, %v1856, %v1852
      %v1858 = vmul.f32 %v1713, %v1857
      %v1859 = vrcp.pop %v1753
      %v1860 = vmul.f32 %v1753, %v1859
      %v1861 = vsub.f32 1.0, %v1860
      %v1862 = vmul.f32 %v1859, %v1861
      %v1863 = vadd.f32 %v1859, %v1862
      %vm1864 = vweird.f32 %v1753
      %vm1865 = vweird.f32 %v1859
      %vm1866 = vmor %vm1864, %vm1865
      %v1867 = vsel %vm1866, %v1859, %v1863
      %v1868 = vand.u32 2147483647, %v1753
      %vm1869 = vcmp.eq.f32.partialorder %v1868, 8.507059e+37
      %v1870 = vand.u32 %v1753, 2147483648
      %v1871 = vor.u32 1.1754944e-38, %v1870
      %v1872 = vsel %vm1869, %v1871, %v1867
      %v1873 = vmul.f32 %v1715, %v1872
      %v1874 = vrcp.pop %v1756
      %v1875 = vmul.f32 %v1756, %v1874
      %v1876 = vsub.f32 1.0, %v1875
      %v1877 = vmul.f32 %v1874, %v1876
      %v1878 = vadd.f32 %v1874, %v1877
      %vm1879 = vweird.f32 %v1756
      %vm1880 = vweird.f32 %v1874
      %vm1881 = vmor %vm1879, %vm1880
      %v1882 = vsel %vm1881, %v1874, %v1878
      %v1883 = vand.u32 2147483647, %v1756
      %vm1884 = vcmp.eq.f32.partialorder %v1883, 8.507059e+37
      %v1885 = vand.u32 %v1756, 2147483648
      %v1886 = vor.u32 1.1754944e-38, %v1885
      %v1887 = vsel %vm1884, %v1886, %v1882
      %v1888 = vmul.f32 %v1717, %v1887
      %v1889 = vrcp.pop %v1759
      %v1890 = vmul.f32 %v1759, %v1889
      %v1891 = vsub.f32 1.0, %v1890
      %v1892 = vmul.f32 %v1889, %v1891
      %v1893 = vadd.f32 %v1889, %v1892
      %vm1894 = vweird.f32 %v1759
      %vm1895 = vweird.f32 %v1889
      %vm1896 = vmor %vm1894, %vm1895
      %v1897 = vsel %vm1896, %v1889, %v1893
      %v1898 = vand.u32 2147483647, %v1759
      %vm1899 = vcmp.eq.f32.partialorder %v1898, 8.507059e+37
      %v1900 = vand.u32 %v1759, 2147483648
      %v1901 = vor.u32 1.1754944e-38, %v1900
      %v1902 = vsel %vm1899, %v1901, %v1897
      %v1903 = vmul.f32 %v1719, %v1902
      %v1904 = vrcp.pop %v1762
      %v1905 = vmul.f32 %v1762, %v1904
      %v1906 = vsub.f32 1.0, %v1905
      %v1907 = vmul.f32 %v1904, %v1906
      %v1908 = vadd.f32 %v1904, %v1907
      %vm1909 = vweird.f32 %v1762
      %vm1910 = vweird.f32 %v1904
      %vm1911 = vmor %vm1909, %vm1910
      %v1912 = vsel %vm1911, %v1904, %v1908
      %v1913 = vand.u32 2147483647, %v1762
      %vm1914 = vcmp.eq.f32.partialorder %v1913, 8.507059e+37
      %v1915 = vand.u32 %v1762, 2147483648
      %v1916 = vor.u32 1.1754944e-38, %v1915
      %v1917 = vsel %vm1914, %v1916, %v1912
      %v1918 = vmul.f32 %v1721, %v1917
      %v1919 = vrcp.pop %v1765
      %v1920 = vmul.f32 %v1765, %v1919
      %v1921 = vsub.f32 1.0, %v1920
      %v1922 = vmul.f32 %v1919, %v1921
      %v1923 = vadd.f32 %v1919, %v1922
      %vm1924 = vweird.f32 %v1765
      %vm1925 = vweird.f32 %v1919
      %vm1926 = vmor %vm1924, %vm1925
      %v1927 = vsel %vm1926, %v1919, %v1923
      %v1928 = vand.u32 2147483647, %v1765
      %vm1929 = vcmp.eq.f32.partialorder %v1928, 8.507059e+37
      %v1930 = vand.u32 %v1765, 2147483648
      %v1931 = vor.u32 1.1754944e-38, %v1930
      %v1932 = vsel %vm1929, %v1931, %v1927
      %v1933 = vmul.f32 %v1723, %v1932
      %v1934 = vrcp.pop %v1768
      %v1935 = vmul.f32 %v1768, %v1934
      %v1936 = vsub.f32 1.0, %v1935
      %v1937 = vmul.f32 %v1934, %v1936
      %v1938 = vadd.f32 %v1934, %v1937
      %vm1939 = vweird.f32 %v1768
      %vm1940 = vweird.f32 %v1934
      %vm1941 = vmor %vm1939, %vm1940
      %v1942 = vsel %vm1941, %v1934, %v1938
      %v1943 = vand.u32 2147483647, %v1768
      %vm1944 = vcmp.eq.f32.partialorder %v1943, 8.507059e+37
      %v1945 = vand.u32 %v1768, 2147483648
      %v1946 = vor.u32 1.1754944e-38, %v1945
      %v1947 = vsel %vm1944, %v1946, %v1942
      %v1948 = vmul.f32 %v1725, %v1947
      %v1949 = vrcp.pop %v1771
      %v1950 = vmul.f32 %v1771, %v1949
      %v1951 = vsub.f32 1.0, %v1950
      %v1952 = vmul.f32 %v1949, %v1951
      %v1953 = vadd.f32 %v1949, %v1952
      %vm1954 = vweird.f32 %v1771
      %vm1955 = vweird.f32 %v1949
      %vm1956 = vmor %vm1954, %vm1955
      %v1957 = vsel %vm1956, %v1949, %v1953
      %v1958 = vand.u32 2147483647, %v1771
      %vm1959 = vcmp.eq.f32.partialorder %v1958, 8.507059e+37
      %v1960 = vand.u32 %v1771, 2147483648
      %v1961 = vor.u32 1.1754944e-38, %v1960
      %v1962 = vsel %vm1959, %v1961, %v1957
      %v1963 = vmul.f32 %v1727, %v1962
      %v1964 = vrcp.pop %v1774
      %v1965 = vmul.f32 %v1774, %v1964
      %v1966 = vsub.f32 1.0, %v1965
      %v1967 = vmul.f32 %v1964, %v1966
      %v1968 = vadd.f32 %v1964, %v1967
      %vm1969 = vweird.f32 %v1774
      %vm1970 = vweird.f32 %v1964
      %vm1971 = vmor %vm1969, %vm1970
      %v1972 = vsel %vm1971, %v1964, %v1968
      %v1973 = vand.u32 2147483647, %v1774
      %vm1974 = vcmp.eq.f32.partialorder %v1973, 8.507059e+37
      %v1975 = vand.u32 %v1774, 2147483648
      %v1976 = vor.u32 1.1754944e-38, %v1975
      %v1977 = vsel %vm1974, %v1976, %v1972
      %v1978 = vmul.f32 %v1729, %v1977
      %v1979 = vrcp.pop %v1777
      %v1980 = vmul.f32 %v1777, %v1979
      %v1981 = vsub.f32 1.0, %v1980
      %v1982 = vmul.f32 %v1979, %v1981
      %v1983 = vadd.f32 %v1979, %v1982
      %vm1984 = vweird.f32 %v1777
      %vm1985 = vweird.f32 %v1979
      %vm1986 = vmor %vm1984, %vm1985
      %v1987 = vsel %vm1986, %v1979, %v1983
      %v1988 = vand.u32 2147483647, %v1777
      %vm1989 = vcmp.eq.f32.partialorder %v1988, 8.507059e+37
      %v1990 = vand.u32 %v1777, 2147483648
      %v1991 = vor.u32 1.1754944e-38, %v1990
      %v1992 = vsel %vm1989, %v1991, %v1987
      %v1993 = vmul.f32 %v1731, %v1992
      %v1994 = vrcp.pop %v1780
      %v1995 = vmul.f32 %v1780, %v1994
      %v1996 = vsub.f32 1.0, %v1995
      %v1997 = vmul.f32 %v1994, %v1996
      %v1998 = vadd.f32 %v1994, %v1997
      %vm1999 = vweird.f32 %v1780
      %vm2000 = vweird.f32 %v1994
      %vm2001 = vmor %vm1999, %vm2000
      %v2002 = vsel %vm2001, %v1994, %v1998
      %v2003 = vand.u32 2147483647, %v1780
      %vm2004 = vcmp.eq.f32.partialorder %v2003, 8.507059e+37
      %v2005 = vand.u32 %v1780, 2147483648
      %v2006 = vor.u32 1.1754944e-38, %v2005
      %v2007 = vsel %vm2004, %v2006, %v2002
      %v2008 = vmul.f32 %v1733, %v2007
      %v2009 = vrcp.pop %v1783
      %v2010 = vmul.f32 %v1783, %v2009
      %v2011 = vsub.f32 1.0, %v2010
      %v2012 = vmul.f32 %v2009, %v2011
      %v2013 = vadd.f32 %v2009, %v2012
      %vm2014 = vweird.f32 %v1783
      %vm2015 = vweird.f32 %v2009
      %vm2016 = vmor %vm2014, %vm2015
      %v2017 = vsel %vm2016, %v2009, %v2013
      %v2018 = vand.u32 2147483647, %v1783
      %vm2019 = vcmp.eq.f32.partialorder %v2018, 8.507059e+37
      %v2020 = vand.u32 %v1783, 2147483648
      %v2021 = vor.u32 1.1754944e-38, %v2020
      %v2022 = vsel %vm2019, %v2021, %v2017
      %v2023 = vmul.f32 %v1735, %v2022
      %v2024 = vpack.c.bf16 %v1798, %v1798
      %v2025 = vpack.c.bf16 %v1813, %v1813
      %v2026 = vpack.c.bf16 %v1828, %v1828
      %v2027 = vpack.c.bf16 %v1843, %v1843
      %v2028 = vpack.c.bf16 %v1858, %v1858
      %v2029 = vpack.c.bf16 %v1873, %v1873
      %v2030 = vpack.c.bf16 %v1888, %v1888
      %v2031 = vpack.c.bf16 %v1903, %v1903
      %v2032 = vpack.c.bf16 %v1918, %v1918
      %v2033 = vpack.c.bf16 %v1933, %v1933
      %v2034 = vpack.c.bf16 %v1948, %v1948
      %v2035 = vpack.c.bf16 %v1963, %v1963
      %v2036 = vpack.c.bf16 %v1978, %v1978
      %v2037 = vpack.c.bf16 %v1993, %v1993
      %v2038 = vpack.c.bf16 %v2008, %v2008
      %v2039 = vpack.c.bf16 %v2023, %v2023
      %v2044 = vunpack.c.l.b16 %v2024
      %v2045 = vunpack.c.l.b16 %v2025
      %v2046 = vunpack.c.l.b16 %v2026
      %v2047 = vunpack.c.l.b16 %v2027
      %v2048 = vpack.c.b16 %v2045, %v2044
      %v2049 = vpack.c.b16 %v2047, %v2046
      %2050 = vrot.lane.b32.xlu0 %v1467, 64
      %v2051 = vpop.permute.xlu0 %2050
      %2052 = vrot.lane.b32.xlu0 %v1468, 64
      %v2053 = vpop.permute.xlu0 %2052
      %v2057 = vsel %vm562, %v2048, 0
      %v2060 = vsel %vm562, %v2049, 0
      %2062 = vmatpush.bf16.msra.mxu0 0
      %2063 = vmatpush.bf16.msra.mxu0 0
      %2064 = vmatpush.bf16.msra.mxu0 0
      %2065 = vmatpush.bf16.msra.mxu0 0
      %2066 = vmatpush.bf16.msra.mxu0 0
      %2067 = vmatpush.bf16.msra.mxu0 0
      %2068 = vmatpush.bf16.msra.mxu0 %v2053
      %2069 = vmatpush.bf16.msra.mxu0 %v2051
      %2070 = vmatmul.bf16.gmra.mxu0 %v2057
      %v2071 = vpop.f32.mrf.mxu0
      %v2072 = vadd.f32 0.0, %v2071
      %v2073 = vpop.f32.mrf.mxu0
      %v2074 = vadd.f32 0.0, %v2073
      %2075 = vmatmul.bf16.gmra.mxu0 %v2060
      %v2076 = vpop.f32.mrf.mxu0
      %v2077 = vadd.f32 0.0, %v2076
      %v2078 = vpop.f32.mrf.mxu0
      %v2079 = vadd.f32 0.0, %v2078
      %2080 = vdwg.mxu0
      %v2085 = vunpack.c.l.b16 %v2028
      %v2086 = vunpack.c.l.b16 %v2029
      %v2087 = vunpack.c.l.b16 %v2030
      %v2088 = vunpack.c.l.b16 %v2031
      %v2089 = vpack.c.b16 %v2086, %v2085
      %v2090 = vpack.c.b16 %v2088, %v2087
      %2091 = vrot.lane.b32.xlu0 %v1513, 64
      %v2092 = vpop.permute.xlu0 %2091
      %2093 = vrot.lane.b32.xlu0 %v1514, 64
      %v2094 = vpop.permute.xlu0 %2093
      %v2098 = vsel %vm562, %v2089, 0
      %v2101 = vsel %vm562, %v2090, 0
      %2103 = vmatpush.bf16.msra.mxu0 0
      %2104 = vmatpush.bf16.msra.mxu0 0
      %2105 = vmatpush.bf16.msra.mxu0 0
      %2106 = vmatpush.bf16.msra.mxu0 0
      %2107 = vmatpush.bf16.msra.mxu0 0
      %2108 = vmatpush.bf16.msra.mxu0 0
      %2109 = vmatpush.bf16.msra.mxu0 %v2094
      %2110 = vmatpush.bf16.msra.mxu0 %v2092
      %2111 = vmatmul.bf16.gmra.mxu0 %v2098
      %v2112 = vpop.f32.mrf.mxu0
      %v2113 = vadd.f32 0.0, %v2112
      %v2114 = vpop.f32.mrf.mxu0
      %v2115 = vadd.f32 0.0, %v2114
      %2116 = vmatmul.bf16.gmra.mxu0 %v2101
      %v2117 = vpop.f32.mrf.mxu0
      %v2118 = vadd.f32 0.0, %v2117
      %v2119 = vpop.f32.mrf.mxu0
      %v2120 = vadd.f32 0.0, %v2119
      %2121 = vdwg.mxu0
      %v2126 = vunpack.c.l.b16 %v2032
      %v2127 = vunpack.c.l.b16 %v2033
      %v2128 = vunpack.c.l.b16 %v2034
      %v2129 = vunpack.c.l.b16 %v2035
      %v2130 = vpack.c.b16 %v2127, %v2126
      %v2131 = vpack.c.b16 %v2129, %v2128
      %2132 = vrot.lane.b32.xlu0 %v1558, 64
      %v2133 = vpop.permute.xlu0 %2132
      %2134 = vrot.lane.b32.xlu0 %v1559, 64
      %v2135 = vpop.permute.xlu0 %2134
      %v2139 = vsel %vm562, %v2130, 0
      %v2142 = vsel %vm562, %v2131, 0
      %2144 = vmatpush.bf16.msra.mxu0 0
      %2145 = vmatpush.bf16.msra.mxu0 0
      %2146 = vmatpush.bf16.msra.mxu0 0
      %2147 = vmatpush.bf16.msra.mxu0 0
      %2148 = vmatpush.bf16.msra.mxu0 0
      %2149 = vmatpush.bf16.msra.mxu0 0
      %2150 = vmatpush.bf16.msra.mxu0 %v2135
      %2151 = vmatpush.bf16.msra.mxu0 %v2133
      %2152 = vmatmul.bf16.gmra.mxu0 %v2139
      %v2153 = vpop.f32.mrf.mxu0
      %v2154 = vadd.f32 0.0, %v2153
      %v2155 = vpop.f32.mrf.mxu0
      %v2156 = vadd.f32 0.0, %v2155
      %2157 = vmatmul.bf16.gmra.mxu0 %v2142
      %v2158 = vpop.f32.mrf.mxu0
      %v2159 = vadd.f32 0.0, %v2158
      %v2160 = vpop.f32.mrf.mxu0
      %v2161 = vadd.f32 0.0, %v2160
      %2162 = vdwg.mxu0
      %v2167 = vunpack.c.l.b16 %v2036
      %v2168 = vunpack.c.l.b16 %v2037
      %v2169 = vunpack.c.l.b16 %v2038
      %v2170 = vunpack.c.l.b16 %v2039
      %v2171 = vpack.c.b16 %v2168, %v2167
      %v2172 = vpack.c.b16 %v2170, %v2169
      %2173 = vrot.lane.b32.xlu0 %v1603, 64
      %v2174 = vpop.permute.xlu0 %2173
      %2175 = vrot.lane.b32.xlu0 %v1604, 64
      %v2176 = vpop.permute.xlu0 %2175
      %v2180 = vsel %vm562, %v2171, 0
      %v2183 = vsel %vm562, %v2172, 0
      %2185 = vmatpush.bf16.msra.mxu0 0
      %2186 = vmatpush.bf16.msra.mxu0 0
      %2187 = vmatpush.bf16.msra.mxu0 0
      %2188 = vmatpush.bf16.msra.mxu0 0
      %2189 = vmatpush.bf16.msra.mxu0 0
      %2190 = vmatpush.bf16.msra.mxu0 0
      %2191 = vmatpush.bf16.msra.mxu0 %v2176
      %2192 = vmatpush.bf16.msra.mxu0 %v2174
      %2193 = vmatmul.bf16.gmra.mxu0 %v2180
      %v2194 = vpop.f32.mrf.mxu0
      %v2195 = vadd.f32 0.0, %v2194
      %v2196 = vpop.f32.mrf.mxu0
      %v2197 = vadd.f32 0.0, %v2196
      %2198 = vmatmul.bf16.gmra.mxu0 %v2183
      %v2199 = vpop.f32.mrf.mxu0
      %v2200 = vadd.f32 0.0, %v2199
      %v2201 = vpop.f32.mrf.mxu0
      %v2202 = vadd.f32 0.0, %v2201
      %2203 = vdwg.mxu0
      %2204 = vrot.lane.b32.xlu0 %v1467, 120
      %v2205 = vpop.permute.xlu0 %2204
      %2206 = vrot.lane.b32.xlu0 %v1468, 120
      %v2207 = vpop.permute.xlu0 %2206
      %2208 = vrot.lane.b32.xlu0 %v1467, 88
      %v2209 = vpop.permute.xlu0 %2208
      %2210 = vrot.lane.b32.xlu0 %v1468, 88
      %v2211 = vpop.permute.xlu0 %2210
      %v2213 = vsel %vm1473, %v2205, 0
      %v2216 = vsel %vm1473, %v2207, 0
      %v2219 = vsel %vm1473, %v2209, 0
      %v2222 = vsel %vm1473, %v2211, 0
      %2224 = vmatpush.bf16.xpose.msra.mxu0 0
      %2225 = vmatpush.bf16.xpose.msra.mxu0 0
      %2226 = vmatpush.bf16.xpose.msra.mxu0 0
      %2227 = vmatpush.bf16.xpose.msra.mxu0 0
      %2228 = vmatpush.bf16.xpose.msra.mxu0 0
      %2229 = vmatpush.bf16.xpose.msra.mxu0 0
      %2230 = vmatpush.bf16.xpose.msra.mxu0 %v2222
      %2231 = vmatpush.bf16.xpose.msra.mxu0 %v2219
      %2232 = vmatmul.bf16.gmra.mxu0 %v2213
      %v2233 = vpop.f32.mrf.mxu0
      %v2234 = vadd.f32 %v232, %v2233
      %v2235 = vpop.f32.mrf.mxu0
      %v2236 = vadd.f32 %v232, %v2235
      %2237 = vmatmul.bf16.gmra.mxu0 %v2216
      %v2238 = vpop.f32.mrf.mxu0
      %v2239 = vadd.f32 %v232, %v2238
      %v2240 = vpop.f32.mrf.mxu0
      %v2241 = vadd.f32 %v232, %v2240
      %2242 = vdwg.mxu0
      %2243 = vrot.lane.b32.xlu0 %v1513, 120
      %v2244 = vpop.permute.xlu0 %2243
      %2245 = vrot.lane.b32.xlu0 %v1514, 120
      %v2246 = vpop.permute.xlu0 %2245
      %2247 = vrot.lane.b32.xlu0 %v1513, 88
      %v2248 = vpop.permute.xlu0 %2247
      %2249 = vrot.lane.b32.xlu0 %v1514, 88
      %v2250 = vpop.permute.xlu0 %2249
      %v2252 = vsel %vm1473, %v2244, 0
      %v2255 = vsel %vm1473, %v2246, 0
      %v2258 = vsel %vm1473, %v2248, 0
      %v2261 = vsel %vm1473, %v2250, 0
      %2263 = vmatpush.bf16.xpose.msra.mxu0 0
      %2264 = vmatpush.bf16.xpose.msra.mxu0 0
      %2265 = vmatpush.bf16.xpose.msra.mxu0 0
      %2266 = vmatpush.bf16.xpose.msra.mxu0 0
      %2267 = vmatpush.bf16.xpose.msra.mxu0 0
      %2268 = vmatpush.bf16.xpose.msra.mxu0 0
      %2269 = vmatpush.bf16.xpose.msra.mxu0 %v2261
      %2270 = vmatpush.bf16.xpose.msra.mxu0 %v2258
      %2271 = vmatmul.bf16.gmra.mxu0 %v2252
      %v2272 = vpop.f32.mrf.mxu0
      %v2273 = vadd.f32 %v232, %v2272
      %v2274 = vpop.f32.mrf.mxu0
      %v2275 = vadd.f32 %v232, %v2274
      %2276 = vmatmul.bf16.gmra.mxu0 %v2255
      %v2277 = vpop.f32.mrf.mxu0
      %v2278 = vadd.f32 %v232, %v2277
      %v2279 = vpop.f32.mrf.mxu0
      %v2280 = vadd.f32 %v232, %v2279
      %2281 = vdwg.mxu0
      %2282 = vrot.lane.b32.xlu0 %v1558, 120
      %v2283 = vpop.permute.xlu0 %2282
      %2284 = vrot.lane.b32.xlu0 %v1559, 120
      %v2285 = vpop.permute.xlu0 %2284
      %2286 = vrot.lane.b32.xlu0 %v1558, 88
      %v2287 = vpop.permute.xlu0 %2286
      %2288 = vrot.lane.b32.xlu0 %v1559, 88
      %v2289 = vpop.permute.xlu0 %2288
      %v2291 = vsel %vm1473, %v2283, 0
      %v2294 = vsel %vm1473, %v2285, 0
      %v2297 = vsel %vm1473, %v2287, 0
      %v2300 = vsel %vm1473, %v2289, 0
      %2302 = vmatpush.bf16.xpose.msra.mxu0 0
      %2303 = vmatpush.bf16.xpose.msra.mxu0 0
      %2304 = vmatpush.bf16.xpose.msra.mxu0 0
      %2305 = vmatpush.bf16.xpose.msra.mxu0 0
      %2306 = vmatpush.bf16.xpose.msra.mxu0 0
      %2307 = vmatpush.bf16.xpose.msra.mxu0 0
      %2308 = vmatpush.bf16.xpose.msra.mxu0 %v2300
      %2309 = vmatpush.bf16.xpose.msra.mxu0 %v2297
      %2310 = vmatmul.bf16.gmra.mxu0 %v2291
      %v2311 = vpop.f32.mrf.mxu0
      %v2312 = vadd.f32 %v232, %v2311
      %v2313 = vpop.f32.mrf.mxu0
      %v2314 = vadd.f32 %v232, %v2313
      %2315 = vmatmul.bf16.gmra.mxu0 %v2294
      %v2316 = vpop.f32.mrf.mxu0
      %v2317 = vadd.f32 %v232, %v2316
      %v2318 = vpop.f32.mrf.mxu0
      %v2319 = vadd.f32 %v232, %v2318
      %2320 = vdwg.mxu0
      %2321 = vrot.lane.b32.xlu0 %v1603, 120
      %v2322 = vpop.permute.xlu0 %2321
      %2323 = vrot.lane.b32.xlu0 %v1604, 120
      %v2324 = vpop.permute.xlu0 %2323
      %2325 = vrot.lane.b32.xlu0 %v1603, 88
      %v2326 = vpop.permute.xlu0 %2325
      %2327 = vrot.lane.b32.xlu0 %v1604, 88
      %v2328 = vpop.permute.xlu0 %2327
      %v2330 = vsel %vm1473, %v2322, 0
      %v2333 = vsel %vm1473, %v2324, 0
      %v2336 = vsel %vm1473, %v2326, 0
      %v2339 = vsel %vm1473, %v2328, 0
      %2341 = vmatpush.bf16.xpose.msra.mxu0 0
      %2342 = vmatpush.bf16.xpose.msra.mxu0 0
      %2343 = vmatpush.bf16.xpose.msra.mxu0 0
      %2344 = vmatpush.bf16.xpose.msra.mxu0 0
      %2345 = vmatpush.bf16.xpose.msra.mxu0 0
      %2346 = vmatpush.bf16.xpose.msra.mxu0 0
      %2347 = vmatpush.bf16.xpose.msra.mxu0 %v2339
      %2348 = vmatpush.bf16.xpose.msra.mxu0 %v2336
      %2349 = vmatmul.bf16.gmra.mxu0 %v2330
      %v2350 = vpop.f32.mrf.mxu0
      %v2351 = vadd.f32 %v232, %v2350
      %v2352 = vpop.f32.mrf.mxu0
      %v2353 = vadd.f32 %v232, %v2352
      %2354 = vmatmul.bf16.gmra.mxu0 %v2333
      %v2355 = vpop.f32.mrf.mxu0
      %v2356 = vadd.f32 %v232, %v2355
      %v2357 = vpop.f32.mrf.mxu0
      %v2358 = vadd.f32 %v232, %v2357
      %2359 = vdwg.mxu0
      %v2360 = vsel %vm562, %v2234, -inf
      %2361 = vmax.xlane.f32.xlu0 %v2360
      %v2362 = vpop.xlane.xlu0 %2361
      %v2363 = vsel %vm562, %v2236, -inf
      %2364 = vmax.xlane.f32.xlu0 %v2363
      %v2365 = vpop.xlane.xlu0 %2364
      %v2366 = vsel %vm562, %v2239, -inf
      %2367 = vmax.xlane.f32.xlu0 %v2366
      %v2368 = vpop.xlane.xlu0 %2367
      %v2369 = vsel %vm562, %v2241, -inf
      %2370 = vmax.xlane.f32.xlu0 %v2369
      %v2371 = vpop.xlane.xlu0 %2370
      %v2372 = vsel %vm562, %v2273, -inf
      %2373 = vmax.xlane.f32.xlu0 %v2372
      %v2374 = vpop.xlane.xlu0 %2373
      %v2375 = vsel %vm562, %v2275, -inf
      %2376 = vmax.xlane.f32.xlu0 %v2375
      %v2377 = vpop.xlane.xlu0 %2376
      %v2378 = vsel %vm562, %v2278, -inf
      %2379 = vmax.xlane.f32.xlu0 %v2378
      %v2380 = vpop.xlane.xlu0 %2379
      %v2381 = vsel %vm562, %v2280, -inf
      %2382 = vmax.xlane.f32.xlu0 %v2381
      %v2383 = vpop.xlane.xlu0 %2382
      %v2384 = vsel %vm562, %v2312, -inf
      %2385 = vmax.xlane.f32.xlu0 %v2384
      %v2386 = vpop.xlane.xlu0 %2385
      %v2387 = vsel %vm562, %v2314, -inf
      %2388 = vmax.xlane.f32.xlu0 %v2387
      %v2389 = vpop.xlane.xlu0 %2388
      %v2390 = vsel %vm562, %v2317, -inf
      %2391 = vmax.xlane.f32.xlu0 %v2390
      %v2392 = vpop.xlane.xlu0 %2391
      %v2393 = vsel %vm562, %v2319, -inf
      %2394 = vmax.xlane.f32.xlu0 %v2393
      %v2395 = vpop.xlane.xlu0 %2394
      %v2396 = vsel %vm562, %v2351, -inf
      %2397 = vmax.xlane.f32.xlu0 %v2396
      %v2398 = vpop.xlane.xlu0 %2397
      %v2399 = vsel %vm562, %v2353, -inf
      %2400 = vmax.xlane.f32.xlu0 %v2399
      %v2401 = vpop.xlane.xlu0 %2400
      %v2402 = vsel %vm562, %v2356, -inf
      %2403 = vmax.xlane.f32.xlu0 %v2402
      %v2404 = vpop.xlane.xlu0 %2403
      %v2405 = vsel %vm562, %v2358, -inf
      %2406 = vmax.xlane.f32.xlu0 %v2405
      %v2407 = vpop.xlane.xlu0 %2406
      %v2408 = vsub.f32 %v2234, %v2362
      %v2409 = vsub.f32 %v2236, %v2365
      %v2410 = vsub.f32 %v2239, %v2368
      %v2411 = vsub.f32 %v2241, %v2371
      %v2412 = vsub.f32 %v2273, %v2374
      %v2413 = vsub.f32 %v2275, %v2377
      %v2414 = vsub.f32 %v2278, %v2380
      %v2415 = vsub.f32 %v2280, %v2383
      %v2416 = vsub.f32 %v2312, %v2386
      %v2417 = vsub.f32 %v2314, %v2389
      %v2418 = vsub.f32 %v2317, %v2392
      %v2419 = vsub.f32 %v2319, %v2395
      %v2420 = vsub.f32 %v2351, %v2398
      %v2421 = vsub.f32 %v2353, %v2401
      %v2422 = vsub.f32 %v2356, %v2404
      %v2423 = vsub.f32 %v2358, %v2407
      %v2424 = vmul.f32 %v2408, 1.442695
      %v2425 = vpow.pop %v2424
      %v2426 = vmul.f32 %v2409, 1.442695
      %v2427 = vpow.pop %v2426
      %v2428 = vmul.f32 %v2410, 1.442695
      %v2429 = vpow.pop %v2428
      %v2430 = vmul.f32 %v2411, 1.442695
      %v2431 = vpow.pop %v2430
      %v2432 = vmul.f32 %v2412, 1.442695
      %v2433 = vpow.pop %v2432
      %v2434 = vmul.f32 %v2413, 1.442695
      %v2435 = vpow.pop %v2434
      %v2436 = vmul.f32 %v2414, 1.442695
      %v2437 = vpow.pop %v2436
      %v2438 = vmul.f32 %v2415, 1.442695
      %v2439 = vpow.pop %v2438
      %v2440 = vmul.f32 %v2416, 1.442695
      %v2441 = vpow.pop %v2440
      %v2442 = vmul.f32 %v2417, 1.442695
      %v2443 = vpow.pop %v2442
      %v2444 = vmul.f32 %v2418, 1.442695
      %v2445 = vpow.pop %v2444
      %v2446 = vmul.f32 %v2419, 1.442695
      %v2447 = vpow.pop %v2446
      %v2448 = vmul.f32 %v2420, 1.442695
      %v2449 = vpow.pop %v2448
      %v2450 = vmul.f32 %v2421, 1.442695
      %v2451 = vpow.pop %v2450
      %v2452 = vmul.f32 %v2422, 1.442695
      %v2453 = vpow.pop %v2452
      %v2454 = vmul.f32 %v2423, 1.442695
      %v2455 = vpow.pop %v2454
      %v2456 = vsel %vm562, %v2425, 0.0
      %2457 = vadd.xlane.f32.xlu0 %v2456
      %v2458 = vpop.xlane.xlu0 %2457
      %v2459 = vsel %vm562, %v2427, 0.0
      %2460 = vadd.xlane.f32.xlu0 %v2459
      %v2461 = vpop.xlane.xlu0 %2460
      %v2462 = vsel %vm562, %v2429, 0.0
      %2463 = vadd.xlane.f32.xlu0 %v2462
      %v2464 = vpop.xlane.xlu0 %2463
      %v2465 = vsel %vm562, %v2431, 0.0
      %2466 = vadd.xlane.f32.xlu0 %v2465
      %v2467 = vpop.xlane.xlu0 %2466
      %v2468 = vsel %vm562, %v2433, 0.0
      %2469 = vadd.xlane.f32.xlu0 %v2468
      %v2470 = vpop.xlane.xlu0 %2469
      %v2471 = vsel %vm562, %v2435, 0.0
      %2472 = vadd.xlane.f32.xlu0 %v2471
      %v2473 = vpop.xlane.xlu0 %2472
      %v2474 = vsel %vm562, %v2437, 0.0
      %2475 = vadd.xlane.f32.xlu0 %v2474
      %v2476 = vpop.xlane.xlu0 %2475
      %v2477 = vsel %vm562, %v2439, 0.0
      %2478 = vadd.xlane.f32.xlu0 %v2477
      %v2479 = vpop.xlane.xlu0 %2478
      %v2480 = vsel %vm562, %v2441, 0.0
      %2481 = vadd.xlane.f32.xlu0 %v2480
      %v2482 = vpop.xlane.xlu0 %2481
      %v2483 = vsel %vm562, %v2443, 0.0
      %2484 = vadd.xlane.f32.xlu0 %v2483
      %v2485 = vpop.xlane.xlu0 %2484
      %v2486 = vsel %vm562, %v2445, 0.0
      %2487 = vadd.xlane.f32.xlu0 %v2486
      %v2488 = vpop.xlane.xlu0 %2487
      %v2489 = vsel %vm562, %v2447, 0.0
      %2490 = vadd.xlane.f32.xlu0 %v2489
      %v2491 = vpop.xlane.xlu0 %2490
      %v2492 = vsel %vm562, %v2449, 0.0
      %2493 = vadd.xlane.f32.xlu0 %v2492
      %v2494 = vpop.xlane.xlu0 %2493
      %v2495 = vsel %vm562, %v2451, 0.0
      %2496 = vadd.xlane.f32.xlu0 %v2495
      %v2497 = vpop.xlane.xlu0 %2496
      %v2498 = vsel %vm562, %v2453, 0.0
      %2499 = vadd.xlane.f32.xlu0 %v2498
      %v2500 = vpop.xlane.xlu0 %2499
      %v2501 = vsel %vm562, %v2455, 0.0
      %2502 = vadd.xlane.f32.xlu0 %v2501
      %v2503 = vpop.xlane.xlu0 %2502
      %v2504 = vrcp.pop %v2458
      %v2505 = vmul.f32 %v2458, %v2504
      %v2506 = vsub.f32 1.0, %v2505
      %v2507 = vmul.f32 %v2504, %v2506
      %v2508 = vadd.f32 %v2504, %v2507
      %vm2509 = vweird.f32 %v2458
      %vm2510 = vweird.f32 %v2504
      %vm2511 = vmor %vm2509, %vm2510
      %v2512 = vsel %vm2511, %v2504, %v2508
      %v2513 = vand.u32 2147483647, %v2458
      %vm2514 = vcmp.eq.f32.partialorder %v2513, 8.507059e+37
      %v2515 = vand.u32 %v2458, 2147483648
      %v2516 = vor.u32 1.1754944e-38, %v2515
      %v2517 = vsel %vm2514, %v2516, %v2512
      %v2518 = vmul.f32 %v2425, %v2517
      %v2519 = vrcp.pop %v2461
      %v2520 = vmul.f32 %v2461, %v2519
      %v2521 = vsub.f32 1.0, %v2520
      %v2522 = vmul.f32 %v2519, %v2521
      %v2523 = vadd.f32 %v2519, %v2522
      %vm2524 = vweird.f32 %v2461
      %vm2525 = vweird.f32 %v2519
      %vm2526 = vmor %vm2524, %vm2525
      %v2527 = vsel %vm2526, %v2519, %v2523
      %v2528 = vand.u32 2147483647, %v2461
      %vm2529 = vcmp.eq.f32.partialorder %v2528, 8.507059e+37
      %v2530 = vand.u32 %v2461, 2147483648
      %v2531 = vor.u32 1.1754944e-38, %v2530
      %v2532 = vsel %vm2529, %v2531, %v2527
      %v2533 = vmul.f32 %v2427, %v2532
      %v2534 = vrcp.pop %v2464
      %v2535 = vmul.f32 %v2464, %v2534
      %v2536 = vsub.f32 1.0, %v2535
      %v2537 = vmul.f32 %v2534, %v2536
      %v2538 = vadd.f32 %v2534, %v2537
      %vm2539 = vweird.f32 %v2464
      %vm2540 = vweird.f32 %v2534
      %vm2541 = vmor %vm2539, %vm2540
      %v2542 = vsel %vm2541, %v2534, %v2538
      %v2543 = vand.u32 2147483647, %v2464
      %vm2544 = vcmp.eq.f32.partialorder %v2543, 8.507059e+37
      %v2545 = vand.u32 %v2464, 2147483648
      %v2546 = vor.u32 1.1754944e-38, %v2545
      %v2547 = vsel %vm2544, %v2546, %v2542
      %v2548 = vmul.f32 %v2429, %v2547
      %v2549 = vrcp.pop %v2467
      %v2550 = vmul.f32 %v2467, %v2549
      %v2551 = vsub.f32 1.0, %v2550
      %v2552 = vmul.f32 %v2549, %v2551
      %v2553 = vadd.f32 %v2549, %v2552
      %vm2554 = vweird.f32 %v2467
      %vm2555 = vweird.f32 %v2549
      %vm2556 = vmor %vm2554, %vm2555
      %v2557 = vsel %vm2556, %v2549, %v2553
      %v2558 = vand.u32 2147483647, %v2467
      %vm2559 = vcmp.eq.f32.partialorder %v2558, 8.507059e+37
      %v2560 = vand.u32 %v2467, 2147483648
      %v2561 = vor.u32 1.1754944e-38, %v2560
      %v2562 = vsel %vm2559, %v2561, %v2557
      %v2563 = vmul.f32 %v2431, %v2562
      %v2564 = vrcp.pop %v2470
      %v2565 = vmul.f32 %v2470, %v2564
      %v2566 = vsub.f32 1.0, %v2565
      %v2567 = vmul.f32 %v2564, %v2566
      %v2568 = vadd.f32 %v2564, %v2567
      %vm2569 = vweird.f32 %v2470
      %vm2570 = vweird.f32 %v2564
      %vm2571 = vmor %vm2569, %vm2570
      %v2572 = vsel %vm2571, %v2564, %v2568
      %v2573 = vand.u32 2147483647, %v2470
      %vm2574 = vcmp.eq.f32.partialorder %v2573, 8.507059e+37
      %v2575 = vand.u32 %v2470, 2147483648
      %v2576 = vor.u32 1.1754944e-38, %v2575
      %v2577 = vsel %vm2574, %v2576, %v2572
      %v2578 = vmul.f32 %v2433, %v2577
      %v2579 = vrcp.pop %v2473
      %v2580 = vmul.f32 %v2473, %v2579
      %v2581 = vsub.f32 1.0, %v2580
      %v2582 = vmul.f32 %v2579, %v2581
      %v2583 = vadd.f32 %v2579, %v2582
      %vm2584 = vweird.f32 %v2473
      %vm2585 = vweird.f32 %v2579
      %vm2586 = vmor %vm2584, %vm2585
      %v2587 = vsel %vm2586, %v2579, %v2583
      %v2588 = vand.u32 2147483647, %v2473
      %vm2589 = vcmp.eq.f32.partialorder %v2588, 8.507059e+37
      %v2590 = vand.u32 %v2473, 2147483648
      %v2591 = vor.u32 1.1754944e-38, %v2590
      %v2592 = vsel %vm2589, %v2591, %v2587
      %v2593 = vmul.f32 %v2435, %v2592
      %v2594 = vrcp.pop %v2476
      %v2595 = vmul.f32 %v2476, %v2594
      %v2596 = vsub.f32 1.0, %v2595
      %v2597 = vmul.f32 %v2594, %v2596
      %v2598 = vadd.f32 %v2594, %v2597
      %vm2599 = vweird.f32 %v2476
      %vm2600 = vweird.f32 %v2594
      %vm2601 = vmor %vm2599, %vm2600
      %v2602 = vsel %vm2601, %v2594, %v2598
      %v2603 = vand.u32 2147483647, %v2476
      %vm2604 = vcmp.eq.f32.partialorder %v2603, 8.507059e+37
      %v2605 = vand.u32 %v2476, 2147483648
      %v2606 = vor.u32 1.1754944e-38, %v2605
      %v2607 = vsel %vm2604, %v2606, %v2602
      %v2608 = vmul.f32 %v2437, %v2607
      %v2609 = vrcp.pop %v2479
      %v2610 = vmul.f32 %v2479, %v2609
      %v2611 = vsub.f32 1.0, %v2610
      %v2612 = vmul.f32 %v2609, %v2611
      %v2613 = vadd.f32 %v2609, %v2612
      %vm2614 = vweird.f32 %v2479
      %vm2615 = vweird.f32 %v2609
      %vm2616 = vmor %vm2614, %vm2615
      %v2617 = vsel %vm2616, %v2609, %v2613
      %v2618 = vand.u32 2147483647, %v2479
      %vm2619 = vcmp.eq.f32.partialorder %v2618, 8.507059e+37
      %v2620 = vand.u32 %v2479, 2147483648
      %v2621 = vor.u32 1.1754944e-38, %v2620
      %v2622 = vsel %vm2619, %v2621, %v2617
      %v2623 = vmul.f32 %v2439, %v2622
      %v2624 = vrcp.pop %v2482
      %v2625 = vmul.f32 %v2482, %v2624
      %v2626 = vsub.f32 1.0, %v2625
      %v2627 = vmul.f32 %v2624, %v2626
      %v2628 = vadd.f32 %v2624, %v2627
      %vm2629 = vweird.f32 %v2482
      %vm2630 = vweird.f32 %v2624
      %vm2631 = vmor %vm2629, %vm2630
      %v2632 = vsel %vm2631, %v2624, %v2628
      %v2633 = vand.u32 2147483647, %v2482
      %vm2634 = vcmp.eq.f32.partialorder %v2633, 8.507059e+37
      %v2635 = vand.u32 %v2482, 2147483648
      %v2636 = vor.u32 1.1754944e-38, %v2635
      %v2637 = vsel %vm2634, %v2636, %v2632
      %v2638 = vmul.f32 %v2441, %v2637
      %v2639 = vrcp.pop %v2485
      %v2640 = vmul.f32 %v2485, %v2639
      %v2641 = vsub.f32 1.0, %v2640
      %v2642 = vmul.f32 %v2639, %v2641
      %v2643 = vadd.f32 %v2639, %v2642
      %vm2644 = vweird.f32 %v2485
      %vm2645 = vweird.f32 %v2639
      %vm2646 = vmor %vm2644, %vm2645
      %v2647 = vsel %vm2646, %v2639, %v2643
      %v2648 = vand.u32 2147483647, %v2485
      %vm2649 = vcmp.eq.f32.partialorder %v2648, 8.507059e+37
      %v2650 = vand.u32 %v2485, 2147483648
      %v2651 = vor.u32 1.1754944e-38, %v2650
      %v2652 = vsel %vm2649, %v2651, %v2647
      %v2653 = vmul.f32 %v2443, %v2652
      %v2654 = vrcp.pop %v2488
      %v2655 = vmul.f32 %v2488, %v2654
      %v2656 = vsub.f32 1.0, %v2655
      %v2657 = vmul.f32 %v2654, %v2656
      %v2658 = vadd.f32 %v2654, %v2657
      %vm2659 = vweird.f32 %v2488
      %vm2660 = vweird.f32 %v2654
      %vm2661 = vmor %vm2659, %vm2660
      %v2662 = vsel %vm2661, %v2654, %v2658
      %v2663 = vand.u32 2147483647, %v2488
      %vm2664 = vcmp.eq.f32.partialorder %v2663, 8.507059e+37
      %v2665 = vand.u32 %v2488, 2147483648
      %v2666 = vor.u32 1.1754944e-38, %v2665
      %v2667 = vsel %vm2664, %v2666, %v2662
      %v2668 = vmul.f32 %v2445, %v2667
      %v2669 = vrcp.pop %v2491
      %v2670 = vmul.f32 %v2491, %v2669
      %v2671 = vsub.f32 1.0, %v2670
      %v2672 = vmul.f32 %v2669, %v2671
      %v2673 = vadd.f32 %v2669, %v2672
      %vm2674 = vweird.f32 %v2491
      %vm2675 = vweird.f32 %v2669
      %vm2676 = vmor %vm2674, %vm2675
      %v2677 = vsel %vm2676, %v2669, %v2673
      %v2678 = vand.u32 2147483647, %v2491
      %vm2679 = vcmp.eq.f32.partialorder %v2678, 8.507059e+37
      %v2680 = vand.u32 %v2491, 2147483648
      %v2681 = vor.u32 1.1754944e-38, %v2680
      %v2682 = vsel %vm2679, %v2681, %v2677
      %v2683 = vmul.f32 %v2447, %v2682
      %v2684 = vrcp.pop %v2494
      %v2685 = vmul.f32 %v2494, %v2684
      %v2686 = vsub.f32 1.0, %v2685
      %v2687 = vmul.f32 %v2684, %v2686
      %v2688 = vadd.f32 %v2684, %v2687
      %vm2689 = vweird.f32 %v2494
      %vm2690 = vweird.f32 %v2684
      %vm2691 = vmor %vm2689, %vm2690
      %v2692 = vsel %vm2691, %v2684, %v2688
      %v2693 = vand.u32 2147483647, %v2494
      %vm2694 = vcmp.eq.f32.partialorder %v2693, 8.507059e+37
      %v2695 = vand.u32 %v2494, 2147483648
      %v2696 = vor.u32 1.1754944e-38, %v2695
      %v2697 = vsel %vm2694, %v2696, %v2692
      %v2698 = vmul.f32 %v2449, %v2697
      %v2699 = vrcp.pop %v2497
      %v2700 = vmul.f32 %v2497, %v2699
      %v2701 = vsub.f32 1.0, %v2700
      %v2702 = vmul.f32 %v2699, %v2701
      %v2703 = vadd.f32 %v2699, %v2702
      %vm2704 = vweird.f32 %v2497
      %vm2705 = vweird.f32 %v2699
      %vm2706 = vmor %vm2704, %vm2705
      %v2707 = vsel %vm2706, %v2699, %v2703
      %v2708 = vand.u32 2147483647, %v2497
      %vm2709 = vcmp.eq.f32.partialorder %v2708, 8.507059e+37
      %v2710 = vand.u32 %v2497, 2147483648
      %v2711 = vor.u32 1.1754944e-38, %v2710
      %v2712 = vsel %vm2709, %v2711, %v2707
      %v2713 = vmul.f32 %v2451, %v2712
      %v2714 = vrcp.pop %v2500
      %v2715 = vmul.f32 %v2500, %v2714
      %v2716 = vsub.f32 1.0, %v2715
      %v2717 = vmul.f32 %v2714, %v2716
      %v2718 = vadd.f32 %v2714, %v2717
      %vm2719 = vweird.f32 %v2500
      %vm2720 = vweird.f32 %v2714
      %vm2721 = vmor %vm2719, %vm2720
      %v2722 = vsel %vm2721, %v2714, %v2718
      %v2723 = vand.u32 2147483647, %v2500
      %vm2724 = vcmp.eq.f32.partialorder %v2723, 8.507059e+37
      %v2725 = vand.u32 %v2500, 2147483648
      %v2726 = vor.u32 1.1754944e-38, %v2725
      %v2727 = vsel %vm2724, %v2726, %v2722
      %v2728 = vmul.f32 %v2453, %v2727
      %v2729 = vrcp.pop %v2503
      %v2730 = vmul.f32 %v2503, %v2729
      %v2731 = vsub.f32 1.0, %v2730
      %v2732 = vmul.f32 %v2729, %v2731
      %v2733 = vadd.f32 %v2729, %v2732
      %vm2734 = vweird.f32 %v2503
      %vm2735 = vweird.f32 %v2729
      %vm2736 = vmor %vm2734, %vm2735
      %v2737 = vsel %vm2736, %v2729, %v2733
      %v2738 = vand.u32 2147483647, %v2503
      %vm2739 = vcmp.eq.f32.partialorder %v2738, 8.507059e+37
      %v2740 = vand.u32 %v2503, 2147483648
      %v2741 = vor.u32 1.1754944e-38, %v2740
      %v2742 = vsel %vm2739, %v2741, %v2737
      %v2743 = vmul.f32 %v2455, %v2742
      %v2744 = vpack.c.bf16 %v2518, %v2518
      %v2745 = vpack.c.bf16 %v2533, %v2533
      %v2746 = vpack.c.bf16 %v2548, %v2548
      %v2747 = vpack.c.bf16 %v2563, %v2563
      %v2748 = vpack.c.bf16 %v2578, %v2578
      %v2749 = vpack.c.bf16 %v2593, %v2593
      %v2750 = vpack.c.bf16 %v2608, %v2608
      %v2751 = vpack.c.bf16 %v2623, %v2623
      %v2752 = vpack.c.bf16 %v2638, %v2638
      %v2753 = vpack.c.bf16 %v2653, %v2653
      %v2754 = vpack.c.bf16 %v2668, %v2668
      %v2755 = vpack.c.bf16 %v2683, %v2683
      %v2756 = vpack.c.bf16 %v2698, %v2698
      %v2757 = vpack.c.bf16 %v2713, %v2713
      %v2758 = vpack.c.bf16 %v2728, %v2728
      %v2759 = vpack.c.bf16 %v2743, %v2743
      %v2764 = vunpack.c.l.b16 %v2744
      %v2765 = vunpack.c.l.b16 %v2745
      %v2766 = vunpack.c.l.b16 %v2746
      %v2767 = vunpack.c.l.b16 %v2747
      %v2768 = vpack.c.b16 %v2765, %v2764
      %v2769 = vpack.c.b16 %v2767, %v2766
      %2770 = vrot.lane.b32.xlu0 %v1467, 56
      %v2771 = vpop.permute.xlu0 %2770
      %2772 = vrot.lane.b32.xlu0 %v1468, 56
      %v2773 = vpop.permute.xlu0 %2772
      %v2777 = vsel %vm562, %v2768, 0
      %v2780 = vsel %vm562, %v2769, 0
      %2782 = vmatpush.bf16.msra.mxu0 0
      %2783 = vmatpush.bf16.msra.mxu0 0
      %2784 = vmatpush.bf16.msra.mxu0 0
      %2785 = vmatpush.bf16.msra.mxu0 0
      %2786 = vmatpush.bf16.msra.mxu0 0
      %2787 = vmatpush.bf16.msra.mxu0 0
      %2788 = vmatpush.bf16.msra.mxu0 %v2773
      %2789 = vmatpush.bf16.msra.mxu0 %v2771
      %2790 = vmatmul.bf16.gmra.mxu0 %v2777
      %v2791 = vpop.f32.mrf.mxu0
      %v2792 = vadd.f32 0.0, %v2791
      %v2793 = vpop.f32.mrf.mxu0
      %v2794 = vadd.f32 0.0, %v2793
      %2795 = vmatmul.bf16.gmra.mxu0 %v2780
      %v2796 = vpop.f32.mrf.mxu0
      %v2797 = vadd.f32 0.0, %v2796
      %v2798 = vpop.f32.mrf.mxu0
      %v2799 = vadd.f32 0.0, %v2798
      %2800 = vdwg.mxu0
      %v2805 = vunpack.c.l.b16 %v2748
      %v2806 = vunpack.c.l.b16 %v2749
      %v2807 = vunpack.c.l.b16 %v2750
      %v2808 = vunpack.c.l.b16 %v2751
      %v2809 = vpack.c.b16 %v2806, %v2805
      %v2810 = vpack.c.b16 %v2808, %v2807
      %2811 = vrot.lane.b32.xlu0 %v1513, 56
      %v2812 = vpop.permute.xlu0 %2811
      %2813 = vrot.lane.b32.xlu0 %v1514, 56
      %v2814 = vpop.permute.xlu0 %2813
      %v2818 = vsel %vm562, %v2809, 0
      %v2821 = vsel %vm562, %v2810, 0
      %2823 = vmatpush.bf16.msra.mxu0 0
      %2824 = vmatpush.bf16.msra.mxu0 0
      %2825 = vmatpush.bf16.msra.mxu0 0
      %2826 = vmatpush.bf16.msra.mxu0 0
      %2827 = vmatpush.bf16.msra.mxu0 0
      %2828 = vmatpush.bf16.msra.mxu0 0
      %2829 = vmatpush.bf16.msra.mxu0 %v2814
      %2830 = vmatpush.bf16.msra.mxu0 %v2812
      %2831 = vmatmul.bf16.gmra.mxu0 %v2818
      %v2832 = vpop.f32.mrf.mxu0
      %v2833 = vadd.f32 0.0, %v2832
      %v2834 = vpop.f32.mrf.mxu0
      %v2835 = vadd.f32 0.0, %v2834
      %2836 = vmatmul.bf16.gmra.mxu0 %v2821
      %v2837 = vpop.f32.mrf.mxu0
      %v2838 = vadd.f32 0.0, %v2837
      %v2839 = vpop.f32.mrf.mxu0
      %v2840 = vadd.f32 0.0, %v2839
      %2841 = vdwg.mxu0
      %v2846 = vunpack.c.l.b16 %v2752
      %v2847 = vunpack.c.l.b16 %v2753
      %v2848 = vunpack.c.l.b16 %v2754
      %v2849 = vunpack.c.l.b16 %v2755
      %v2850 = vpack.c.b16 %v2847, %v2846
      %v2851 = vpack.c.b16 %v2849, %v2848
      %2852 = vrot.lane.b32.xlu0 %v1558, 56
      %v2853 = vpop.permute.xlu0 %2852
      %2854 = vrot.lane.b32.xlu0 %v1559, 56
      %v2855 = vpop.permute.xlu0 %2854
      %v2859 = vsel %vm562, %v2850, 0
      %v2862 = vsel %vm562, %v2851, 0
      %2864 = vmatpush.bf16.msra.mxu0 0
      %2865 = vmatpush.bf16.msra.mxu0 0
      %2866 = vmatpush.bf16.msra.mxu0 0
      %2867 = vmatpush.bf16.msra.mxu0 0
      %2868 = vmatpush.bf16.msra.mxu0 0
      %2869 = vmatpush.bf16.msra.mxu0 0
      %2870 = vmatpush.bf16.msra.mxu0 %v2855
      %2871 = vmatpush.bf16.msra.mxu0 %v2853
      %2872 = vmatmul.bf16.gmra.mxu0 %v2859
      %v2873 = vpop.f32.mrf.mxu0
      %v2874 = vadd.f32 0.0, %v2873
      %v2875 = vpop.f32.mrf.mxu0
      %v2876 = vadd.f32 0.0, %v2875
      %2877 = vmatmul.bf16.gmra.mxu0 %v2862
      %v2878 = vpop.f32.mrf.mxu0
      %v2879 = vadd.f32 0.0, %v2878
      %v2880 = vpop.f32.mrf.mxu0
      %v2881 = vadd.f32 0.0, %v2880
      %2882 = vdwg.mxu0
      %v2887 = vunpack.c.l.b16 %v2756
      %v2888 = vunpack.c.l.b16 %v2757
      %v2889 = vunpack.c.l.b16 %v2758
      %v2890 = vunpack.c.l.b16 %v2759
      %v2891 = vpack.c.b16 %v2888, %v2887
      %v2892 = vpack.c.b16 %v2890, %v2889
      %2893 = vrot.lane.b32.xlu0 %v1603, 56
      %v2894 = vpop.permute.xlu0 %2893
      %2895 = vrot.lane.b32.xlu0 %v1604, 56
      %v2896 = vpop.permute.xlu0 %2895
      %v2900 = vsel %vm562, %v2891, 0
      %v2903 = vsel %vm562, %v2892, 0
      %2905 = vmatpush.bf16.msra.mxu0 0
      %2906 = vmatpush.bf16.msra.mxu0 0
      %2907 = vmatpush.bf16.msra.mxu0 0
      %2908 = vmatpush.bf16.msra.mxu0 0
      %2909 = vmatpush.bf16.msra.mxu0 0
      %2910 = vmatpush.bf16.msra.mxu0 0
      %2911 = vmatpush.bf16.msra.mxu0 %v2896
      %2912 = vmatpush.bf16.msra.mxu0 %v2894
      %2913 = vmatmul.bf16.gmra.mxu0 %v2900
      %v2914 = vpop.f32.mrf.mxu0
      %v2915 = vadd.f32 0.0, %v2914
      %v2916 = vpop.f32.mrf.mxu0
      %v2917 = vadd.f32 0.0, %v2916
      %2918 = vmatmul.bf16.gmra.mxu0 %v2903
      %v2919 = vpop.f32.mrf.mxu0
      %v2920 = vadd.f32 0.0, %v2919
      %v2921 = vpop.f32.mrf.mxu0
      %v2922 = vadd.f32 0.0, %v2921
      %2923 = vdwg.mxu0
      %2924 = vrot.lane.b32.xlu0 %v1467, 112
      %v2925 = vpop.permute.xlu0 %2924
      %2926 = vrot.lane.b32.xlu0 %v1468, 112
      %v2927 = vpop.permute.xlu0 %2926
      %2928 = vrot.lane.b32.xlu0 %v1467, 80
      %v2929 = vpop.permute.xlu0 %2928
      %2930 = vrot.lane.b32.xlu0 %v1468, 80
      %v2931 = vpop.permute.xlu0 %2930
      %v2933 = vsel %vm1473, %v2925, 0
      %v2936 = vsel %vm1473, %v2927, 0
      %v2939 = vsel %vm1473, %v2929, 0
      %v2942 = vsel %vm1473, %v2931, 0
      %2944 = vmatpush.bf16.xpose.msra.mxu0 0
      %2945 = vmatpush.bf16.xpose.msra.mxu0 0
      %2946 = vmatpush.bf16.xpose.msra.mxu0 0
      %2947 = vmatpush.bf16.xpose.msra.mxu0 0
      %2948 = vmatpush.bf16.xpose.msra.mxu0 0
      %2949 = vmatpush.bf16.xpose.msra.mxu0 0
      %2950 = vmatpush.bf16.xpose.msra.mxu0 %v2942
      %2951 = vmatpush.bf16.xpose.msra.mxu0 %v2939
      %2952 = vmatmul.bf16.gmra.mxu0 %v2933
      %v2953 = vpop.f32.mrf.mxu0
      %v2954 = vadd.f32 %v232, %v2953
      %v2955 = vpop.f32.mrf.mxu0
      %v2956 = vadd.f32 %v232, %v2955
      %2957 = vmatmul.bf16.gmra.mxu0 %v2936
      %v2958 = vpop.f32.mrf.mxu0
      %v2959 = vadd.f32 %v232, %v2958
      %v2960 = vpop.f32.mrf.mxu0
      %v2961 = vadd.f32 %v232, %v2960
      %2962 = vdwg.mxu0
      %2963 = vrot.lane.b32.xlu0 %v1513, 112
      %v2964 = vpop.permute.xlu0 %2963
      %2965 = vrot.lane.b32.xlu0 %v1514, 112
      %v2966 = vpop.permute.xlu0 %2965
      %2967 = vrot.lane.b32.xlu0 %v1513, 80
      %v2968 = vpop.permute.xlu0 %2967
      %2969 = vrot.lane.b32.xlu0 %v1514, 80
      %v2970 = vpop.permute.xlu0 %2969
      %v2972 = vsel %vm1473, %v2964, 0
      %v2975 = vsel %vm1473, %v2966, 0
      %v2978 = vsel %vm1473, %v2968, 0
      %v2981 = vsel %vm1473, %v2970, 0
      %2983 = vmatpush.bf16.xpose.msra.mxu0 0
      %2984 = vmatpush.bf16.xpose.msra.mxu0 0
      %2985 = vmatpush.bf16.xpose.msra.mxu0 0
      %2986 = vmatpush.bf16.xpose.msra.mxu0 0
      %2987 = vmatpush.bf16.xpose.msra.mxu0 0
      %2988 = vmatpush.bf16.xpose.msra.mxu0 0
      %2989 = vmatpush.bf16.xpose.msra.mxu0 %v2981
      %2990 = vmatpush.bf16.xpose.msra.mxu0 %v2978
      %2991 = vmatmul.bf16.gmra.mxu0 %v2972
      %v2992 = vpop.f32.mrf.mxu0
      %v2993 = vadd.f32 %v232, %v2992
      %v2994 = vpop.f32.mrf.mxu0
      %v2995 = vadd.f32 %v232, %v2994
      %2996 = vmatmul.bf16.gmra.mxu0 %v2975
      %v2997 = vpop.f32.mrf.mxu0
      %v2998 = vadd.f32 %v232, %v2997
      %v2999 = vpop.f32.mrf.mxu0
      %v3000 = vadd.f32 %v232, %v2999
      %3001 = vdwg.mxu0
      %3002 = vrot.lane.b32.xlu0 %v1558, 112
      %v3003 = vpop.permute.xlu0 %3002
      %3004 = vrot.lane.b32.xlu0 %v1559, 112
      %v3005 = vpop.permute.xlu0 %3004
      %3006 = vrot.lane.b32.xlu0 %v1558, 80
      %v3007 = vpop.permute.xlu0 %3006
      %3008 = vrot.lane.b32.xlu0 %v1559, 80
      %v3009 = vpop.permute.xlu0 %3008
      %v3011 = vsel %vm1473, %v3003, 0
      %v3014 = vsel %vm1473, %v3005, 0
      %v3017 = vsel %vm1473, %v3007, 0
      %v3020 = vsel %vm1473, %v3009, 0
      %3022 = vmatpush.bf16.xpose.msra.mxu0 0
      %3023 = vmatpush.bf16.xpose.msra.mxu0 0
      %3024 = vmatpush.bf16.xpose.msra.mxu0 0
      %3025 = vmatpush.bf16.xpose.msra.mxu0 0
      %3026 = vmatpush.bf16.xpose.msra.mxu0 0
      %3027 = vmatpush.bf16.xpose.msra.mxu0 0
      %3028 = vmatpush.bf16.xpose.msra.mxu0 %v3020
      %3029 = vmatpush.bf16.xpose.msra.mxu0 %v3017
      %3030 = vmatmul.bf16.gmra.mxu0 %v3011
      %v3031 = vpop.f32.mrf.mxu0
      %v3032 = vadd.f32 %v232, %v3031
      %v3033 = vpop.f32.mrf.mxu0
      %v3034 = vadd.f32 %v232, %v3033
      %3035 = vmatmul.bf16.gmra.mxu0 %v3014
      %v3036 = vpop.f32.mrf.mxu0
      %v3037 = vadd.f32 %v232, %v3036
      %v3038 = vpop.f32.mrf.mxu0
      %v3039 = vadd.f32 %v232, %v3038
      %3040 = vdwg.mxu0
      %3041 = vrot.lane.b32.xlu0 %v1603, 112
      %v3042 = vpop.permute.xlu0 %3041
      %3043 = vrot.lane.b32.xlu0 %v1604, 112
      %v3044 = vpop.permute.xlu0 %3043
      %3045 = vrot.lane.b32.xlu0 %v1603, 80
      %v3046 = vpop.permute.xlu0 %3045
      %3047 = vrot.lane.b32.xlu0 %v1604, 80
      %v3048 = vpop.permute.xlu0 %3047
      %v3050 = vsel %vm1473, %v3042, 0
      %v3053 = vsel %vm1473, %v3044, 0
      %v3056 = vsel %vm1473, %v3046, 0
      %v3059 = vsel %vm1473, %v3048, 0
      %3061 = vmatpush.bf16.xpose.msra.mxu0 0
      %3062 = vmatpush.bf16.xpose.msra.mxu0 0
      %3063 = vmatpush.bf16.xpose.msra.mxu0 0
      %3064 = vmatpush.bf16.xpose.msra.mxu0 0
      %3065 = vmatpush.bf16.xpose.msra.mxu0 0
      %3066 = vmatpush.bf16.xpose.msra.mxu0 0
      %3067 = vmatpush.bf16.xpose.msra.mxu0 %v3059
      %3068 = vmatpush.bf16.xpose.msra.mxu0 %v3056
      %3069 = vmatmul.bf16.gmra.mxu0 %v3050
      %v3070 = vpop.f32.mrf.mxu0
      %v3071 = vadd.f32 %v232, %v3070
      %v3072 = vpop.f32.mrf.mxu0
      %v3073 = vadd.f32 %v232, %v3072
      %3074 = vmatmul.bf16.gmra.mxu0 %v3053
      %v3075 = vpop.f32.mrf.mxu0
      %v3076 = vadd.f32 %v232, %v3075
      %v3077 = vpop.f32.mrf.mxu0
      %v3078 = vadd.f32 %v232, %v3077
      %3079 = vdwg.mxu0
      %v3080 = vsel %vm562, %v2954, -inf
      %3081 = vmax.xlane.f32.xlu0 %v3080
      %v3082 = vpop.xlane.xlu0 %3081
      %v3083 = vsel %vm562, %v2956, -inf
      %3084 = vmax.xlane.f32.xlu0 %v3083
      %v3085 = vpop.xlane.xlu0 %3084
      %v3086 = vsel %vm562, %v2959, -inf
      %3087 = vmax.xlane.f32.xlu0 %v3086
      %v3088 = vpop.xlane.xlu0 %3087
      %v3089 = vsel %vm562, %v2961, -inf
      %3090 = vmax.xlane.f32.xlu0 %v3089
      %v3091 = vpop.xlane.xlu0 %3090
      %v3092 = vsel %vm562, %v2993, -inf
      %3093 = vmax.xlane.f32.xlu0 %v3092
      %v3094 = vpop.xlane.xlu0 %3093
      %v3095 = vsel %vm562, %v2995, -inf
      %3096 = vmax.xlane.f32.xlu0 %v3095
      %v3097 = vpop.xlane.xlu0 %3096
      %v3098 = vsel %vm562, %v2998, -inf
      %3099 = vmax.xlane.f32.xlu0 %v3098
      %v3100 = vpop.xlane.xlu0 %3099
      %v3101 = vsel %vm562, %v3000, -inf
      %3102 = vmax.xlane.f32.xlu0 %v3101
      %v3103 = vpop.xlane.xlu0 %3102
      %v3104 = vsel %vm562, %v3032, -inf
      %3105 = vmax.xlane.f32.xlu0 %v3104
      %v3106 = vpop.xlane.xlu0 %3105
      %v3107 = vsel %vm562, %v3034, -inf
      %3108 = vmax.xlane.f32.xlu0 %v3107
      %v3109 = vpop.xlane.xlu0 %3108
      %v3110 = vsel %vm562, %v3037, -inf
      %3111 = vmax.xlane.f32.xlu0 %v3110
      %v3112 = vpop.xlane.xlu0 %3111
      %v3113 = vsel %vm562, %v3039, -inf
      %3114 = vmax.xlane.f32.xlu0 %v3113
      %v3115 = vpop.xlane.xlu0 %3114
      %v3116 = vsel %vm562, %v3071, -inf
      %3117 = vmax.xlane.f32.xlu0 %v3116
      %v3118 = vpop.xlane.xlu0 %3117
      %v3119 = vsel %vm562, %v3073, -inf
      %3120 = vmax.xlane.f32.xlu0 %v3119
      %v3121 = vpop.xlane.xlu0 %3120
      %v3122 = vsel %vm562, %v3076, -inf
      %3123 = vmax.xlane.f32.xlu0 %v3122
      %v3124 = vpop.xlane.xlu0 %3123
      %v3125 = vsel %vm562, %v3078, -inf
      %3126 = vmax.xlane.f32.xlu0 %v3125
      %v3127 = vpop.xlane.xlu0 %3126
      %v3128 = vsub.f32 %v2954, %v3082
      %v3129 = vsub.f32 %v2956, %v3085
      %v3130 = vsub.f32 %v2959, %v3088
      %v3131 = vsub.f32 %v2961, %v3091
      %v3132 = vsub.f32 %v2993, %v3094
      %v3133 = vsub.f32 %v2995, %v3097
      %v3134 = vsub.f32 %v2998, %v3100
      %v3135 = vsub.f32 %v3000, %v3103
      %v3136 = vsub.f32 %v3032, %v3106
      %v3137 = vsub.f32 %v3034, %v3109
      %v3138 = vsub.f32 %v3037, %v3112
      %v3139 = vsub.f32 %v3039, %v3115
      %v3140 = vsub.f32 %v3071, %v3118
      %v3141 = vsub.f32 %v3073, %v3121
      %v3142 = vsub.f32 %v3076, %v3124
      %v3143 = vsub.f32 %v3078, %v3127
      %v3144 = vmul.f32 %v3128, 1.442695
      %v3145 = vpow.pop %v3144
      %v3146 = vmul.f32 %v3129, 1.442695
      %v3147 = vpow.pop %v3146
      %v3148 = vmul.f32 %v3130, 1.442695
      %v3149 = vpow.pop %v3148
      %v3150 = vmul.f32 %v3131, 1.442695
      %v3151 = vpow.pop %v3150
      %v3152 = vmul.f32 %v3132, 1.442695
      %v3153 = vpow.pop %v3152
      %v3154 = vmul.f32 %v3133, 1.442695
      %v3155 = vpow.pop %v3154
      %v3156 = vmul.f32 %v3134, 1.442695
      %v3157 = vpow.pop %v3156
      %v3158 = vmul.f32 %v3135, 1.442695
      %v3159 = vpow.pop %v3158
      %v3160 = vmul.f32 %v3136, 1.442695
      %v3161 = vpow.pop %v3160
      %v3162 = vmul.f32 %v3137, 1.442695
      %v3163 = vpow.pop %v3162
      %v3164 = vmul.f32 %v3138, 1.442695
      %v3165 = vpow.pop %v3164
      %v3166 = vmul.f32 %v3139, 1.442695
      %v3167 = vpow.pop %v3166
      %v3168 = vmul.f32 %v3140, 1.442695
      %v3169 = vpow.pop %v3168
      %v3170 = vmul.f32 %v3141, 1.442695
      %v3171 = vpow.pop %v3170
      %v3172 = vmul.f32 %v3142, 1.442695
      %v3173 = vpow.pop %v3172
      %v3174 = vmul.f32 %v3143, 1.442695
      %v3175 = vpow.pop %v3174
      %v3176 = vsel %vm562, %v3145, 0.0
      %3177 = vadd.xlane.f32.xlu0 %v3176
      %v3178 = vpop.xlane.xlu0 %3177
      %v3179 = vsel %vm562, %v3147, 0.0
      %3180 = vadd.xlane.f32.xlu0 %v3179
      %v3181 = vpop.xlane.xlu0 %3180
      %v3182 = vsel %vm562, %v3149, 0.0
      %3183 = vadd.xlane.f32.xlu0 %v3182
      %v3184 = vpop.xlane.xlu0 %3183
      %v3185 = vsel %vm562, %v3151, 0.0
      %3186 = vadd.xlane.f32.xlu0 %v3185
      %v3187 = vpop.xlane.xlu0 %3186
      %v3188 = vsel %vm562, %v3153, 0.0
      %3189 = vadd.xlane.f32.xlu0 %v3188
      %v3190 = vpop.xlane.xlu0 %3189
      %v3191 = vsel %vm562, %v3155, 0.0
      %3192 = vadd.xlane.f32.xlu0 %v3191
      %v3193 = vpop.xlane.xlu0 %3192
      %v3194 = vsel %vm562, %v3157, 0.0
      %3195 = vadd.xlane.f32.xlu0 %v3194
      %v3196 = vpop.xlane.xlu0 %3195
      %v3197 = vsel %vm562, %v3159, 0.0
      %3198 = vadd.xlane.f32.xlu0 %v3197
      %v3199 = vpop.xlane.xlu0 %3198
      %v3200 = vsel %vm562, %v3161, 0.0
      %3201 = vadd.xlane.f32.xlu0 %v3200
      %v3202 = vpop.xlane.xlu0 %3201
      %v3203 = vsel %vm562, %v3163, 0.0
      %3204 = vadd.xlane.f32.xlu0 %v3203
      %v3205 = vpop.xlane.xlu0 %3204
      %v3206 = vsel %vm562, %v3165, 0.0
      %3207 = vadd.xlane.f32.xlu0 %v3206
      %v3208 = vpop.xlane.xlu0 %3207
      %v3209 = vsel %vm562, %v3167, 0.0
      %3210 = vadd.xlane.f32.xlu0 %v3209
      %v3211 = vpop.xlane.xlu0 %3210
      %v3212 = vsel %vm562, %v3169, 0.0
      %3213 = vadd.xlane.f32.xlu0 %v3212
      %v3214 = vpop.xlane.xlu0 %3213
      %v3215 = vsel %vm562, %v3171, 0.0
      %3216 = vadd.xlane.f32.xlu0 %v3215
      %v3217 = vpop.xlane.xlu0 %3216
      %v3218 = vsel %vm562, %v3173, 0.0
      %3219 = vadd.xlane.f32.xlu0 %v3218
      %v3220 = vpop.xlane.xlu0 %3219
      %v3221 = vsel %vm562, %v3175, 0.0
      %3222 = vadd.xlane.f32.xlu0 %v3221
      %v3223 = vpop.xlane.xlu0 %3222
      %v3224 = vrcp.pop %v3178
      %v3225 = vmul.f32 %v3178, %v3224
      %v3226 = vsub.f32 1.0, %v3225
      %v3227 = vmul.f32 %v3224, %v3226
      %v3228 = vadd.f32 %v3224, %v3227
      %vm3229 = vweird.f32 %v3178
      %vm3230 = vweird.f32 %v3224
      %vm3231 = vmor %vm3229, %vm3230
      %v3232 = vsel %vm3231, %v3224, %v3228
      %v3233 = vand.u32 2147483647, %v3178
      %vm3234 = vcmp.eq.f32.partialorder %v3233, 8.507059e+37
      %v3235 = vand.u32 %v3178, 2147483648
      %v3236 = vor.u32 1.1754944e-38, %v3235
      %v3237 = vsel %vm3234, %v3236, %v3232
      %v3238 = vmul.f32 %v3145, %v3237
      %v3239 = vrcp.pop %v3181
      %v3240 = vmul.f32 %v3181, %v3239
      %v3241 = vsub.f32 1.0, %v3240
      %v3242 = vmul.f32 %v3239, %v3241
      %v3243 = vadd.f32 %v3239, %v3242
      %vm3244 = vweird.f32 %v3181
      %vm3245 = vweird.f32 %v3239
      %vm3246 = vmor %vm3244, %vm3245
      %v3247 = vsel %vm3246, %v3239, %v3243
      %v3248 = vand.u32 2147483647, %v3181
      %vm3249 = vcmp.eq.f32.partialorder %v3248, 8.507059e+37
      %v3250 = vand.u32 %v3181, 2147483648
      %v3251 = vor.u32 1.1754944e-38, %v3250
      %v3252 = vsel %vm3249, %v3251, %v3247
      %v3253 = vmul.f32 %v3147, %v3252
      %v3254 = vrcp.pop %v3184
      %v3255 = vmul.f32 %v3184, %v3254
      %v3256 = vsub.f32 1.0, %v3255
      %v3257 = vmul.f32 %v3254, %v3256
      %v3258 = vadd.f32 %v3254, %v3257
      %vm3259 = vweird.f32 %v3184
      %vm3260 = vweird.f32 %v3254
      %vm3261 = vmor %vm3259, %vm3260
      %v3262 = vsel %vm3261, %v3254, %v3258
      %v3263 = vand.u32 2147483647, %v3184
      %vm3264 = vcmp.eq.f32.partialorder %v3263, 8.507059e+37
      %v3265 = vand.u32 %v3184, 2147483648
      %v3266 = vor.u32 1.1754944e-38, %v3265
      %v3267 = vsel %vm3264, %v3266, %v3262
      %v3268 = vmul.f32 %v3149, %v3267
      %v3269 = vrcp.pop %v3187
      %v3270 = vmul.f32 %v3187, %v3269
      %v3271 = vsub.f32 1.0, %v3270
      %v3272 = vmul.f32 %v3269, %v3271
      %v3273 = vadd.f32 %v3269, %v3272
      %vm3274 = vweird.f32 %v3187
      %vm3275 = vweird.f32 %v3269
      %vm3276 = vmor %vm3274, %vm3275
      %v3277 = vsel %vm3276, %v3269, %v3273
      %v3278 = vand.u32 2147483647, %v3187
      %vm3279 = vcmp.eq.f32.partialorder %v3278, 8.507059e+37
      %v3280 = vand.u32 %v3187, 2147483648
      %v3281 = vor.u32 1.1754944e-38, %v3280
      %v3282 = vsel %vm3279, %v3281, %v3277
      %v3283 = vmul.f32 %v3151, %v3282
      %v3284 = vrcp.pop %v3190
      %v3285 = vmul.f32 %v3190, %v3284
      %v3286 = vsub.f32 1.0, %v3285
      %v3287 = vmul.f32 %v3284, %v3286
      %v3288 = vadd.f32 %v3284, %v3287
      %vm3289 = vweird.f32 %v3190
      %vm3290 = vweird.f32 %v3284
      %vm3291 = vmor %vm3289, %vm3290
      %v3292 = vsel %vm3291, %v3284, %v3288
      %v3293 = vand.u32 2147483647, %v3190
      %vm3294 = vcmp.eq.f32.partialorder %v3293, 8.507059e+37
      %v3295 = vand.u32 %v3190, 2147483648
      %v3296 = vor.u32 1.1754944e-38, %v3295
      %v3297 = vsel %vm3294, %v3296, %v3292
      %v3298 = vmul.f32 %v3153, %v3297
      %v3299 = vrcp.pop %v3193
      %v3300 = vmul.f32 %v3193, %v3299
      %v3301 = vsub.f32 1.0, %v3300
      %v3302 = vmul.f32 %v3299, %v3301
      %v3303 = vadd.f32 %v3299, %v3302
      %vm3304 = vweird.f32 %v3193
      %vm3305 = vweird.f32 %v3299
      %vm3306 = vmor %vm3304, %vm3305
      %v3307 = vsel %vm3306, %v3299, %v3303
      %v3308 = vand.u32 2147483647, %v3193
      %vm3309 = vcmp.eq.f32.partialorder %v3308, 8.507059e+37
      %v3310 = vand.u32 %v3193, 2147483648
      %v3311 = vor.u32 1.1754944e-38, %v3310
      %v3312 = vsel %vm3309, %v3311, %v3307
      %v3313 = vmul.f32 %v3155, %v3312
      %v3314 = vrcp.pop %v3196
      %v3315 = vmul.f32 %v3196, %v3314
      %v3316 = vsub.f32 1.0, %v3315
      %v3317 = vmul.f32 %v3314, %v3316
      %v3318 = vadd.f32 %v3314, %v3317
      %vm3319 = vweird.f32 %v3196
      %vm3320 = vweird.f32 %v3314
      %vm3321 = vmor %vm3319, %vm3320
      %v3322 = vsel %vm3321, %v3314, %v3318
      %v3323 = vand.u32 2147483647, %v3196
      %vm3324 = vcmp.eq.f32.partialorder %v3323, 8.507059e+37
      %v3325 = vand.u32 %v3196, 2147483648
      %v3326 = vor.u32 1.1754944e-38, %v3325
      %v3327 = vsel %vm3324, %v3326, %v3322
      %v3328 = vmul.f32 %v3157, %v3327
      %v3329 = vrcp.pop %v3199
      %v3330 = vmul.f32 %v3199, %v3329
      %v3331 = vsub.f32 1.0, %v3330
      %v3332 = vmul.f32 %v3329, %v3331
      %v3333 = vadd.f32 %v3329, %v3332
      %vm3334 = vweird.f32 %v3199
      %vm3335 = vweird.f32 %v3329
      %vm3336 = vmor %vm3334, %vm3335
      %v3337 = vsel %vm3336, %v3329, %v3333
      %v3338 = vand.u32 2147483647, %v3199
      %vm3339 = vcmp.eq.f32.partialorder %v3338, 8.507059e+37
      %v3340 = vand.u32 %v3199, 2147483648
      %v3341 = vor.u32 1.1754944e-38, %v3340
      %v3342 = vsel %vm3339, %v3341, %v3337
      %v3343 = vmul.f32 %v3159, %v3342
      %v3344 = vrcp.pop %v3202
      %v3345 = vmul.f32 %v3202, %v3344
      %v3346 = vsub.f32 1.0, %v3345
      %v3347 = vmul.f32 %v3344, %v3346
      %v3348 = vadd.f32 %v3344, %v3347
      %vm3349 = vweird.f32 %v3202
      %vm3350 = vweird.f32 %v3344
      %vm3351 = vmor %vm3349, %vm3350
      %v3352 = vsel %vm3351, %v3344, %v3348
      %v3353 = vand.u32 2147483647, %v3202
      %vm3354 = vcmp.eq.f32.partialorder %v3353, 8.507059e+37
      %v3355 = vand.u32 %v3202, 2147483648
      %v3356 = vor.u32 1.1754944e-38, %v3355
      %v3357 = vsel %vm3354, %v3356, %v3352
      %v3358 = vmul.f32 %v3161, %v3357
      %v3359 = vrcp.pop %v3205
      %v3360 = vmul.f32 %v3205, %v3359
      %v3361 = vsub.f32 1.0, %v3360
      %v3362 = vmul.f32 %v3359, %v3361
      %v3363 = vadd.f32 %v3359, %v3362
      %vm3364 = vweird.f32 %v3205
      %vm3365 = vweird.f32 %v3359
      %vm3366 = vmor %vm3364, %vm3365
      %v3367 = vsel %vm3366, %v3359, %v3363
      %v3368 = vand.u32 2147483647, %v3205
      %vm3369 = vcmp.eq.f32.partialorder %v3368, 8.507059e+37
      %v3370 = vand.u32 %v3205, 2147483648
      %v3371 = vor.u32 1.1754944e-38, %v3370
      %v3372 = vsel %vm3369, %v3371, %v3367
      %v3373 = vmul.f32 %v3163, %v3372
      %v3374 = vrcp.pop %v3208
      %v3375 = vmul.f32 %v3208, %v3374
      %v3376 = vsub.f32 1.0, %v3375
      %v3377 = vmul.f32 %v3374, %v3376
      %v3378 = vadd.f32 %v3374, %v3377
      %vm3379 = vweird.f32 %v3208
      %vm3380 = vweird.f32 %v3374
      %vm3381 = vmor %vm3379, %vm3380
      %v3382 = vsel %vm3381, %v3374, %v3378
      %v3383 = vand.u32 2147483647, %v3208
      %vm3384 = vcmp.eq.f32.partialorder %v3383, 8.507059e+37
      %v3385 = vand.u32 %v3208, 2147483648
      %v3386 = vor.u32 1.1754944e-38, %v3385
      %v3387 = vsel %vm3384, %v3386, %v3382
      %v3388 = vmul.f32 %v3165, %v3387
      %v3389 = vrcp.pop %v3211
      %v3390 = vmul.f32 %v3211, %v3389
      %v3391 = vsub.f32 1.0, %v3390
      %v3392 = vmul.f32 %v3389, %v3391
      %v3393 = vadd.f32 %v3389, %v3392
      %vm3394 = vweird.f32 %v3211
      %vm3395 = vweird.f32 %v3389
      %vm3396 = vmor %vm3394, %vm3395
      %v3397 = vsel %vm3396, %v3389, %v3393
      %v3398 = vand.u32 2147483647, %v3211
      %vm3399 = vcmp.eq.f32.partialorder %v3398, 8.507059e+37
      %v3400 = vand.u32 %v3211, 2147483648
      %v3401 = vor.u32 1.1754944e-38, %v3400
      %v3402 = vsel %vm3399, %v3401, %v3397
      %v3403 = vmul.f32 %v3167, %v3402
      %v3404 = vrcp.pop %v3214
      %v3405 = vmul.f32 %v3214, %v3404
      %v3406 = vsub.f32 1.0, %v3405
      %v3407 = vmul.f32 %v3404, %v3406
      %v3408 = vadd.f32 %v3404, %v3407
      %vm3409 = vweird.f32 %v3214
      %vm3410 = vweird.f32 %v3404
      %vm3411 = vmor %vm3409, %vm3410
      %v3412 = vsel %vm3411, %v3404, %v3408
      %v3413 = vand.u32 2147483647, %v3214
      %vm3414 = vcmp.eq.f32.partialorder %v3413, 8.507059e+37
      %v3415 = vand.u32 %v3214, 2147483648
      %v3416 = vor.u32 1.1754944e-38, %v3415
      %v3417 = vsel %vm3414, %v3416, %v3412
      %v3418 = vmul.f32 %v3169, %v3417
      %v3419 = vrcp.pop %v3217
      %v3420 = vmul.f32 %v3217, %v3419
      %v3421 = vsub.f32 1.0, %v3420
      %v3422 = vmul.f32 %v3419, %v3421
      %v3423 = vadd.f32 %v3419, %v3422
      %vm3424 = vweird.f32 %v3217
      %vm3425 = vweird.f32 %v3419
      %vm3426 = vmor %vm3424, %vm3425
      %v3427 = vsel %vm3426, %v3419, %v3423
      %v3428 = vand.u32 2147483647, %v3217
      %vm3429 = vcmp.eq.f32.partialorder %v3428, 8.507059e+37
      %v3430 = vand.u32 %v3217, 2147483648
      %v3431 = vor.u32 1.1754944e-38, %v3430
      %v3432 = vsel %vm3429, %v3431, %v3427
      %v3433 = vmul.f32 %v3171, %v3432
      %v3434 = vrcp.pop %v3220
      %v3435 = vmul.f32 %v3220, %v3434
      %v3436 = vsub.f32 1.0, %v3435
      %v3437 = vmul.f32 %v3434, %v3436
      %v3438 = vadd.f32 %v3434, %v3437
      %vm3439 = vweird.f32 %v3220
      %vm3440 = vweird.f32 %v3434
      %vm3441 = vmor %vm3439, %vm3440
      %v3442 = vsel %vm3441, %v3434, %v3438
      %v3443 = vand.u32 2147483647, %v3220
      %vm3444 = vcmp.eq.f32.partialorder %v3443, 8.507059e+37
      %v3445 = vand.u32 %v3220, 2147483648
      %v3446 = vor.u32 1.1754944e-38, %v3445
      %v3447 = vsel %vm3444, %v3446, %v3442
      %v3448 = vmul.f32 %v3173, %v3447
      %v3449 = vrcp.pop %v3223
      %v3450 = vmul.f32 %v3223, %v3449
      %v3451 = vsub.f32 1.0, %v3450
      %v3452 = vmul.f32 %v3449, %v3451
      %v3453 = vadd.f32 %v3449, %v3452
      %vm3454 = vweird.f32 %v3223
      %vm3455 = vweird.f32 %v3449
      %vm3456 = vmor %vm3454, %vm3455
      %v3457 = vsel %vm3456, %v3449, %v3453
      %v3458 = vand.u32 2147483647, %v3223
      %vm3459 = vcmp.eq.f32.partialorder %v3458, 8.507059e+37
      %v3460 = vand.u32 %v3223, 2147483648
      %v3461 = vor.u32 1.1754944e-38, %v3460
      %v3462 = vsel %vm3459, %v3461, %v3457
      %v3463 = vmul.f32 %v3175, %v3462
      %v3464 = vpack.c.bf16 %v3238, %v3238
      %v3465 = vpack.c.bf16 %v3253, %v3253
      %v3466 = vpack.c.bf16 %v3268, %v3268
      %v3467 = vpack.c.bf16 %v3283, %v3283
      %v3468 = vpack.c.bf16 %v3298, %v3298
      %v3469 = vpack.c.bf16 %v3313, %v3313
      %v3470 = vpack.c.bf16 %v3328, %v3328
      %v3471 = vpack.c.bf16 %v3343, %v3343
      %v3472 = vpack.c.bf16 %v3358, %v3358
      %v3473 = vpack.c.bf16 %v3373, %v3373
      %v3474 = vpack.c.bf16 %v3388, %v3388
      %v3475 = vpack.c.bf16 %v3403, %v3403
      %v3476 = vpack.c.bf16 %v3418, %v3418
      %v3477 = vpack.c.bf16 %v3433, %v3433
      %v3478 = vpack.c.bf16 %v3448, %v3448
      %v3479 = vpack.c.bf16 %v3463, %v3463
      %v3484 = vunpack.c.l.b16 %v3464
      %v3485 = vunpack.c.l.b16 %v3465
      %v3486 = vunpack.c.l.b16 %v3466
      %v3487 = vunpack.c.l.b16 %v3467
      %v3488 = vpack.c.b16 %v3485, %v3484
      %v3489 = vpack.c.b16 %v3487, %v3486
      %3490 = vrot.lane.b32.xlu0 %v1467, 48
      %v3491 = vpop.permute.xlu0 %3490
      %3492 = vrot.lane.b32.xlu0 %v1468, 48
      %v3493 = vpop.permute.xlu0 %3492
      %v3497 = vsel %vm562, %v3488, 0
      %v3500 = vsel %vm562, %v3489, 0
      %3502 = vmatpush.bf16.msra.mxu0 0
      %3503 = vmatpush.bf16.msra.mxu0 0
      %3504 = vmatpush.bf16.msra.mxu0 0
      %3505 = vmatpush.bf16.msra.mxu0 0
      %3506 = vmatpush.bf16.msra.mxu0 0
      %3507 = vmatpush.bf16.msra.mxu0 0
      %3508 = vmatpush.bf16.msra.mxu0 %v3493
      %3509 = vmatpush.bf16.msra.mxu0 %v3491
      %3510 = vmatmul.bf16.gmra.mxu0 %v3497
      %v3511 = vpop.f32.mrf.mxu0
      %v3512 = vadd.f32 0.0, %v3511
      %v3513 = vpop.f32.mrf.mxu0
      %v3514 = vadd.f32 0.0, %v3513
      %3515 = vmatmul.bf16.gmra.mxu0 %v3500
      %v3516 = vpop.f32.mrf.mxu0
      %v3517 = vadd.f32 0.0, %v3516
      %v3518 = vpop.f32.mrf.mxu0
      %v3519 = vadd.f32 0.0, %v3518
      %3520 = vdwg.mxu0
      %v3525 = vunpack.c.l.b16 %v3468
      %v3526 = vunpack.c.l.b16 %v3469
      %v3527 = vunpack.c.l.b16 %v3470
      %v3528 = vunpack.c.l.b16 %v3471
      %v3529 = vpack.c.b16 %v3526, %v3525
      %v3530 = vpack.c.b16 %v3528, %v3527
      %3531 = vrot.lane.b32.xlu0 %v1513, 48
      %v3532 = vpop.permute.xlu0 %3531
      %3533 = vrot.lane.b32.xlu0 %v1514, 48
      %v3534 = vpop.permute.xlu0 %3533
      %v3538 = vsel %vm562, %v3529, 0
      %v3541 = vsel %vm562, %v3530, 0
      %3543 = vmatpush.bf16.msra.mxu0 0
      %3544 = vmatpush.bf16.msra.mxu0 0
      %3545 = vmatpush.bf16.msra.mxu0 0
      %3546 = vmatpush.bf16.msra.mxu0 0
      %3547 = vmatpush.bf16.msra.mxu0 0
      %3548 = vmatpush.bf16.msra.mxu0 0
      %3549 = vmatpush.bf16.msra.mxu0 %v3534
      %3550 = vmatpush.bf16.msra.mxu0 %v3532
      %3551 = vmatmul.bf16.gmra.mxu0 %v3538
      %v3552 = vpop.f32.mrf.mxu0
      %v3553 = vadd.f32 0.0, %v3552
      %v3554 = vpop.f32.mrf.mxu0
      %v3555 = vadd.f32 0.0, %v3554
      %3556 = vmatmul.bf16.gmra.mxu0 %v3541
      %v3557 = vpop.f32.mrf.mxu0
      %v3558 = vadd.f32 0.0, %v3557
      %v3559 = vpop.f32.mrf.mxu0
      %v3560 = vadd.f32 0.0, %v3559
      %3561 = vdwg.mxu0
      %v3566 = vunpack.c.l.b16 %v3472
      %v3567 = vunpack.c.l.b16 %v3473
      %v3568 = vunpack.c.l.b16 %v3474
      %v3569 = vunpack.c.l.b16 %v3475
      %v3570 = vpack.c.b16 %v3567, %v3566
      %v3571 = vpack.c.b16 %v3569, %v3568
      %3572 = vrot.lane.b32.xlu0 %v1558, 48
      %v3573 = vpop.permute.xlu0 %3572
      %3574 = vrot.lane.b32.xlu0 %v1559, 48
      %v3575 = vpop.permute.xlu0 %3574
      %v3579 = vsel %vm562, %v3570, 0
      %v3582 = vsel %vm562, %v3571, 0
      %3584 = vmatpush.bf16.msra.mxu0 0
      %3585 = vmatpush.bf16.msra.mxu0 0
      %3586 = vmatpush.bf16.msra.mxu0 0
      %3587 = vmatpush.bf16.msra.mxu0 0
      %3588 = vmatpush.bf16.msra.mxu0 0
      %3589 = vmatpush.bf16.msra.mxu0 0
      %3590 = vmatpush.bf16.msra.mxu0 %v3575
      %3591 = vmatpush.bf16.msra.mxu0 %v3573
      %3592 = vmatmul.bf16.gmra.mxu0 %v3579
      %v3593 = vpop.f32.mrf.mxu0
      %v3594 = vadd.f32 0.0, %v3593
      %v3595 = vpop.f32.mrf.mxu0
      %v3596 = vadd.f32 0.0, %v3595
      %3597 = vmatmul.bf16.gmra.mxu0 %v3582
      %v3598 = vpop.f32.mrf.mxu0
      %v3599 = vadd.f32 0.0, %v3598
      %v3600 = vpop.f32.mrf.mxu0
      %v3601 = vadd.f32 0.0, %v3600
      %3602 = vdwg.mxu0
      %v3607 = vunpack.c.l.b16 %v3476
      %v3608 = vunpack.c.l.b16 %v3477
      %v3609 = vunpack.c.l.b16 %v3478
      %v3610 = vunpack.c.l.b16 %v3479
      %v3611 = vpack.c.b16 %v3608, %v3607
      %v3612 = vpack.c.b16 %v3610, %v3609
      %3613 = vrot.lane.b32.xlu0 %v1603, 48
      %v3614 = vpop.permute.xlu0 %3613
      %3615 = vrot.lane.b32.xlu0 %v1604, 48
      %v3616 = vpop.permute.xlu0 %3615
      %v3620 = vsel %vm562, %v3611, 0
      %v3623 = vsel %vm562, %v3612, 0
      %3625 = vmatpush.bf16.msra.mxu0 0
      %3626 = vmatpush.bf16.msra.mxu0 0
      %3627 = vmatpush.bf16.msra.mxu0 0
      %3628 = vmatpush.bf16.msra.mxu0 0
      %3629 = vmatpush.bf16.msra.mxu0 0
      %3630 = vmatpush.bf16.msra.mxu0 0
      %3631 = vmatpush.bf16.msra.mxu0 %v3616
      %3632 = vmatpush.bf16.msra.mxu0 %v3614
      %3633 = vmatmul.bf16.gmra.mxu0 %v3620
      %v3634 = vpop.f32.mrf.mxu0
      %v3635 = vadd.f32 0.0, %v3634
      %v3636 = vpop.f32.mrf.mxu0
      %v3637 = vadd.f32 0.0, %v3636
      %3638 = vmatmul.bf16.gmra.mxu0 %v3623
      %v3639 = vpop.f32.mrf.mxu0
      %v3640 = vadd.f32 0.0, %v3639
      %v3641 = vpop.f32.mrf.mxu0
      %v3642 = vadd.f32 0.0, %v3641
      %3643 = vdwg.mxu0
      %3644 = vrot.lane.b32.xlu0 %v1467, 104
      %v3645 = vpop.permute.xlu0 %3644
      %3646 = vrot.lane.b32.xlu0 %v1468, 104
      %v3647 = vpop.permute.xlu0 %3646
      %3648 = vrot.lane.b32.xlu0 %v1467, 72
      %v3649 = vpop.permute.xlu0 %3648
      %3650 = vrot.lane.b32.xlu0 %v1468, 72
      %v3651 = vpop.permute.xlu0 %3650
      %v3653 = vsel %vm1473, %v3645, 0
      %v3656 = vsel %vm1473, %v3647, 0
      %v3659 = vsel %vm1473, %v3649, 0
      %v3662 = vsel %vm1473, %v3651, 0
      %3664 = vmatpush.bf16.xpose.msra.mxu0 0
      %3665 = vmatpush.bf16.xpose.msra.mxu0 0
      %3666 = vmatpush.bf16.xpose.msra.mxu0 0
      %3667 = vmatpush.bf16.xpose.msra.mxu0 0
      %3668 = vmatpush.bf16.xpose.msra.mxu0 0
      %3669 = vmatpush.bf16.xpose.msra.mxu0 0
      %3670 = vmatpush.bf16.xpose.msra.mxu0 %v3662
      %3671 = vmatpush.bf16.xpose.msra.mxu0 %v3659
      %3672 = vmatmul.bf16.gmra.mxu0 %v3653
      %v3673 = vpop.f32.mrf.mxu0
      %v3674 = vadd.f32 %v232, %v3673
      %v3675 = vpop.f32.mrf.mxu0
      %v3676 = vadd.f32 %v232, %v3675
      %3677 = vmatmul.bf16.gmra.mxu0 %v3656
      %v3678 = vpop.f32.mrf.mxu0
      %v3679 = vadd.f32 %v232, %v3678
      %v3680 = vpop.f32.mrf.mxu0
      %v3681 = vadd.f32 %v232, %v3680
      %3682 = vdwg.mxu0
      %3683 = vrot.lane.b32.xlu0 %v1513, 104
      %v3684 = vpop.permute.xlu0 %3683
      %3685 = vrot.lane.b32.xlu0 %v1514, 104
      %v3686 = vpop.permute.xlu0 %3685
      %3687 = vrot.lane.b32.xlu0 %v1513, 72
      %v3688 = vpop.permute.xlu0 %3687
      %3689 = vrot.lane.b32.xlu0 %v1514, 72
      %v3690 = vpop.permute.xlu0 %3689
      %v3692 = vsel %vm1473, %v3684, 0
      %v3695 = vsel %vm1473, %v3686, 0
      %v3698 = vsel %vm1473, %v3688, 0
      %v3701 = vsel %vm1473, %v3690, 0
      %3703 = vmatpush.bf16.xpose.msra.mxu0 0
      %3704 = vmatpush.bf16.xpose.msra.mxu0 0
      %3705 = vmatpush.bf16.xpose.msra.mxu0 0
      %3706 = vmatpush.bf16.xpose.msra.mxu0 0
      %3707 = vmatpush.bf16.xpose.msra.mxu0 0
      %3708 = vmatpush.bf16.xpose.msra.mxu0 0
      %3709 = vmatpush.bf16.xpose.msra.mxu0 %v3701
      %3710 = vmatpush.bf16.xpose.msra.mxu0 %v3698
      %3711 = vmatmul.bf16.gmra.mxu0 %v3692
      %v3712 = vpop.f32.mrf.mxu0
      %v3713 = vadd.f32 %v232, %v3712
      %v3714 = vpop.f32.mrf.mxu0
      %v3715 = vadd.f32 %v232, %v3714
      %3716 = vmatmul.bf16.gmra.mxu0 %v3695
      %v3717 = vpop.f32.mrf.mxu0
      %v3718 = vadd.f32 %v232, %v3717
      %v3719 = vpop.f32.mrf.mxu0
      %v3720 = vadd.f32 %v232, %v3719
      %3721 = vdwg.mxu0
      %3722 = vrot.lane.b32.xlu0 %v1558, 104
      %v3723 = vpop.permute.xlu0 %3722
      %3724 = vrot.lane.b32.xlu0 %v1559, 104
      %v3725 = vpop.permute.xlu0 %3724
      %3726 = vrot.lane.b32.xlu0 %v1558, 72
      %v3727 = vpop.permute.xlu0 %3726
      %3728 = vrot.lane.b32.xlu0 %v1559, 72
      %v3729 = vpop.permute.xlu0 %3728
      %v3731 = vsel %vm1473, %v3723, 0
      %v3734 = vsel %vm1473, %v3725, 0
      %v3737 = vsel %vm1473, %v3727, 0
      %v3740 = vsel %vm1473, %v3729, 0
      %3742 = vmatpush.bf16.xpose.msra.mxu0 0
      %3743 = vmatpush.bf16.xpose.msra.mxu0 0
      %3744 = vmatpush.bf16.xpose.msra.mxu0 0
      %3745 = vmatpush.bf16.xpose.msra.mxu0 0
      %3746 = vmatpush.bf16.xpose.msra.mxu0 0
      %3747 = vmatpush.bf16.xpose.msra.mxu0 0
      %3748 = vmatpush.bf16.xpose.msra.mxu0 %v3740
      %3749 = vmatpush.bf16.xpose.msra.mxu0 %v3737
      %3750 = vmatmul.bf16.gmra.mxu0 %v3731
      %v3751 = vpop.f32.mrf.mxu0
      %v3752 = vadd.f32 %v232, %v3751
      %v3753 = vpop.f32.mrf.mxu0
      %v3754 = vadd.f32 %v232, %v3753
      %3755 = vmatmul.bf16.gmra.mxu0 %v3734
      %v3756 = vpop.f32.mrf.mxu0
      %v3757 = vadd.f32 %v232, %v3756
      %v3758 = vpop.f32.mrf.mxu0
      %v3759 = vadd.f32 %v232, %v3758
      %3760 = vdwg.mxu0
      %3761 = vrot.lane.b32.xlu0 %v1603, 104
      %v3762 = vpop.permute.xlu0 %3761
      %3763 = vrot.lane.b32.xlu0 %v1604, 104
      %v3764 = vpop.permute.xlu0 %3763
      %3765 = vrot.lane.b32.xlu0 %v1603, 72
      %v3766 = vpop.permute.xlu0 %3765
      %3767 = vrot.lane.b32.xlu0 %v1604, 72
      %v3768 = vpop.permute.xlu0 %3767
      %v3770 = vsel %vm1473, %v3762, 0
      %v3773 = vsel %vm1473, %v3764, 0
      %v3776 = vsel %vm1473, %v3766, 0
      %v3779 = vsel %vm1473, %v3768, 0
      %3781 = vmatpush.bf16.xpose.msra.mxu0 0
      %3782 = vmatpush.bf16.xpose.msra.mxu0 0
      %3783 = vmatpush.bf16.xpose.msra.mxu0 0
      %3784 = vmatpush.bf16.xpose.msra.mxu0 0
      %3785 = vmatpush.bf16.xpose.msra.mxu0 0
      %3786 = vmatpush.bf16.xpose.msra.mxu0 0
      %3787 = vmatpush.bf16.xpose.msra.mxu0 %v3779
      %3788 = vmatpush.bf16.xpose.msra.mxu0 %v3776
      %3789 = vmatmul.bf16.gmra.mxu0 %v3770
      %v3790 = vpop.f32.mrf.mxu0
      %v3791 = vadd.f32 %v232, %v3790
      %v3792 = vpop.f32.mrf.mxu0
      %v3793 = vadd.f32 %v232, %v3792
      %3794 = vmatmul.bf16.gmra.mxu0 %v3773
      %v3795 = vpop.f32.mrf.mxu0
      %v3796 = vadd.f32 %v232, %v3795
      %v3797 = vpop.f32.mrf.mxu0
      %v3798 = vadd.f32 %v232, %v3797
      %3799 = vdwg.mxu0
      %v3800 = vsel %vm562, %v3674, -inf
      %3801 = vmax.xlane.f32.xlu0 %v3800
      %v3802 = vpop.xlane.xlu0 %3801
      %v3803 = vsel %vm562, %v3676, -inf
      %3804 = vmax.xlane.f32.xlu0 %v3803
      %v3805 = vpop.xlane.xlu0 %3804
      %v3806 = vsel %vm562, %v3679, -inf
      %3807 = vmax.xlane.f32.xlu0 %v3806
      %v3808 = vpop.xlane.xlu0 %3807
      %v3809 = vsel %vm562, %v3681, -inf
      %3810 = vmax.xlane.f32.xlu0 %v3809
      %v3811 = vpop.xlane.xlu0 %3810
      %v3812 = vsel %vm562, %v3713, -inf
      %3813 = vmax.xlane.f32.xlu0 %v3812
      %v3814 = vpop.xlane.xlu0 %3813
      %v3815 = vsel %vm562, %v3715, -inf
      %3816 = vmax.xlane.f32.xlu0 %v3815
      %v3817 = vpop.xlane.xlu0 %3816
      %v3818 = vsel %vm562, %v3718, -inf
      %3819 = vmax.xlane.f32.xlu0 %v3818
      %v3820 = vpop.xlane.xlu0 %3819
      %v3821 = vsel %vm562, %v3720, -inf
      %3822 = vmax.xlane.f32.xlu0 %v3821
      %v3823 = vpop.xlane.xlu0 %3822
      %v3824 = vsel %vm562, %v3752, -inf
      %3825 = vmax.xlane.f32.xlu0 %v3824
      %v3826 = vpop.xlane.xlu0 %3825
      %v3827 = vsel %vm562, %v3754, -inf
      %3828 = vmax.xlane.f32.xlu0 %v3827
      %v3829 = vpop.xlane.xlu0 %3828
      %v3830 = vsel %vm562, %v3757, -inf
      %3831 = vmax.xlane.f32.xlu0 %v3830
      %v3832 = vpop.xlane.xlu0 %3831
      %v3833 = vsel %vm562, %v3759, -inf
      %3834 = vmax.xlane.f32.xlu0 %v3833
      %v3835 = vpop.xlane.xlu0 %3834
      %v3836 = vsel %vm562, %v3791, -inf
      %3837 = vmax.xlane.f32.xlu0 %v3836
      %v3838 = vpop.xlane.xlu0 %3837
      %v3839 = vsel %vm562, %v3793, -inf
      %3840 = vmax.xlane.f32.xlu0 %v3839
      %v3841 = vpop.xlane.xlu0 %3840
      %v3842 = vsel %vm562, %v3796, -inf
      %3843 = vmax.xlane.f32.xlu0 %v3842
      %v3844 = vpop.xlane.xlu0 %3843
      %v3845 = vsel %vm562, %v3798, -inf
      %3846 = vmax.xlane.f32.xlu0 %v3845
      %v3847 = vpop.xlane.xlu0 %3846
      %v3848 = vsub.f32 %v3674, %v3802
      %v3849 = vsub.f32 %v3676, %v3805
      %v3850 = vsub.f32 %v3679, %v3808
      %v3851 = vsub.f32 %v3681, %v3811
      %v3852 = vsub.f32 %v3713, %v3814
      %v3853 = vsub.f32 %v3715, %v3817
      %v3854 = vsub.f32 %v3718, %v3820
      %v3855 = vsub.f32 %v3720, %v3823
      %v3856 = vsub.f32 %v3752, %v3826
      %v3857 = vsub.f32 %v3754, %v3829
      %v3858 = vsub.f32 %v3757, %v3832
      %v3859 = vsub.f32 %v3759, %v3835
      %v3860 = vsub.f32 %v3791, %v3838
      %v3861 = vsub.f32 %v3793, %v3841
      %v3862 = vsub.f32 %v3796, %v3844
      %v3863 = vsub.f32 %v3798, %v3847
      %v3864 = vmul.f32 %v3848, 1.442695
      %v3865 = vpow.pop %v3864
      %v3866 = vmul.f32 %v3849, 1.442695
      %v3867 = vpow.pop %v3866
      %v3868 = vmul.f32 %v3850, 1.442695
      %v3869 = vpow.pop %v3868
      %v3870 = vmul.f32 %v3851, 1.442695
      %v3871 = vpow.pop %v3870
      %v3872 = vmul.f32 %v3852, 1.442695
      %v3873 = vpow.pop %v3872
      %v3874 = vmul.f32 %v3853, 1.442695
      %v3875 = vpow.pop %v3874
      %v3876 = vmul.f32 %v3854, 1.442695
      %v3877 = vpow.pop %v3876
      %v3878 = vmul.f32 %v3855, 1.442695
      %v3879 = vpow.pop %v3878
      %v3880 = vmul.f32 %v3856, 1.442695
      %v3881 = vpow.pop %v3880
      %v3882 = vmul.f32 %v3857, 1.442695
      %v3883 = vpow.pop %v3882
      %v3884 = vmul.f32 %v3858, 1.442695
      %v3885 = vpow.pop %v3884
      %v3886 = vmul.f32 %v3859, 1.442695
      %v3887 = vpow.pop %v3886
      %v3888 = vmul.f32 %v3860, 1.442695
      %v3889 = vpow.pop %v3888
      %v3890 = vmul.f32 %v3861, 1.442695
      %v3891 = vpow.pop %v3890
      %v3892 = vmul.f32 %v3862, 1.442695
      %v3893 = vpow.pop %v3892
      %v3894 = vmul.f32 %v3863, 1.442695
      %v3895 = vpow.pop %v3894
      %v3896 = vsel %vm562, %v3865, 0.0
      %3897 = vadd.xlane.f32.xlu0 %v3896
      %v3898 = vpop.xlane.xlu0 %3897
      %v3899 = vsel %vm562, %v3867, 0.0
      %3900 = vadd.xlane.f32.xlu0 %v3899
      %v3901 = vpop.xlane.xlu0 %3900
      %v3902 = vsel %vm562, %v3869, 0.0
      %3903 = vadd.xlane.f32.xlu0 %v3902
      %v3904 = vpop.xlane.xlu0 %3903
      %v3905 = vsel %vm562, %v3871, 0.0
      %3906 = vadd.xlane.f32.xlu0 %v3905
      %v3907 = vpop.xlane.xlu0 %3906
      %v3908 = vsel %vm562, %v3873, 0.0
      %3909 = vadd.xlane.f32.xlu0 %v3908
      %v3910 = vpop.xlane.xlu0 %3909
      %v3911 = vsel %vm562, %v3875, 0.0
      %3912 = vadd.xlane.f32.xlu0 %v3911
      %v3913 = vpop.xlane.xlu0 %3912
      %v3914 = vsel %vm562, %v3877, 0.0
      %3915 = vadd.xlane.f32.xlu0 %v3914
      %v3916 = vpop.xlane.xlu0 %3915
      %v3917 = vsel %vm562, %v3879, 0.0
      %3918 = vadd.xlane.f32.xlu0 %v3917
      %v3919 = vpop.xlane.xlu0 %3918
      %v3920 = vsel %vm562, %v3881, 0.0
      %3921 = vadd.xlane.f32.xlu0 %v3920
      %v3922 = vpop.xlane.xlu0 %3921
      %v3923 = vsel %vm562, %v3883, 0.0
      %3924 = vadd.xlane.f32.xlu0 %v3923
      %v3925 = vpop.xlane.xlu0 %3924
      %v3926 = vsel %vm562, %v3885, 0.0
      %3927 = vadd.xlane.f32.xlu0 %v3926
      %v3928 = vpop.xlane.xlu0 %3927
      %v3929 = vsel %vm562, %v3887, 0.0
      %3930 = vadd.xlane.f32.xlu0 %v3929
      %v3931 = vpop.xlane.xlu0 %3930
      %v3932 = vsel %vm562, %v3889, 0.0
      %3933 = vadd.xlane.f32.xlu0 %v3932
      %v3934 = vpop.xlane.xlu0 %3933
      %v3935 = vsel %vm562, %v3891, 0.0
      %3936 = vadd.xlane.f32.xlu0 %v3935
      %v3937 = vpop.xlane.xlu0 %3936
      %v3938 = vsel %vm562, %v3893, 0.0
      %3939 = vadd.xlane.f32.xlu0 %v3938
      %v3940 = vpop.xlane.xlu0 %3939
      %v3941 = vsel %vm562, %v3895, 0.0
      %3942 = vadd.xlane.f32.xlu0 %v3941
      %v3943 = vpop.xlane.xlu0 %3942
      %v3944 = vrcp.pop %v3898
      %v3945 = vmul.f32 %v3898, %v3944
      %v3946 = vsub.f32 1.0, %v3945
      %v3947 = vmul.f32 %v3944, %v3946
      %v3948 = vadd.f32 %v3944, %v3947
      %vm3949 = vweird.f32 %v3898
      %vm3950 = vweird.f32 %v3944
      %vm3951 = vmor %vm3949, %vm3950
      %v3952 = vsel %vm3951, %v3944, %v3948
      %v3953 = vand.u32 2147483647, %v3898
      %vm3954 = vcmp.eq.f32.partialorder %v3953, 8.507059e+37
      %v3955 = vand.u32 %v3898, 2147483648
      %v3956 = vor.u32 1.1754944e-38, %v3955
      %v3957 = vsel %vm3954, %v3956, %v3952
      %v3958 = vmul.f32 %v3865, %v3957
      %v3959 = vrcp.pop %v3901
      %v3960 = vmul.f32 %v3901, %v3959
      %v3961 = vsub.f32 1.0, %v3960
      %v3962 = vmul.f32 %v3959, %v3961
      %v3963 = vadd.f32 %v3959, %v3962
      %vm3964 = vweird.f32 %v3901
      %vm3965 = vweird.f32 %v3959
      %vm3966 = vmor %vm3964, %vm3965
      %v3967 = vsel %vm3966, %v3959, %v3963
      %v3968 = vand.u32 2147483647, %v3901
      %vm3969 = vcmp.eq.f32.partialorder %v3968, 8.507059e+37
      %v3970 = vand.u32 %v3901, 2147483648
      %v3971 = vor.u32 1.1754944e-38, %v3970
      %v3972 = vsel %vm3969, %v3971, %v3967
      %v3973 = vmul.f32 %v3867, %v3972
      %v3974 = vrcp.pop %v3904
      %v3975 = vmul.f32 %v3904, %v3974
      %v3976 = vsub.f32 1.0, %v3975
      %v3977 = vmul.f32 %v3974, %v3976
      %v3978 = vadd.f32 %v3974, %v3977
      %vm3979 = vweird.f32 %v3904
      %vm3980 = vweird.f32 %v3974
      %vm3981 = vmor %vm3979, %vm3980
      %v3982 = vsel %vm3981, %v3974, %v3978
      %v3983 = vand.u32 2147483647, %v3904
      %vm3984 = vcmp.eq.f32.partialorder %v3983, 8.507059e+37
      %v3985 = vand.u32 %v3904, 2147483648
      %v3986 = vor.u32 1.1754944e-38, %v3985
      %v3987 = vsel %vm3984, %v3986, %v3982
      %v3988 = vmul.f32 %v3869, %v3987
      %v3989 = vrcp.pop %v3907
      %v3990 = vmul.f32 %v3907, %v3989
      %v3991 = vsub.f32 1.0, %v3990
      %v3992 = vmul.f32 %v3989, %v3991
      %v3993 = vadd.f32 %v3989, %v3992
      %vm3994 = vweird.f32 %v3907
      %vm3995 = vweird.f32 %v3989
      %vm3996 = vmor %vm3994, %vm3995
      %v3997 = vsel %vm3996, %v3989, %v3993
      %v3998 = vand.u32 2147483647, %v3907
      %vm3999 = vcmp.eq.f32.partialorder %v3998, 8.507059e+37
      %v4000 = vand.u32 %v3907, 2147483648
      %v4001 = vor.u32 1.1754944e-38, %v4000
      %v4002 = vsel %vm3999, %v4001, %v3997
      %v4003 = vmul.f32 %v3871, %v4002
      %v4004 = vrcp.pop %v3910
      %v4005 = vmul.f32 %v3910, %v4004
      %v4006 = vsub.f32 1.0, %v4005
      %v4007 = vmul.f32 %v4004, %v4006
      %v4008 = vadd.f32 %v4004, %v4007
      %vm4009 = vweird.f32 %v3910
      %vm4010 = vweird.f32 %v4004
      %vm4011 = vmor %vm4009, %vm4010
      %v4012 = vsel %vm4011, %v4004, %v4008
      %v4013 = vand.u32 2147483647, %v3910
      %vm4014 = vcmp.eq.f32.partialorder %v4013, 8.507059e+37
      %v4015 = vand.u32 %v3910, 2147483648
      %v4016 = vor.u32 1.1754944e-38, %v4015
      %v4017 = vsel %vm4014, %v4016, %v4012
      %v4018 = vmul.f32 %v3873, %v4017
      %v4019 = vrcp.pop %v3913
      %v4020 = vmul.f32 %v3913, %v4019
      %v4021 = vsub.f32 1.0, %v4020
      %v4022 = vmul.f32 %v4019, %v4021
      %v4023 = vadd.f32 %v4019, %v4022
      %vm4024 = vweird.f32 %v3913
      %vm4025 = vweird.f32 %v4019
      %vm4026 = vmor %vm4024, %vm4025
      %v4027 = vsel %vm4026, %v4019, %v4023
      %v4028 = vand.u32 2147483647, %v3913
      %vm4029 = vcmp.eq.f32.partialorder %v4028, 8.507059e+37
      %v4030 = vand.u32 %v3913, 2147483648
      %v4031 = vor.u32 1.1754944e-38, %v4030
      %v4032 = vsel %vm4029, %v4031, %v4027
      %v4033 = vmul.f32 %v3875, %v4032
      %v4034 = vrcp.pop %v3916
      %v4035 = vmul.f32 %v3916, %v4034
      %v4036 = vsub.f32 1.0, %v4035
      %v4037 = vmul.f32 %v4034, %v4036
      %v4038 = vadd.f32 %v4034, %v4037
      %vm4039 = vweird.f32 %v3916
      %vm4040 = vweird.f32 %v4034
      %vm4041 = vmor %vm4039, %vm4040
      %v4042 = vsel %vm4041, %v4034, %v4038
      %v4043 = vand.u32 2147483647, %v3916
      %vm4044 = vcmp.eq.f32.partialorder %v4043, 8.507059e+37
      %v4045 = vand.u32 %v3916, 2147483648
      %v4046 = vor.u32 1.1754944e-38, %v4045
      %v4047 = vsel %vm4044, %v4046, %v4042
      %v4048 = vmul.f32 %v3877, %v4047
      %v4049 = vrcp.pop %v3919
      %v4050 = vmul.f32 %v3919, %v4049
      %v4051 = vsub.f32 1.0, %v4050
      %v4052 = vmul.f32 %v4049, %v4051
      %v4053 = vadd.f32 %v4049, %v4052
      %vm4054 = vweird.f32 %v3919
      %vm4055 = vweird.f32 %v4049
      %vm4056 = vmor %vm4054, %vm4055
      %v4057 = vsel %vm4056, %v4049, %v4053
      %v4058 = vand.u32 2147483647, %v3919
      %vm4059 = vcmp.eq.f32.partialorder %v4058, 8.507059e+37
      %v4060 = vand.u32 %v3919, 2147483648
      %v4061 = vor.u32 1.1754944e-38, %v4060
      %v4062 = vsel %vm4059, %v4061, %v4057
      %v4063 = vmul.f32 %v3879, %v4062
      %v4064 = vrcp.pop %v3922
      %v4065 = vmul.f32 %v3922, %v4064
      %v4066 = vsub.f32 1.0, %v4065
      %v4067 = vmul.f32 %v4064, %v4066
      %v4068 = vadd.f32 %v4064, %v4067
      %vm4069 = vweird.f32 %v3922
      %vm4070 = vweird.f32 %v4064
      %vm4071 = vmor %vm4069, %vm4070
      %v4072 = vsel %vm4071, %v4064, %v4068
      %v4073 = vand.u32 2147483647, %v3922
      %vm4074 = vcmp.eq.f32.partialorder %v4073, 8.507059e+37
      %v4075 = vand.u32 %v3922, 2147483648
      %v4076 = vor.u32 1.1754944e-38, %v4075
      %v4077 = vsel %vm4074, %v4076, %v4072
      %v4078 = vmul.f32 %v3881, %v4077
      %v4079 = vrcp.pop %v3925
      %v4080 = vmul.f32 %v3925, %v4079
      %v4081 = vsub.f32 1.0, %v4080
      %v4082 = vmul.f32 %v4079, %v4081
      %v4083 = vadd.f32 %v4079, %v4082
      %vm4084 = vweird.f32 %v3925
      %vm4085 = vweird.f32 %v4079
      %vm4086 = vmor %vm4084, %vm4085
      %v4087 = vsel %vm4086, %v4079, %v4083
      %v4088 = vand.u32 2147483647, %v3925
      %vm4089 = vcmp.eq.f32.partialorder %v4088, 8.507059e+37
      %v4090 = vand.u32 %v3925, 2147483648
      %v4091 = vor.u32 1.1754944e-38, %v4090
      %v4092 = vsel %vm4089, %v4091, %v4087
      %v4093 = vmul.f32 %v3883, %v4092
      %v4094 = vrcp.pop %v3928
      %v4095 = vmul.f32 %v3928, %v4094
      %v4096 = vsub.f32 1.0, %v4095
      %v4097 = vmul.f32 %v4094, %v4096
      %v4098 = vadd.f32 %v4094, %v4097
      %vm4099 = vweird.f32 %v3928
      %vm4100 = vweird.f32 %v4094
      %vm4101 = vmor %vm4099, %vm4100
      %v4102 = vsel %vm4101, %v4094, %v4098
      %v4103 = vand.u32 2147483647, %v3928
      %vm4104 = vcmp.eq.f32.partialorder %v4103, 8.507059e+37
      %v4105 = vand.u32 %v3928, 2147483648
      %v4106 = vor.u32 1.1754944e-38, %v4105
      %v4107 = vsel %vm4104, %v4106, %v4102
      %v4108 = vmul.f32 %v3885, %v4107
      %v4109 = vrcp.pop %v3931
      %v4110 = vmul.f32 %v3931, %v4109
      %v4111 = vsub.f32 1.0, %v4110
      %v4112 = vmul.f32 %v4109, %v4111
      %v4113 = vadd.f32 %v4109, %v4112
      %vm4114 = vweird.f32 %v3931
      %vm4115 = vweird.f32 %v4109
      %vm4116 = vmor %vm4114, %vm4115
      %v4117 = vsel %vm4116, %v4109, %v4113
      %v4118 = vand.u32 2147483647, %v3931
      %vm4119 = vcmp.eq.f32.partialorder %v4118, 8.507059e+37
      %v4120 = vand.u32 %v3931, 2147483648
      %v4121 = vor.u32 1.1754944e-38, %v4120
      %v4122 = vsel %vm4119, %v4121, %v4117
      %v4123 = vmul.f32 %v3887, %v4122
      %v4124 = vrcp.pop %v3934
      %v4125 = vmul.f32 %v3934, %v4124
      %v4126 = vsub.f32 1.0, %v4125
      %v4127 = vmul.f32 %v4124, %v4126
      %v4128 = vadd.f32 %v4124, %v4127
      %vm4129 = vweird.f32 %v3934
      %vm4130 = vweird.f32 %v4124
      %vm4131 = vmor %vm4129, %vm4130
      %v4132 = vsel %vm4131, %v4124, %v4128
      %v4133 = vand.u32 2147483647, %v3934
      %vm4134 = vcmp.eq.f32.partialorder %v4133, 8.507059e+37
      %v4135 = vand.u32 %v3934, 2147483648
      %v4136 = vor.u32 1.1754944e-38, %v4135
      %v4137 = vsel %vm4134, %v4136, %v4132
      %v4138 = vmul.f32 %v3889, %v4137
      %v4139 = vrcp.pop %v3937
      %v4140 = vmul.f32 %v3937, %v4139
      %v4141 = vsub.f32 1.0, %v4140
      %v4142 = vmul.f32 %v4139, %v4141
      %v4143 = vadd.f32 %v4139, %v4142
      %vm4144 = vweird.f32 %v3937
      %vm4145 = vweird.f32 %v4139
      %vm4146 = vmor %vm4144, %vm4145
      %v4147 = vsel %vm4146, %v4139, %v4143
      %v4148 = vand.u32 2147483647, %v3937
      %vm4149 = vcmp.eq.f32.partialorder %v4148, 8.507059e+37
      %v4150 = vand.u32 %v3937, 2147483648
      %v4151 = vor.u32 1.1754944e-38, %v4150
      %v4152 = vsel %vm4149, %v4151, %v4147
      %v4153 = vmul.f32 %v3891, %v4152
      %v4154 = vrcp.pop %v3940
      %v4155 = vmul.f32 %v3940, %v4154
      %v4156 = vsub.f32 1.0, %v4155
      %v4157 = vmul.f32 %v4154, %v4156
      %v4158 = vadd.f32 %v4154, %v4157
      %vm4159 = vweird.f32 %v3940
      %vm4160 = vweird.f32 %v4154
      %vm4161 = vmor %vm4159, %vm4160
      %v4162 = vsel %vm4161, %v4154, %v4158
      %v4163 = vand.u32 2147483647, %v3940
      %vm4164 = vcmp.eq.f32.partialorder %v4163, 8.507059e+37
      %v4165 = vand.u32 %v3940, 2147483648
      %v4166 = vor.u32 1.1754944e-38, %v4165
      %v4167 = vsel %vm4164, %v4166, %v4162
      %v4168 = vmul.f32 %v3893, %v4167
      %v4169 = vrcp.pop %v3943
      %v4170 = vmul.f32 %v3943, %v4169
      %v4171 = vsub.f32 1.0, %v4170
      %v4172 = vmul.f32 %v4169, %v4171
      %v4173 = vadd.f32 %v4169, %v4172
      %vm4174 = vweird.f32 %v3943
      %vm4175 = vweird.f32 %v4169
      %vm4176 = vmor %vm4174, %vm4175
      %v4177 = vsel %vm4176, %v4169, %v4173
      %v4178 = vand.u32 2147483647, %v3943
      %vm4179 = vcmp.eq.f32.partialorder %v4178, 8.507059e+37
      %v4180 = vand.u32 %v3943, 2147483648
      %v4181 = vor.u32 1.1754944e-38, %v4180
      %v4182 = vsel %vm4179, %v4181, %v4177
      %v4183 = vmul.f32 %v3895, %v4182
      %v4184 = vpack.c.bf16 %v3958, %v3958
      %v4185 = vpack.c.bf16 %v3973, %v3973
      %v4186 = vpack.c.bf16 %v3988, %v3988
      %v4187 = vpack.c.bf16 %v4003, %v4003
      %v4188 = vpack.c.bf16 %v4018, %v4018
      %v4189 = vpack.c.bf16 %v4033, %v4033
      %v4190 = vpack.c.bf16 %v4048, %v4048
      %v4191 = vpack.c.bf16 %v4063, %v4063
      %v4192 = vpack.c.bf16 %v4078, %v4078
      %v4193 = vpack.c.bf16 %v4093, %v4093
      %v4194 = vpack.c.bf16 %v4108, %v4108
      %v4195 = vpack.c.bf16 %v4123, %v4123
      %v4196 = vpack.c.bf16 %v4138, %v4138
      %v4197 = vpack.c.bf16 %v4153, %v4153
      %v4198 = vpack.c.bf16 %v4168, %v4168
      %v4199 = vpack.c.bf16 %v4183, %v4183
      %v4204 = vunpack.c.l.b16 %v4184
      %v4205 = vunpack.c.l.b16 %v4185
      %v4206 = vunpack.c.l.b16 %v4186
      %v4207 = vunpack.c.l.b16 %v4187
      %v4208 = vpack.c.b16 %v4205, %v4204
      %v4209 = vpack.c.b16 %v4207, %v4206
      %4210 = vrot.lane.b32.xlu0 %v1467, 40
      %v4211 = vpop.permute.xlu0 %4210
      %4212 = vrot.lane.b32.xlu0 %v1468, 40
      %v4213 = vpop.permute.xlu0 %4212
      %v4217 = vsel %vm562, %v4208, 0
      %v4220 = vsel %vm562, %v4209, 0
      %4222 = vmatpush.bf16.msra.mxu0 0
      %4223 = vmatpush.bf16.msra.mxu0 0
      %4224 = vmatpush.bf16.msra.mxu0 0
      %4225 = vmatpush.bf16.msra.mxu0 0
      %4226 = vmatpush.bf16.msra.mxu0 0
      %4227 = vmatpush.bf16.msra.mxu0 0
      %4228 = vmatpush.bf16.msra.mxu0 %v4213
      %4229 = vmatpush.bf16.msra.mxu0 %v4211
      %4230 = vmatmul.bf16.gmra.mxu0 %v4217
      %v4231 = vpop.f32.mrf.mxu0
      %v4232 = vadd.f32 0.0, %v4231
      %v4233 = vpop.f32.mrf.mxu0
      %v4234 = vadd.f32 0.0, %v4233
      %4235 = vmatmul.bf16.gmra.mxu0 %v4220
      %v4236 = vpop.f32.mrf.mxu0
      %v4237 = vadd.f32 0.0, %v4236
      %v4238 = vpop.f32.mrf.mxu0
      %v4239 = vadd.f32 0.0, %v4238
      %4240 = vdwg.mxu0
      %v4245 = vunpack.c.l.b16 %v4188
      %v4246 = vunpack.c.l.b16 %v4189
      %v4247 = vunpack.c.l.b16 %v4190
      %v4248 = vunpack.c.l.b16 %v4191
      %v4249 = vpack.c.b16 %v4246, %v4245
      %v4250 = vpack.c.b16 %v4248, %v4247
      %4251 = vrot.lane.b32.xlu0 %v1513, 40
      %v4252 = vpop.permute.xlu0 %4251
      %4253 = vrot.lane.b32.xlu0 %v1514, 40
      %v4254 = vpop.permute.xlu0 %4253
      %v4258 = vsel %vm562, %v4249, 0
      %v4261 = vsel %vm562, %v4250, 0
      %4263 = vmatpush.bf16.msra.mxu0 0
      %4264 = vmatpush.bf16.msra.mxu0 0
      %4265 = vmatpush.bf16.msra.mxu0 0
      %4266 = vmatpush.bf16.msra.mxu0 0
      %4267 = vmatpush.bf16.msra.mxu0 0
      %4268 = vmatpush.bf16.msra.mxu0 0
      %4269 = vmatpush.bf16.msra.mxu0 %v4254
      %4270 = vmatpush.bf16.msra.mxu0 %v4252
      %4271 = vmatmul.bf16.gmra.mxu0 %v4258
      %v4272 = vpop.f32.mrf.mxu0
      %v4273 = vadd.f32 0.0, %v4272
      %v4274 = vpop.f32.mrf.mxu0
      %v4275 = vadd.f32 0.0, %v4274
      %4276 = vmatmul.bf16.gmra.mxu0 %v4261
      %v4277 = vpop.f32.mrf.mxu0
      %v4278 = vadd.f32 0.0, %v4277
      %v4279 = vpop.f32.mrf.mxu0
      %v4280 = vadd.f32 0.0, %v4279
      %4281 = vdwg.mxu0
      %v4286 = vunpack.c.l.b16 %v4192
      %v4287 = vunpack.c.l.b16 %v4193
      %v4288 = vunpack.c.l.b16 %v4194
      %v4289 = vunpack.c.l.b16 %v4195
      %v4290 = vpack.c.b16 %v4287, %v4286
      %v4291 = vpack.c.b16 %v4289, %v4288
      %4292 = vrot.lane.b32.xlu0 %v1558, 40
      %v4293 = vpop.permute.xlu0 %4292
      %4294 = vrot.lane.b32.xlu0 %v1559, 40
      %v4295 = vpop.permute.xlu0 %4294
      %v4299 = vsel %vm562, %v4290, 0
      %v4302 = vsel %vm562, %v4291, 0
      %4304 = vmatpush.bf16.msra.mxu0 0
      %4305 = vmatpush.bf16.msra.mxu0 0
      %4306 = vmatpush.bf16.msra.mxu0 0
      %4307 = vmatpush.bf16.msra.mxu0 0
      %4308 = vmatpush.bf16.msra.mxu0 0
      %4309 = vmatpush.bf16.msra.mxu0 0
      %4310 = vmatpush.bf16.msra.mxu0 %v4295
      %4311 = vmatpush.bf16.msra.mxu0 %v4293
      %4312 = vmatmul.bf16.gmra.mxu0 %v4299
      %v4313 = vpop.f32.mrf.mxu0
      %v4314 = vadd.f32 0.0, %v4313
      %v4315 = vpop.f32.mrf.mxu0
      %v4316 = vadd.f32 0.0, %v4315
      %4317 = vmatmul.bf16.gmra.mxu0 %v4302
      %v4318 = vpop.f32.mrf.mxu0
      %v4319 = vadd.f32 0.0, %v4318
      %v4320 = vpop.f32.mrf.mxu0
      %v4321 = vadd.f32 0.0, %v4320
      %4322 = vdwg.mxu0
      %v4327 = vunpack.c.l.b16 %v4196
      %v4328 = vunpack.c.l.b16 %v4197
      %v4329 = vunpack.c.l.b16 %v4198
      %v4330 = vunpack.c.l.b16 %v4199
      %v4331 = vpack.c.b16 %v4328, %v4327
      %v4332 = vpack.c.b16 %v4330, %v4329
      %4333 = vrot.lane.b32.xlu0 %v1603, 40
      %v4334 = vpop.permute.xlu0 %4333
      %4335 = vrot.lane.b32.xlu0 %v1604, 40
      %v4336 = vpop.permute.xlu0 %4335
      %v4340 = vsel %vm562, %v4331, 0
      %v4343 = vsel %vm562, %v4332, 0
      %4345 = vmatpush.bf16.msra.mxu0 0
      %4346 = vmatpush.bf16.msra.mxu0 0
      %4347 = vmatpush.bf16.msra.mxu0 0
      %4348 = vmatpush.bf16.msra.mxu0 0
      %4349 = vmatpush.bf16.msra.mxu0 0
      %4350 = vmatpush.bf16.msra.mxu0 0
      %4351 = vmatpush.bf16.msra.mxu0 %v4336
      %4352 = vmatpush.bf16.msra.mxu0 %v4334
      %4353 = vmatmul.bf16.gmra.mxu0 %v4340
      %v4354 = vpop.f32.mrf.mxu0
      %v4355 = vadd.f32 0.0, %v4354
      %v4356 = vpop.f32.mrf.mxu0
      %v4357 = vadd.f32 0.0, %v4356
      %4358 = vmatmul.bf16.gmra.mxu0 %v4343
      %v4359 = vpop.f32.mrf.mxu0
      %v4360 = vadd.f32 0.0, %v4359
      %v4361 = vpop.f32.mrf.mxu0
      %v4362 = vadd.f32 0.0, %v4361
      %4363 = vdwg.mxu0
      %4380 = vrot.lane.b32.xlu0 %v2792, 8
      %v4381 = vpop.permute.xlu0 %4380
      %4382 = vrot.lane.b32.xlu0 %v2794, 8
      %v4383 = vpop.permute.xlu0 %4382
      %4384 = vrot.lane.b32.xlu0 %v2797, 8
      %v4385 = vpop.permute.xlu0 %4384
      %4386 = vrot.lane.b32.xlu0 %v2799, 8
      %v4387 = vpop.permute.xlu0 %4386
      %4388 = vrot.lane.b32.xlu0 %v2833, 8
      %v4389 = vpop.permute.xlu0 %4388
      %4390 = vrot.lane.b32.xlu0 %v2835, 8
      %v4391 = vpop.permute.xlu0 %4390
      %4392 = vrot.lane.b32.xlu0 %v2838, 8
      %v4393 = vpop.permute.xlu0 %4392
      %4394 = vrot.lane.b32.xlu0 %v2840, 8
      %v4395 = vpop.permute.xlu0 %4394
      %4396 = vrot.lane.b32.xlu0 %v2874, 8
      %v4397 = vpop.permute.xlu0 %4396
      %4398 = vrot.lane.b32.xlu0 %v2876, 8
      %v4399 = vpop.permute.xlu0 %4398
      %4400 = vrot.lane.b32.xlu0 %v2879, 8
      %v4401 = vpop.permute.xlu0 %4400
      %4402 = vrot.lane.b32.xlu0 %v2881, 8
      %v4403 = vpop.permute.xlu0 %4402
      %4404 = vrot.lane.b32.xlu0 %v2915, 8
      %v4405 = vpop.permute.xlu0 %4404
      %4406 = vrot.lane.b32.xlu0 %v2917, 8
      %v4407 = vpop.permute.xlu0 %4406
      %4408 = vrot.lane.b32.xlu0 %v2920, 8
      %v4409 = vpop.permute.xlu0 %4408
      %4410 = vrot.lane.b32.xlu0 %v2922, 8
      %v4411 = vpop.permute.xlu0 %4410
      %4444 = vrot.lane.b32.xlu0 %v3512, 16
      %v4445 = vpop.permute.xlu0 %4444
      %4446 = vrot.lane.b32.xlu0 %v3514, 16
      %v4447 = vpop.permute.xlu0 %4446
      %4448 = vrot.lane.b32.xlu0 %v3517, 16
      %v4449 = vpop.permute.xlu0 %4448
      %4450 = vrot.lane.b32.xlu0 %v3519, 16
      %v4451 = vpop.permute.xlu0 %4450
      %4452 = vrot.lane.b32.xlu0 %v3553, 16
      %v4453 = vpop.permute.xlu0 %4452
      %4454 = vrot.lane.b32.xlu0 %v3555, 16
      %v4455 = vpop.permute.xlu0 %4454
      %4456 = vrot.lane.b32.xlu0 %v3558, 16
      %v4457 = vpop.permute.xlu0 %4456
      %4458 = vrot.lane.b32.xlu0 %v3560, 16
      %v4459 = vpop.permute.xlu0 %4458
      %4460 = vrot.lane.b32.xlu0 %v3594, 16
      %v4461 = vpop.permute.xlu0 %4460
      %4462 = vrot.lane.b32.xlu0 %v3596, 16
      %v4463 = vpop.permute.xlu0 %4462
      %4464 = vrot.lane.b32.xlu0 %v3599, 16
      %v4465 = vpop.permute.xlu0 %4464
      %4466 = vrot.lane.b32.xlu0 %v3601, 16
      %v4467 = vpop.permute.xlu0 %4466
      %4468 = vrot.lane.b32.xlu0 %v3635, 16
      %v4469 = vpop.permute.xlu0 %4468
      %4470 = vrot.lane.b32.xlu0 %v3637, 16
      %v4471 = vpop.permute.xlu0 %4470
      %4472 = vrot.lane.b32.xlu0 %v3640, 16
      %v4473 = vpop.permute.xlu0 %4472
      %4474 = vrot.lane.b32.xlu0 %v3642, 16
      %v4475 = vpop.permute.xlu0 %4474
      %4508 = vrot.lane.b32.xlu0 %v4232, 24
      %v4509 = vpop.permute.xlu0 %4508
      %4510 = vrot.lane.b32.xlu0 %v4234, 24
      %v4511 = vpop.permute.xlu0 %4510
      %4512 = vrot.lane.b32.xlu0 %v4237, 24
      %v4513 = vpop.permute.xlu0 %4512
      %4514 = vrot.lane.b32.xlu0 %v4239, 24
      %v4515 = vpop.permute.xlu0 %4514
      %4516 = vrot.lane.b32.xlu0 %v4273, 24
      %v4517 = vpop.permute.xlu0 %4516
      %4518 = vrot.lane.b32.xlu0 %v4275, 24
      %v4519 = vpop.permute.xlu0 %4518
      %4520 = vrot.lane.b32.xlu0 %v4278, 24
      %v4521 = vpop.permute.xlu0 %4520
      %4522 = vrot.lane.b32.xlu0 %v4280, 24
      %v4523 = vpop.permute.xlu0 %4522
      %4524 = vrot.lane.b32.xlu0 %v4314, 24
      %v4525 = vpop.permute.xlu0 %4524
      %4526 = vrot.lane.b32.xlu0 %v4316, 24
      %v4527 = vpop.permute.xlu0 %4526
      %4528 = vrot.lane.b32.xlu0 %v4319, 24
      %v4529 = vpop.permute.xlu0 %4528
      %4530 = vrot.lane.b32.xlu0 %v4321, 24
      %v4531 = vpop.permute.xlu0 %4530
      %4532 = vrot.lane.b32.xlu0 %v4355, 24
      %v4533 = vpop.permute.xlu0 %4532
      %4534 = vrot.lane.b32.xlu0 %v4357, 24
      %v4535 = vpop.permute.xlu0 %4534
      %4536 = vrot.lane.b32.xlu0 %v4360, 24
      %v4537 = vpop.permute.xlu0 %4536
      %4538 = vrot.lane.b32.xlu0 %v4362, 24
      %v4539 = vpop.permute.xlu0 %4538
      %v4556 = vsel %vm1473, %v2072, %v4381
      %v4557 = vsel %vm1473, %v2074, %v4383
      %v4558 = vsel %vm1473, %v2077, %v4385
      %v4559 = vsel %vm1473, %v2079, %v4387
      %v4560 = vsel %vm1473, %v2113, %v4389
      %v4561 = vsel %vm1473, %v2115, %v4391
      %v4562 = vsel %vm1473, %v2118, %v4393
      %v4563 = vsel %vm1473, %v2120, %v4395
      %v4564 = vsel %vm1473, %v2154, %v4397
      %v4565 = vsel %vm1473, %v2156, %v4399
      %v4566 = vsel %vm1473, %v2159, %v4401
      %v4567 = vsel %vm1473, %v2161, %v4403
      %v4568 = vsel %vm1473, %v2195, %v4405
      %v4569 = vsel %vm1473, %v2197, %v4407
      %v4570 = vsel %vm1473, %v2200, %v4409
      %v4571 = vsel %vm1473, %v2202, %v4411
      %vm4572 = vcmask 130048
      %v4573 = vsel %vm4572, %v4556, %v4445
      %v4574 = vsel %vm4572, %v4557, %v4447
      %v4575 = vsel %vm4572, %v4558, %v4449
      %v4576 = vsel %vm4572, %v4559, %v4451
      %v4577 = vsel %vm4572, %v4560, %v4453
      %v4578 = vsel %vm4572, %v4561, %v4455
      %v4579 = vsel %vm4572, %v4562, %v4457
      %v4580 = vsel %vm4572, %v4563, %v4459
      %v4581 = vsel %vm4572, %v4564, %v4461
      %v4582 = vsel %vm4572, %v4565, %v4463
      %v4583 = vsel %vm4572, %v4566, %v4465
      %v4584 = vsel %vm4572, %v4567, %v4467
      %v4585 = vsel %vm4572, %v4568, %v4469
      %v4586 = vsel %vm4572, %v4569, %v4471
      %v4587 = vsel %vm4572, %v4570, %v4473
      %v4588 = vsel %vm4572, %v4571, %v4475
      %vm4589 = vcmask 195584
      %v4590 = vsel %vm4589, %v4573, %v4509
      %v4591 = vsel %vm4589, %v4574, %v4511
      %v4592 = vsel %vm4589, %v4575, %v4513
      %v4593 = vsel %vm4589, %v4576, %v4515
      %v4594 = vsel %vm4589, %v4577, %v4517
      %v4595 = vsel %vm4589, %v4578, %v4519
      %v4596 = vsel %vm4589, %v4579, %v4521
      %v4597 = vsel %vm4589, %v4580, %v4523
      %v4598 = vsel %vm4589, %v4581, %v4525
      %v4599 = vsel %vm4589, %v4582, %v4527
      %v4600 = vsel %vm4589, %v4583, %v4529
      %v4601 = vsel %vm4589, %v4584, %v4531
      %v4602 = vsel %vm4589, %v4585, %v4533
      %v4603 = vsel %vm4589, %v4586, %v4535
      %v4604 = vsel %vm4589, %v4587, %v4537
      %v4605 = vsel %vm4589, %v4588, %v4539
      %v4606 = vld [vmem:[%s1 + $0x60] sm:$0xf]
      %v4607 = vld [vmem:[%s1 + $0x64] sm:$0xf]
      %v4608 = vld [vmem:[%s1 + $0x68] sm:$0xf]
      %v4609 = vld [vmem:[%s1 + $0x6c] sm:$0xf]
      %v4610 = vpack.c.bf16 %v4591, %v4590
      %v4611 = vpack.c.bf16 %v4593, %v4592
      %v4612 = vpack.c.bf16 %v4595, %v4594
      %v4613 = vpack.c.bf16 %v4597, %v4596
      %v4614 = vpack.c.bf16 %v4599, %v4598
      %v4615 = vpack.c.bf16 %v4601, %v4600
      %v4616 = vpack.c.bf16 %v4603, %v4602
      %v4617 = vpack.c.bf16 %v4605, %v4604
      %v4622 = vunpack.c.l.b16 %v4606
      %v4623 = vunpack.c.l.b16 %v4607
      %v4624 = vunpack.c.l.b16 %v4608
      %v4625 = vunpack.c.l.b16 %v4609
      %v4626 = vpack.c.b16 %v4623, %v4622
      %v4627 = vpack.c.b16 %v4625, %v4624
      %v4631 = vsel %vm562, %v4610, 0
      %v4634 = vsel %vm562, %v4611, 0
      %v4637 = vsel %vm562, %v4612, 0
      %v4640 = vsel %vm562, %v4613, 0
      %v4643 = vsel %vm562, %v4614, 0
      %v4646 = vsel %vm562, %v4615, 0
      %v4649 = vsel %vm562, %v4616, 0
      %v4652 = vsel %vm562, %v4617, 0
      %4654 = vmatpush.bf16.msra.mxu0 0
      %4655 = vmatpush.bf16.msra.mxu0 0
      %4656 = vmatpush.bf16.msra.mxu0 0
      %4657 = vmatpush.bf16.msra.mxu0 0
      %4658 = vmatpush.bf16.msra.mxu0 0
      %4659 = vmatpush.bf16.msra.mxu0 0
      %4660 = vmatpush.bf16.msra.mxu0 %v4627
      %4661 = vmatpush.bf16.msra.mxu0 %v4626
      %4662 = vmatmul.bf16.gmra.mxu0 %v4631
      %v4663 = vpop.f32.mrf.mxu0
      %v4664 = vadd.f32 0.0, %v4663
      %v4665 = vpop.f32.mrf.mxu0
      %v4666 = vadd.f32 0.0, %v4665
      %4667 = vmatmul.bf16.gmra.mxu0 %v4634
      %v4668 = vpop.f32.mrf.mxu0
      %v4669 = vadd.f32 0.0, %v4668
      %v4670 = vpop.f32.mrf.mxu0
      %v4671 = vadd.f32 0.0, %v4670
      %4672 = vmatmul.bf16.gmra.mxu0 %v4637
      %v4673 = vpop.f32.mrf.mxu0
      %v4674 = vadd.f32 0.0, %v4673
      %v4675 = vpop.f32.mrf.mxu0
      %v4676 = vadd.f32 0.0, %v4675
      %4677 = vmatmul.bf16.gmra.mxu0 %v4640
      %v4678 = vpop.f32.mrf.mxu0
      %v4679 = vadd.f32 0.0, %v4678
      %v4680 = vpop.f32.mrf.mxu0
      %v4681 = vadd.f32 0.0, %v4680
      %4682 = vmatmul.bf16.gmra.mxu0 %v4643
      %v4683 = vpop.f32.mrf.mxu0
      %v4684 = vadd.f32 0.0, %v4683
      %v4685 = vpop.f32.mrf.mxu0
      %v4686 = vadd.f32 0.0, %v4685
      %4687 = vmatmul.bf16.gmra.mxu0 %v4646
      %v4688 = vpop.f32.mrf.mxu0
      %v4689 = vadd.f32 0.0, %v4688
      %v4690 = vpop.f32.mrf.mxu0
      %v4691 = vadd.f32 0.0, %v4690
      %4692 = vmatmul.bf16.gmra.mxu0 %v4649
      %v4693 = vpop.f32.mrf.mxu0
      %v4694 = vadd.f32 0.0, %v4693
      %v4695 = vpop.f32.mrf.mxu0
      %v4696 = vadd.f32 0.0, %v4695
      %4697 = vmatmul.bf16.gmra.mxu0 %v4652
      %v4698 = vpop.f32.mrf.mxu0
      %v4699 = vadd.f32 0.0, %v4698
      %v4700 = vpop.f32.mrf.mxu0
      %v4701 = vadd.f32 0.0, %v4700
      %4702 = vdwg.mxu0
      %v4703 = vadd.f32 %v940, %v4664
      %v4704 = vadd.f32 %v941, %v4666
      %v4705 = vadd.f32 %v942, %v4669
      %v4706 = vadd.f32 %v943, %v4671
      %v4707 = vadd.f32 %v944, %v4674
      %v4708 = vadd.f32 %v945, %v4676
      %v4709 = vadd.f32 %v946, %v4679
      %v4710 = vadd.f32 %v947, %v4681
      %v4711 = vadd.f32 %v948, %v4684
      %v4712 = vadd.f32 %v949, %v4686
      %v4713 = vadd.f32 %v950, %v4689
      %v4714 = vadd.f32 %v951, %v4691
      %v4715 = vadd.f32 %v952, %v4694
      %v4716 = vadd.f32 %v953, %v4696
      %v4717 = vadd.f32 %v954, %v4699
      %v4718 = vadd.f32 %v955, %v4701
      %v4719 = vld [vmem:[%s3 + $0x28] sm:$0x1]
      %v4720 = vperm.slane %v4719, 0
      %v4721 = vadd.f32 %v4703, %v4720
      %v4722 = vadd.f32 %v4704, %v4720
      %v4723 = vadd.f32 %v4705, %v4720
      %v4724 = vadd.f32 %v4706, %v4720
      %v4725 = vadd.f32 %v4707, %v4720
      %v4726 = vadd.f32 %v4708, %v4720
      %v4727 = vadd.f32 %v4709, %v4720
      %v4728 = vadd.f32 %v4710, %v4720
      %v4729 = vadd.f32 %v4711, %v4720
      %v4730 = vadd.f32 %v4712, %v4720
      %v4731 = vadd.f32 %v4713, %v4720
      %v4732 = vadd.f32 %v4714, %v4720
      %v4733 = vadd.f32 %v4715, %v4720
      %v4734 = vadd.f32 %v4716, %v4720
      %v4735 = vadd.f32 %v4717, %v4720
      %v4736 = vadd.f32 %v4718, %v4720
      %v4737 = vld [vmem:[%s3 + $0x26] sm:$0x1]
      %v4738 = vld [vmem:[%s3 + $0x27] sm:$0x1]
      %v4739 = vsel %vm562, %v4721, 0.0
      %4740 = vadd.xlane.f32.xlu0 %v4739
      %v4741 = vpop.xlane.xlu0 %4740
      %v4742 = vsel %vm562, %v4722, 0.0
      %4743 = vadd.xlane.f32.xlu0 %v4742
      %v4744 = vpop.xlane.xlu0 %4743
      %v4745 = vsel %vm562, %v4723, 0.0
      %4746 = vadd.xlane.f32.xlu0 %v4745
      %v4747 = vpop.xlane.xlu0 %4746
      %v4748 = vsel %vm562, %v4724, 0.0
      %4749 = vadd.xlane.f32.xlu0 %v4748
      %v4750 = vpop.xlane.xlu0 %4749
      %v4751 = vsel %vm562, %v4725, 0.0
      %4752 = vadd.xlane.f32.xlu0 %v4751
      %v4753 = vpop.xlane.xlu0 %4752
      %v4754 = vsel %vm562, %v4726, 0.0
      %4755 = vadd.xlane.f32.xlu0 %v4754
      %v4756 = vpop.xlane.xlu0 %4755
      %v4757 = vsel %vm562, %v4727, 0.0
      %4758 = vadd.xlane.f32.xlu0 %v4757
      %v4759 = vpop.xlane.xlu0 %4758
      %v4760 = vsel %vm562, %v4728, 0.0
      %4761 = vadd.xlane.f32.xlu0 %v4760
      %v4762 = vpop.xlane.xlu0 %4761
      %v4763 = vsel %vm562, %v4729, 0.0
      %4764 = vadd.xlane.f32.xlu0 %v4763
      %v4765 = vpop.xlane.xlu0 %4764
      %v4766 = vsel %vm562, %v4730, 0.0
      %4767 = vadd.xlane.f32.xlu0 %v4766
      %v4768 = vpop.xlane.xlu0 %4767
      %v4769 = vsel %vm562, %v4731, 0.0
      %4770 = vadd.xlane.f32.xlu0 %v4769
      %v4771 = vpop.xlane.xlu0 %4770
      %v4772 = vsel %vm562, %v4732, 0.0
      %4773 = vadd.xlane.f32.xlu0 %v4772
      %v4774 = vpop.xlane.xlu0 %4773
      %v4775 = vsel %vm562, %v4733, 0.0
      %4776 = vadd.xlane.f32.xlu0 %v4775
      %v4777 = vpop.xlane.xlu0 %4776
      %v4778 = vsel %vm562, %v4734, 0.0
      %4779 = vadd.xlane.f32.xlu0 %v4778
      %v4780 = vpop.xlane.xlu0 %4779
      %v4781 = vsel %vm562, %v4735, 0.0
      %4782 = vadd.xlane.f32.xlu0 %v4781
      %v4783 = vpop.xlane.xlu0 %4782
      %v4784 = vsel %vm562, %v4736, 0.0
      %4785 = vadd.xlane.f32.xlu0 %v4784
      %v4786 = vpop.xlane.xlu0 %4785
      %v4787 = vmul.f32 %v4741, %v617
      %v4788 = vmul.f32 %v4744, %v617
      %v4789 = vmul.f32 %v4747, %v617
      %v4790 = vmul.f32 %v4750, %v617
      %v4791 = vmul.f32 %v4753, %v617
      %v4792 = vmul.f32 %v4756, %v617
      %v4793 = vmul.f32 %v4759, %v617
      %v4794 = vmul.f32 %v4762, %v617
      %v4795 = vmul.f32 %v4765, %v617
      %v4796 = vmul.f32 %v4768, %v617
      %v4797 = vmul.f32 %v4771, %v617
      %v4798 = vmul.f32 %v4774, %v617
      %v4799 = vmul.f32 %v4777, %v617
      %v4800 = vmul.f32 %v4780, %v617
      %v4801 = vmul.f32 %v4783, %v617
      %v4802 = vmul.f32 %v4786, %v617
      %v4803 = vsub.f32 %v4721, %v4787
      %v4804 = vsub.f32 %v4722, %v4788
      %v4805 = vsub.f32 %v4723, %v4789
      %v4806 = vsub.f32 %v4724, %v4790
      %v4807 = vsub.f32 %v4725, %v4791
      %v4808 = vsub.f32 %v4726, %v4792
      %v4809 = vsub.f32 %v4727, %v4793
      %v4810 = vsub.f32 %v4728, %v4794
      %v4811 = vsub.f32 %v4729, %v4795
      %v4812 = vsub.f32 %v4730, %v4796
      %v4813 = vsub.f32 %v4731, %v4797
      %v4814 = vsub.f32 %v4732, %v4798
      %v4815 = vsub.f32 %v4733, %v4799
      %v4816 = vsub.f32 %v4734, %v4800
      %v4817 = vsub.f32 %v4735, %v4801
      %v4818 = vsub.f32 %v4736, %v4802
      %v4819 = vmul.f32 %v4803, %v4803
      %v4820 = vmul.f32 %v4804, %v4804
      %v4821 = vmul.f32 %v4805, %v4805
      %v4822 = vmul.f32 %v4806, %v4806
      %v4823 = vmul.f32 %v4807, %v4807
      %v4824 = vmul.f32 %v4808, %v4808
      %v4825 = vmul.f32 %v4809, %v4809
      %v4826 = vmul.f32 %v4810, %v4810
      %v4827 = vmul.f32 %v4811, %v4811
      %v4828 = vmul.f32 %v4812, %v4812
      %v4829 = vmul.f32 %v4813, %v4813
      %v4830 = vmul.f32 %v4814, %v4814
      %v4831 = vmul.f32 %v4815, %v4815
      %v4832 = vmul.f32 %v4816, %v4816
      %v4833 = vmul.f32 %v4817, %v4817
      %v4834 = vmul.f32 %v4818, %v4818
      %v4835 = vsel %vm562, %v4819, 0.0
      %4836 = vadd.xlane.f32.xlu0 %v4835
      %v4837 = vpop.xlane.xlu0 %4836
      %v4838 = vsel %vm562, %v4820, 0.0
      %4839 = vadd.xlane.f32.xlu0 %v4838
      %v4840 = vpop.xlane.xlu0 %4839
      %v4841 = vsel %vm562, %v4821, 0.0
      %4842 = vadd.xlane.f32.xlu0 %v4841
      %v4843 = vpop.xlane.xlu0 %4842
      %v4844 = vsel %vm562, %v4822, 0.0
      %4845 = vadd.xlane.f32.xlu0 %v4844
      %v4846 = vpop.xlane.xlu0 %4845
      %v4847 = vsel %vm562, %v4823, 0.0
      %4848 = vadd.xlane.f32.xlu0 %v4847
      %v4849 = vpop.xlane.xlu0 %4848
      %v4850 = vsel %vm562, %v4824, 0.0
      %4851 = vadd.xlane.f32.xlu0 %v4850
      %v4852 = vpop.xlane.xlu0 %4851
      %v4853 = vsel %vm562, %v4825, 0.0
      %4854 = vadd.xlane.f32.xlu0 %v4853
      %v4855 = vpop.xlane.xlu0 %4854
      %v4856 = vsel %vm562, %v4826, 0.0
      %4857 = vadd.xlane.f32.xlu0 %v4856
      %v4858 = vpop.xlane.xlu0 %4857
      %v4859 = vsel %vm562, %v4827, 0.0
      %4860 = vadd.xlane.f32.xlu0 %v4859
      %v4861 = vpop.xlane.xlu0 %4860
      %v4862 = vsel %vm562, %v4828, 0.0
      %4863 = vadd.xlane.f32.xlu0 %v4862
      %v4864 = vpop.xlane.xlu0 %4863
      %v4865 = vsel %vm562, %v4829, 0.0
      %4866 = vadd.xlane.f32.xlu0 %v4865
      %v4867 = vpop.xlane.xlu0 %4866
      %v4868 = vsel %vm562, %v4830, 0.0
      %4869 = vadd.xlane.f32.xlu0 %v4868
      %v4870 = vpop.xlane.xlu0 %4869
      %v4871 = vsel %vm562, %v4831, 0.0
      %4872 = vadd.xlane.f32.xlu0 %v4871
      %v4873 = vpop.xlane.xlu0 %4872
      %v4874 = vsel %vm562, %v4832, 0.0
      %4875 = vadd.xlane.f32.xlu0 %v4874
      %v4876 = vpop.xlane.xlu0 %4875
      %v4877 = vsel %vm562, %v4833, 0.0
      %4878 = vadd.xlane.f32.xlu0 %v4877
      %v4879 = vpop.xlane.xlu0 %4878
      %v4880 = vsel %vm562, %v4834, 0.0
      %4881 = vadd.xlane.f32.xlu0 %v4880
      %v4882 = vpop.xlane.xlu0 %4881
      %v4883 = vmul.f32 %v4837, %v617
      %v4884 = vmul.f32 %v4840, %v617
      %v4885 = vmul.f32 %v4843, %v617
      %v4886 = vmul.f32 %v4846, %v617
      %v4887 = vmul.f32 %v4849, %v617
      %v4888 = vmul.f32 %v4852, %v617
      %v4889 = vmul.f32 %v4855, %v617
      %v4890 = vmul.f32 %v4858, %v617
      %v4891 = vmul.f32 %v4861, %v617
      %v4892 = vmul.f32 %v4864, %v617
      %v4893 = vmul.f32 %v4867, %v617
      %v4894 = vmul.f32 %v4870, %v617
      %v4895 = vmul.f32 %v4873, %v617
      %v4896 = vmul.f32 %v4876, %v617
      %v4897 = vmul.f32 %v4879, %v617
      %v4898 = vmul.f32 %v4882, %v617
      %v4899 = vadd.f32 %v4883, 1e-05
      %v4900 = vadd.f32 %v4884, 1e-05
      %v4901 = vadd.f32 %v4885, 1e-05
      %v4902 = vadd.f32 %v4886, 1e-05
      %v4903 = vadd.f32 %v4887, 1e-05
      %v4904 = vadd.f32 %v4888, 1e-05
      %v4905 = vadd.f32 %v4889, 1e-05
      %v4906 = vadd.f32 %v4890, 1e-05
      %v4907 = vadd.f32 %v4891, 1e-05
      %v4908 = vadd.f32 %v4892, 1e-05
      %v4909 = vadd.f32 %v4893, 1e-05
      %v4910 = vadd.f32 %v4894, 1e-05
      %v4911 = vadd.f32 %v4895, 1e-05
      %v4912 = vadd.f32 %v4896, 1e-05
      %v4913 = vadd.f32 %v4897, 1e-05
      %v4914 = vadd.f32 %v4898, 1e-05
      %v4915 = vrsqrt.pop %v4899
      %v4916 = vmul.f32 %v4915, %v4899
      %v4917 = vmul.f32 %v4916, %v4915
      %v4918 = vmul.f32 0.5, %v4917
      %v4919 = vsub.f32 1.5, %v4918
      %v4920 = vmul.f32 %v4915, %v4919
      %vm4921 = vweird.f32 %v4899
      %vm4922 = vweird.f32 %v4915
      %vm4923 = vmor %vm4921, %vm4922
      %v4924 = vsel %vm4923, %v4915, %v4920
      %v4925 = vrsqrt.pop %v4900
      %v4926 = vmul.f32 %v4925, %v4900
      %v4927 = vmul.f32 %v4926, %v4925
      %v4928 = vmul.f32 0.5, %v4927
      %v4929 = vsub.f32 1.5, %v4928
      %v4930 = vmul.f32 %v4925, %v4929
      %vm4931 = vweird.f32 %v4900
      %vm4932 = vweird.f32 %v4925
      %vm4933 = vmor %vm4931, %vm4932
      %v4934 = vsel %vm4933, %v4925, %v4930
      %v4935 = vrsqrt.pop %v4901
      %v4936 = vmul.f32 %v4935, %v4901
      %v4937 = vmul.f32 %v4936, %v4935
      %v4938 = vmul.f32 0.5, %v4937
      %v4939 = vsub.f32 1.5, %v4938
      %v4940 = vmul.f32 %v4935, %v4939
      %vm4941 = vweird.f32 %v4901
      %vm4942 = vweird.f32 %v4935
      %vm4943 = vmor %vm4941, %vm4942
      %v4944 = vsel %vm4943, %v4935, %v4940
      %v4945 = vrsqrt.pop %v4902
      %v4946 = vmul.f32 %v4945, %v4902
      %v4947 = vmul.f32 %v4946, %v4945
      %v4948 = vmul.f32 0.5, %v4947
      %v4949 = vsub.f32 1.5, %v4948
      %v4950 = vmul.f32 %v4945, %v4949
      %vm4951 = vweird.f32 %v4902
      %vm4952 = vweird.f32 %v4945
      %vm4953 = vmor %vm4951, %vm4952
      %v4954 = vsel %vm4953, %v4945, %v4950
      %v4955 = vrsqrt.pop %v4903
      %v4956 = vmul.f32 %v4955, %v4903
      %v4957 = vmul.f32 %v4956, %v4955
      %v4958 = vmul.f32 0.5, %v4957
      %v4959 = vsub.f32 1.5, %v4958
      %v4960 = vmul.f32 %v4955, %v4959
      %vm4961 = vweird.f32 %v4903
      %vm4962 = vweird.f32 %v4955
      %vm4963 = vmor %vm4961, %vm4962
      %v4964 = vsel %vm4963, %v4955, %v4960
      %v4965 = vrsqrt.pop %v4904
      %v4966 = vmul.f32 %v4965, %v4904
      %v4967 = vmul.f32 %v4966, %v4965
      %v4968 = vmul.f32 0.5, %v4967
      %v4969 = vsub.f32 1.5, %v4968
      %v4970 = vmul.f32 %v4965, %v4969
      %vm4971 = vweird.f32 %v4904
      %vm4972 = vweird.f32 %v4965
      %vm4973 = vmor %vm4971, %vm4972
      %v4974 = vsel %vm4973, %v4965, %v4970
      %v4975 = vrsqrt.pop %v4905
      %v4976 = vmul.f32 %v4975, %v4905
      %v4977 = vmul.f32 %v4976, %v4975
      %v4978 = vmul.f32 0.5, %v4977
      %v4979 = vsub.f32 1.5, %v4978
      %v4980 = vmul.f32 %v4975, %v4979
      %vm4981 = vweird.f32 %v4905
      %vm4982 = vweird.f32 %v4975
      %vm4983 = vmor %vm4981, %vm4982
      %v4984 = vsel %vm4983, %v4975, %v4980
      %v4985 = vrsqrt.pop %v4906
      %v4986 = vmul.f32 %v4985, %v4906
      %v4987 = vmul.f32 %v4986, %v4985
      %v4988 = vmul.f32 0.5, %v4987
      %v4989 = vsub.f32 1.5, %v4988
      %v4990 = vmul.f32 %v4985, %v4989
      %vm4991 = vweird.f32 %v4906
      %vm4992 = vweird.f32 %v4985
      %vm4993 = vmor %vm4991, %vm4992
      %v4994 = vsel %vm4993, %v4985, %v4990
      %v4995 = vrsqrt.pop %v4907
      %v4996 = vmul.f32 %v4995, %v4907
      %v4997 = vmul.f32 %v4996, %v4995
      %v4998 = vmul.f32 0.5, %v4997
      %v4999 = vsub.f32 1.5, %v4998
      %v5000 = vmul.f32 %v4995, %v4999
      %vm5001 = vweird.f32 %v4907
      %vm5002 = vweird.f32 %v4995
      %vm5003 = vmor %vm5001, %vm5002
      %v5004 = vsel %vm5003, %v4995, %v5000
      %v5005 = vrsqrt.pop %v4908
      %v5006 = vmul.f32 %v5005, %v4908
      %v5007 = vmul.f32 %v5006, %v5005
      %v5008 = vmul.f32 0.5, %v5007
      %v5009 = vsub.f32 1.5, %v5008
      %v5010 = vmul.f32 %v5005, %v5009
      %vm5011 = vweird.f32 %v4908
      %vm5012 = vweird.f32 %v5005
      %vm5013 = vmor %vm5011, %vm5012
      %v5014 = vsel %vm5013, %v5005, %v5010
      %v5015 = vrsqrt.pop %v4909
      %v5016 = vmul.f32 %v5015, %v4909
      %v5017 = vmul.f32 %v5016, %v5015
      %v5018 = vmul.f32 0.5, %v5017
      %v5019 = vsub.f32 1.5, %v5018
      %v5020 = vmul.f32 %v5015, %v5019
      %vm5021 = vweird.f32 %v4909
      %vm5022 = vweird.f32 %v5015
      %vm5023 = vmor %vm5021, %vm5022
      %v5024 = vsel %vm5023, %v5015, %v5020
      %v5025 = vrsqrt.pop %v4910
      %v5026 = vmul.f32 %v5025, %v4910
      %v5027 = vmul.f32 %v5026, %v5025
      %v5028 = vmul.f32 0.5, %v5027
      %v5029 = vsub.f32 1.5, %v5028
      %v5030 = vmul.f32 %v5025, %v5029
      %vm5031 = vweird.f32 %v4910
      %vm5032 = vweird.f32 %v5025
      %vm5033 = vmor %vm5031, %vm5032
      %v5034 = vsel %vm5033, %v5025, %v5030
      %v5035 = vrsqrt.pop %v4911
      %v5036 = vmul.f32 %v5035, %v4911
      %v5037 = vmul.f32 %v5036, %v5035
      %v5038 = vmul.f32 0.5, %v5037
      %v5039 = vsub.f32 1.5, %v5038
      %v5040 = vmul.f32 %v5035, %v5039
      %vm5041 = vweird.f32 %v4911
      %vm5042 = vweird.f32 %v5035
      %vm5043 = vmor %vm5041, %vm5042
      %v5044 = vsel %vm5043, %v5035, %v5040
      %v5045 = vrsqrt.pop %v4912
      %v5046 = vmul.f32 %v5045, %v4912
      %v5047 = vmul.f32 %v5046, %v5045
      %v5048 = vmul.f32 0.5, %v5047
      %v5049 = vsub.f32 1.5, %v5048
      %v5050 = vmul.f32 %v5045, %v5049
      %vm5051 = vweird.f32 %v4912
      %vm5052 = vweird.f32 %v5045
      %vm5053 = vmor %vm5051, %vm5052
      %v5054 = vsel %vm5053, %v5045, %v5050
      %v5055 = vrsqrt.pop %v4913
      %v5056 = vmul.f32 %v5055, %v4913
      %v5057 = vmul.f32 %v5056, %v5055
      %v5058 = vmul.f32 0.5, %v5057
      %v5059 = vsub.f32 1.5, %v5058
      %v5060 = vmul.f32 %v5055, %v5059
      %vm5061 = vweird.f32 %v4913
      %vm5062 = vweird.f32 %v5055
      %vm5063 = vmor %vm5061, %vm5062
      %v5064 = vsel %vm5063, %v5055, %v5060
      %v5065 = vrsqrt.pop %v4914
      %v5066 = vmul.f32 %v5065, %v4914
      %v5067 = vmul.f32 %v5066, %v5065
      %v5068 = vmul.f32 0.5, %v5067
      %v5069 = vsub.f32 1.5, %v5068
      %v5070 = vmul.f32 %v5065, %v5069
      %vm5071 = vweird.f32 %v4914
      %vm5072 = vweird.f32 %v5065
      %vm5073 = vmor %vm5071, %vm5072
      %v5074 = vsel %vm5073, %v5065, %v5070
      %v5075 = vmul.f32 %v4803, %v4924
      %v5076 = vmul.f32 %v4804, %v4934
      %v5077 = vmul.f32 %v4805, %v4944
      %v5078 = vmul.f32 %v4806, %v4954
      %v5079 = vmul.f32 %v4807, %v4964
      %v5080 = vmul.f32 %v4808, %v4974
      %v5081 = vmul.f32 %v4809, %v4984
      %v5082 = vmul.f32 %v4810, %v4994
      %v5083 = vmul.f32 %v4811, %v5004
      %v5084 = vmul.f32 %v4812, %v5014
      %v5085 = vmul.f32 %v4813, %v5024
      %v5086 = vmul.f32 %v4814, %v5034
      %v5087 = vmul.f32 %v4815, %v5044
      %v5088 = vmul.f32 %v4816, %v5054
      %v5089 = vmul.f32 %v4817, %v5064
      %v5090 = vmul.f32 %v4818, %v5074
      %v5091 = vperm.slane %v4737, 0
      %v5092 = vmul.f32 %v5075, %v5091
      %v5093 = vmul.f32 %v5076, %v5091
      %v5094 = vmul.f32 %v5077, %v5091
      %v5095 = vmul.f32 %v5078, %v5091
      %v5096 = vmul.f32 %v5079, %v5091
      %v5097 = vmul.f32 %v5080, %v5091
      %v5098 = vmul.f32 %v5081, %v5091
      %v5099 = vmul.f32 %v5082, %v5091
      %v5100 = vmul.f32 %v5083, %v5091
      %v5101 = vmul.f32 %v5084, %v5091
      %v5102 = vmul.f32 %v5085, %v5091
      %v5103 = vmul.f32 %v5086, %v5091
      %v5104 = vmul.f32 %v5087, %v5091
      %v5105 = vmul.f32 %v5088, %v5091
      %v5106 = vmul.f32 %v5089, %v5091
      %v5107 = vmul.f32 %v5090, %v5091
      %v5108 = vperm.slane %v4738, 0
      %v5109 = vadd.f32 %v5092, %v5108
      %v5110 = vadd.f32 %v5093, %v5108
      %v5111 = vadd.f32 %v5094, %v5108
      %v5112 = vadd.f32 %v5095, %v5108
      %v5113 = vadd.f32 %v5096, %v5108
      %v5114 = vadd.f32 %v5097, %v5108
      %v5115 = vadd.f32 %v5098, %v5108
      %v5116 = vadd.f32 %v5099, %v5108
      %v5117 = vadd.f32 %v5100, %v5108
      %v5118 = vadd.f32 %v5101, %v5108
      %v5119 = vadd.f32 %v5102, %v5108
      %v5120 = vadd.f32 %v5103, %v5108
      %v5121 = vadd.f32 %v5104, %v5108
      %v5122 = vadd.f32 %v5105, %v5108
      %v5123 = vadd.f32 %v5106, %v5108
      %v5124 = vadd.f32 %v5107, %v5108
      %v5125 = vld [vmem:[%s2 + $0x20] sm:$0xf]
      %v5126 = vld [vmem:[%s2 + $0x24] sm:$0xf]
      %v5127 = vld [vmem:[%s2 + $0x28] sm:$0xf]
      %v5128 = vld [vmem:[%s2 + $0x2c] sm:$0xf]
      %v5129 = vpack.c.bf16 %v5110, %v5109
      %v5130 = vpack.c.bf16 %v5112, %v5111
      %v5131 = vpack.c.bf16 %v5114, %v5113
      %v5132 = vpack.c.bf16 %v5116, %v5115
      %v5133 = vpack.c.bf16 %v5118, %v5117
      %v5134 = vpack.c.bf16 %v5120, %v5119
      %v5135 = vpack.c.bf16 %v5122, %v5121
      %v5136 = vpack.c.bf16 %v5124, %v5123
      %v5137 = vld [vmem:[%s4 + $0x2] sm:$0x1]
      %v5138 = vperm.slane %v5137, 0
      %v5143 = vunpack.c.l.b16 %v5125
      %v5144 = vunpack.c.l.b16 %v5126
      %v5145 = vunpack.c.l.b16 %v5127
      %v5146 = vunpack.c.l.b16 %v5128
      %v5147 = vpack.c.b16 %v5144, %v5143
      %v5148 = vpack.c.b16 %v5146, %v5145
      %v5152 = vsel %vm562, %v5129, 0
      %v5155 = vsel %vm562, %v5130, 0
      %v5158 = vsel %vm562, %v5131, 0
      %v5161 = vsel %vm562, %v5132, 0
      %v5164 = vsel %vm562, %v5133, 0
      %v5167 = vsel %vm562, %v5134, 0
      %v5170 = vsel %vm562, %v5135, 0
      %v5173 = vsel %vm562, %v5136, 0
      %5175 = vmatpush.bf16.msra.mxu0 0
      %5176 = vmatpush.bf16.msra.mxu0 0
      %5177 = vmatpush.bf16.msra.mxu0 0
      %5178 = vmatpush.bf16.msra.mxu0 0
      %5179 = vmatpush.bf16.msra.mxu0 0
      %5180 = vmatpush.bf16.msra.mxu0 0
      %5181 = vmatpush.bf16.msra.mxu0 %v5148
      %5182 = vmatpush.bf16.msra.mxu0 %v5147
      %5183 = vmatmul.bf16.gmra.mxu0 %v5152
      %v5184 = vpop.f32.mrf.mxu0
      %v5185 = vadd.f32 %v5138, %v5184
      %v5186 = vpop.f32.mrf.mxu0
      %v5187 = vadd.f32 %v5138, %v5186
      %5188 = vmatmul.bf16.gmra.mxu0 %v5155
      %v5189 = vpop.f32.mrf.mxu0
      %v5190 = vadd.f32 %v5138, %v5189
      %v5191 = vpop.f32.mrf.mxu0
      %v5192 = vadd.f32 %v5138, %v5191
      %5193 = vmatmul.bf16.gmra.mxu0 %v5158
      %v5194 = vpop.f32.mrf.mxu0
      %v5195 = vadd.f32 %v5138, %v5194
      %v5196 = vpop.f32.mrf.mxu0
      %v5197 = vadd.f32 %v5138, %v5196
      %5198 = vmatmul.bf16.gmra.mxu0 %v5161
      %v5199 = vpop.f32.mrf.mxu0
      %v5200 = vadd.f32 %v5138, %v5199
      %v5201 = vpop.f32.mrf.mxu0
      %v5202 = vadd.f32 %v5138, %v5201
      %5203 = vmatmul.bf16.gmra.mxu0 %v5164
      %v5204 = vpop.f32.mrf.mxu0
      %v5205 = vadd.f32 %v5138, %v5204
      %v5206 = vpop.f32.mrf.mxu0
      %v5207 = vadd.f32 %v5138, %v5206
      %5208 = vmatmul.bf16.gmra.mxu0 %v5167
      %v5209 = vpop.f32.mrf.mxu0
      %v5210 = vadd.f32 %v5138, %v5209
      %v5211 = vpop.f32.mrf.mxu0
      %v5212 = vadd.f32 %v5138, %v5211
      %5213 = vmatmul.bf16.gmra.mxu0 %v5170
      %v5214 = vpop.f32.mrf.mxu0
      %v5215 = vadd.f32 %v5138, %v5214
      %v5216 = vpop.f32.mrf.mxu0
      %v5217 = vadd.f32 %v5138, %v5216
      %5218 = vmatmul.bf16.gmra.mxu0 %v5173
      %v5219 = vpop.f32.mrf.mxu0
      %v5220 = vadd.f32 %v5138, %v5219
      %v5221 = vpop.f32.mrf.mxu0
      %v5222 = vadd.f32 %v5138, %v5221
      %5223 = vdwg.mxu0
      %v5224 = vmul.f32 %v5185, %v5185
      %v5225 = vmul.f32 %v5187, %v5187
      %v5226 = vmul.f32 %v5190, %v5190
      %v5227 = vmul.f32 %v5192, %v5192
      %v5228 = vmul.f32 %v5195, %v5195
      %v5229 = vmul.f32 %v5197, %v5197
      %v5230 = vmul.f32 %v5200, %v5200
      %v5231 = vmul.f32 %v5202, %v5202
      %v5232 = vmul.f32 %v5205, %v5205
      %v5233 = vmul.f32 %v5207, %v5207
      %v5234 = vmul.f32 %v5210, %v5210
      %v5235 = vmul.f32 %v5212, %v5212
      %v5236 = vmul.f32 %v5215, %v5215
      %v5237 = vmul.f32 %v5217, %v5217
      %v5238 = vmul.f32 %v5220, %v5220
      %v5239 = vmul.f32 %v5222, %v5222
      %v5240 = vmul.f32 %v5185, %v5224
      %v5241 = vmul.f32 %v5187, %v5225
      %v5242 = vmul.f32 %v5190, %v5226
      %v5243 = vmul.f32 %v5192, %v5227
      %v5244 = vmul.f32 %v5195, %v5228
      %v5245 = vmul.f32 %v5197, %v5229
      %v5246 = vmul.f32 %v5200, %v5230
      %v5247 = vmul.f32 %v5202, %v5231
      %v5248 = vmul.f32 %v5205, %v5232
      %v5249 = vmul.f32 %v5207, %v5233
      %v5250 = vmul.f32 %v5210, %v5234
      %v5251 = vmul.f32 %v5212, %v5235
      %v5252 = vmul.f32 %v5215, %v5236
      %v5253 = vmul.f32 %v5217, %v5237
      %v5254 = vmul.f32 %v5220, %v5238
      %v5255 = vmul.f32 %v5222, %v5239
      %v5256 = vmul.f32 %v5240, 0.044715
      %v5257 = vmul.f32 %v5241, 0.044715
      %v5258 = vmul.f32 %v5242, 0.044715
      %v5259 = vmul.f32 %v5243, 0.044715
      %v5260 = vmul.f32 %v5244, 0.044715
      %v5261 = vmul.f32 %v5245, 0.044715
      %v5262 = vmul.f32 %v5246, 0.044715
      %v5263 = vmul.f32 %v5247, 0.044715
      %v5264 = vmul.f32 %v5248, 0.044715
      %v5265 = vmul.f32 %v5249, 0.044715
      %v5266 = vmul.f32 %v5250, 0.044715
      %v5267 = vmul.f32 %v5251, 0.044715
      %v5268 = vmul.f32 %v5252, 0.044715
      %v5269 = vmul.f32 %v5253, 0.044715
      %v5270 = vmul.f32 %v5254, 0.044715
      %v5271 = vmul.f32 %v5255, 0.044715
      %v5272 = vadd.f32 %v5185, %v5256
      %v5273 = vadd.f32 %v5187, %v5257
      %v5274 = vadd.f32 %v5190, %v5258
      %v5275 = vadd.f32 %v5192, %v5259
      %v5276 = vadd.f32 %v5195, %v5260
      %v5277 = vadd.f32 %v5197, %v5261
      %v5278 = vadd.f32 %v5200, %v5262
      %v5279 = vadd.f32 %v5202, %v5263
      %v5280 = vadd.f32 %v5205, %v5264
      %v5281 = vadd.f32 %v5207, %v5265
      %v5282 = vadd.f32 %v5210, %v5266
      %v5283 = vadd.f32 %v5212, %v5267
      %v5284 = vadd.f32 %v5215, %v5268
      %v5285 = vadd.f32 %v5217, %v5269
      %v5286 = vadd.f32 %v5220, %v5270
      %v5287 = vadd.f32 %v5222, %v5271
      %v5288 = vmul.f32 %v5272, 0.7978846
      %v5289 = vmul.f32 %v5273, 0.7978846
      %v5290 = vmul.f32 %v5274, 0.7978846
      %v5291 = vmul.f32 %v5275, 0.7978846
      %v5292 = vmul.f32 %v5276, 0.7978846
      %v5293 = vmul.f32 %v5277, 0.7978846
      %v5294 = vmul.f32 %v5278, 0.7978846
      %v5295 = vmul.f32 %v5279, 0.7978846
      %v5296 = vmul.f32 %v5280, 0.7978846
      %v5297 = vmul.f32 %v5281, 0.7978846
      %v5298 = vmul.f32 %v5282, 0.7978846
      %v5299 = vmul.f32 %v5283, 0.7978846
      %v5300 = vmul.f32 %v5284, 0.7978846
      %v5301 = vmul.f32 %v5285, 0.7978846
      %v5302 = vmul.f32 %v5286, 0.7978846
      %v5303 = vmul.f32 %v5287, 0.7978846
      %v5304 = vtanh.pop %v5288
      %v5305 = vtanh.pop %v5289
      %v5306 = vtanh.pop %v5290
      %v5307 = vtanh.pop %v5291
      %v5308 = vtanh.pop %v5292
      %v5309 = vtanh.pop %v5293
      %v5310 = vtanh.pop %v5294
      %v5311 = vtanh.pop %v5295
      %v5312 = vtanh.pop %v5296
      %v5313 = vtanh.pop %v5297
      %v5314 = vtanh.pop %v5298
      %v5315 = vtanh.pop %v5299
      %v5316 = vtanh.pop %v5300
      %v5317 = vtanh.pop %v5301
      %v5318 = vtanh.pop %v5302
      %v5319 = vtanh.pop %v5303
      %v5320 = vadd.f32 %v5304, 1.0
      %v5321 = vadd.f32 %v5305, 1.0
      %v5322 = vadd.f32 %v5306, 1.0
      %v5323 = vadd.f32 %v5307, 1.0
      %v5324 = vadd.f32 %v5308, 1.0
      %v5325 = vadd.f32 %v5309, 1.0
      %v5326 = vadd.f32 %v5310, 1.0
      %v5327 = vadd.f32 %v5311, 1.0
      %v5328 = vadd.f32 %v5312, 1.0
      %v5329 = vadd.f32 %v5313, 1.0
      %v5330 = vadd.f32 %v5314, 1.0
      %v5331 = vadd.f32 %v5315, 1.0
      %v5332 = vadd.f32 %v5316, 1.0
      %v5333 = vadd.f32 %v5317, 1.0
      %v5334 = vadd.f32 %v5318, 1.0
      %v5335 = vadd.f32 %v5319, 1.0
      %v5336 = vmul.f32 %v5320, 0.5
      %v5337 = vmul.f32 %v5321, 0.5
      %v5338 = vmul.f32 %v5322, 0.5
      %v5339 = vmul.f32 %v5323, 0.5
      %v5340 = vmul.f32 %v5324, 0.5
      %v5341 = vmul.f32 %v5325, 0.5
      %v5342 = vmul.f32 %v5326, 0.5
      %v5343 = vmul.f32 %v5327, 0.5
      %v5344 = vmul.f32 %v5328, 0.5
      %v5345 = vmul.f32 %v5329, 0.5
      %v5346 = vmul.f32 %v5330, 0.5
      %v5347 = vmul.f32 %v5331, 0.5
      %v5348 = vmul.f32 %v5332, 0.5
      %v5349 = vmul.f32 %v5333, 0.5
      %v5350 = vmul.f32 %v5334, 0.5
      %v5351 = vmul.f32 %v5335, 0.5
      %v5352 = vmul.f32 %v5185, %v5336
      %v5353 = vmul.f32 %v5187, %v5337
      %v5354 = vmul.f32 %v5190, %v5338
      %v5355 = vmul.f32 %v5192, %v5339
      %v5356 = vmul.f32 %v5195, %v5340
      %v5357 = vmul.f32 %v5197, %v5341
      %v5358 = vmul.f32 %v5200, %v5342
      %v5359 = vmul.f32 %v5202, %v5343
      %v5360 = vmul.f32 %v5205, %v5344
      %v5361 = vmul.f32 %v5207, %v5345
      %v5362 = vmul.f32 %v5210, %v5346
      %v5363 = vmul.f32 %v5212, %v5347
      %v5364 = vmul.f32 %v5215, %v5348
      %v5365 = vmul.f32 %v5217, %v5349
      %v5366 = vmul.f32 %v5220, %v5350
      %v5367 = vmul.f32 %v5222, %v5351
      %v5368 = vld [vmem:[%s1 + $0x80] sm:$0xf]
      %v5369 = vld [vmem:[%s1 + $0x84] sm:$0xf]
      %v5370 = vld [vmem:[%s1 + $0x88] sm:$0xf]
      %v5371 = vld [vmem:[%s1 + $0x8c] sm:$0xf]
      %v5372 = vld [vmem:[%s1 + $0x90] sm:$0xf]
      %v5373 = vld [vmem:[%s1 + $0x94] sm:$0xf]
      %v5374 = vld [vmem:[%s1 + $0x98] sm:$0xf]
      %v5375 = vld [vmem:[%s1 + $0x9c] sm:$0xf]
      %v5376 = vld [vmem:[%s1 + $0xa0] sm:$0xf]
      %v5377 = vld [vmem:[%s1 + $0xa4] sm:$0xf]
      %v5378 = vld [vmem:[%s1 + $0xa8] sm:$0xf]
      %v5379 = vld [vmem:[%s1 + $0xac] sm:$0xf]
      %v5380 = vld [vmem:[%s1 + $0xb0] sm:$0xf]
      %v5381 = vld [vmem:[%s1 + $0xb4] sm:$0xf]
      %v5382 = vld [vmem:[%s1 + $0xb8] sm:$0xf]
      %v5383 = vld [vmem:[%s1 + $0xbc] sm:$0xf]
      %v5384 = vpack.c.bf16 %v5353, %v5352
      %v5385 = vpack.c.bf16 %v5355, %v5354
      %v5386 = vpack.c.bf16 %v5357, %v5356
      %v5387 = vpack.c.bf16 %v5359, %v5358
      %v5388 = vpack.c.bf16 %v5361, %v5360
      %v5389 = vpack.c.bf16 %v5363, %v5362
      %v5390 = vpack.c.bf16 %v5365, %v5364
      %v5391 = vpack.c.bf16 %v5367, %v5366
      %v5408 = vunpack.c.l.b16 %v5368
      %v5409 = vunpack.c.l.b16 %v5369
      %v5410 = vunpack.c.l.b16 %v5370
      %v5411 = vunpack.c.l.b16 %v5371
      %v5412 = vunpack.c.l.b16 %v5372
      %v5413 = vunpack.c.l.b16 %v5373
      %v5414 = vunpack.c.l.b16 %v5374
      %v5415 = vunpack.c.l.b16 %v5375
      %v5416 = vunpack.c.l.b16 %v5376
      %v5417 = vunpack.c.l.b16 %v5377
      %v5418 = vunpack.c.l.b16 %v5378
      %v5419 = vunpack.c.l.b16 %v5379
      %v5420 = vunpack.c.l.b16 %v5380
      %v5421 = vunpack.c.l.b16 %v5381
      %v5422 = vunpack.c.l.b16 %v5382
      %v5423 = vunpack.c.l.b16 %v5383
      %v5424 = vpack.c.b16 %v5409, %v5408
      %v5425 = vpack.c.b16 %v5411, %v5410
      %v5426 = vpack.c.b16 %v5413, %v5412
      %v5427 = vpack.c.b16 %v5415, %v5414
      %v5428 = vpack.c.b16 %v5417, %v5416
      %v5429 = vpack.c.b16 %v5419, %v5418
      %v5430 = vpack.c.b16 %v5421, %v5420
      %v5431 = vpack.c.b16 %v5423, %v5422
      %5440 = vmatpush.bf16.msra.mxu0 %v5431
      %5441 = vmatpush.bf16.msra.mxu0 %v5430
      %5442 = vmatpush.bf16.msra.mxu0 %v5429
      %5443 = vmatpush.bf16.msra.mxu0 %v5428
      %5444 = vmatpush.bf16.msra.mxu0 %v5427
      %5445 = vmatpush.bf16.msra.mxu0 %v5426
      %5446 = vmatpush.bf16.msra.mxu0 %v5425
      %5447 = vmatpush.bf16.msra.mxu0 %v5424
      %5448 = vmatmul.bf16.gmra.mxu0 %v5384
      %v5449 = vpop.f32.mrf.mxu0
      %v5450 = vadd.f32 0.0, %v5449
      %v5451 = vpop.f32.mrf.mxu0
      %v5452 = vadd.f32 0.0, %v5451
      %5453 = vmatmul.bf16.gmra.mxu0 %v5385
      %v5454 = vpop.f32.mrf.mxu0
      %v5455 = vadd.f32 0.0, %v5454
      %v5456 = vpop.f32.mrf.mxu0
      %v5457 = vadd.f32 0.0, %v5456
      %5458 = vmatmul.bf16.gmra.mxu0 %v5386
      %v5459 = vpop.f32.mrf.mxu0
      %v5460 = vadd.f32 0.0, %v5459
      %v5461 = vpop.f32.mrf.mxu0
      %v5462 = vadd.f32 0.0, %v5461
      %5463 = vmatmul.bf16.gmra.mxu0 %v5387
      %v5464 = vpop.f32.mrf.mxu0
      %v5465 = vadd.f32 0.0, %v5464
      %v5466 = vpop.f32.mrf.mxu0
      %v5467 = vadd.f32 0.0, %v5466
      %5468 = vmatmul.bf16.gmra.mxu0 %v5388
      %v5469 = vpop.f32.mrf.mxu0
      %v5470 = vadd.f32 0.0, %v5469
      %v5471 = vpop.f32.mrf.mxu0
      %v5472 = vadd.f32 0.0, %v5471
      %5473 = vmatmul.bf16.gmra.mxu0 %v5389
      %v5474 = vpop.f32.mrf.mxu0
      %v5475 = vadd.f32 0.0, %v5474
      %v5476 = vpop.f32.mrf.mxu0
      %v5477 = vadd.f32 0.0, %v5476
      %5478 = vmatmul.bf16.gmra.mxu0 %v5390
      %v5479 = vpop.f32.mrf.mxu0
      %v5480 = vadd.f32 0.0, %v5479
      %v5481 = vpop.f32.mrf.mxu0
      %v5482 = vadd.f32 0.0, %v5481
      %5483 = vmatmul.bf16.gmra.mxu0 %v5391
      %v5484 = vpop.f32.mrf.mxu0
      %v5485 = vadd.f32 0.0, %v5484
      %v5486 = vpop.f32.mrf.mxu0
      %v5487 = vadd.f32 0.0, %v5486
      %5488 = vdwg.mxu0
      %v5489 = vadd.f32 %v4721, %v5450
      %v5490 = vadd.f32 %v4722, %v5452
      %v5491 = vadd.f32 %v4723, %v5455
      %v5492 = vadd.f32 %v4724, %v5457
      %v5493 = vadd.f32 %v4725, %v5460
      %v5494 = vadd.f32 %v4726, %v5462
      %v5495 = vadd.f32 %v4727, %v5465
      %v5496 = vadd.f32 %v4728, %v5467
      %v5497 = vadd.f32 %v4729, %v5470
      %v5498 = vadd.f32 %v4730, %v5472
      %v5499 = vadd.f32 %v4731, %v5475
      %v5500 = vadd.f32 %v4732, %v5477
      %v5501 = vadd.f32 %v4733, %v5480
      %v5502 = vadd.f32 %v4734, %v5482
      %v5503 = vadd.f32 %v4735, %v5485
      %v5504 = vadd.f32 %v4736, %v5487
      %v5505 = vld [vmem:[%s3 + $0x29] sm:$0x1]
      %v5506 = vperm.slane %v5505, 0
      %v5507 = vadd.f32 %v5489, %v5506
      %v5508 = vadd.f32 %v5490, %v5506
      %v5509 = vadd.f32 %v5491, %v5506
      %v5510 = vadd.f32 %v5492, %v5506
      %v5511 = vadd.f32 %v5493, %v5506
      %v5512 = vadd.f32 %v5494, %v5506
      %v5513 = vadd.f32 %v5495, %v5506
      %v5514 = vadd.f32 %v5496, %v5506
      %v5515 = vadd.f32 %v5497, %v5506
      %v5516 = vadd.f32 %v5498, %v5506
      %v5517 = vadd.f32 %v5499, %v5506
      %v5518 = vadd.f32 %v5500, %v5506
      %v5519 = vadd.f32 %v5501, %v5506
      %v5520 = vadd.f32 %v5502, %v5506
      %v5521 = vadd.f32 %v5503, %v5506
      %v5522 = vadd.f32 %v5504, %v5506
      %v5523 = vld [vmem:[%s3 + $0x2a] sm:$0x1]
      %v5524 = vld [vmem:[%s3 + $0x2b] sm:$0x1]
      %v5525 = vsel %vm562, %v5507, 0.0
      %5526 = vadd.xlane.f32.xlu0 %v5525
      %v5527 = vpop.xlane.xlu0 %5526
      %v5528 = vsel %vm562, %v5508, 0.0
      %5529 = vadd.xlane.f32.xlu0 %v5528
      %v5530 = vpop.xlane.xlu0 %5529
      %v5531 = vsel %vm562, %v5509, 0.0
      %5532 = vadd.xlane.f32.xlu0 %v5531
      %v5533 = vpop.xlane.xlu0 %5532
      %v5534 = vsel %vm562, %v5510, 0.0
      %5535 = vadd.xlane.f32.xlu0 %v5534
      %v5536 = vpop.xlane.xlu0 %5535
      %v5537 = vsel %vm562, %v5511, 0.0
      %5538 = vadd.xlane.f32.xlu0 %v5537
      %v5539 = vpop.xlane.xlu0 %5538
      %v5540 = vsel %vm562, %v5512, 0.0
      %5541 = vadd.xlane.f32.xlu0 %v5540
      %v5542 = vpop.xlane.xlu0 %5541
      %v5543 = vsel %vm562, %v5513, 0.0
      %5544 = vadd.xlane.f32.xlu0 %v5543
      %v5545 = vpop.xlane.xlu0 %5544
      %v5546 = vsel %vm562, %v5514, 0.0
      %5547 = vadd.xlane.f32.xlu0 %v5546
      %v5548 = vpop.xlane.xlu0 %5547
      %v5549 = vsel %vm562, %v5515, 0.0
      %5550 = vadd.xlane.f32.xlu0 %v5549
      %v5551 = vpop.xlane.xlu0 %5550
      %v5552 = vsel %vm562, %v5516, 0.0
      %5553 = vadd.xlane.f32.xlu0 %v5552
      %v5554 = vpop.xlane.xlu0 %5553
      %v5555 = vsel %vm562, %v5517, 0.0
      %5556 = vadd.xlane.f32.xlu0 %v5555
      %v5557 = vpop.xlane.xlu0 %5556
      %v5558 = vsel %vm562, %v5518, 0.0
      %5559 = vadd.xlane.f32.xlu0 %v5558
      %v5560 = vpop.xlane.xlu0 %5559
      %v5561 = vsel %vm562, %v5519, 0.0
      %5562 = vadd.xlane.f32.xlu0 %v5561
      %v5563 = vpop.xlane.xlu0 %5562
      %v5564 = vsel %vm562, %v5520, 0.0
      %5565 = vadd.xlane.f32.xlu0 %v5564
      %v5566 = vpop.xlane.xlu0 %5565
      %v5567 = vsel %vm562, %v5521, 0.0
      %5568 = vadd.xlane.f32.xlu0 %v5567
      %v5569 = vpop.xlane.xlu0 %5568
      %v5570 = vsel %vm562, %v5522, 0.0
      %5571 = vadd.xlane.f32.xlu0 %v5570
      %v5572 = vpop.xlane.xlu0 %5571
      %v5573 = vmul.f32 %v5527, %v617
      %v5574 = vmul.f32 %v5530, %v617
      %v5575 = vmul.f32 %v5533, %v617
      %v5576 = vmul.f32 %v5536, %v617
      %v5577 = vmul.f32 %v5539, %v617
      %v5578 = vmul.f32 %v5542, %v617
      %v5579 = vmul.f32 %v5545, %v617
      %v5580 = vmul.f32 %v5548, %v617
      %v5581 = vmul.f32 %v5551, %v617
      %v5582 = vmul.f32 %v5554, %v617
      %v5583 = vmul.f32 %v5557, %v617
      %v5584 = vmul.f32 %v5560, %v617
      %v5585 = vmul.f32 %v5563, %v617
      %v5586 = vmul.f32 %v5566, %v617
      %v5587 = vmul.f32 %v5569, %v617
      %v5588 = vmul.f32 %v5572, %v617
      %v5589 = vsub.f32 %v5507, %v5573
      %v5590 = vsub.f32 %v5508, %v5574
      %v5591 = vsub.f32 %v5509, %v5575
      %v5592 = vsub.f32 %v5510, %v5576
      %v5593 = vsub.f32 %v5511, %v5577
      %v5594 = vsub.f32 %v5512, %v5578
      %v5595 = vsub.f32 %v5513, %v5579
      %v5596 = vsub.f32 %v5514, %v5580
      %v5597 = vsub.f32 %v5515, %v5581
      %v5598 = vsub.f32 %v5516, %v5582
      %v5599 = vsub.f32 %v5517, %v5583
      %v5600 = vsub.f32 %v5518, %v5584
      %v5601 = vsub.f32 %v5519, %v5585
      %v5602 = vsub.f32 %v5520, %v5586
      %v5603 = vsub.f32 %v5521, %v5587
      %v5604 = vsub.f32 %v5522, %v5588
      %v5605 = vmul.f32 %v5589, %v5589
      %v5606 = vmul.f32 %v5590, %v5590
      %v5607 = vmul.f32 %v5591, %v5591
      %v5608 = vmul.f32 %v5592, %v5592
      %v5609 = vmul.f32 %v5593, %v5593
      %v5610 = vmul.f32 %v5594, %v5594
      %v5611 = vmul.f32 %v5595, %v5595
      %v5612 = vmul.f32 %v5596, %v5596
      %v5613 = vmul.f32 %v5597, %v5597
      %v5614 = vmul.f32 %v5598, %v5598
      %v5615 = vmul.f32 %v5599, %v5599
      %v5616 = vmul.f32 %v5600, %v5600
      %v5617 = vmul.f32 %v5601, %v5601
      %v5618 = vmul.f32 %v5602, %v5602
      %v5619 = vmul.f32 %v5603, %v5603
      %v5620 = vmul.f32 %v5604, %v5604
      %v5621 = vsel %vm562, %v5605, 0.0
      %5622 = vadd.xlane.f32.xlu0 %v5621
      %v5623 = vpop.xlane.xlu0 %5622
      %v5624 = vsel %vm562, %v5606, 0.0
      %5625 = vadd.xlane.f32.xlu0 %v5624
      %v5626 = vpop.xlane.xlu0 %5625
      %v5627 = vsel %vm562, %v5607, 0.0
      %5628 = vadd.xlane.f32.xlu0 %v5627
      %v5629 = vpop.xlane.xlu0 %5628
      %v5630 = vsel %vm562, %v5608, 0.0
      %5631 = vadd.xlane.f32.xlu0 %v5630
      %v5632 = vpop.xlane.xlu0 %5631
      %v5633 = vsel %vm562, %v5609, 0.0
      %5634 = vadd.xlane.f32.xlu0 %v5633
      %v5635 = vpop.xlane.xlu0 %5634
      %v5636 = vsel %vm562, %v5610, 0.0
      %5637 = vadd.xlane.f32.xlu0 %v5636
      %v5638 = vpop.xlane.xlu0 %5637
      %v5639 = vsel %vm562, %v5611, 0.0
      %5640 = vadd.xlane.f32.xlu0 %v5639
      %v5641 = vpop.xlane.xlu0 %5640
      %v5642 = vsel %vm562, %v5612, 0.0
      %5643 = vadd.xlane.f32.xlu0 %v5642
      %v5644 = vpop.xlane.xlu0 %5643
      %v5645 = vsel %vm562, %v5613, 0.0
      %5646 = vadd.xlane.f32.xlu0 %v5645
      %v5647 = vpop.xlane.xlu0 %5646
      %v5648 = vsel %vm562, %v5614, 0.0
      %5649 = vadd.xlane.f32.xlu0 %v5648
      %v5650 = vpop.xlane.xlu0 %5649
      %v5651 = vsel %vm562, %v5615, 0.0
      %5652 = vadd.xlane.f32.xlu0 %v5651
      %v5653 = vpop.xlane.xlu0 %5652
      %v5654 = vsel %vm562, %v5616, 0.0
      %5655 = vadd.xlane.f32.xlu0 %v5654
      %v5656 = vpop.xlane.xlu0 %5655
      %v5657 = vsel %vm562, %v5617, 0.0
      %5658 = vadd.xlane.f32.xlu0 %v5657
      %v5659 = vpop.xlane.xlu0 %5658
      %v5660 = vsel %vm562, %v5618, 0.0
      %5661 = vadd.xlane.f32.xlu0 %v5660
      %v5662 = vpop.xlane.xlu0 %5661
      %v5663 = vsel %vm562, %v5619, 0.0
      %5664 = vadd.xlane.f32.xlu0 %v5663
      %v5665 = vpop.xlane.xlu0 %5664
      %v5666 = vsel %vm562, %v5620, 0.0
      %5667 = vadd.xlane.f32.xlu0 %v5666
      %v5668 = vpop.xlane.xlu0 %5667
      %v5669 = vmul.f32 %v5623, %v617
      %v5670 = vmul.f32 %v5626, %v617
      %v5671 = vmul.f32 %v5629, %v617
      %v5672 = vmul.f32 %v5632, %v617
      %v5673 = vmul.f32 %v5635, %v617
      %v5674 = vmul.f32 %v5638, %v617
      %v5675 = vmul.f32 %v5641, %v617
      %v5676 = vmul.f32 %v5644, %v617
      %v5677 = vmul.f32 %v5647, %v617
      %v5678 = vmul.f32 %v5650, %v617
      %v5679 = vmul.f32 %v5653, %v617
      %v5680 = vmul.f32 %v5656, %v617
      %v5681 = vmul.f32 %v5659, %v617
      %v5682 = vmul.f32 %v5662, %v617
      %v5683 = vmul.f32 %v5665, %v617
      %v5684 = vmul.f32 %v5668, %v617
      %v5685 = vadd.f32 %v5669, 1e-05
      %v5686 = vadd.f32 %v5670, 1e-05
      %v5687 = vadd.f32 %v5671, 1e-05
      %v5688 = vadd.f32 %v5672, 1e-05
      %v5689 = vadd.f32 %v5673, 1e-05
      %v5690 = vadd.f32 %v5674, 1e-05
      %v5691 = vadd.f32 %v5675, 1e-05
      %v5692 = vadd.f32 %v5676, 1e-05
      %v5693 = vadd.f32 %v5677, 1e-05
      %v5694 = vadd.f32 %v5678, 1e-05
      %v5695 = vadd.f32 %v5679, 1e-05
      %v5696 = vadd.f32 %v5680, 1e-05
      %v5697 = vadd.f32 %v5681, 1e-05
      %v5698 = vadd.f32 %v5682, 1e-05
      %v5699 = vadd.f32 %v5683, 1e-05
      %v5700 = vadd.f32 %v5684, 1e-05
      %v5701 = vrsqrt.pop %v5685
      %v5702 = vmul.f32 %v5701, %v5685
      %v5703 = vmul.f32 %v5702, %v5701
      %v5704 = vmul.f32 0.5, %v5703
      %v5705 = vsub.f32 1.5, %v5704
      %v5706 = vmul.f32 %v5701, %v5705
      %vm5707 = vweird.f32 %v5685
      %vm5708 = vweird.f32 %v5701
      %vm5709 = vmor %vm5707, %vm5708
      %v5710 = vsel %vm5709, %v5701, %v5706
      %v5711 = vrsqrt.pop %v5686
      %v5712 = vmul.f32 %v5711, %v5686
      %v5713 = vmul.f32 %v5712, %v5711
      %v5714 = vmul.f32 0.5, %v5713
      %v5715 = vsub.f32 1.5, %v5714
      %v5716 = vmul.f32 %v5711, %v5715
      %vm5717 = vweird.f32 %v5686
      %vm5718 = vweird.f32 %v5711
      %vm5719 = vmor %vm5717, %vm5718
      %v5720 = vsel %vm5719, %v5711, %v5716
      %v5721 = vrsqrt.pop %v5687
      %v5722 = vmul.f32 %v5721, %v5687
      %v5723 = vmul.f32 %v5722, %v5721
      %v5724 = vmul.f32 0.5, %v5723
      %v5725 = vsub.f32 1.5, %v5724
      %v5726 = vmul.f32 %v5721, %v5725
      %vm5727 = vweird.f32 %v5687
      %vm5728 = vweird.f32 %v5721
      %vm5729 = vmor %vm5727, %vm5728
      %v5730 = vsel %vm5729, %v5721, %v5726
      %v5731 = vrsqrt.pop %v5688
      %v5732 = vmul.f32 %v5731, %v5688
      %v5733 = vmul.f32 %v5732, %v5731
      %v5734 = vmul.f32 0.5, %v5733
      %v5735 = vsub.f32 1.5, %v5734
      %v5736 = vmul.f32 %v5731, %v5735
      %vm5737 = vweird.f32 %v5688
      %vm5738 = vweird.f32 %v5731
      %vm5739 = vmor %vm5737, %vm5738
      %v5740 = vsel %vm5739, %v5731, %v5736
      %v5741 = vrsqrt.pop %v5689
      %v5742 = vmul.f32 %v5741, %v5689
      %v5743 = vmul.f32 %v5742, %v5741
      %v5744 = vmul.f32 0.5, %v5743
      %v5745 = vsub.f32 1.5, %v5744
      %v5746 = vmul.f32 %v5741, %v5745
      %vm5747 = vweird.f32 %v5689
      %vm5748 = vweird.f32 %v5741
      %vm5749 = vmor %vm5747, %vm5748
      %v5750 = vsel %vm5749, %v5741, %v5746
      %v5751 = vrsqrt.pop %v5690
      %v5752 = vmul.f32 %v5751, %v5690
      %v5753 = vmul.f32 %v5752, %v5751
      %v5754 = vmul.f32 0.5, %v5753
      %v5755 = vsub.f32 1.5, %v5754
      %v5756 = vmul.f32 %v5751, %v5755
      %vm5757 = vweird.f32 %v5690
      %vm5758 = vweird.f32 %v5751
      %vm5759 = vmor %vm5757, %vm5758
      %v5760 = vsel %vm5759, %v5751, %v5756
      %v5761 = vrsqrt.pop %v5691
      %v5762 = vmul.f32 %v5761, %v5691
      %v5763 = vmul.f32 %v5762, %v5761
      %v5764 = vmul.f32 0.5, %v5763
      %v5765 = vsub.f32 1.5, %v5764
      %v5766 = vmul.f32 %v5761, %v5765
      %vm5767 = vweird.f32 %v5691
      %vm5768 = vweird.f32 %v5761
      %vm5769 = vmor %vm5767, %vm5768
      %v5770 = vsel %vm5769, %v5761, %v5766
      %v5771 = vrsqrt.pop %v5692
      %v5772 = vmul.f32 %v5771, %v5692
      %v5773 = vmul.f32 %v5772, %v5771
      %v5774 = vmul.f32 0.5, %v5773
      %v5775 = vsub.f32 1.5, %v5774
      %v5776 = vmul.f32 %v5771, %v5775
      %vm5777 = vweird.f32 %v5692
      %vm5778 = vweird.f32 %v5771
      %vm5779 = vmor %vm5777, %vm5778
      %v5780 = vsel %vm5779, %v5771, %v5776
      %v5781 = vrsqrt.pop %v5693
      %v5782 = vmul.f32 %v5781, %v5693
      %v5783 = vmul.f32 %v5782, %v5781
      %v5784 = vmul.f32 0.5, %v5783
      %v5785 = vsub.f32 1.5, %v5784
      %v5786 = vmul.f32 %v5781, %v5785
      %vm5787 = vweird.f32 %v5693
      %vm5788 = vweird.f32 %v5781
      %vm5789 = vmor %vm5787, %vm5788
      %v5790 = vsel %vm5789, %v5781, %v5786
      %v5791 = vrsqrt.pop %v5694
      %v5792 = vmul.f32 %v5791, %v5694
      %v5793 = vmul.f32 %v5792, %v5791
      %v5794 = vmul.f32 0.5, %v5793
      %v5795 = vsub.f32 1.5, %v5794
      %v5796 = vmul.f32 %v5791, %v5795
      %vm5797 = vweird.f32 %v5694
      %vm5798 = vweird.f32 %v5791
      %vm5799 = vmor %vm5797, %vm5798
      %v5800 = vsel %vm5799, %v5791, %v5796
      %v5801 = vrsqrt.pop %v5695
      %v5802 = vmul.f32 %v5801, %v5695
      %v5803 = vmul.f32 %v5802, %v5801
      %v5804 = vmul.f32 0.5, %v5803
      %v5805 = vsub.f32 1.5, %v5804
      %v5806 = vmul.f32 %v5801, %v5805
      %vm5807 = vweird.f32 %v5695
      %vm5808 = vweird.f32 %v5801
      %vm5809 = vmor %vm5807, %vm5808
      %v5810 = vsel %vm5809, %v5801, %v5806
      %v5811 = vrsqrt.pop %v5696
      %v5812 = vmul.f32 %v5811, %v5696
      %v5813 = vmul.f32 %v5812, %v5811
      %v5814 = vmul.f32 0.5, %v5813
      %v5815 = vsub.f32 1.5, %v5814
      %v5816 = vmul.f32 %v5811, %v5815
      %vm5817 = vweird.f32 %v5696
      %vm5818 = vweird.f32 %v5811
      %vm5819 = vmor %vm5817, %vm5818
      %v5820 = vsel %vm5819, %v5811, %v5816
      %v5821 = vrsqrt.pop %v5697
      %v5822 = vmul.f32 %v5821, %v5697
      %v5823 = vmul.f32 %v5822, %v5821
      %v5824 = vmul.f32 0.5, %v5823
      %v5825 = vsub.f32 1.5, %v5824
      %v5826 = vmul.f32 %v5821, %v5825
      %vm5827 = vweird.f32 %v5697
      %vm5828 = vweird.f32 %v5821
      %vm5829 = vmor %vm5827, %vm5828
      %v5830 = vsel %vm5829, %v5821, %v5826
      %v5831 = vrsqrt.pop %v5698
      %v5832 = vmul.f32 %v5831, %v5698
      %v5833 = vmul.f32 %v5832, %v5831
      %v5834 = vmul.f32 0.5, %v5833
      %v5835 = vsub.f32 1.5, %v5834
      %v5836 = vmul.f32 %v5831, %v5835
      %vm5837 = vweird.f32 %v5698
      %vm5838 = vweird.f32 %v5831
      %vm5839 = vmor %vm5837, %vm5838
      %v5840 = vsel %vm5839, %v5831, %v5836
      %v5841 = vrsqrt.pop %v5699
      %v5842 = vmul.f32 %v5841, %v5699
      %v5843 = vmul.f32 %v5842, %v5841
      %v5844 = vmul.f32 0.5, %v5843
      %v5845 = vsub.f32 1.5, %v5844
      %v5846 = vmul.f32 %v5841, %v5845
      %vm5847 = vweird.f32 %v5699
      %vm5848 = vweird.f32 %v5841
      %vm5849 = vmor %vm5847, %vm5848
      %v5850 = vsel %vm5849, %v5841, %v5846
      %v5851 = vrsqrt.pop %v5700
      %v5852 = vmul.f32 %v5851, %v5700
      %v5853 = vmul.f32 %v5852, %v5851
      %v5854 = vmul.f32 0.5, %v5853
      %v5855 = vsub.f32 1.5, %v5854
      %v5856 = vmul.f32 %v5851, %v5855
      %vm5857 = vweird.f32 %v5700
      %vm5858 = vweird.f32 %v5851
      %vm5859 = vmor %vm5857, %vm5858
      %v5860 = vsel %vm5859, %v5851, %v5856
      %v5861 = vmul.f32 %v5589, %v5710
      %v5862 = vmul.f32 %v5590, %v5720
      %v5863 = vmul.f32 %v5591, %v5730
      %v5864 = vmul.f32 %v5592, %v5740
      %v5865 = vmul.f32 %v5593, %v5750
      %v5866 = vmul.f32 %v5594, %v5760
      %v5867 = vmul.f32 %v5595, %v5770
      %v5868 = vmul.f32 %v5596, %v5780
      %v5869 = vmul.f32 %v5597, %v5790
      %v5870 = vmul.f32 %v5598, %v5800
      %v5871 = vmul.f32 %v5599, %v5810
      %v5872 = vmul.f32 %v5600, %v5820
      %v5873 = vmul.f32 %v5601, %v5830
      %v5874 = vmul.f32 %v5602, %v5840
      %v5875 = vmul.f32 %v5603, %v5850
      %v5876 = vmul.f32 %v5604, %v5860
      %v5877 = vperm.slane %v5523, 0
      %v5878 = vmul.f32 %v5861, %v5877
      %v5879 = vmul.f32 %v5862, %v5877
      %v5880 = vmul.f32 %v5863, %v5877
      %v5881 = vmul.f32 %v5864, %v5877
      %v5882 = vmul.f32 %v5865, %v5877
      %v5883 = vmul.f32 %v5866, %v5877
      %v5884 = vmul.f32 %v5867, %v5877
      %v5885 = vmul.f32 %v5868, %v5877
      %v5886 = vmul.f32 %v5869, %v5877
      %v5887 = vmul.f32 %v5870, %v5877
      %v5888 = vmul.f32 %v5871, %v5877
      %v5889 = vmul.f32 %v5872, %v5877
      %v5890 = vmul.f32 %v5873, %v5877
      %v5891 = vmul.f32 %v5874, %v5877
      %v5892 = vmul.f32 %v5875, %v5877
      %v5893 = vmul.f32 %v5876, %v5877
      %v5894 = vperm.slane %v5524, 0
      %v5895 = vadd.f32 %v5878, %v5894
      %v5896 = vadd.f32 %v5879, %v5894
      %v5897 = vadd.f32 %v5880, %v5894
      %v5898 = vadd.f32 %v5881, %v5894
      %v5899 = vadd.f32 %v5882, %v5894
      %v5900 = vadd.f32 %v5883, %v5894
      %v5901 = vadd.f32 %v5884, %v5894
      %v5902 = vadd.f32 %v5885, %v5894
      %v5903 = vadd.f32 %v5886, %v5894
      %v5904 = vadd.f32 %v5887, %v5894
      %v5905 = vadd.f32 %v5888, %v5894
      %v5906 = vadd.f32 %v5889, %v5894
      %v5907 = vadd.f32 %v5890, %v5894
      %v5908 = vadd.f32 %v5891, %v5894
      %v5909 = vadd.f32 %v5892, %v5894
      %v5910 = vadd.f32 %v5893, %v5894
      %v5911 = vld [vmem:[%s2 + $0x10] sm:$0xf]
      %v5912 = vld [vmem:[%s2 + $0x14] sm:$0xf]
      %v5913 = vld [vmem:[%s2 + $0x18] sm:$0xf]
      %v5914 = vld [vmem:[%s2 + $0x1c] sm:$0xf]
      %v5915 = vpack.c.bf16 %v5896, %v5895
      %v5916 = vpack.c.bf16 %v5898, %v5897
      %v5917 = vpack.c.bf16 %v5900, %v5899
      %v5918 = vpack.c.bf16 %v5902, %v5901
      %v5919 = vpack.c.bf16 %v5904, %v5903
      %v5920 = vpack.c.bf16 %v5906, %v5905
      %v5921 = vpack.c.bf16 %v5908, %v5907
      %v5922 = vpack.c.bf16 %v5910, %v5909
      %v5923 = vld [vmem:[%s4 + $0x1] sm:$0x1]
      %v5924 = vperm.slane %v5923, 0
      %v5929 = vunpack.c.l.b16 %v5911
      %v5930 = vunpack.c.l.b16 %v5912
      %v5931 = vunpack.c.l.b16 %v5913
      %v5932 = vunpack.c.l.b16 %v5914
      %v5933 = vpack.c.b16 %v5930, %v5929
      %v5934 = vpack.c.b16 %v5932, %v5931
      %v5938 = vsel %vm562, %v5915, 0
      %v5941 = vsel %vm562, %v5916, 0
      %v5944 = vsel %vm562, %v5917, 0
      %v5947 = vsel %vm562, %v5918, 0
      %v5950 = vsel %vm562, %v5919, 0
      %v5953 = vsel %vm562, %v5920, 0
      %v5956 = vsel %vm562, %v5921, 0
      %v5959 = vsel %vm562, %v5922, 0
      %5961 = vmatpush.bf16.msra.mxu0 0
      %5962 = vmatpush.bf16.msra.mxu0 0
      %5963 = vmatpush.bf16.msra.mxu0 0
      %5964 = vmatpush.bf16.msra.mxu0 0
      %5965 = vmatpush.bf16.msra.mxu0 0
      %5966 = vmatpush.bf16.msra.mxu0 0
      %5967 = vmatpush.bf16.msra.mxu0 %v5934
      %5968 = vmatpush.bf16.msra.mxu0 %v5933
      %5969 = vmatmul.bf16.gmra.mxu0 %v5938
      %v5970 = vpop.f32.mrf.mxu0
      %v5971 = vadd.f32 %v5924, %v5970
      %v5972 = vpop.f32.mrf.mxu0
      %v5973 = vadd.f32 %v5924, %v5972
      %5974 = vmatmul.bf16.gmra.mxu0 %v5941
      %v5975 = vpop.f32.mrf.mxu0
      %v5976 = vadd.f32 %v5924, %v5975
      %v5977 = vpop.f32.mrf.mxu0
      %v5978 = vadd.f32 %v5924, %v5977
      %5979 = vmatmul.bf16.gmra.mxu0 %v5944
      %v5980 = vpop.f32.mrf.mxu0
      %v5981 = vadd.f32 %v5924, %v5980
      %v5982 = vpop.f32.mrf.mxu0
      %v5983 = vadd.f32 %v5924, %v5982
      %5984 = vmatmul.bf16.gmra.mxu0 %v5947
      %v5985 = vpop.f32.mrf.mxu0
      %v5986 = vadd.f32 %v5924, %v5985
      %v5987 = vpop.f32.mrf.mxu0
      %v5988 = vadd.f32 %v5924, %v5987
      %5989 = vmatmul.bf16.gmra.mxu0 %v5950
      %v5990 = vpop.f32.mrf.mxu0
      %v5991 = vadd.f32 %v5924, %v5990
      %v5992 = vpop.f32.mrf.mxu0
      %v5993 = vadd.f32 %v5924, %v5992
      %5994 = vmatmul.bf16.gmra.mxu0 %v5953
      %v5995 = vpop.f32.mrf.mxu0
      %v5996 = vadd.f32 %v5924, %v5995
      %v5997 = vpop.f32.mrf.mxu0
      %v5998 = vadd.f32 %v5924, %v5997
      %5999 = vmatmul.bf16.gmra.mxu0 %v5956
      %v6000 = vpop.f32.mrf.mxu0
      %v6001 = vadd.f32 %v5924, %v6000
      %v6002 = vpop.f32.mrf.mxu0
      %v6003 = vadd.f32 %v5924, %v6002
      %6004 = vmatmul.bf16.gmra.mxu0 %v5959
      %v6005 = vpop.f32.mrf.mxu0
      %v6006 = vadd.f32 %v5924, %v6005
      %v6007 = vpop.f32.mrf.mxu0
      %v6008 = vadd.f32 %v5924, %v6007
      %6009 = vdwg.mxu0
      %v6010 = vpack.c.bf16 %v5971, %v5971
      %v6011 = vpack.c.bf16 %v5973, %v5973
      %v6012 = vpack.c.bf16 %v5976, %v5976
      %v6013 = vpack.c.bf16 %v5978, %v5978
      %v6014 = vpack.c.bf16 %v5981, %v5981
      %v6015 = vpack.c.bf16 %v5983, %v5983
      %v6016 = vpack.c.bf16 %v5986, %v5986
      %v6017 = vpack.c.bf16 %v5988, %v5988
      %v6018 = vpack.c.bf16 %v5991, %v5991
      %v6019 = vpack.c.bf16 %v5993, %v5993
      %v6020 = vpack.c.bf16 %v5996, %v5996
      %v6021 = vpack.c.bf16 %v5998, %v5998
      %v6022 = vpack.c.bf16 %v6001, %v6001
      %v6023 = vpack.c.bf16 %v6003, %v6003
      %v6024 = vpack.c.bf16 %v6006, %v6006
      %v6025 = vpack.c.bf16 %v6008, %v6008
      %v6030 = vunpack.c.l.b16 %v6010
      %v6031 = vunpack.c.l.b16 %v6011
      %v6032 = vunpack.c.l.b16 %v6012
      %v6033 = vunpack.c.l.b16 %v6013
      %v6034 = vpack.c.b16 %v6031, %v6030
      %v6035 = vpack.c.b16 %v6033, %v6032
      %6036 = vrot.lane.b32.xlu0 %v6034, 96
      %v6037 = vpop.permute.xlu0 %6036
      %6038 = vrot.lane.b32.xlu0 %v6035, 96
      %v6039 = vpop.permute.xlu0 %6038
      %v6041 = vsel %vm1473, %v6034, 0
      %v6044 = vsel %vm1473, %v6035, 0
      %v6047 = vsel %vm1473, %v6037, 0
      %v6050 = vsel %vm1473, %v6039, 0
      %6052 = vmatpush.bf16.xpose.msra.mxu0 0
      %6053 = vmatpush.bf16.xpose.msra.mxu0 0
      %6054 = vmatpush.bf16.xpose.msra.mxu0 0
      %6055 = vmatpush.bf16.xpose.msra.mxu0 0
      %6056 = vmatpush.bf16.xpose.msra.mxu0 0
      %6057 = vmatpush.bf16.xpose.msra.mxu0 0
      %6058 = vmatpush.bf16.xpose.msra.mxu0 %v6050
      %6059 = vmatpush.bf16.xpose.msra.mxu0 %v6047
      %6060 = vmatmul.bf16.gmra.mxu0 %v6041
      %v6061 = vpop.f32.mrf.mxu0
      %v6062 = vadd.f32 %v232, %v6061
      %v6063 = vpop.f32.mrf.mxu0
      %v6064 = vadd.f32 %v232, %v6063
      %6065 = vmatmul.bf16.gmra.mxu0 %v6044
      %v6066 = vpop.f32.mrf.mxu0
      %v6067 = vadd.f32 %v232, %v6066
      %v6068 = vpop.f32.mrf.mxu0
      %v6069 = vadd.f32 %v232, %v6068
      %6070 = vdwg.mxu0
      %v6075 = vunpack.c.l.b16 %v6014
      %v6076 = vunpack.c.l.b16 %v6015
      %v6077 = vunpack.c.l.b16 %v6016
      %v6078 = vunpack.c.l.b16 %v6017
      %v6079 = vpack.c.b16 %v6076, %v6075
      %v6080 = vpack.c.b16 %v6078, %v6077
      %6081 = vrot.lane.b32.xlu0 %v6079, 96
      %v6082 = vpop.permute.xlu0 %6081
      %6083 = vrot.lane.b32.xlu0 %v6080, 96
      %v6084 = vpop.permute.xlu0 %6083
      %v6086 = vsel %vm1473, %v6079, 0
      %v6089 = vsel %vm1473, %v6080, 0
      %v6092 = vsel %vm1473, %v6082, 0
      %v6095 = vsel %vm1473, %v6084, 0
      %6097 = vmatpush.bf16.xpose.msra.mxu0 0
      %6098 = vmatpush.bf16.xpose.msra.mxu0 0
      %6099 = vmatpush.bf16.xpose.msra.mxu0 0
      %6100 = vmatpush.bf16.xpose.msra.mxu0 0
      %6101 = vmatpush.bf16.xpose.msra.mxu0 0
      %6102 = vmatpush.bf16.xpose.msra.mxu0 0
      %6103 = vmatpush.bf16.xpose.msra.mxu0 %v6095
      %6104 = vmatpush.bf16.xpose.msra.mxu0 %v6092
      %6105 = vmatmul.bf16.gmra.mxu0 %v6086
      %v6106 = vpop.f32.mrf.mxu0
      %v6107 = vadd.f32 %v232, %v6106
      %v6108 = vpop.f32.mrf.mxu0
      %v6109 = vadd.f32 %v232, %v6108
      %6110 = vmatmul.bf16.gmra.mxu0 %v6089
      %v6111 = vpop.f32.mrf.mxu0
      %v6112 = vadd.f32 %v232, %v6111
      %v6113 = vpop.f32.mrf.mxu0
      %v6114 = vadd.f32 %v232, %v6113
      %6115 = vdwg.mxu0
      %v6120 = vunpack.c.l.b16 %v6018
      %v6121 = vunpack.c.l.b16 %v6019
      %v6122 = vunpack.c.l.b16 %v6020
      %v6123 = vunpack.c.l.b16 %v6021
      %v6124 = vpack.c.b16 %v6121, %v6120
      %v6125 = vpack.c.b16 %v6123, %v6122
      %6126 = vrot.lane.b32.xlu0 %v6124, 96
      %v6127 = vpop.permute.xlu0 %6126
      %6128 = vrot.lane.b32.xlu0 %v6125, 96
      %v6129 = vpop.permute.xlu0 %6128
      %v6131 = vsel %vm1473, %v6124, 0
      %v6134 = vsel %vm1473, %v6125, 0
      %v6137 = vsel %vm1473, %v6127, 0
      %v6140 = vsel %vm1473, %v6129, 0
      %6142 = vmatpush.bf16.xpose.msra.mxu0 0
      %6143 = vmatpush.bf16.xpose.msra.mxu0 0
      %6144 = vmatpush.bf16.xpose.msra.mxu0 0
      %6145 = vmatpush.bf16.xpose.msra.mxu0 0
      %6146 = vmatpush.bf16.xpose.msra.mxu0 0
      %6147 = vmatpush.bf16.xpose.msra.mxu0 0
      %6148 = vmatpush.bf16.xpose.msra.mxu0 %v6140
      %6149 = vmatpush.bf16.xpose.msra.mxu0 %v6137
      %6150 = vmatmul.bf16.gmra.mxu0 %v6131
      %v6151 = vpop.f32.mrf.mxu0
      %v6152 = vadd.f32 %v232, %v6151
      %v6153 = vpop.f32.mrf.mxu0
      %v6154 = vadd.f32 %v232, %v6153
      %6155 = vmatmul.bf16.gmra.mxu0 %v6134
      %v6156 = vpop.f32.mrf.mxu0
      %v6157 = vadd.f32 %v232, %v6156
      %v6158 = vpop.f32.mrf.mxu0
      %v6159 = vadd.f32 %v232, %v6158
      %6160 = vdwg.mxu0
      %v6165 = vunpack.c.l.b16 %v6022
      %v6166 = vunpack.c.l.b16 %v6023
      %v6167 = vunpack.c.l.b16 %v6024
      %v6168 = vunpack.c.l.b16 %v6025
      %v6169 = vpack.c.b16 %v6166, %v6165
      %v6170 = vpack.c.b16 %v6168, %v6167
      %6171 = vrot.lane.b32.xlu0 %v6169, 96
      %v6172 = vpop.permute.xlu0 %6171
      %6173 = vrot.lane.b32.xlu0 %v6170, 96
      %v6174 = vpop.permute.xlu0 %6173
      %v6176 = vsel %vm1473, %v6169, 0
      %v6179 = vsel %vm1473, %v6170, 0
      %v6182 = vsel %vm1473, %v6172, 0
      %v6185 = vsel %vm1473, %v6174, 0
      %6187 = vmatpush.bf16.xpose.msra.mxu0 0
      %6188 = vmatpush.bf16.xpose.msra.mxu0 0
      %6189 = vmatpush.bf16.xpose.msra.mxu0 0
      %6190 = vmatpush.bf16.xpose.msra.mxu0 0
      %6191 = vmatpush.bf16.xpose.msra.mxu0 0
      %6192 = vmatpush.bf16.xpose.msra.mxu0 0
      %6193 = vmatpush.bf16.xpose.msra.mxu0 %v6185
      %6194 = vmatpush.bf16.xpose.msra.mxu0 %v6182
      %6195 = vmatmul.bf16.gmra.mxu0 %v6176
      %v6196 = vpop.f32.mrf.mxu0
      %v6197 = vadd.f32 %v232, %v6196
      %v6198 = vpop.f32.mrf.mxu0
      %v6199 = vadd.f32 %v232, %v6198
      %6200 = vmatmul.bf16.gmra.mxu0 %v6179
      %v6201 = vpop.f32.mrf.mxu0
      %v6202 = vadd.f32 %v232, %v6201
      %v6203 = vpop.f32.mrf.mxu0
      %v6204 = vadd.f32 %v232, %v6203
      %6205 = vdwg.mxu0
      %v6206 = vsel %vm562, %v6062, -inf
      %6207 = vmax.xlane.f32.xlu0 %v6206
      %v6208 = vpop.xlane.xlu0 %6207
      %v6209 = vsel %vm562, %v6064, -inf
      %6210 = vmax.xlane.f32.xlu0 %v6209
      %v6211 = vpop.xlane.xlu0 %6210
      %v6212 = vsel %vm562, %v6067, -inf
      %6213 = vmax.xlane.f32.xlu0 %v6212
      %v6214 = vpop.xlane.xlu0 %6213
      %v6215 = vsel %vm562, %v6069, -inf
      %6216 = vmax.xlane.f32.xlu0 %v6215
      %v6217 = vpop.xlane.xlu0 %6216
      %v6218 = vsel %vm562, %v6107, -inf
      %6219 = vmax.xlane.f32.xlu0 %v6218
      %v6220 = vpop.xlane.xlu0 %6219
      %v6221 = vsel %vm562, %v6109, -inf
      %6222 = vmax.xlane.f32.xlu0 %v6221
      %v6223 = vpop.xlane.xlu0 %6222
      %v6224 = vsel %vm562, %v6112, -inf
      %6225 = vmax.xlane.f32.xlu0 %v6224
      %v6226 = vpop.xlane.xlu0 %6225
      %v6227 = vsel %vm562, %v6114, -inf
      %6228 = vmax.xlane.f32.xlu0 %v6227
      %v6229 = vpop.xlane.xlu0 %6228
      %v6230 = vsel %vm562, %v6152, -inf
      %6231 = vmax.xlane.f32.xlu0 %v6230
      %v6232 = vpop.xlane.xlu0 %6231
      %v6233 = vsel %vm562, %v6154, -inf
      %6234 = vmax.xlane.f32.xlu0 %v6233
      %v6235 = vpop.xlane.xlu0 %6234
      %v6236 = vsel %vm562, %v6157, -inf
      %6237 = vmax.xlane.f32.xlu0 %v6236
      %v6238 = vpop.xlane.xlu0 %6237
      %v6239 = vsel %vm562, %v6159, -inf
      %6240 = vmax.xlane.f32.xlu0 %v6239
      %v6241 = vpop.xlane.xlu0 %6240
      %v6242 = vsel %vm562, %v6197, -inf
      %6243 = vmax.xlane.f32.xlu0 %v6242
      %v6244 = vpop.xlane.xlu0 %6243
      %v6245 = vsel %vm562, %v6199, -inf
      %6246 = vmax.xlane.f32.xlu0 %v6245
      %v6247 = vpop.xlane.xlu0 %6246
      %v6248 = vsel %vm562, %v6202, -inf
      %6249 = vmax.xlane.f32.xlu0 %v6248
      %v6250 = vpop.xlane.xlu0 %6249
      %v6251 = vsel %vm562, %v6204, -inf
      %6252 = vmax.xlane.f32.xlu0 %v6251
      %v6253 = vpop.xlane.xlu0 %6252
      %v6254 = vsub.f32 %v6062, %v6208
      %v6255 = vsub.f32 %v6064, %v6211
      %v6256 = vsub.f32 %v6067, %v6214
      %v6257 = vsub.f32 %v6069, %v6217
      %v6258 = vsub.f32 %v6107, %v6220
      %v6259 = vsub.f32 %v6109, %v6223
      %v6260 = vsub.f32 %v6112, %v6226
      %v6261 = vsub.f32 %v6114, %v6229
      %v6262 = vsub.f32 %v6152, %v6232
      %v6263 = vsub.f32 %v6154, %v6235
      %v6264 = vsub.f32 %v6157, %v6238
      %v6265 = vsub.f32 %v6159, %v6241
      %v6266 = vsub.f32 %v6197, %v6244
      %v6267 = vsub.f32 %v6199, %v6247
      %v6268 = vsub.f32 %v6202, %v6250
      %v6269 = vsub.f32 %v6204, %v6253
      %v6270 = vmul.f32 %v6254, 1.442695
      %v6271 = vpow.pop %v6270
      %v6272 = vmul.f32 %v6255, 1.442695
      %v6273 = vpow.pop %v6272
      %v6274 = vmul.f32 %v6256, 1.442695
      %v6275 = vpow.pop %v6274
      %v6276 = vmul.f32 %v6257, 1.442695
      %v6277 = vpow.pop %v6276
      %v6278 = vmul.f32 %v6258, 1.442695
      %v6279 = vpow.pop %v6278
      %v6280 = vmul.f32 %v6259, 1.442695
      %v6281 = vpow.pop %v6280
      %v6282 = vmul.f32 %v6260, 1.442695
      %v6283 = vpow.pop %v6282
      %v6284 = vmul.f32 %v6261, 1.442695
      %v6285 = vpow.pop %v6284
      %v6286 = vmul.f32 %v6262, 1.442695
      %v6287 = vpow.pop %v6286
      %v6288 = vmul.f32 %v6263, 1.442695
      %v6289 = vpow.pop %v6288
      %v6290 = vmul.f32 %v6264, 1.442695
      %v6291 = vpow.pop %v6290
      %v6292 = vmul.f32 %v6265, 1.442695
      %v6293 = vpow.pop %v6292
      %v6294 = vmul.f32 %v6266, 1.442695
      %v6295 = vpow.pop %v6294
      %v6296 = vmul.f32 %v6267, 1.442695
      %v6297 = vpow.pop %v6296
      %v6298 = vmul.f32 %v6268, 1.442695
      %v6299 = vpow.pop %v6298
      %v6300 = vmul.f32 %v6269, 1.442695
      %v6301 = vpow.pop %v6300
      %v6302 = vsel %vm562, %v6271, 0.0
      %6303 = vadd.xlane.f32.xlu0 %v6302
      %v6304 = vpop.xlane.xlu0 %6303
      %v6305 = vsel %vm562, %v6273, 0.0
      %6306 = vadd.xlane.f32.xlu0 %v6305
      %v6307 = vpop.xlane.xlu0 %6306
      %v6308 = vsel %vm562, %v6275, 0.0
      %6309 = vadd.xlane.f32.xlu0 %v6308
      %v6310 = vpop.xlane.xlu0 %6309
      %v6311 = vsel %vm562, %v6277, 0.0
      %6312 = vadd.xlane.f32.xlu0 %v6311
      %v6313 = vpop.xlane.xlu0 %6312
      %v6314 = vsel %vm562, %v6279, 0.0
      %6315 = vadd.xlane.f32.xlu0 %v6314
      %v6316 = vpop.xlane.xlu0 %6315
      %v6317 = vsel %vm562, %v6281, 0.0
      %6318 = vadd.xlane.f32.xlu0 %v6317
      %v6319 = vpop.xlane.xlu0 %6318
      %v6320 = vsel %vm562, %v6283, 0.0
      %6321 = vadd.xlane.f32.xlu0 %v6320
      %v6322 = vpop.xlane.xlu0 %6321
      %v6323 = vsel %vm562, %v6285, 0.0
      %6324 = vadd.xlane.f32.xlu0 %v6323
      %v6325 = vpop.xlane.xlu0 %6324
      %v6326 = vsel %vm562, %v6287, 0.0
      %6327 = vadd.xlane.f32.xlu0 %v6326
      %v6328 = vpop.xlane.xlu0 %6327
      %v6329 = vsel %vm562, %v6289, 0.0
      %6330 = vadd.xlane.f32.xlu0 %v6329
      %v6331 = vpop.xlane.xlu0 %6330
      %v6332 = vsel %vm562, %v6291, 0.0
      %6333 = vadd.xlane.f32.xlu0 %v6332
      %v6334 = vpop.xlane.xlu0 %6333
      %v6335 = vsel %vm562, %v6293, 0.0
      %6336 = vadd.xlane.f32.xlu0 %v6335
      %v6337 = vpop.xlane.xlu0 %6336
      %v6338 = vsel %vm562, %v6295, 0.0
      %6339 = vadd.xlane.f32.xlu0 %v6338
      %v6340 = vpop.xlane.xlu0 %6339
      %v6341 = vsel %vm562, %v6297, 0.0
      %6342 = vadd.xlane.f32.xlu0 %v6341
      %v6343 = vpop.xlane.xlu0 %6342
      %v6344 = vsel %vm562, %v6299, 0.0
      %6345 = vadd.xlane.f32.xlu0 %v6344
      %v6346 = vpop.xlane.xlu0 %6345
      %v6347 = vsel %vm562, %v6301, 0.0
      %6348 = vadd.xlane.f32.xlu0 %v6347
      %v6349 = vpop.xlane.xlu0 %6348
      %v6350 = vrcp.pop %v6304
      %v6351 = vmul.f32 %v6304, %v6350
      %v6352 = vsub.f32 1.0, %v6351
      %v6353 = vmul.f32 %v6350, %v6352
      %v6354 = vadd.f32 %v6350, %v6353
      %vm6355 = vweird.f32 %v6304
      %vm6356 = vweird.f32 %v6350
      %vm6357 = vmor %vm6355, %vm6356
      %v6358 = vsel %vm6357, %v6350, %v6354
      %v6359 = vand.u32 2147483647, %v6304
      %vm6360 = vcmp.eq.f32.partialorder %v6359, 8.507059e+37
      %v6361 = vand.u32 %v6304, 2147483648
      %v6362 = vor.u32 1.1754944e-38, %v6361
      %v6363 = vsel %vm6360, %v6362, %v6358
      %v6364 = vmul.f32 %v6271, %v6363
      %v6365 = vrcp.pop %v6307
      %v6366 = vmul.f32 %v6307, %v6365
      %v6367 = vsub.f32 1.0, %v6366
      %v6368 = vmul.f32 %v6365, %v6367
      %v6369 = vadd.f32 %v6365, %v6368
      %vm6370 = vweird.f32 %v6307
      %vm6371 = vweird.f32 %v6365
      %vm6372 = vmor %vm6370, %vm6371
      %v6373 = vsel %vm6372, %v6365, %v6369
      %v6374 = vand.u32 2147483647, %v6307
      %vm6375 = vcmp.eq.f32.partialorder %v6374, 8.507059e+37
      %v6376 = vand.u32 %v6307, 2147483648
      %v6377 = vor.u32 1.1754944e-38, %v6376
      %v6378 = vsel %vm6375, %v6377, %v6373
      %v6379 = vmul.f32 %v6273, %v6378
      %v6380 = vrcp.pop %v6310
      %v6381 = vmul.f32 %v6310, %v6380
      %v6382 = vsub.f32 1.0, %v6381
      %v6383 = vmul.f32 %v6380, %v6382
      %v6384 = vadd.f32 %v6380, %v6383
      %vm6385 = vweird.f32 %v6310
      %vm6386 = vweird.f32 %v6380
      %vm6387 = vmor %vm6385, %vm6386
      %v6388 = vsel %vm6387, %v6380, %v6384
      %v6389 = vand.u32 2147483647, %v6310
      %vm6390 = vcmp.eq.f32.partialorder %v6389, 8.507059e+37
      %v6391 = vand.u32 %v6310, 2147483648
      %v6392 = vor.u32 1.1754944e-38, %v6391
      %v6393 = vsel %vm6390, %v6392, %v6388
      %v6394 = vmul.f32 %v6275, %v6393
      %v6395 = vrcp.pop %v6313
      %v6396 = vmul.f32 %v6313, %v6395
      %v6397 = vsub.f32 1.0, %v6396
      %v6398 = vmul.f32 %v6395, %v6397
      %v6399 = vadd.f32 %v6395, %v6398
      %vm6400 = vweird.f32 %v6313
      %vm6401 = vweird.f32 %v6395
      %vm6402 = vmor %vm6400, %vm6401
      %v6403 = vsel %vm6402, %v6395, %v6399
      %v6404 = vand.u32 2147483647, %v6313
      %vm6405 = vcmp.eq.f32.partialorder %v6404, 8.507059e+37
      %v6406 = vand.u32 %v6313, 2147483648
      %v6407 = vor.u32 1.1754944e-38, %v6406
      %v6408 = vsel %vm6405, %v6407, %v6403
      %v6409 = vmul.f32 %v6277, %v6408
      %v6410 = vrcp.pop %v6316
      %v6411 = vmul.f32 %v6316, %v6410
      %v6412 = vsub.f32 1.0, %v6411
      %v6413 = vmul.f32 %v6410, %v6412
      %v6414 = vadd.f32 %v6410, %v6413
      %vm6415 = vweird.f32 %v6316
      %vm6416 = vweird.f32 %v6410
      %vm6417 = vmor %vm6415, %vm6416
      %v6418 = vsel %vm6417, %v6410, %v6414
      %v6419 = vand.u32 2147483647, %v6316
      %vm6420 = vcmp.eq.f32.partialorder %v6419, 8.507059e+37
      %v6421 = vand.u32 %v6316, 2147483648
      %v6422 = vor.u32 1.1754944e-38, %v6421
      %v6423 = vsel %vm6420, %v6422, %v6418
      %v6424 = vmul.f32 %v6279, %v6423
      %v6425 = vrcp.pop %v6319
      %v6426 = vmul.f32 %v6319, %v6425
      %v6427 = vsub.f32 1.0, %v6426
      %v6428 = vmul.f32 %v6425, %v6427
      %v6429 = vadd.f32 %v6425, %v6428
      %vm6430 = vweird.f32 %v6319
      %vm6431 = vweird.f32 %v6425
      %vm6432 = vmor %vm6430, %vm6431
      %v6433 = vsel %vm6432, %v6425, %v6429
      %v6434 = vand.u32 2147483647, %v6319
      %vm6435 = vcmp.eq.f32.partialorder %v6434, 8.507059e+37
      %v6436 = vand.u32 %v6319, 2147483648
      %v6437 = vor.u32 1.1754944e-38, %v6436
      %v6438 = vsel %vm6435, %v6437, %v6433
      %v6439 = vmul.f32 %v6281, %v6438
      %v6440 = vrcp.pop %v6322
      %v6441 = vmul.f32 %v6322, %v6440
      %v6442 = vsub.f32 1.0, %v6441
      %v6443 = vmul.f32 %v6440, %v6442
      %v6444 = vadd.f32 %v6440, %v6443
      %vm6445 = vweird.f32 %v6322
      %vm6446 = vweird.f32 %v6440
      %vm6447 = vmor %vm6445, %vm6446
      %v6448 = vsel %vm6447, %v6440, %v6444
      %v6449 = vand.u32 2147483647, %v6322
      %vm6450 = vcmp.eq.f32.partialorder %v6449, 8.507059e+37
      %v6451 = vand.u32 %v6322, 2147483648
      %v6452 = vor.u32 1.1754944e-38, %v6451
      %v6453 = vsel %vm6450, %v6452, %v6448
      %v6454 = vmul.f32 %v6283, %v6453
      %v6455 = vrcp.pop %v6325
      %v6456 = vmul.f32 %v6325, %v6455
      %v6457 = vsub.f32 1.0, %v6456
      %v6458 = vmul.f32 %v6455, %v6457
      %v6459 = vadd.f32 %v6455, %v6458
      %vm6460 = vweird.f32 %v6325
      %vm6461 = vweird.f32 %v6455
      %vm6462 = vmor %vm6460, %vm6461
      %v6463 = vsel %vm6462, %v6455, %v6459
      %v6464 = vand.u32 2147483647, %v6325
      %vm6465 = vcmp.eq.f32.partialorder %v6464, 8.507059e+37
      %v6466 = vand.u32 %v6325, 2147483648
      %v6467 = vor.u32 1.1754944e-38, %v6466
      %v6468 = vsel %vm6465, %v6467, %v6463
      %v6469 = vmul.f32 %v6285, %v6468
      %v6470 = vrcp.pop %v6328
      %v6471 = vmul.f32 %v6328, %v6470
      %v6472 = vsub.f32 1.0, %v6471
      %v6473 = vmul.f32 %v6470, %v6472
      %v6474 = vadd.f32 %v6470, %v6473
      %vm6475 = vweird.f32 %v6328
      %vm6476 = vweird.f32 %v6470
      %vm6477 = vmor %vm6475, %vm6476
      %v6478 = vsel %vm6477, %v6470, %v6474
      %v6479 = vand.u32 2147483647, %v6328
      %vm6480 = vcmp.eq.f32.partialorder %v6479, 8.507059e+37
      %v6481 = vand.u32 %v6328, 2147483648
      %v6482 = vor.u32 1.1754944e-38, %v6481
      %v6483 = vsel %vm6480, %v6482, %v6478
      %v6484 = vmul.f32 %v6287, %v6483
      %v6485 = vrcp.pop %v6331
      %v6486 = vmul.f32 %v6331, %v6485
      %v6487 = vsub.f32 1.0, %v6486
      %v6488 = vmul.f32 %v6485, %v6487
      %v6489 = vadd.f32 %v6485, %v6488
      %vm6490 = vweird.f32 %v6331
      %vm6491 = vweird.f32 %v6485
      %vm6492 = vmor %vm6490, %vm6491
      %v6493 = vsel %vm6492, %v6485, %v6489
      %v6494 = vand.u32 2147483647, %v6331
      %vm6495 = vcmp.eq.f32.partialorder %v6494, 8.507059e+37
      %v6496 = vand.u32 %v6331, 2147483648
      %v6497 = vor.u32 1.1754944e-38, %v6496
      %v6498 = vsel %vm6495, %v6497, %v6493
      %v6499 = vmul.f32 %v6289, %v6498
      %v6500 = vrcp.pop %v6334
      %v6501 = vmul.f32 %v6334, %v6500
      %v6502 = vsub.f32 1.0, %v6501
      %v6503 = vmul.f32 %v6500, %v6502
      %v6504 = vadd.f32 %v6500, %v6503
      %vm6505 = vweird.f32 %v6334
      %vm6506 = vweird.f32 %v6500
      %vm6507 = vmor %vm6505, %vm6506
      %v6508 = vsel %vm6507, %v6500, %v6504
      %v6509 = vand.u32 2147483647, %v6334
      %vm6510 = vcmp.eq.f32.partialorder %v6509, 8.507059e+37
      %v6511 = vand.u32 %v6334, 2147483648
      %v6512 = vor.u32 1.1754944e-38, %v6511
      %v6513 = vsel %vm6510, %v6512, %v6508
      %v6514 = vmul.f32 %v6291, %v6513
      %v6515 = vrcp.pop %v6337
      %v6516 = vmul.f32 %v6337, %v6515
      %v6517 = vsub.f32 1.0, %v6516
      %v6518 = vmul.f32 %v6515, %v6517
      %v6519 = vadd.f32 %v6515, %v6518
      %vm6520 = vweird.f32 %v6337
      %vm6521 = vweird.f32 %v6515
      %vm6522 = vmor %vm6520, %vm6521
      %v6523 = vsel %vm6522, %v6515, %v6519
      %v6524 = vand.u32 2147483647, %v6337
      %vm6525 = vcmp.eq.f32.partialorder %v6524, 8.507059e+37
      %v6526 = vand.u32 %v6337, 2147483648
      %v6527 = vor.u32 1.1754944e-38, %v6526
      %v6528 = vsel %vm6525, %v6527, %v6523
      %v6529 = vmul.f32 %v6293, %v6528
      %v6530 = vrcp.pop %v6340
      %v6531 = vmul.f32 %v6340, %v6530
      %v6532 = vsub.f32 1.0, %v6531
      %v6533 = vmul.f32 %v6530, %v6532
      %v6534 = vadd.f32 %v6530, %v6533
      %vm6535 = vweird.f32 %v6340
      %vm6536 = vweird.f32 %v6530
      %vm6537 = vmor %vm6535, %vm6536
      %v6538 = vsel %vm6537, %v6530, %v6534
      %v6539 = vand.u32 2147483647, %v6340
      %vm6540 = vcmp.eq.f32.partialorder %v6539, 8.507059e+37
      %v6541 = vand.u32 %v6340, 2147483648
      %v6542 = vor.u32 1.1754944e-38, %v6541
      %v6543 = vsel %vm6540, %v6542, %v6538
      %v6544 = vmul.f32 %v6295, %v6543
      %v6545 = vrcp.pop %v6343
      %v6546 = vmul.f32 %v6343, %v6545
      %v6547 = vsub.f32 1.0, %v6546
      %v6548 = vmul.f32 %v6545, %v6547
      %v6549 = vadd.f32 %v6545, %v6548
      %vm6550 = vweird.f32 %v6343
      %vm6551 = vweird.f32 %v6545
      %vm6552 = vmor %vm6550, %vm6551
      %v6553 = vsel %vm6552, %v6545, %v6549
      %v6554 = vand.u32 2147483647, %v6343
      %vm6555 = vcmp.eq.f32.partialorder %v6554, 8.507059e+37
      %v6556 = vand.u32 %v6343, 2147483648
      %v6557 = vor.u32 1.1754944e-38, %v6556
      %v6558 = vsel %vm6555, %v6557, %v6553
      %v6559 = vmul.f32 %v6297, %v6558
      %v6560 = vrcp.pop %v6346
      %v6561 = vmul.f32 %v6346, %v6560
      %v6562 = vsub.f32 1.0, %v6561
      %v6563 = vmul.f32 %v6560, %v6562
      %v6564 = vadd.f32 %v6560, %v6563
      %vm6565 = vweird.f32 %v6346
      %vm6566 = vweird.f32 %v6560
      %vm6567 = vmor %vm6565, %vm6566
      %v6568 = vsel %vm6567, %v6560, %v6564
      %v6569 = vand.u32 2147483647, %v6346
      %vm6570 = vcmp.eq.f32.partialorder %v6569, 8.507059e+37
      %v6571 = vand.u32 %v6346, 2147483648
      %v6572 = vor.u32 1.1754944e-38, %v6571
      %v6573 = vsel %vm6570, %v6572, %v6568
      %v6574 = vmul.f32 %v6299, %v6573
      %v6575 = vrcp.pop %v6349
      %v6576 = vmul.f32 %v6349, %v6575
      %v6577 = vsub.f32 1.0, %v6576
      %v6578 = vmul.f32 %v6575, %v6577
      %v6579 = vadd.f32 %v6575, %v6578
      %vm6580 = vweird.f32 %v6349
      %vm6581 = vweird.f32 %v6575
      %vm6582 = vmor %vm6580, %vm6581
      %v6583 = vsel %vm6582, %v6575, %v6579
      %v6584 = vand.u32 2147483647, %v6349
      %vm6585 = vcmp.eq.f32.partialorder %v6584, 8.507059e+37
      %v6586 = vand.u32 %v6349, 2147483648
      %v6587 = vor.u32 1.1754944e-38, %v6586
      %v6588 = vsel %vm6585, %v6587, %v6583
      %v6589 = vmul.f32 %v6301, %v6588
      %v6590 = vpack.c.bf16 %v6364, %v6364
      %v6591 = vpack.c.bf16 %v6379, %v6379
      %v6592 = vpack.c.bf16 %v6394, %v6394
      %v6593 = vpack.c.bf16 %v6409, %v6409
      %v6594 = vpack.c.bf16 %v6424, %v6424
      %v6595 = vpack.c.bf16 %v6439, %v6439
      %v6596 = vpack.c.bf16 %v6454, %v6454
      %v6597 = vpack.c.bf16 %v6469, %v6469
      %v6598 = vpack.c.bf16 %v6484, %v6484
      %v6599 = vpack.c.bf16 %v6499, %v6499
      %v6600 = vpack.c.bf16 %v6514, %v6514
      %v6601 = vpack.c.bf16 %v6529, %v6529
      %v6602 = vpack.c.bf16 %v6544, %v6544
      %v6603 = vpack.c.bf16 %v6559, %v6559
      %v6604 = vpack.c.bf16 %v6574, %v6574
      %v6605 = vpack.c.bf16 %v6589, %v6589
      %v6610 = vunpack.c.l.b16 %v6590
      %v6611 = vunpack.c.l.b16 %v6591
      %v6612 = vunpack.c.l.b16 %v6592
      %v6613 = vunpack.c.l.b16 %v6593
      %v6614 = vpack.c.b16 %v6611, %v6610
      %v6615 = vpack.c.b16 %v6613, %v6612
      %6616 = vrot.lane.b32.xlu0 %v6034, 64
      %v6617 = vpop.permute.xlu0 %6616
      %6618 = vrot.lane.b32.xlu0 %v6035, 64
      %v6619 = vpop.permute.xlu0 %6618
      %v6623 = vsel %vm562, %v6614, 0
      %v6626 = vsel %vm562, %v6615, 0
      %6628 = vmatpush.bf16.msra.mxu0 0
      %6629 = vmatpush.bf16.msra.mxu0 0
      %6630 = vmatpush.bf16.msra.mxu0 0
      %6631 = vmatpush.bf16.msra.mxu0 0
      %6632 = vmatpush.bf16.msra.mxu0 0
      %6633 = vmatpush.bf16.msra.mxu0 0
      %6634 = vmatpush.bf16.msra.mxu0 %v6619
      %6635 = vmatpush.bf16.msra.mxu0 %v6617
      %6636 = vmatmul.bf16.gmra.mxu0 %v6623
      %v6637 = vpop.f32.mrf.mxu0
      %v6638 = vadd.f32 0.0, %v6637
      %v6639 = vpop.f32.mrf.mxu0
      %v6640 = vadd.f32 0.0, %v6639
      %6641 = vmatmul.bf16.gmra.mxu0 %v6626
      %v6642 = vpop.f32.mrf.mxu0
      %v6643 = vadd.f32 0.0, %v6642
      %v6644 = vpop.f32.mrf.mxu0
      %v6645 = vadd.f32 0.0, %v6644
      %6646 = vdwg.mxu0
      %v6651 = vunpack.c.l.b16 %v6594
      %v6652 = vunpack.c.l.b16 %v6595
      %v6653 = vunpack.c.l.b16 %v6596
      %v6654 = vunpack.c.l.b16 %v6597
      %v6655 = vpack.c.b16 %v6652, %v6651
      %v6656 = vpack.c.b16 %v6654, %v6653
      %6657 = vrot.lane.b32.xlu0 %v6079, 64
      %v6658 = vpop.permute.xlu0 %6657
      %6659 = vrot.lane.b32.xlu0 %v6080, 64
      %v6660 = vpop.permute.xlu0 %6659
      %v6664 = vsel %vm562, %v6655, 0
      %v6667 = vsel %vm562, %v6656, 0
      %6669 = vmatpush.bf16.msra.mxu0 0
      %6670 = vmatpush.bf16.msra.mxu0 0
      %6671 = vmatpush.bf16.msra.mxu0 0
      %6672 = vmatpush.bf16.msra.mxu0 0
      %6673 = vmatpush.bf16.msra.mxu0 0
      %6674 = vmatpush.bf16.msra.mxu0 0
      %6675 = vmatpush.bf16.msra.mxu0 %v6660
      %6676 = vmatpush.bf16.msra.mxu0 %v6658
      %6677 = vmatmul.bf16.gmra.mxu0 %v6664
      %v6678 = vpop.f32.mrf.mxu0
      %v6679 = vadd.f32 0.0, %v6678
      %v6680 = vpop.f32.mrf.mxu0
      %v6681 = vadd.f32 0.0, %v6680
      %6682 = vmatmul.bf16.gmra.mxu0 %v6667
      %v6683 = vpop.f32.mrf.mxu0
      %v6684 = vadd.f32 0.0, %v6683
      %v6685 = vpop.f32.mrf.mxu0
      %v6686 = vadd.f32 0.0, %v6685
      %6687 = vdwg.mxu0
      %v6692 = vunpack.c.l.b16 %v6598
      %v6693 = vunpack.c.l.b16 %v6599
      %v6694 = vunpack.c.l.b16 %v6600
      %v6695 = vunpack.c.l.b16 %v6601
      %v6696 = vpack.c.b16 %v6693, %v6692
      %v6697 = vpack.c.b16 %v6695, %v6694
      %6698 = vrot.lane.b32.xlu0 %v6124, 64
      %v6699 = vpop.permute.xlu0 %6698
      %6700 = vrot.lane.b32.xlu0 %v6125, 64
      %v6701 = vpop.permute.xlu0 %6700
      %v6705 = vsel %vm562, %v6696, 0
      %v6708 = vsel %vm562, %v6697, 0
      %6710 = vmatpush.bf16.msra.mxu0 0
      %6711 = vmatpush.bf16.msra.mxu0 0
      %6712 = vmatpush.bf16.msra.mxu0 0
      %6713 = vmatpush.bf16.msra.mxu0 0
      %6714 = vmatpush.bf16.msra.mxu0 0
      %6715 = vmatpush.bf16.msra.mxu0 0
      %6716 = vmatpush.bf16.msra.mxu0 %v6701
      %6717 = vmatpush.bf16.msra.mxu0 %v6699
      %6718 = vmatmul.bf16.gmra.mxu0 %v6705
      %v6719 = vpop.f32.mrf.mxu0
      %v6720 = vadd.f32 0.0, %v6719
      %v6721 = vpop.f32.mrf.mxu0
      %v6722 = vadd.f32 0.0, %v6721
      %6723 = vmatmul.bf16.gmra.mxu0 %v6708
      %v6724 = vpop.f32.mrf.mxu0
      %v6725 = vadd.f32 0.0, %v6724
      %v6726 = vpop.f32.mrf.mxu0
      %v6727 = vadd.f32 0.0, %v6726
      %6728 = vdwg.mxu0
      %v6733 = vunpack.c.l.b16 %v6602
      %v6734 = vunpack.c.l.b16 %v6603
      %v6735 = vunpack.c.l.b16 %v6604
      %v6736 = vunpack.c.l.b16 %v6605
      %v6737 = vpack.c.b16 %v6734, %v6733
      %v6738 = vpack.c.b16 %v6736, %v6735
      %6739 = vrot.lane.b32.xlu0 %v6169, 64
      %v6740 = vpop.permute.xlu0 %6739
      %6741 = vrot.lane.b32.xlu0 %v6170, 64
      %v6742 = vpop.permute.xlu0 %6741
      %v6746 = vsel %vm562, %v6737, 0
      %v6749 = vsel %vm562, %v6738, 0
      %6751 = vmatpush.bf16.msra.mxu0 0
      %6752 = vmatpush.bf16.msra.mxu0 0
      %6753 = vmatpush.bf16.msra.mxu0 0
      %6754 = vmatpush.bf16.msra.mxu0 0
      %6755 = vmatpush.bf16.msra.mxu0 0
      %6756 = vmatpush.bf16.msra.mxu0 0
      %6757 = vmatpush.bf16.msra.mxu0 %v6742
      %6758 = vmatpush.bf16.msra.mxu0 %v6740
      %6759 = vmatmul.bf16.gmra.mxu0 %v6746
      %v6760 = vpop.f32.mrf.mxu0
      %v6761 = vadd.f32 0.0, %v6760
      %v6762 = vpop.f32.mrf.mxu0
      %v6763 = vadd.f32 0.0, %v6762
      %6764 = vmatmul.bf16.gmra.mxu0 %v6749
      %v6765 = vpop.f32.mrf.mxu0
      %v6766 = vadd.f32 0.0, %v6765
      %v6767 = vpop.f32.mrf.mxu0
      %v6768 = vadd.f32 0.0, %v6767
      %6769 = vdwg.mxu0
      %6770 = vrot.lane.b32.xlu0 %v6034, 120
      %v6771 = vpop.permute.xlu0 %6770
      %6772 = vrot.lane.b32.xlu0 %v6035, 120
      %v6773 = vpop.permute.xlu0 %6772
      %6774 = vrot.lane.b32.xlu0 %v6034, 88
      %v6775 = vpop.permute.xlu0 %6774
      %6776 = vrot.lane.b32.xlu0 %v6035, 88
      %v6777 = vpop.permute.xlu0 %6776
      %v6779 = vsel %vm1473, %v6771, 0
      %v6782 = vsel %vm1473, %v6773, 0
      %v6785 = vsel %vm1473, %v6775, 0
      %v6788 = vsel %vm1473, %v6777, 0
      %6790 = vmatpush.bf16.xpose.msra.mxu0 0
      %6791 = vmatpush.bf16.xpose.msra.mxu0 0
      %6792 = vmatpush.bf16.xpose.msra.mxu0 0
      %6793 = vmatpush.bf16.xpose.msra.mxu0 0
      %6794 = vmatpush.bf16.xpose.msra.mxu0 0
      %6795 = vmatpush.bf16.xpose.msra.mxu0 0
      %6796 = vmatpush.bf16.xpose.msra.mxu0 %v6788
      %6797 = vmatpush.bf16.xpose.msra.mxu0 %v6785
      %6798 = vmatmul.bf16.gmra.mxu0 %v6779
      %v6799 = vpop.f32.mrf.mxu0
      %v6800 = vadd.f32 %v232, %v6799
      %v6801 = vpop.f32.mrf.mxu0
      %v6802 = vadd.f32 %v232, %v6801
      %6803 = vmatmul.bf16.gmra.mxu0 %v6782
      %v6804 = vpop.f32.mrf.mxu0
      %v6805 = vadd.f32 %v232, %v6804
      %v6806 = vpop.f32.mrf.mxu0
      %v6807 = vadd.f32 %v232, %v6806
      %6808 = vdwg.mxu0
      %6809 = vrot.lane.b32.xlu0 %v6079, 120
      %v6810 = vpop.permute.xlu0 %6809
      %6811 = vrot.lane.b32.xlu0 %v6080, 120
      %v6812 = vpop.permute.xlu0 %6811
      %6813 = vrot.lane.b32.xlu0 %v6079, 88
      %v6814 = vpop.permute.xlu0 %6813
      %6815 = vrot.lane.b32.xlu0 %v6080, 88
      %v6816 = vpop.permute.xlu0 %6815
      %v6818 = vsel %vm1473, %v6810, 0
      %v6821 = vsel %vm1473, %v6812, 0
      %v6824 = vsel %vm1473, %v6814, 0
      %v6827 = vsel %vm1473, %v6816, 0
      %6829 = vmatpush.bf16.xpose.msra.mxu0 0
      %6830 = vmatpush.bf16.xpose.msra.mxu0 0
      %6831 = vmatpush.bf16.xpose.msra.mxu0 0
      %6832 = vmatpush.bf16.xpose.msra.mxu0 0
      %6833 = vmatpush.bf16.xpose.msra.mxu0 0
      %6834 = vmatpush.bf16.xpose.msra.mxu0 0
      %6835 = vmatpush.bf16.xpose.msra.mxu0 %v6827
      %6836 = vmatpush.bf16.xpose.msra.mxu0 %v6824
      %6837 = vmatmul.bf16.gmra.mxu0 %v6818
      %v6838 = vpop.f32.mrf.mxu0
      %v6839 = vadd.f32 %v232, %v6838
      %v6840 = vpop.f32.mrf.mxu0
      %v6841 = vadd.f32 %v232, %v6840
      %6842 = vmatmul.bf16.gmra.mxu0 %v6821
      %v6843 = vpop.f32.mrf.mxu0
      %v6844 = vadd.f32 %v232, %v6843
      %v6845 = vpop.f32.mrf.mxu0
      %v6846 = vadd.f32 %v232, %v6845
      %6847 = vdwg.mxu0
      %6848 = vrot.lane.b32.xlu0 %v6124, 120
      %v6849 = vpop.permute.xlu0 %6848
      %6850 = vrot.lane.b32.xlu0 %v6125, 120
      %v6851 = vpop.permute.xlu0 %6850
      %6852 = vrot.lane.b32.xlu0 %v6124, 88
      %v6853 = vpop.permute.xlu0 %6852
      %6854 = vrot.lane.b32.xlu0 %v6125, 88
      %v6855 = vpop.permute.xlu0 %6854
      %v6857 = vsel %vm1473, %v6849, 0
      %v6860 = vsel %vm1473, %v6851, 0
      %v6863 = vsel %vm1473, %v6853, 0
      %v6866 = vsel %vm1473, %v6855, 0
      %6868 = vmatpush.bf16.xpose.msra.mxu0 0
      %6869 = vmatpush.bf16.xpose.msra.mxu0 0
      %6870 = vmatpush.bf16.xpose.msra.mxu0 0
      %6871 = vmatpush.bf16.xpose.msra.mxu0 0
      %6872 = vmatpush.bf16.xpose.msra.mxu0 0
      %6873 = vmatpush.bf16.xpose.msra.mxu0 0
      %6874 = vmatpush.bf16.xpose.msra.mxu0 %v6866
      %6875 = vmatpush.bf16.xpose.msra.mxu0 %v6863
      %6876 = vmatmul.bf16.gmra.mxu0 %v6857
      %v6877 = vpop.f32.mrf.mxu0
      %v6878 = vadd.f32 %v232, %v6877
      %v6879 = vpop.f32.mrf.mxu0
      %v6880 = vadd.f32 %v232, %v6879
      %6881 = vmatmul.bf16.gmra.mxu0 %v6860
      %v6882 = vpop.f32.mrf.mxu0
      %v6883 = vadd.f32 %v232, %v6882
      %v6884 = vpop.f32.mrf.mxu0
      %v6885 = vadd.f32 %v232, %v6884
      %6886 = vdwg.mxu0
      %6887 = vrot.lane.b32.xlu0 %v6169, 120
      %v6888 = vpop.permute.xlu0 %6887
      %6889 = vrot.lane.b32.xlu0 %v6170, 120
      %v6890 = vpop.permute.xlu0 %6889
      %6891 = vrot.lane.b32.xlu0 %v6169, 88
      %v6892 = vpop.permute.xlu0 %6891
      %6893 = vrot.lane.b32.xlu0 %v6170, 88
      %v6894 = vpop.permute.xlu0 %6893
      %v6896 = vsel %vm1473, %v6888, 0
      %v6899 = vsel %vm1473, %v6890, 0
      %v6902 = vsel %vm1473, %v6892, 0
      %v6905 = vsel %vm1473, %v6894, 0
      %6907 = vmatpush.bf16.xpose.msra.mxu0 0
      %6908 = vmatpush.bf16.xpose.msra.mxu0 0
      %6909 = vmatpush.bf16.xpose.msra.mxu0 0
      %6910 = vmatpush.bf16.xpose.msra.mxu0 0
      %6911 = vmatpush.bf16.xpose.msra.mxu0 0
      %6912 = vmatpush.bf16.xpose.msra.mxu0 0
      %6913 = vmatpush.bf16.xpose.msra.mxu0 %v6905
      %6914 = vmatpush.bf16.xpose.msra.mxu0 %v6902
      %6915 = vmatmul.bf16.gmra.mxu0 %v6896
      %v6916 = vpop.f32.mrf.mxu0
      %v6917 = vadd.f32 %v232, %v6916
      %v6918 = vpop.f32.mrf.mxu0
      %v6919 = vadd.f32 %v232, %v6918
      %6920 = vmatmul.bf16.gmra.mxu0 %v6899
      %v6921 = vpop.f32.mrf.mxu0
      %v6922 = vadd.f32 %v232, %v6921
      %v6923 = vpop.f32.mrf.mxu0
      %v6924 = vadd.f32 %v232, %v6923
      %6925 = vdwg.mxu0
      %v6926 = vsel %vm562, %v6800, -inf
      %6927 = vmax.xlane.f32.xlu0 %v6926
      %v6928 = vpop.xlane.xlu0 %6927
      %v6929 = vsel %vm562, %v6802, -inf
      %6930 = vmax.xlane.f32.xlu0 %v6929
      %v6931 = vpop.xlane.xlu0 %6930
      %v6932 = vsel %vm562, %v6805, -inf
      %6933 = vmax.xlane.f32.xlu0 %v6932
      %v6934 = vpop.xlane.xlu0 %6933
      %v6935 = vsel %vm562, %v6807, -inf
      %6936 = vmax.xlane.f32.xlu0 %v6935
      %v6937 = vpop.xlane.xlu0 %6936
      %v6938 = vsel %vm562, %v6839, -inf
      %6939 = vmax.xlane.f32.xlu0 %v6938
      %v6940 = vpop.xlane.xlu0 %6939
      %v6941 = vsel %vm562, %v6841, -inf
      %6942 = vmax.xlane.f32.xlu0 %v6941
      %v6943 = vpop.xlane.xlu0 %6942
      %v6944 = vsel %vm562, %v6844, -inf
      %6945 = vmax.xlane.f32.xlu0 %v6944
      %v6946 = vpop.xlane.xlu0 %6945
      %v6947 = vsel %vm562, %v6846, -inf
      %6948 = vmax.xlane.f32.xlu0 %v6947
      %v6949 = vpop.xlane.xlu0 %6948
      %v6950 = vsel %vm562, %v6878, -inf
      %6951 = vmax.xlane.f32.xlu0 %v6950
      %v6952 = vpop.xlane.xlu0 %6951
      %v6953 = vsel %vm562, %v6880, -inf
      %6954 = vmax.xlane.f32.xlu0 %v6953
      %v6955 = vpop.xlane.xlu0 %6954
      %v6956 = vsel %vm562, %v6883, -inf
      %6957 = vmax.xlane.f32.xlu0 %v6956
      %v6958 = vpop.xlane.xlu0 %6957
      %v6959 = vsel %vm562, %v6885, -inf
      %6960 = vmax.xlane.f32.xlu0 %v6959
      %v6961 = vpop.xlane.xlu0 %6960
      %v6962 = vsel %vm562, %v6917, -inf
      %6963 = vmax.xlane.f32.xlu0 %v6962
      %v6964 = vpop.xlane.xlu0 %6963
      %v6965 = vsel %vm562, %v6919, -inf
      %6966 = vmax.xlane.f32.xlu0 %v6965
      %v6967 = vpop.xlane.xlu0 %6966
      %v6968 = vsel %vm562, %v6922, -inf
      %6969 = vmax.xlane.f32.xlu0 %v6968
      %v6970 = vpop.xlane.xlu0 %6969
      %v6971 = vsel %vm562, %v6924, -inf
      %6972 = vmax.xlane.f32.xlu0 %v6971
      %v6973 = vpop.xlane.xlu0 %6972
      %v6974 = vsub.f32 %v6800, %v6928
      %v6975 = vsub.f32 %v6802, %v6931
      %v6976 = vsub.f32 %v6805, %v6934
      %v6977 = vsub.f32 %v6807, %v6937
      %v6978 = vsub.f32 %v6839, %v6940
      %v6979 = vsub.f32 %v6841, %v6943
      %v6980 = vsub.f32 %v6844, %v6946
      %v6981 = vsub.f32 %v6846, %v6949
      %v6982 = vsub.f32 %v6878, %v6952
      %v6983 = vsub.f32 %v6880, %v6955
      %v6984 = vsub.f32 %v6883, %v6958
      %v6985 = vsub.f32 %v6885, %v6961
      %v6986 = vsub.f32 %v6917, %v6964
      %v6987 = vsub.f32 %v6919, %v6967
      %v6988 = vsub.f32 %v6922, %v6970
      %v6989 = vsub.f32 %v6924, %v6973
      %v6990 = vmul.f32 %v6974, 1.442695
      %v6991 = vpow.pop %v6990
      %v6992 = vmul.f32 %v6975, 1.442695
      %v6993 = vpow.pop %v6992
      %v6994 = vmul.f32 %v6976, 1.442695
      %v6995 = vpow.pop %v6994
      %v6996 = vmul.f32 %v6977, 1.442695
      %v6997 = vpow.pop %v6996
      %v6998 = vmul.f32 %v6978, 1.442695
      %v6999 = vpow.pop %v6998
      %v7000 = vmul.f32 %v6979, 1.442695
      %v7001 = vpow.pop %v7000
      %v7002 = vmul.f32 %v6980, 1.442695
      %v7003 = vpow.pop %v7002
      %v7004 = vmul.f32 %v6981, 1.442695
      %v7005 = vpow.pop %v7004
      %v7006 = vmul.f32 %v6982, 1.442695
      %v7007 = vpow.pop %v7006
      %v7008 = vmul.f32 %v6983, 1.442695
      %v7009 = vpow.pop %v7008
      %v7010 = vmul.f32 %v6984, 1.442695
      %v7011 = vpow.pop %v7010
      %v7012 = vmul.f32 %v6985, 1.442695
      %v7013 = vpow.pop %v7012
      %v7014 = vmul.f32 %v6986, 1.442695
      %v7015 = vpow.pop %v7014
      %v7016 = vmul.f32 %v6987, 1.442695
      %v7017 = vpow.pop %v7016
      %v7018 = vmul.f32 %v6988, 1.442695
      %v7019 = vpow.pop %v7018
      %v7020 = vmul.f32 %v6989, 1.442695
      %v7021 = vpow.pop %v7020
      %v7022 = vsel %vm562, %v6991, 0.0
      %7023 = vadd.xlane.f32.xlu0 %v7022
      %v7024 = vpop.xlane.xlu0 %7023
      %v7025 = vsel %vm562, %v6993, 0.0
      %7026 = vadd.xlane.f32.xlu0 %v7025
      %v7027 = vpop.xlane.xlu0 %7026
      %v7028 = vsel %vm562, %v6995, 0.0
      %7029 = vadd.xlane.f32.xlu0 %v7028
      %v7030 = vpop.xlane.xlu0 %7029
      %v7031 = vsel %vm562, %v6997, 0.0
      %7032 = vadd.xlane.f32.xlu0 %v7031
      %v7033 = vpop.xlane.xlu0 %7032
      %v7034 = vsel %vm562, %v6999, 0.0
      %7035 = vadd.xlane.f32.xlu0 %v7034
      %v7036 = vpop.xlane.xlu0 %7035
      %v7037 = vsel %vm562, %v7001, 0.0
      %7038 = vadd.xlane.f32.xlu0 %v7037
      %v7039 = vpop.xlane.xlu0 %7038
      %v7040 = vsel %vm562, %v7003, 0.0
      %7041 = vadd.xlane.f32.xlu0 %v7040
      %v7042 = vpop.xlane.xlu0 %7041
      %v7043 = vsel %vm562, %v7005, 0.0
      %7044 = vadd.xlane.f32.xlu0 %v7043
      %v7045 = vpop.xlane.xlu0 %7044
      %v7046 = vsel %vm562, %v7007, 0.0
      %7047 = vadd.xlane.f32.xlu0 %v7046
      %v7048 = vpop.xlane.xlu0 %7047
      %v7049 = vsel %vm562, %v7009, 0.0
      %7050 = vadd.xlane.f32.xlu0 %v7049
      %v7051 = vpop.xlane.xlu0 %7050
      %v7052 = vsel %vm562, %v7011, 0.0
      %7053 = vadd.xlane.f32.xlu0 %v7052
      %v7054 = vpop.xlane.xlu0 %7053
      %v7055 = vsel %vm562, %v7013, 0.0
      %7056 = vadd.xlane.f32.xlu0 %v7055
      %v7057 = vpop.xlane.xlu0 %7056
      %v7058 = vsel %vm562, %v7015, 0.0
      %7059 = vadd.xlane.f32.xlu0 %v7058
      %v7060 = vpop.xlane.xlu0 %7059
      %v7061 = vsel %vm562, %v7017, 0.0
      %7062 = vadd.xlane.f32.xlu0 %v7061
      %v7063 = vpop.xlane.xlu0 %7062
      %v7064 = vsel %vm562, %v7019, 0.0
      %7065 = vadd.xlane.f32.xlu0 %v7064
      %v7066 = vpop.xlane.xlu0 %7065
      %v7067 = vsel %vm562, %v7021, 0.0
      %7068 = vadd.xlane.f32.xlu0 %v7067
      %v7069 = vpop.xlane.xlu0 %7068
      %v7070 = vrcp.pop %v7024
      %v7071 = vmul.f32 %v7024, %v7070
      %v7072 = vsub.f32 1.0, %v7071
      %v7073 = vmul.f32 %v7070, %v7072
      %v7074 = vadd.f32 %v7070, %v7073
      %vm7075 = vweird.f32 %v7024
      %vm7076 = vweird.f32 %v7070
      %vm7077 = vmor %vm7075, %vm7076
      %v7078 = vsel %vm7077, %v7070, %v7074
      %v7079 = vand.u32 2147483647, %v7024
      %vm7080 = vcmp.eq.f32.partialorder %v7079, 8.507059e+37
      %v7081 = vand.u32 %v7024, 2147483648
      %v7082 = vor.u32 1.1754944e-38, %v7081
      %v7083 = vsel %vm7080, %v7082, %v7078
      %v7084 = vmul.f32 %v6991, %v7083
      %v7085 = vrcp.pop %v7027
      %v7086 = vmul.f32 %v7027, %v7085
      %v7087 = vsub.f32 1.0, %v7086
      %v7088 = vmul.f32 %v7085, %v7087
      %v7089 = vadd.f32 %v7085, %v7088
      %vm7090 = vweird.f32 %v7027
      %vm7091 = vweird.f32 %v7085
      %vm7092 = vmor %vm7090, %vm7091
      %v7093 = vsel %vm7092, %v7085, %v7089
      %v7094 = vand.u32 2147483647, %v7027
      %vm7095 = vcmp.eq.f32.partialorder %v7094, 8.507059e+37
      %v7096 = vand.u32 %v7027, 2147483648
      %v7097 = vor.u32 1.1754944e-38, %v7096
      %v7098 = vsel %vm7095, %v7097, %v7093
      %v7099 = vmul.f32 %v6993, %v7098
      %v7100 = vrcp.pop %v7030
      %v7101 = vmul.f32 %v7030, %v7100
      %v7102 = vsub.f32 1.0, %v7101
      %v7103 = vmul.f32 %v7100, %v7102
      %v7104 = vadd.f32 %v7100, %v7103
      %vm7105 = vweird.f32 %v7030
      %vm7106 = vweird.f32 %v7100
      %vm7107 = vmor %vm7105, %vm7106
      %v7108 = vsel %vm7107, %v7100, %v7104
      %v7109 = vand.u32 2147483647, %v7030
      %vm7110 = vcmp.eq.f32.partialorder %v7109, 8.507059e+37
      %v7111 = vand.u32 %v7030, 2147483648
      %v7112 = vor.u32 1.1754944e-38, %v7111
      %v7113 = vsel %vm7110, %v7112, %v7108
      %v7114 = vmul.f32 %v6995, %v7113
      %v7115 = vrcp.pop %v7033
      %v7116 = vmul.f32 %v7033, %v7115
      %v7117 = vsub.f32 1.0, %v7116
      %v7118 = vmul.f32 %v7115, %v7117
      %v7119 = vadd.f32 %v7115, %v7118
      %vm7120 = vweird.f32 %v7033
      %vm7121 = vweird.f32 %v7115
      %vm7122 = vmor %vm7120, %vm7121
      %v7123 = vsel %vm7122, %v7115, %v7119
      %v7124 = vand.u32 2147483647, %v7033
      %vm7125 = vcmp.eq.f32.partialorder %v7124, 8.507059e+37
      %v7126 = vand.u32 %v7033, 2147483648
      %v7127 = vor.u32 1.1754944e-38, %v7126
      %v7128 = vsel %vm7125, %v7127, %v7123
      %v7129 = vmul.f32 %v6997, %v7128
      %v7130 = vrcp.pop %v7036
      %v7131 = vmul.f32 %v7036, %v7130
      %v7132 = vsub.f32 1.0, %v7131
      %v7133 = vmul.f32 %v7130, %v7132
      %v7134 = vadd.f32 %v7130, %v7133
      %vm7135 = vweird.f32 %v7036
      %vm7136 = vweird.f32 %v7130
      %vm7137 = vmor %vm7135, %vm7136
      %v7138 = vsel %vm7137, %v7130, %v7134
      %v7139 = vand.u32 2147483647, %v7036
      %vm7140 = vcmp.eq.f32.partialorder %v7139, 8.507059e+37
      %v7141 = vand.u32 %v7036, 2147483648
      %v7142 = vor.u32 1.1754944e-38, %v7141
      %v7143 = vsel %vm7140, %v7142, %v7138
      %v7144 = vmul.f32 %v6999, %v7143
      %v7145 = vrcp.pop %v7039
      %v7146 = vmul.f32 %v7039, %v7145
      %v7147 = vsub.f32 1.0, %v7146
      %v7148 = vmul.f32 %v7145, %v7147
      %v7149 = vadd.f32 %v7145, %v7148
      %vm7150 = vweird.f32 %v7039
      %vm7151 = vweird.f32 %v7145
      %vm7152 = vmor %vm7150, %vm7151
      %v7153 = vsel %vm7152, %v7145, %v7149
      %v7154 = vand.u32 2147483647, %v7039
      %vm7155 = vcmp.eq.f32.partialorder %v7154, 8.507059e+37
      %v7156 = vand.u32 %v7039, 2147483648
      %v7157 = vor.u32 1.1754944e-38, %v7156
      %v7158 = vsel %vm7155, %v7157, %v7153
      %v7159 = vmul.f32 %v7001, %v7158
      %v7160 = vrcp.pop %v7042
      %v7161 = vmul.f32 %v7042, %v7160
      %v7162 = vsub.f32 1.0, %v7161
      %v7163 = vmul.f32 %v7160, %v7162
      %v7164 = vadd.f32 %v7160, %v7163
      %vm7165 = vweird.f32 %v7042
      %vm7166 = vweird.f32 %v7160
      %vm7167 = vmor %vm7165, %vm7166
      %v7168 = vsel %vm7167, %v7160, %v7164
      %v7169 = vand.u32 2147483647, %v7042
      %vm7170 = vcmp.eq.f32.partialorder %v7169, 8.507059e+37
      %v7171 = vand.u32 %v7042, 2147483648
      %v7172 = vor.u32 1.1754944e-38, %v7171
      %v7173 = vsel %vm7170, %v7172, %v7168
      %v7174 = vmul.f32 %v7003, %v7173
      %v7175 = vrcp.pop %v7045
      %v7176 = vmul.f32 %v7045, %v7175
      %v7177 = vsub.f32 1.0, %v7176
      %v7178 = vmul.f32 %v7175, %v7177
      %v7179 = vadd.f32 %v7175, %v7178
      %vm7180 = vweird.f32 %v7045
      %vm7181 = vweird.f32 %v7175
      %vm7182 = vmor %vm7180, %vm7181
      %v7183 = vsel %vm7182, %v7175, %v7179
      %v7184 = vand.u32 2147483647, %v7045
      %vm7185 = vcmp.eq.f32.partialorder %v7184, 8.507059e+37
      %v7186 = vand.u32 %v7045, 2147483648
      %v7187 = vor.u32 1.1754944e-38, %v7186
      %v7188 = vsel %vm7185, %v7187, %v7183
      %v7189 = vmul.f32 %v7005, %v7188
      %v7190 = vrcp.pop %v7048
      %v7191 = vmul.f32 %v7048, %v7190
      %v7192 = vsub.f32 1.0, %v7191
      %v7193 = vmul.f32 %v7190, %v7192
      %v7194 = vadd.f32 %v7190, %v7193
      %vm7195 = vweird.f32 %v7048
      %vm7196 = vweird.f32 %v7190
      %vm7197 = vmor %vm7195, %vm7196
      %v7198 = vsel %vm7197, %v7190, %v7194
      %v7199 = vand.u32 2147483647, %v7048
      %vm7200 = vcmp.eq.f32.partialorder %v7199, 8.507059e+37
      %v7201 = vand.u32 %v7048, 2147483648
      %v7202 = vor.u32 1.1754944e-38, %v7201
      %v7203 = vsel %vm7200, %v7202, %v7198
      %v7204 = vmul.f32 %v7007, %v7203
      %v7205 = vrcp.pop %v7051
      %v7206 = vmul.f32 %v7051, %v7205
      %v7207 = vsub.f32 1.0, %v7206
      %v7208 = vmul.f32 %v7205, %v7207
      %v7209 = vadd.f32 %v7205, %v7208
      %vm7210 = vweird.f32 %v7051
      %vm7211 = vweird.f32 %v7205
      %vm7212 = vmor %vm7210, %vm7211
      %v7213 = vsel %vm7212, %v7205, %v7209
      %v7214 = vand.u32 2147483647, %v7051
      %vm7215 = vcmp.eq.f32.partialorder %v7214, 8.507059e+37
      %v7216 = vand.u32 %v7051, 2147483648
      %v7217 = vor.u32 1.1754944e-38, %v7216
      %v7218 = vsel %vm7215, %v7217, %v7213
      %v7219 = vmul.f32 %v7009, %v7218
      %v7220 = vrcp.pop %v7054
      %v7221 = vmul.f32 %v7054, %v7220
      %v7222 = vsub.f32 1.0, %v7221
      %v7223 = vmul.f32 %v7220, %v7222
      %v7224 = vadd.f32 %v7220, %v7223
      %vm7225 = vweird.f32 %v7054
      %vm7226 = vweird.f32 %v7220
      %vm7227 = vmor %vm7225, %vm7226
      %v7228 = vsel %vm7227, %v7220, %v7224
      %v7229 = vand.u32 2147483647, %v7054
      %vm7230 = vcmp.eq.f32.partialorder %v7229, 8.507059e+37
      %v7231 = vand.u32 %v7054, 2147483648
      %v7232 = vor.u32 1.1754944e-38, %v7231
      %v7233 = vsel %vm7230, %v7232, %v7228
      %v7234 = vmul.f32 %v7011, %v7233
      %v7235 = vrcp.pop %v7057
      %v7236 = vmul.f32 %v7057, %v7235
      %v7237 = vsub.f32 1.0, %v7236
      %v7238 = vmul.f32 %v7235, %v7237
      %v7239 = vadd.f32 %v7235, %v7238
      %vm7240 = vweird.f32 %v7057
      %vm7241 = vweird.f32 %v7235
      %vm7242 = vmor %vm7240, %vm7241
      %v7243 = vsel %vm7242, %v7235, %v7239
      %v7244 = vand.u32 2147483647, %v7057
      %vm7245 = vcmp.eq.f32.partialorder %v7244, 8.507059e+37
      %v7246 = vand.u32 %v7057, 2147483648
      %v7247 = vor.u32 1.1754944e-38, %v7246
      %v7248 = vsel %vm7245, %v7247, %v7243
      %v7249 = vmul.f32 %v7013, %v7248
      %v7250 = vrcp.pop %v7060
      %v7251 = vmul.f32 %v7060, %v7250
      %v7252 = vsub.f32 1.0, %v7251
      %v7253 = vmul.f32 %v7250, %v7252
      %v7254 = vadd.f32 %v7250, %v7253
      %vm7255 = vweird.f32 %v7060
      %vm7256 = vweird.f32 %v7250
      %vm7257 = vmor %vm7255, %vm7256
      %v7258 = vsel %vm7257, %v7250, %v7254
      %v7259 = vand.u32 2147483647, %v7060
      %vm7260 = vcmp.eq.f32.partialorder %v7259, 8.507059e+37
      %v7261 = vand.u32 %v7060, 2147483648
      %v7262 = vor.u32 1.1754944e-38, %v7261
      %v7263 = vsel %vm7260, %v7262, %v7258
      %v7264 = vmul.f32 %v7015, %v7263
      %v7265 = vrcp.pop %v7063
      %v7266 = vmul.f32 %v7063, %v7265
      %v7267 = vsub.f32 1.0, %v7266
      %v7268 = vmul.f32 %v7265, %v7267
      %v7269 = vadd.f32 %v7265, %v7268
      %vm7270 = vweird.f32 %v7063
      %vm7271 = vweird.f32 %v7265
      %vm7272 = vmor %vm7270, %vm7271
      %v7273 = vsel %vm7272, %v7265, %v7269
      %v7274 = vand.u32 2147483647, %v7063
      %vm7275 = vcmp.eq.f32.partialorder %v7274, 8.507059e+37
      %v7276 = vand.u32 %v7063, 2147483648
      %v7277 = vor.u32 1.1754944e-38, %v7276
      %v7278 = vsel %vm7275, %v7277, %v7273
      %v7279 = vmul.f32 %v7017, %v7278
      %v7280 = vrcp.pop %v7066
      %v7281 = vmul.f32 %v7066, %v7280
      %v7282 = vsub.f32 1.0, %v7281
      %v7283 = vmul.f32 %v7280, %v7282
      %v7284 = vadd.f32 %v7280, %v7283
      %vm7285 = vweird.f32 %v7066
      %vm7286 = vweird.f32 %v7280
      %vm7287 = vmor %vm7285, %vm7286
      %v7288 = vsel %vm7287, %v7280, %v7284
      %v7289 = vand.u32 2147483647, %v7066
      %vm7290 = vcmp.eq.f32.partialorder %v7289, 8.507059e+37
      %v7291 = vand.u32 %v7066, 2147483648
      %v7292 = vor.u32 1.1754944e-38, %v7291
      %v7293 = vsel %vm7290, %v7292, %v7288
      %v7294 = vmul.f32 %v7019, %v7293
      %v7295 = vrcp.pop %v7069
      %v7296 = vmul.f32 %v7069, %v7295
      %v7297 = vsub.f32 1.0, %v7296
      %v7298 = vmul.f32 %v7295, %v7297
      %v7299 = vadd.f32 %v7295, %v7298
      %vm7300 = vweird.f32 %v7069
      %vm7301 = vweird.f32 %v7295
      %vm7302 = vmor %vm7300, %vm7301
      %v7303 = vsel %vm7302, %v7295, %v7299
      %v7304 = vand.u32 2147483647, %v7069
      %vm7305 = vcmp.eq.f32.partialorder %v7304, 8.507059e+37
      %v7306 = vand.u32 %v7069, 2147483648
      %v7307 = vor.u32 1.1754944e-38, %v7306
      %v7308 = vsel %vm7305, %v7307, %v7303
      %v7309 = vmul.f32 %v7021, %v7308
      %v7310 = vpack.c.bf16 %v7084, %v7084
      %v7311 = vpack.c.bf16 %v7099, %v7099
      %v7312 = vpack.c.bf16 %v7114, %v7114
      %v7313 = vpack.c.bf16 %v7129, %v7129
      %v7314 = vpack.c.bf16 %v7144, %v7144
      %v7315 = vpack.c.bf16 %v7159, %v7159
      %v7316 = vpack.c.bf16 %v7174, %v7174
      %v7317 = vpack.c.bf16 %v7189, %v7189
      %v7318 = vpack.c.bf16 %v7204, %v7204
      %v7319 = vpack.c.bf16 %v7219, %v7219
      %v7320 = vpack.c.bf16 %v7234, %v7234
      %v7321 = vpack.c.bf16 %v7249, %v7249
      %v7322 = vpack.c.bf16 %v7264, %v7264
      %v7323 = vpack.c.bf16 %v7279, %v7279
      %v7324 = vpack.c.bf16 %v7294, %v7294
      %v7325 = vpack.c.bf16 %v7309, %v7309
      %v7330 = vunpack.c.l.b16 %v7310
      %v7331 = vunpack.c.l.b16 %v7311
      %v7332 = vunpack.c.l.b16 %v7312
      %v7333 = vunpack.c.l.b16 %v7313
      %v7334 = vpack.c.b16 %v7331, %v7330
      %v7335 = vpack.c.b16 %v7333, %v7332
      %7336 = vrot.lane.b32.xlu0 %v6034, 56
      %v7337 = vpop.permute.xlu0 %7336
      %7338 = vrot.lane.b32.xlu0 %v6035, 56
      %v7339 = vpop.permute.xlu0 %7338
      %v7343 = vsel %vm562, %v7334, 0
      %v7346 = vsel %vm562, %v7335, 0
      %7348 = vmatpush.bf16.msra.mxu0 0
      %7349 = vmatpush.bf16.msra.mxu0 0
      %7350 = vmatpush.bf16.msra.mxu0 0
      %7351 = vmatpush.bf16.msra.mxu0 0
      %7352 = vmatpush.bf16.msra.mxu0 0
      %7353 = vmatpush.bf16.msra.mxu0 0
      %7354 = vmatpush.bf16.msra.mxu0 %v7339
      %7355 = vmatpush.bf16.msra.mxu0 %v7337
      %7356 = vmatmul.bf16.gmra.mxu0 %v7343
      %v7357 = vpop.f32.mrf.mxu0
      %v7358 = vadd.f32 0.0, %v7357
      %v7359 = vpop.f32.mrf.mxu0
      %v7360 = vadd.f32 0.0, %v7359
      %7361 = vmatmul.bf16.gmra.mxu0 %v7346
      %v7362 = vpop.f32.mrf.mxu0
      %v7363 = vadd.f32 0.0, %v7362
      %v7364 = vpop.f32.mrf.mxu0
      %v7365 = vadd.f32 0.0, %v7364
      %7366 = vdwg.mxu0
      %v7371 = vunpack.c.l.b16 %v7314
      %v7372 = vunpack.c.l.b16 %v7315
      %v7373 = vunpack.c.l.b16 %v7316
      %v7374 = vunpack.c.l.b16 %v7317
      %v7375 = vpack.c.b16 %v7372, %v7371
      %v7376 = vpack.c.b16 %v7374, %v7373
      %7377 = vrot.lane.b32.xlu0 %v6079, 56
      %v7378 = vpop.permute.xlu0 %7377
      %7379 = vrot.lane.b32.xlu0 %v6080, 56
      %v7380 = vpop.permute.xlu0 %7379
      %v7384 = vsel %vm562, %v7375, 0
      %v7387 = vsel %vm562, %v7376, 0
      %7389 = vmatpush.bf16.msra.mxu0 0
      %7390 = vmatpush.bf16.msra.mxu0 0
      %7391 = vmatpush.bf16.msra.mxu0 0
      %7392 = vmatpush.bf16.msra.mxu0 0
      %7393 = vmatpush.bf16.msra.mxu0 0
      %7394 = vmatpush.bf16.msra.mxu0 0
      %7395 = vmatpush.bf16.msra.mxu0 %v7380
      %7396 = vmatpush.bf16.msra.mxu0 %v7378
      %7397 = vmatmul.bf16.gmra.mxu0 %v7384
      %v7398 = vpop.f32.mrf.mxu0
      %v7399 = vadd.f32 0.0, %v7398
      %v7400 = vpop.f32.mrf.mxu0
      %v7401 = vadd.f32 0.0, %v7400
      %7402 = vmatmul.bf16.gmra.mxu0 %v7387
      %v7403 = vpop.f32.mrf.mxu0
      %v7404 = vadd.f32 0.0, %v7403
      %v7405 = vpop.f32.mrf.mxu0
      %v7406 = vadd.f32 0.0, %v7405
      %7407 = vdwg.mxu0
      %v7412 = vunpack.c.l.b16 %v7318
      %v7413 = vunpack.c.l.b16 %v7319
      %v7414 = vunpack.c.l.b16 %v7320
      %v7415 = vunpack.c.l.b16 %v7321
      %v7416 = vpack.c.b16 %v7413, %v7412
      %v7417 = vpack.c.b16 %v7415, %v7414
      %7418 = vrot.lane.b32.xlu0 %v6124, 56
      %v7419 = vpop.permute.xlu0 %7418
      %7420 = vrot.lane.b32.xlu0 %v6125, 56
      %v7421 = vpop.permute.xlu0 %7420
      %v7425 = vsel %vm562, %v7416, 0
      %v7428 = vsel %vm562, %v7417, 0
      %7430 = vmatpush.bf16.msra.mxu0 0
      %7431 = vmatpush.bf16.msra.mxu0 0
      %7432 = vmatpush.bf16.msra.mxu0 0
      %7433 = vmatpush.bf16.msra.mxu0 0
      %7434 = vmatpush.bf16.msra.mxu0 0
      %7435 = vmatpush.bf16.msra.mxu0 0
      %7436 = vmatpush.bf16.msra.mxu0 %v7421
      %7437 = vmatpush.bf16.msra.mxu0 %v7419
      %7438 = vmatmul.bf16.gmra.mxu0 %v7425
      %v7439 = vpop.f32.mrf.mxu0
      %v7440 = vadd.f32 0.0, %v7439
      %v7441 = vpop.f32.mrf.mxu0
      %v7442 = vadd.f32 0.0, %v7441
      %7443 = vmatmul.bf16.gmra.mxu0 %v7428
      %v7444 = vpop.f32.mrf.mxu0
      %v7445 = vadd.f32 0.0, %v7444
      %v7446 = vpop.f32.mrf.mxu0
      %v7447 = vadd.f32 0.0, %v7446
      %7448 = vdwg.mxu0
      %v7453 = vunpack.c.l.b16 %v7322
      %v7454 = vunpack.c.l.b16 %v7323
      %v7455 = vunpack.c.l.b16 %v7324
      %v7456 = vunpack.c.l.b16 %v7325
      %v7457 = vpack.c.b16 %v7454, %v7453
      %v7458 = vpack.c.b16 %v7456, %v7455
      %7459 = vrot.lane.b32.xlu0 %v6169, 56
      %v7460 = vpop.permute.xlu0 %7459
      %7461 = vrot.lane.b32.xlu0 %v6170, 56
      %v7462 = vpop.permute.xlu0 %7461
      %v7466 = vsel %vm562, %v7457, 0
      %v7469 = vsel %vm562, %v7458, 0
      %7471 = vmatpush.bf16.msra.mxu0 0
      %7472 = vmatpush.bf16.msra.mxu0 0
      %7473 = vmatpush.bf16.msra.mxu0 0
      %7474 = vmatpush.bf16.msra.mxu0 0
      %7475 = vmatpush.bf16.msra.mxu0 0
      %7476 = vmatpush.bf16.msra.mxu0 0
      %7477 = vmatpush.bf16.msra.mxu0 %v7462
      %7478 = vmatpush.bf16.msra.mxu0 %v7460
      %7479 = vmatmul.bf16.gmra.mxu0 %v7466
      %v7480 = vpop.f32.mrf.mxu0
      %v7481 = vadd.f32 0.0, %v7480
      %v7482 = vpop.f32.mrf.mxu0
      %v7483 = vadd.f32 0.0, %v7482
      %7484 = vmatmul.bf16.gmra.mxu0 %v7469
      %v7485 = vpop.f32.mrf.mxu0
      %v7486 = vadd.f32 0.0, %v7485
      %v7487 = vpop.f32.mrf.mxu0
      %v7488 = vadd.f32 0.0, %v7487
      %7489 = vdwg.mxu0
      %7490 = vrot.lane.b32.xlu0 %v6034, 112
      %v7491 = vpop.permute.xlu0 %7490
      %7492 = vrot.lane.b32.xlu0 %v6035, 112
      %v7493 = vpop.permute.xlu0 %7492
      %7494 = vrot.lane.b32.xlu0 %v6034, 80
      %v7495 = vpop.permute.xlu0 %7494
      %7496 = vrot.lane.b32.xlu0 %v6035, 80
      %v7497 = vpop.permute.xlu0 %7496
      %v7499 = vsel %vm1473, %v7491, 0
      %v7502 = vsel %vm1473, %v7493, 0
      %v7505 = vsel %vm1473, %v7495, 0
      %v7508 = vsel %vm1473, %v7497, 0
      %7510 = vmatpush.bf16.xpose.msra.mxu0 0
      %7511 = vmatpush.bf16.xpose.msra.mxu0 0
      %7512 = vmatpush.bf16.xpose.msra.mxu0 0
      %7513 = vmatpush.bf16.xpose.msra.mxu0 0
      %7514 = vmatpush.bf16.xpose.msra.mxu0 0
      %7515 = vmatpush.bf16.xpose.msra.mxu0 0
      %7516 = vmatpush.bf16.xpose.msra.mxu0 %v7508
      %7517 = vmatpush.bf16.xpose.msra.mxu0 %v7505
      %7518 = vmatmul.bf16.gmra.mxu0 %v7499
      %v7519 = vpop.f32.mrf.mxu0
      %v7520 = vadd.f32 %v232, %v7519
      %v7521 = vpop.f32.mrf.mxu0
      %v7522 = vadd.f32 %v232, %v7521
      %7523 = vmatmul.bf16.gmra.mxu0 %v7502
      %v7524 = vpop.f32.mrf.mxu0
      %v7525 = vadd.f32 %v232, %v7524
      %v7526 = vpop.f32.mrf.mxu0
      %v7527 = vadd.f32 %v232, %v7526
      %7528 = vdwg.mxu0
      %7529 = vrot.lane.b32.xlu0 %v6079, 112
      %v7530 = vpop.permute.xlu0 %7529
      %7531 = vrot.lane.b32.xlu0 %v6080, 112
      %v7532 = vpop.permute.xlu0 %7531
      %7533 = vrot.lane.b32.xlu0 %v6079, 80
      %v7534 = vpop.permute.xlu0 %7533
      %7535 = vrot.lane.b32.xlu0 %v6080, 80
      %v7536 = vpop.permute.xlu0 %7535
      %v7538 = vsel %vm1473, %v7530, 0
      %v7541 = vsel %vm1473, %v7532, 0
      %v7544 = vsel %vm1473, %v7534, 0
      %v7547 = vsel %vm1473, %v7536, 0
      %7549 = vmatpush.bf16.xpose.msra.mxu0 0
      %7550 = vmatpush.bf16.xpose.msra.mxu0 0
      %7551 = vmatpush.bf16.xpose.msra.mxu0 0
      %7552 = vmatpush.bf16.xpose.msra.mxu0 0
      %7553 = vmatpush.bf16.xpose.msra.mxu0 0
      %7554 = vmatpush.bf16.xpose.msra.mxu0 0
      %7555 = vmatpush.bf16.xpose.msra.mxu0 %v7547
      %7556 = vmatpush.bf16.xpose.msra.mxu0 %v7544
      %7557 = vmatmul.bf16.gmra.mxu0 %v7538
      %v7558 = vpop.f32.mrf.mxu0
      %v7559 = vadd.f32 %v232, %v7558
      %v7560 = vpop.f32.mrf.mxu0
      %v7561 = vadd.f32 %v232, %v7560
      %7562 = vmatmul.bf16.gmra.mxu0 %v7541
      %v7563 = vpop.f32.mrf.mxu0
      %v7564 = vadd.f32 %v232, %v7563
      %v7565 = vpop.f32.mrf.mxu0
      %v7566 = vadd.f32 %v232, %v7565
      %7567 = vdwg.mxu0
      %7568 = vrot.lane.b32.xlu0 %v6124, 112
      %v7569 = vpop.permute.xlu0 %7568
      %7570 = vrot.lane.b32.xlu0 %v6125, 112
      %v7571 = vpop.permute.xlu0 %7570
      %7572 = vrot.lane.b32.xlu0 %v6124, 80
      %v7573 = vpop.permute.xlu0 %7572
      %7574 = vrot.lane.b32.xlu0 %v6125, 80
      %v7575 = vpop.permute.xlu0 %7574
      %v7577 = vsel %vm1473, %v7569, 0
      %v7580 = vsel %vm1473, %v7571, 0
      %v7583 = vsel %vm1473, %v7573, 0
      %v7586 = vsel %vm1473, %v7575, 0
      %7588 = vmatpush.bf16.xpose.msra.mxu0 0
      %7589 = vmatpush.bf16.xpose.msra.mxu0 0
      %7590 = vmatpush.bf16.xpose.msra.mxu0 0
      %7591 = vmatpush.bf16.xpose.msra.mxu0 0
      %7592 = vmatpush.bf16.xpose.msra.mxu0 0
      %7593 = vmatpush.bf16.xpose.msra.mxu0 0
      %7594 = vmatpush.bf16.xpose.msra.mxu0 %v7586
      %7595 = vmatpush.bf16.xpose.msra.mxu0 %v7583
      %7596 = vmatmul.bf16.gmra.mxu0 %v7577
      %v7597 = vpop.f32.mrf.mxu0
      %v7598 = vadd.f32 %v232, %v7597
      %v7599 = vpop.f32.mrf.mxu0
      %v7600 = vadd.f32 %v232, %v7599
      %7601 = vmatmul.bf16.gmra.mxu0 %v7580
      %v7602 = vpop.f32.mrf.mxu0
      %v7603 = vadd.f32 %v232, %v7602
      %v7604 = vpop.f32.mrf.mxu0
      %v7605 = vadd.f32 %v232, %v7604
      %7606 = vdwg.mxu0
      %7607 = vrot.lane.b32.xlu0 %v6169, 112
      %v7608 = vpop.permute.xlu0 %7607
      %7609 = vrot.lane.b32.xlu0 %v6170, 112
      %v7610 = vpop.permute.xlu0 %7609
      %7611 = vrot.lane.b32.xlu0 %v6169, 80
      %v7612 = vpop.permute.xlu0 %7611
      %7613 = vrot.lane.b32.xlu0 %v6170, 80
      %v7614 = vpop.permute.xlu0 %7613
      %v7616 = vsel %vm1473, %v7608, 0
      %v7619 = vsel %vm1473, %v7610, 0
      %v7622 = vsel %vm1473, %v7612, 0
      %v7625 = vsel %vm1473, %v7614, 0
      %7627 = vmatpush.bf16.xpose.msra.mxu0 0
      %7628 = vmatpush.bf16.xpose.msra.mxu0 0
      %7629 = vmatpush.bf16.xpose.msra.mxu0 0
      %7630 = vmatpush.bf16.xpose.msra.mxu0 0
      %7631 = vmatpush.bf16.xpose.msra.mxu0 0
      %7632 = vmatpush.bf16.xpose.msra.mxu0 0
      %7633 = vmatpush.bf16.xpose.msra.mxu0 %v7625
      %7634 = vmatpush.bf16.xpose.msra.mxu0 %v7622
      %7635 = vmatmul.bf16.gmra.mxu0 %v7616
      %v7636 = vpop.f32.mrf.mxu0
      %v7637 = vadd.f32 %v232, %v7636
      %v7638 = vpop.f32.mrf.mxu0
      %v7639 = vadd.f32 %v232, %v7638
      %7640 = vmatmul.bf16.gmra.mxu0 %v7619
      %v7641 = vpop.f32.mrf.mxu0
      %v7642 = vadd.f32 %v232, %v7641
      %v7643 = vpop.f32.mrf.mxu0
      %v7644 = vadd.f32 %v232, %v7643
      %7645 = vdwg.mxu0
      %v7646 = vsel %vm562, %v7520, -inf
      %7647 = vmax.xlane.f32.xlu0 %v7646
      %v7648 = vpop.xlane.xlu0 %7647
      %v7649 = vsel %vm562, %v7522, -inf
      %7650 = vmax.xlane.f32.xlu0 %v7649
      %v7651 = vpop.xlane.xlu0 %7650
      %v7652 = vsel %vm562, %v7525, -inf
      %7653 = vmax.xlane.f32.xlu0 %v7652
      %v7654 = vpop.xlane.xlu0 %7653
      %v7655 = vsel %vm562, %v7527, -inf
      %7656 = vmax.xlane.f32.xlu0 %v7655
      %v7657 = vpop.xlane.xlu0 %7656
      %v7658 = vsel %vm562, %v7559, -inf
      %7659 = vmax.xlane.f32.xlu0 %v7658
      %v7660 = vpop.xlane.xlu0 %7659
      %v7661 = vsel %vm562, %v7561, -inf
      %7662 = vmax.xlane.f32.xlu0 %v7661
      %v7663 = vpop.xlane.xlu0 %7662
      %v7664 = vsel %vm562, %v7564, -inf
      %7665 = vmax.xlane.f32.xlu0 %v7664
      %v7666 = vpop.xlane.xlu0 %7665
      %v7667 = vsel %vm562, %v7566, -inf
      %7668 = vmax.xlane.f32.xlu0 %v7667
      %v7669 = vpop.xlane.xlu0 %7668
      %v7670 = vsel %vm562, %v7598, -inf
      %7671 = vmax.xlane.f32.xlu0 %v7670
      %v7672 = vpop.xlane.xlu0 %7671
      %v7673 = vsel %vm562, %v7600, -inf
      %7674 = vmax.xlane.f32.xlu0 %v7673
      %v7675 = vpop.xlane.xlu0 %7674
      %v7676 = vsel %vm562, %v7603, -inf
      %7677 = vmax.xlane.f32.xlu0 %v7676
      %v7678 = vpop.xlane.xlu0 %7677
      %v7679 = vsel %vm562, %v7605, -inf
      %7680 = vmax.xlane.f32.xlu0 %v7679
      %v7681 = vpop.xlane.xlu0 %7680
      %v7682 = vsel %vm562, %v7637, -inf
      %7683 = vmax.xlane.f32.xlu0 %v7682
      %v7684 = vpop.xlane.xlu0 %7683
      %v7685 = vsel %vm562, %v7639, -inf
      %7686 = vmax.xlane.f32.xlu0 %v7685
      %v7687 = vpop.xlane.xlu0 %7686
      %v7688 = vsel %vm562, %v7642, -inf
      %7689 = vmax.xlane.f32.xlu0 %v7688
      %v7690 = vpop.xlane.xlu0 %7689
      %v7691 = vsel %vm562, %v7644, -inf
      %7692 = vmax.xlane.f32.xlu0 %v7691
      %v7693 = vpop.xlane.xlu0 %7692
      %v7694 = vsub.f32 %v7520, %v7648
      %v7695 = vsub.f32 %v7522, %v7651
      %v7696 = vsub.f32 %v7525, %v7654
      %v7697 = vsub.f32 %v7527, %v7657
      %v7698 = vsub.f32 %v7559, %v7660
      %v7699 = vsub.f32 %v7561, %v7663
      %v7700 = vsub.f32 %v7564, %v7666
      %v7701 = vsub.f32 %v7566, %v7669
      %v7702 = vsub.f32 %v7598, %v7672
      %v7703 = vsub.f32 %v7600, %v7675
      %v7704 = vsub.f32 %v7603, %v7678
      %v7705 = vsub.f32 %v7605, %v7681
      %v7706 = vsub.f32 %v7637, %v7684
      %v7707 = vsub.f32 %v7639, %v7687
      %v7708 = vsub.f32 %v7642, %v7690
      %v7709 = vsub.f32 %v7644, %v7693
      %v7710 = vmul.f32 %v7694, 1.442695
      %v7711 = vpow.pop %v7710
      %v7712 = vmul.f32 %v7695, 1.442695
      %v7713 = vpow.pop %v7712
      %v7714 = vmul.f32 %v7696, 1.442695
      %v7715 = vpow.pop %v7714
      %v7716 = vmul.f32 %v7697, 1.442695
      %v7717 = vpow.pop %v7716
      %v7718 = vmul.f32 %v7698, 1.442695
      %v7719 = vpow.pop %v7718
      %v7720 = vmul.f32 %v7699, 1.442695
      %v7721 = vpow.pop %v7720
      %v7722 = vmul.f32 %v7700, 1.442695
      %v7723 = vpow.pop %v7722
      %v7724 = vmul.f32 %v7701, 1.442695
      %v7725 = vpow.pop %v7724
      %v7726 = vmul.f32 %v7702, 1.442695
      %v7727 = vpow.pop %v7726
      %v7728 = vmul.f32 %v7703, 1.442695
      %v7729 = vpow.pop %v7728
      %v7730 = vmul.f32 %v7704, 1.442695
      %v7731 = vpow.pop %v7730
      %v7732 = vmul.f32 %v7705, 1.442695
      %v7733 = vpow.pop %v7732
      %v7734 = vmul.f32 %v7706, 1.442695
      %v7735 = vpow.pop %v7734
      %v7736 = vmul.f32 %v7707, 1.442695
      %v7737 = vpow.pop %v7736
      %v7738 = vmul.f32 %v7708, 1.442695
      %v7739 = vpow.pop %v7738
      %v7740 = vmul.f32 %v7709, 1.442695
      %v7741 = vpow.pop %v7740
      %v7742 = vsel %vm562, %v7711, 0.0
      %7743 = vadd.xlane.f32.xlu0 %v7742
      %v7744 = vpop.xlane.xlu0 %7743
      %v7745 = vsel %vm562, %v7713, 0.0
      %7746 = vadd.xlane.f32.xlu0 %v7745
      %v7747 = vpop.xlane.xlu0 %7746
      %v7748 = vsel %vm562, %v7715, 0.0
      %7749 = vadd.xlane.f32.xlu0 %v7748
      %v7750 = vpop.xlane.xlu0 %7749
      %v7751 = vsel %vm562, %v7717, 0.0
      %7752 = vadd.xlane.f32.xlu0 %v7751
      %v7753 = vpop.xlane.xlu0 %7752
      %v7754 = vsel %vm562, %v7719, 0.0
      %7755 = vadd.xlane.f32.xlu0 %v7754
      %v7756 = vpop.xlane.xlu0 %7755
      %v7757 = vsel %vm562, %v7721, 0.0
      %7758 = vadd.xlane.f32.xlu0 %v7757
      %v7759 = vpop.xlane.xlu0 %7758
      %v7760 = vsel %vm562, %v7723, 0.0
      %7761 = vadd.xlane.f32.xlu0 %v7760
      %v7762 = vpop.xlane.xlu0 %7761
      %v7763 = vsel %vm562, %v7725, 0.0
      %7764 = vadd.xlane.f32.xlu0 %v7763
      %v7765 = vpop.xlane.xlu0 %7764
      %v7766 = vsel %vm562, %v7727, 0.0
      %7767 = vadd.xlane.f32.xlu0 %v7766
      %v7768 = vpop.xlane.xlu0 %7767
      %v7769 = vsel %vm562, %v7729, 0.0
      %7770 = vadd.xlane.f32.xlu0 %v7769
      %v7771 = vpop.xlane.xlu0 %7770
      %v7772 = vsel %vm562, %v7731, 0.0
      %7773 = vadd.xlane.f32.xlu0 %v7772
      %v7774 = vpop.xlane.xlu0 %7773
      %v7775 = vsel %vm562, %v7733, 0.0
      %7776 = vadd.xlane.f32.xlu0 %v7775
      %v7777 = vpop.xlane.xlu0 %7776
      %v7778 = vsel %vm562, %v7735, 0.0
      %7779 = vadd.xlane.f32.xlu0 %v7778
      %v7780 = vpop.xlane.xlu0 %7779
      %v7781 = vsel %vm562, %v7737, 0.0
      %7782 = vadd.xlane.f32.xlu0 %v7781
      %v7783 = vpop.xlane.xlu0 %7782
      %v7784 = vsel %vm562, %v7739, 0.0
      %7785 = vadd.xlane.f32.xlu0 %v7784
      %v7786 = vpop.xlane.xlu0 %7785
      %v7787 = vsel %vm562, %v7741, 0.0
      %7788 = vadd.xlane.f32.xlu0 %v7787
      %v7789 = vpop.xlane.xlu0 %7788
      %v7790 = vrcp.pop %v7744
      %v7791 = vmul.f32 %v7744, %v7790
      %v7792 = vsub.f32 1.0, %v7791
      %v7793 = vmul.f32 %v7790, %v7792
      %v7794 = vadd.f32 %v7790, %v7793
      %vm7795 = vweird.f32 %v7744
      %vm7796 = vweird.f32 %v7790
      %vm7797 = vmor %vm7795, %vm7796
      %v7798 = vsel %vm7797, %v7790, %v7794
      %v7799 = vand.u32 2147483647, %v7744
      %vm7800 = vcmp.eq.f32.partialorder %v7799, 8.507059e+37
      %v7801 = vand.u32 %v7744, 2147483648
      %v7802 = vor.u32 1.1754944e-38, %v7801
      %v7803 = vsel %vm7800, %v7802, %v7798
      %v7804 = vmul.f32 %v7711, %v7803
      %v7805 = vrcp.pop %v7747
      %v7806 = vmul.f32 %v7747, %v7805
      %v7807 = vsub.f32 1.0, %v7806
      %v7808 = vmul.f32 %v7805, %v7807
      %v7809 = vadd.f32 %v7805, %v7808
      %vm7810 = vweird.f32 %v7747
      %vm7811 = vweird.f32 %v7805
      %vm7812 = vmor %vm7810, %vm7811
      %v7813 = vsel %vm7812, %v7805, %v7809
      %v7814 = vand.u32 2147483647, %v7747
      %vm7815 = vcmp.eq.f32.partialorder %v7814, 8.507059e+37
      %v7816 = vand.u32 %v7747, 2147483648
      %v7817 = vor.u32 1.1754944e-38, %v7816
      %v7818 = vsel %vm7815, %v7817, %v7813
      %v7819 = vmul.f32 %v7713, %v7818
      %v7820 = vrcp.pop %v7750
      %v7821 = vmul.f32 %v7750, %v7820
      %v7822 = vsub.f32 1.0, %v7821
      %v7823 = vmul.f32 %v7820, %v7822
      %v7824 = vadd.f32 %v7820, %v7823
      %vm7825 = vweird.f32 %v7750
      %vm7826 = vweird.f32 %v7820
      %vm7827 = vmor %vm7825, %vm7826
      %v7828 = vsel %vm7827, %v7820, %v7824
      %v7829 = vand.u32 2147483647, %v7750
      %vm7830 = vcmp.eq.f32.partialorder %v7829, 8.507059e+37
      %v7831 = vand.u32 %v7750, 2147483648
      %v7832 = vor.u32 1.1754944e-38, %v7831
      %v7833 = vsel %vm7830, %v7832, %v7828
      %v7834 = vmul.f32 %v7715, %v7833
      %v7835 = vrcp.pop %v7753
      %v7836 = vmul.f32 %v7753, %v7835
      %v7837 = vsub.f32 1.0, %v7836
      %v7838 = vmul.f32 %v7835, %v7837
      %v7839 = vadd.f32 %v7835, %v7838
      %vm7840 = vweird.f32 %v7753
      %vm7841 = vweird.f32 %v7835
      %vm7842 = vmor %vm7840, %vm7841
      %v7843 = vsel %vm7842, %v7835, %v7839
      %v7844 = vand.u32 2147483647, %v7753
      %vm7845 = vcmp.eq.f32.partialorder %v7844, 8.507059e+37
      %v7846 = vand.u32 %v7753, 2147483648
      %v7847 = vor.u32 1.1754944e-38, %v7846
      %v7848 = vsel %vm7845, %v7847, %v7843
      %v7849 = vmul.f32 %v7717, %v7848
      %v7850 = vrcp.pop %v7756
      %v7851 = vmul.f32 %v7756, %v7850
      %v7852 = vsub.f32 1.0, %v7851
      %v7853 = vmul.f32 %v7850, %v7852
      %v7854 = vadd.f32 %v7850, %v7853
      %vm7855 = vweird.f32 %v7756
      %vm7856 = vweird.f32 %v7850
      %vm7857 = vmor %vm7855, %vm7856
      %v7858 = vsel %vm7857, %v7850, %v7854
      %v7859 = vand.u32 2147483647, %v7756
      %vm7860 = vcmp.eq.f32.partialorder %v7859, 8.507059e+37
      %v7861 = vand.u32 %v7756, 2147483648
      %v7862 = vor.u32 1.1754944e-38, %v7861
      %v7863 = vsel %vm7860, %v7862, %v7858
      %v7864 = vmul.f32 %v7719, %v7863
      %v7865 = vrcp.pop %v7759
      %v7866 = vmul.f32 %v7759, %v7865
      %v7867 = vsub.f32 1.0, %v7866
      %v7868 = vmul.f32 %v7865, %v7867
      %v7869 = vadd.f32 %v7865, %v7868
      %vm7870 = vweird.f32 %v7759
      %vm7871 = vweird.f32 %v7865
      %vm7872 = vmor %vm7870, %vm7871
      %v7873 = vsel %vm7872, %v7865, %v7869
      %v7874 = vand.u32 2147483647, %v7759
      %vm7875 = vcmp.eq.f32.partialorder %v7874, 8.507059e+37
      %v7876 = vand.u32 %v7759, 2147483648
      %v7877 = vor.u32 1.1754944e-38, %v7876
      %v7878 = vsel %vm7875, %v7877, %v7873
      %v7879 = vmul.f32 %v7721, %v7878
      %v7880 = vrcp.pop %v7762
      %v7881 = vmul.f32 %v7762, %v7880
      %v7882 = vsub.f32 1.0, %v7881
      %v7883 = vmul.f32 %v7880, %v7882
      %v7884 = vadd.f32 %v7880, %v7883
      %vm7885 = vweird.f32 %v7762
      %vm7886 = vweird.f32 %v7880
      %vm7887 = vmor %vm7885, %vm7886
      %v7888 = vsel %vm7887, %v7880, %v7884
      %v7889 = vand.u32 2147483647, %v7762
      %vm7890 = vcmp.eq.f32.partialorder %v7889, 8.507059e+37
      %v7891 = vand.u32 %v7762, 2147483648
      %v7892 = vor.u32 1.1754944e-38, %v7891
      %v7893 = vsel %vm7890, %v7892, %v7888
      %v7894 = vmul.f32 %v7723, %v7893
      %v7895 = vrcp.pop %v7765
      %v7896 = vmul.f32 %v7765, %v7895
      %v7897 = vsub.f32 1.0, %v7896
      %v7898 = vmul.f32 %v7895, %v7897
      %v7899 = vadd.f32 %v7895, %v7898
      %vm7900 = vweird.f32 %v7765
      %vm7901 = vweird.f32 %v7895
      %vm7902 = vmor %vm7900, %vm7901
      %v7903 = vsel %vm7902, %v7895, %v7899
      %v7904 = vand.u32 2147483647, %v7765
      %vm7905 = vcmp.eq.f32.partialorder %v7904, 8.507059e+37
      %v7906 = vand.u32 %v7765, 2147483648
      %v7907 = vor.u32 1.1754944e-38, %v7906
      %v7908 = vsel %vm7905, %v7907, %v7903
      %v7909 = vmul.f32 %v7725, %v7908
      %v7910 = vrcp.pop %v7768
      %v7911 = vmul.f32 %v7768, %v7910
      %v7912 = vsub.f32 1.0, %v7911
      %v7913 = vmul.f32 %v7910, %v7912
      %v7914 = vadd.f32 %v7910, %v7913
      %vm7915 = vweird.f32 %v7768
      %vm7916 = vweird.f32 %v7910
      %vm7917 = vmor %vm7915, %vm7916
      %v7918 = vsel %vm7917, %v7910, %v7914
      %v7919 = vand.u32 2147483647, %v7768
      %vm7920 = vcmp.eq.f32.partialorder %v7919, 8.507059e+37
      %v7921 = vand.u32 %v7768, 2147483648
      %v7922 = vor.u32 1.1754944e-38, %v7921
      %v7923 = vsel %vm7920, %v7922, %v7918
      %v7924 = vmul.f32 %v7727, %v7923
      %v7925 = vrcp.pop %v7771
      %v7926 = vmul.f32 %v7771, %v7925
      %v7927 = vsub.f32 1.0, %v7926
      %v7928 = vmul.f32 %v7925, %v7927
      %v7929 = vadd.f32 %v7925, %v7928
      %vm7930 = vweird.f32 %v7771
      %vm7931 = vweird.f32 %v7925
      %vm7932 = vmor %vm7930, %vm7931
      %v7933 = vsel %vm7932, %v7925, %v7929
      %v7934 = vand.u32 2147483647, %v7771
      %vm7935 = vcmp.eq.f32.partialorder %v7934, 8.507059e+37
      %v7936 = vand.u32 %v7771, 2147483648
      %v7937 = vor.u32 1.1754944e-38, %v7936
      %v7938 = vsel %vm7935, %v7937, %v7933
      %v7939 = vmul.f32 %v7729, %v7938
      %v7940 = vrcp.pop %v7774
      %v7941 = vmul.f32 %v7774, %v7940
      %v7942 = vsub.f32 1.0, %v7941
      %v7943 = vmul.f32 %v7940, %v7942
      %v7944 = vadd.f32 %v7940, %v7943
      %vm7945 = vweird.f32 %v7774
      %vm7946 = vweird.f32 %v7940
      %vm7947 = vmor %vm7945, %vm7946
      %v7948 = vsel %vm7947, %v7940, %v7944
      %v7949 = vand.u32 2147483647, %v7774
      %vm7950 = vcmp.eq.f32.partialorder %v7949, 8.507059e+37
      %v7951 = vand.u32 %v7774, 2147483648
      %v7952 = vor.u32 1.1754944e-38, %v7951
      %v7953 = vsel %vm7950, %v7952, %v7948
      %v7954 = vmul.f32 %v7731, %v7953
      %v7955 = vrcp.pop %v7777
      %v7956 = vmul.f32 %v7777, %v7955
      %v7957 = vsub.f32 1.0, %v7956
      %v7958 = vmul.f32 %v7955, %v7957
      %v7959 = vadd.f32 %v7955, %v7958
      %vm7960 = vweird.f32 %v7777
      %vm7961 = vweird.f32 %v7955
      %vm7962 = vmor %vm7960, %vm7961
      %v7963 = vsel %vm7962, %v7955, %v7959
      %v7964 = vand.u32 2147483647, %v7777
      %vm7965 = vcmp.eq.f32.partialorder %v7964, 8.507059e+37
      %v7966 = vand.u32 %v7777, 2147483648
      %v7967 = vor.u32 1.1754944e-38, %v7966
      %v7968 = vsel %vm7965, %v7967, %v7963
      %v7969 = vmul.f32 %v7733, %v7968
      %v7970 = vrcp.pop %v7780
      %v7971 = vmul.f32 %v7780, %v7970
      %v7972 = vsub.f32 1.0, %v7971
      %v7973 = vmul.f32 %v7970, %v7972
      %v7974 = vadd.f32 %v7970, %v7973
      %vm7975 = vweird.f32 %v7780
      %vm7976 = vweird.f32 %v7970
      %vm7977 = vmor %vm7975, %vm7976
      %v7978 = vsel %vm7977, %v7970, %v7974
      %v7979 = vand.u32 2147483647, %v7780
      %vm7980 = vcmp.eq.f32.partialorder %v7979, 8.507059e+37
      %v7981 = vand.u32 %v7780, 2147483648
      %v7982 = vor.u32 1.1754944e-38, %v7981
      %v7983 = vsel %vm7980, %v7982, %v7978
      %v7984 = vmul.f32 %v7735, %v7983
      %v7985 = vrcp.pop %v7783
      %v7986 = vmul.f32 %v7783, %v7985
      %v7987 = vsub.f32 1.0, %v7986
      %v7988 = vmul.f32 %v7985, %v7987
      %v7989 = vadd.f32 %v7985, %v7988
      %vm7990 = vweird.f32 %v7783
      %vm7991 = vweird.f32 %v7985
      %vm7992 = vmor %vm7990, %vm7991
      %v7993 = vsel %vm7992, %v7985, %v7989
      %v7994 = vand.u32 2147483647, %v7783
      %vm7995 = vcmp.eq.f32.partialorder %v7994, 8.507059e+37
      %v7996 = vand.u32 %v7783, 2147483648
      %v7997 = vor.u32 1.1754944e-38, %v7996
      %v7998 = vsel %vm7995, %v7997, %v7993
      %v7999 = vmul.f32 %v7737, %v7998
      %v8000 = vrcp.pop %v7786
      %v8001 = vmul.f32 %v7786, %v8000
      %v8002 = vsub.f32 1.0, %v8001
      %v8003 = vmul.f32 %v8000, %v8002
      %v8004 = vadd.f32 %v8000, %v8003
      %vm8005 = vweird.f32 %v7786
      %vm8006 = vweird.f32 %v8000
      %vm8007 = vmor %vm8005, %vm8006
      %v8008 = vsel %vm8007, %v8000, %v8004
      %v8009 = vand.u32 2147483647, %v7786
      %vm8010 = vcmp.eq.f32.partialorder %v8009, 8.507059e+37
      %v8011 = vand.u32 %v7786, 2147483648
      %v8012 = vor.u32 1.1754944e-38, %v8011
      %v8013 = vsel %vm8010, %v8012, %v8008
      %v8014 = vmul.f32 %v7739, %v8013
      %v8015 = vrcp.pop %v7789
      %v8016 = vmul.f32 %v7789, %v8015
      %v8017 = vsub.f32 1.0, %v8016
      %v8018 = vmul.f32 %v8015, %v8017
      %v8019 = vadd.f32 %v8015, %v8018
      %vm8020 = vweird.f32 %v7789
      %vm8021 = vweird.f32 %v8015
      %vm8022 = vmor %vm8020, %vm8021
      %v8023 = vsel %vm8022, %v8015, %v8019
      %v8024 = vand.u32 2147483647, %v7789
      %vm8025 = vcmp.eq.f32.partialorder %v8024, 8.507059e+37
      %v8026 = vand.u32 %v7789, 2147483648
      %v8027 = vor.u32 1.1754944e-38, %v8026
      %v8028 = vsel %vm8025, %v8027, %v8023
      %v8029 = vmul.f32 %v7741, %v8028
      %v8030 = vpack.c.bf16 %v7804, %v7804
      %v8031 = vpack.c.bf16 %v7819, %v7819
      %v8032 = vpack.c.bf16 %v7834, %v7834
      %v8033 = vpack.c.bf16 %v7849, %v7849
      %v8034 = vpack.c.bf16 %v7864, %v7864
      %v8035 = vpack.c.bf16 %v7879, %v7879
      %v8036 = vpack.c.bf16 %v7894, %v7894
      %v8037 = vpack.c.bf16 %v7909, %v7909
      %v8038 = vpack.c.bf16 %v7924, %v7924
      %v8039 = vpack.c.bf16 %v7939, %v7939
      %v8040 = vpack.c.bf16 %v7954, %v7954
      %v8041 = vpack.c.bf16 %v7969, %v7969
      %v8042 = vpack.c.bf16 %v7984, %v7984
      %v8043 = vpack.c.bf16 %v7999, %v7999
      %v8044 = vpack.c.bf16 %v8014, %v8014
      %v8045 = vpack.c.bf16 %v8029, %v8029
      %v8050 = vunpack.c.l.b16 %v8030
      %v8051 = vunpack.c.l.b16 %v8031
      %v8052 = vunpack.c.l.b16 %v8032
      %v8053 = vunpack.c.l.b16 %v8033
      %v8054 = vpack.c.b16 %v8051, %v8050
      %v8055 = vpack.c.b16 %v8053, %v8052
      %8056 = vrot.lane.b32.xlu0 %v6034, 48
      %v8057 = vpop.permute.xlu0 %8056
      %8058 = vrot.lane.b32.xlu0 %v6035, 48
      %v8059 = vpop.permute.xlu0 %8058
      %v8063 = vsel %vm562, %v8054, 0
      %v8066 = vsel %vm562, %v8055, 0
      %8068 = vmatpush.bf16.msra.mxu0 0
      %8069 = vmatpush.bf16.msra.mxu0 0
      %8070 = vmatpush.bf16.msra.mxu0 0
      %8071 = vmatpush.bf16.msra.mxu0 0
      %8072 = vmatpush.bf16.msra.mxu0 0
      %8073 = vmatpush.bf16.msra.mxu0 0
      %8074 = vmatpush.bf16.msra.mxu0 %v8059
      %8075 = vmatpush.bf16.msra.mxu0 %v8057
      %8076 = vmatmul.bf16.gmra.mxu0 %v8063
      %v8077 = vpop.f32.mrf.mxu0
      %v8078 = vadd.f32 0.0, %v8077
      %v8079 = vpop.f32.mrf.mxu0
      %v8080 = vadd.f32 0.0, %v8079
      %8081 = vmatmul.bf16.gmra.mxu0 %v8066
      %v8082 = vpop.f32.mrf.mxu0
      %v8083 = vadd.f32 0.0, %v8082
      %v8084 = vpop.f32.mrf.mxu0
      %v8085 = vadd.f32 0.0, %v8084
      %8086 = vdwg.mxu0
      %v8091 = vunpack.c.l.b16 %v8034
      %v8092 = vunpack.c.l.b16 %v8035
      %v8093 = vunpack.c.l.b16 %v8036
      %v8094 = vunpack.c.l.b16 %v8037
      %v8095 = vpack.c.b16 %v8092, %v8091
      %v8096 = vpack.c.b16 %v8094, %v8093
      %8097 = vrot.lane.b32.xlu0 %v6079, 48
      %v8098 = vpop.permute.xlu0 %8097
      %8099 = vrot.lane.b32.xlu0 %v6080, 48
      %v8100 = vpop.permute.xlu0 %8099
      %v8104 = vsel %vm562, %v8095, 0
      %v8107 = vsel %vm562, %v8096, 0
      %8109 = vmatpush.bf16.msra.mxu0 0
      %8110 = vmatpush.bf16.msra.mxu0 0
      %8111 = vmatpush.bf16.msra.mxu0 0
      %8112 = vmatpush.bf16.msra.mxu0 0
      %8113 = vmatpush.bf16.msra.mxu0 0
      %8114 = vmatpush.bf16.msra.mxu0 0
      %8115 = vmatpush.bf16.msra.mxu0 %v8100
      %8116 = vmatpush.bf16.msra.mxu0 %v8098
      %8117 = vmatmul.bf16.gmra.mxu0 %v8104
      %v8118 = vpop.f32.mrf.mxu0
      %v8119 = vadd.f32 0.0, %v8118
      %v8120 = vpop.f32.mrf.mxu0
      %v8121 = vadd.f32 0.0, %v8120
      %8122 = vmatmul.bf16.gmra.mxu0 %v8107
      %v8123 = vpop.f32.mrf.mxu0
      %v8124 = vadd.f32 0.0, %v8123
      %v8125 = vpop.f32.mrf.mxu0
      %v8126 = vadd.f32 0.0, %v8125
      %8127 = vdwg.mxu0
      %v8132 = vunpack.c.l.b16 %v8038
      %v8133 = vunpack.c.l.b16 %v8039
      %v8134 = vunpack.c.l.b16 %v8040
      %v8135 = vunpack.c.l.b16 %v8041
      %v8136 = vpack.c.b16 %v8133, %v8132
      %v8137 = vpack.c.b16 %v8135, %v8134
      %8138 = vrot.lane.b32.xlu0 %v6124, 48
      %v8139 = vpop.permute.xlu0 %8138
      %8140 = vrot.lane.b32.xlu0 %v6125, 48
      %v8141 = vpop.permute.xlu0 %8140
      %v8145 = vsel %vm562, %v8136, 0
      %v8148 = vsel %vm562, %v8137, 0
      %8150 = vmatpush.bf16.msra.mxu0 0
      %8151 = vmatpush.bf16.msra.mxu0 0
      %8152 = vmatpush.bf16.msra.mxu0 0
      %8153 = vmatpush.bf16.msra.mxu0 0
      %8154 = vmatpush.bf16.msra.mxu0 0
      %8155 = vmatpush.bf16.msra.mxu0 0
      %8156 = vmatpush.bf16.msra.mxu0 %v8141
      %8157 = vmatpush.bf16.msra.mxu0 %v8139
      %8158 = vmatmul.bf16.gmra.mxu0 %v8145
      %v8159 = vpop.f32.mrf.mxu0
      %v8160 = vadd.f32 0.0, %v8159
      %v8161 = vpop.f32.mrf.mxu0
      %v8162 = vadd.f32 0.0, %v8161
      %8163 = vmatmul.bf16.gmra.mxu0 %v8148
      %v8164 = vpop.f32.mrf.mxu0
      %v8165 = vadd.f32 0.0, %v8164
      %v8166 = vpop.f32.mrf.mxu0
      %v8167 = vadd.f32 0.0, %v8166
      %8168 = vdwg.mxu0
      %v8173 = vunpack.c.l.b16 %v8042
      %v8174 = vunpack.c.l.b16 %v8043
      %v8175 = vunpack.c.l.b16 %v8044
      %v8176 = vunpack.c.l.b16 %v8045
      %v8177 = vpack.c.b16 %v8174, %v8173
      %v8178 = vpack.c.b16 %v8176, %v8175
      %8179 = vrot.lane.b32.xlu0 %v6169, 48
      %v8180 = vpop.permute.xlu0 %8179
      %8181 = vrot.lane.b32.xlu0 %v6170, 48
      %v8182 = vpop.permute.xlu0 %8181
      %v8186 = vsel %vm562, %v8177, 0
      %v8189 = vsel %vm562, %v8178, 0
      %8191 = vmatpush.bf16.msra.mxu0 0
      %8192 = vmatpush.bf16.msra.mxu0 0
      %8193 = vmatpush.bf16.msra.mxu0 0
      %8194 = vmatpush.bf16.msra.mxu0 0
      %8195 = vmatpush.bf16.msra.mxu0 0
      %8196 = vmatpush.bf16.msra.mxu0 0
      %8197 = vmatpush.bf16.msra.mxu0 %v8182
      %8198 = vmatpush.bf16.msra.mxu0 %v8180
      %8199 = vmatmul.bf16.gmra.mxu0 %v8186
      %v8200 = vpop.f32.mrf.mxu0
      %v8201 = vadd.f32 0.0, %v8200
      %v8202 = vpop.f32.mrf.mxu0
      %v8203 = vadd.f32 0.0, %v8202
      %8204 = vmatmul.bf16.gmra.mxu0 %v8189
      %v8205 = vpop.f32.mrf.mxu0
      %v8206 = vadd.f32 0.0, %v8205
      %v8207 = vpop.f32.mrf.mxu0
      %v8208 = vadd.f32 0.0, %v8207
      %8209 = vdwg.mxu0
      %8210 = vrot.lane.b32.xlu0 %v6034, 104
      %v8211 = vpop.permute.xlu0 %8210
      %8212 = vrot.lane.b32.xlu0 %v6035, 104
      %v8213 = vpop.permute.xlu0 %8212
      %8214 = vrot.lane.b32.xlu0 %v6034, 72
      %v8215 = vpop.permute.xlu0 %8214
      %8216 = vrot.lane.b32.xlu0 %v6035, 72
      %v8217 = vpop.permute.xlu0 %8216
      %v8219 = vsel %vm1473, %v8211, 0
      %v8222 = vsel %vm1473, %v8213, 0
      %v8225 = vsel %vm1473, %v8215, 0
      %v8228 = vsel %vm1473, %v8217, 0
      %8230 = vmatpush.bf16.xpose.msra.mxu0 0
      %8231 = vmatpush.bf16.xpose.msra.mxu0 0
      %8232 = vmatpush.bf16.xpose.msra.mxu0 0
      %8233 = vmatpush.bf16.xpose.msra.mxu0 0
      %8234 = vmatpush.bf16.xpose.msra.mxu0 0
      %8235 = vmatpush.bf16.xpose.msra.mxu0 0
      %8236 = vmatpush.bf16.xpose.msra.mxu0 %v8228
      %8237 = vmatpush.bf16.xpose.msra.mxu0 %v8225
      %8238 = vmatmul.bf16.gmra.mxu0 %v8219
      %v8239 = vpop.f32.mrf.mxu0
      %v8240 = vadd.f32 %v232, %v8239
      %v8241 = vpop.f32.mrf.mxu0
      %v8242 = vadd.f32 %v232, %v8241
      %8243 = vmatmul.bf16.gmra.mxu0 %v8222
      %v8244 = vpop.f32.mrf.mxu0
      %v8245 = vadd.f32 %v232, %v8244
      %v8246 = vpop.f32.mrf.mxu0
      %v8247 = vadd.f32 %v232, %v8246
      %8248 = vdwg.mxu0
      %8249 = vrot.lane.b32.xlu0 %v6079, 104
      %v8250 = vpop.permute.xlu0 %8249
      %8251 = vrot.lane.b32.xlu0 %v6080, 104
      %v8252 = vpop.permute.xlu0 %8251
      %8253 = vrot.lane.b32.xlu0 %v6079, 72
      %v8254 = vpop.permute.xlu0 %8253
      %8255 = vrot.lane.b32.xlu0 %v6080, 72
      %v8256 = vpop.permute.xlu0 %8255
      %v8258 = vsel %vm1473, %v8250, 0
      %v8261 = vsel %vm1473, %v8252, 0
      %v8264 = vsel %vm1473, %v8254, 0
      %v8267 = vsel %vm1473, %v8256, 0
      %8269 = vmatpush.bf16.xpose.msra.mxu0 0
      %8270 = vmatpush.bf16.xpose.msra.mxu0 0
      %8271 = vmatpush.bf16.xpose.msra.mxu0 0
      %8272 = vmatpush.bf16.xpose.msra.mxu0 0
      %8273 = vmatpush.bf16.xpose.msra.mxu0 0
      %8274 = vmatpush.bf16.xpose.msra.mxu0 0
      %8275 = vmatpush.bf16.xpose.msra.mxu0 %v8267
      %8276 = vmatpush.bf16.xpose.msra.mxu0 %v8264
      %8277 = vmatmul.bf16.gmra.mxu0 %v8258
      %v8278 = vpop.f32.mrf.mxu0
      %v8279 = vadd.f32 %v232, %v8278
      %v8280 = vpop.f32.mrf.mxu0
      %v8281 = vadd.f32 %v232, %v8280
      %8282 = vmatmul.bf16.gmra.mxu0 %v8261
      %v8283 = vpop.f32.mrf.mxu0
      %v8284 = vadd.f32 %v232, %v8283
      %v8285 = vpop.f32.mrf.mxu0
      %v8286 = vadd.f32 %v232, %v8285
      %8287 = vdwg.mxu0
      %8288 = vrot.lane.b32.xlu0 %v6124, 104
      %v8289 = vpop.permute.xlu0 %8288
      %8290 = vrot.lane.b32.xlu0 %v6125, 104
      %v8291 = vpop.permute.xlu0 %8290
      %8292 = vrot.lane.b32.xlu0 %v6124, 72
      %v8293 = vpop.permute.xlu0 %8292
      %8294 = vrot.lane.b32.xlu0 %v6125, 72
      %v8295 = vpop.permute.xlu0 %8294
      %v8297 = vsel %vm1473, %v8289, 0
      %v8300 = vsel %vm1473, %v8291, 0
      %v8303 = vsel %vm1473, %v8293, 0
      %v8306 = vsel %vm1473, %v8295, 0
      %8308 = vmatpush.bf16.xpose.msra.mxu0 0
      %8309 = vmatpush.bf16.xpose.msra.mxu0 0
      %8310 = vmatpush.bf16.xpose.msra.mxu0 0
      %8311 = vmatpush.bf16.xpose.msra.mxu0 0
      %8312 = vmatpush.bf16.xpose.msra.mxu0 0
      %8313 = vmatpush.bf16.xpose.msra.mxu0 0
      %8314 = vmatpush.bf16.xpose.msra.mxu0 %v8306
      %8315 = vmatpush.bf16.xpose.msra.mxu0 %v8303
      %8316 = vmatmul.bf16.gmra.mxu0 %v8297
      %v8317 = vpop.f32.mrf.mxu0
      %v8318 = vadd.f32 %v232, %v8317
      %v8319 = vpop.f32.mrf.mxu0
      %v8320 = vadd.f32 %v232, %v8319
      %8321 = vmatmul.bf16.gmra.mxu0 %v8300
      %v8322 = vpop.f32.mrf.mxu0
      %v8323 = vadd.f32 %v232, %v8322
      %v8324 = vpop.f32.mrf.mxu0
      %v8325 = vadd.f32 %v232, %v8324
      %8326 = vdwg.mxu0
      %8327 = vrot.lane.b32.xlu0 %v6169, 104
      %v8328 = vpop.permute.xlu0 %8327
      %8329 = vrot.lane.b32.xlu0 %v6170, 104
      %v8330 = vpop.permute.xlu0 %8329
      %8331 = vrot.lane.b32.xlu0 %v6169, 72
      %v8332 = vpop.permute.xlu0 %8331
      %8333 = vrot.lane.b32.xlu0 %v6170, 72
      %v8334 = vpop.permute.xlu0 %8333
      %v8336 = vsel %vm1473, %v8328, 0
      %v8339 = vsel %vm1473, %v8330, 0
      %v8342 = vsel %vm1473, %v8332, 0
      %v8345 = vsel %vm1473, %v8334, 0
      %8347 = vmatpush.bf16.xpose.msra.mxu0 0
      %8348 = vmatpush.bf16.xpose.msra.mxu0 0
      %8349 = vmatpush.bf16.xpose.msra.mxu0 0
      %8350 = vmatpush.bf16.xpose.msra.mxu0 0
      %8351 = vmatpush.bf16.xpose.msra.mxu0 0
      %8352 = vmatpush.bf16.xpose.msra.mxu0 0
      %8353 = vmatpush.bf16.xpose.msra.mxu0 %v8345
      %8354 = vmatpush.bf16.xpose.msra.mxu0 %v8342
      %8355 = vmatmul.bf16.gmra.mxu0 %v8336
      %v8356 = vpop.f32.mrf.mxu0
      %v8357 = vadd.f32 %v232, %v8356
      %v8358 = vpop.f32.mrf.mxu0
      %v8359 = vadd.f32 %v232, %v8358
      %8360 = vmatmul.bf16.gmra.mxu0 %v8339
      %v8361 = vpop.f32.mrf.mxu0
      %v8362 = vadd.f32 %v232, %v8361
      %v8363 = vpop.f32.mrf.mxu0
      %v8364 = vadd.f32 %v232, %v8363
      %8365 = vdwg.mxu0
      %v8366 = vsel %vm562, %v8240, -inf
      %8367 = vmax.xlane.f32.xlu0 %v8366
      %v8368 = vpop.xlane.xlu0 %8367
      %v8369 = vsel %vm562, %v8242, -inf
      %8370 = vmax.xlane.f32.xlu0 %v8369
      %v8371 = vpop.xlane.xlu0 %8370
      %v8372 = vsel %vm562, %v8245, -inf
      %8373 = vmax.xlane.f32.xlu0 %v8372
      %v8374 = vpop.xlane.xlu0 %8373
      %v8375 = vsel %vm562, %v8247, -inf
      %8376 = vmax.xlane.f32.xlu0 %v8375
      %v8377 = vpop.xlane.xlu0 %8376
      %v8378 = vsel %vm562, %v8279, -inf
      %8379 = vmax.xlane.f32.xlu0 %v8378
      %v8380 = vpop.xlane.xlu0 %8379
      %v8381 = vsel %vm562, %v8281, -inf
      %8382 = vmax.xlane.f32.xlu0 %v8381
      %v8383 = vpop.xlane.xlu0 %8382
      %v8384 = vsel %vm562, %v8284, -inf
      %8385 = vmax.xlane.f32.xlu0 %v8384
      %v8386 = vpop.xlane.xlu0 %8385
      %v8387 = vsel %vm562, %v8286, -inf
      %8388 = vmax.xlane.f32.xlu0 %v8387
      %v8389 = vpop.xlane.xlu0 %8388
      %v8390 = vsel %vm562, %v8318, -inf
      %8391 = vmax.xlane.f32.xlu0 %v8390
      %v8392 = vpop.xlane.xlu0 %8391
      %v8393 = vsel %vm562, %v8320, -inf
      %8394 = vmax.xlane.f32.xlu0 %v8393
      %v8395 = vpop.xlane.xlu0 %8394
      %v8396 = vsel %vm562, %v8323, -inf
      %8397 = vmax.xlane.f32.xlu0 %v8396
      %v8398 = vpop.xlane.xlu0 %8397
      %v8399 = vsel %vm562, %v8325, -inf
      %8400 = vmax.xlane.f32.xlu0 %v8399
      %v8401 = vpop.xlane.xlu0 %8400
      %v8402 = vsel %vm562, %v8357, -inf
      %8403 = vmax.xlane.f32.xlu0 %v8402
      %v8404 = vpop.xlane.xlu0 %8403
      %v8405 = vsel %vm562, %v8359, -inf
      %8406 = vmax.xlane.f32.xlu0 %v8405
      %v8407 = vpop.xlane.xlu0 %8406
      %v8408 = vsel %vm562, %v8362, -inf
      %8409 = vmax.xlane.f32.xlu0 %v8408
      %v8410 = vpop.xlane.xlu0 %8409
      %v8411 = vsel %vm562, %v8364, -inf
      %8412 = vmax.xlane.f32.xlu0 %v8411
      %v8413 = vpop.xlane.xlu0 %8412
      %v8414 = vsub.f32 %v8240, %v8368
      %v8415 = vsub.f32 %v8242, %v8371
      %v8416 = vsub.f32 %v8245, %v8374
      %v8417 = vsub.f32 %v8247, %v8377
      %v8418 = vsub.f32 %v8279, %v8380
      %v8419 = vsub.f32 %v8281, %v8383
      %v8420 = vsub.f32 %v8284, %v8386
      %v8421 = vsub.f32 %v8286, %v8389
      %v8422 = vsub.f32 %v8318, %v8392
      %v8423 = vsub.f32 %v8320, %v8395
      %v8424 = vsub.f32 %v8323, %v8398
      %v8425 = vsub.f32 %v8325, %v8401
      %v8426 = vsub.f32 %v8357, %v8404
      %v8427 = vsub.f32 %v8359, %v8407
      %v8428 = vsub.f32 %v8362, %v8410
      %v8429 = vsub.f32 %v8364, %v8413
      %v8430 = vmul.f32 %v8414, 1.442695
      %v8431 = vpow.pop %v8430
      %v8432 = vmul.f32 %v8415, 1.442695
      %v8433 = vpow.pop %v8432
      %v8434 = vmul.f32 %v8416, 1.442695
      %v8435 = vpow.pop %v8434
      %v8436 = vmul.f32 %v8417, 1.442695
      %v8437 = vpow.pop %v8436
      %v8438 = vmul.f32 %v8418, 1.442695
      %v8439 = vpow.pop %v8438
      %v8440 = vmul.f32 %v8419, 1.442695
      %v8441 = vpow.pop %v8440
      %v8442 = vmul.f32 %v8420, 1.442695
      %v8443 = vpow.pop %v8442
      %v8444 = vmul.f32 %v8421, 1.442695
      %v8445 = vpow.pop %v8444
      %v8446 = vmul.f32 %v8422, 1.442695
      %v8447 = vpow.pop %v8446
      %v8448 = vmul.f32 %v8423, 1.442695
      %v8449 = vpow.pop %v8448
      %v8450 = vmul.f32 %v8424, 1.442695
      %v8451 = vpow.pop %v8450
      %v8452 = vmul.f32 %v8425, 1.442695
      %v8453 = vpow.pop %v8452
      %v8454 = vmul.f32 %v8426, 1.442695
      %v8455 = vpow.pop %v8454
      %v8456 = vmul.f32 %v8427, 1.442695
      %v8457 = vpow.pop %v8456
      %v8458 = vmul.f32 %v8428, 1.442695
      %v8459 = vpow.pop %v8458
      %v8460 = vmul.f32 %v8429, 1.442695
      %v8461 = vpow.pop %v8460
      %v8462 = vsel %vm562, %v8431, 0.0
      %8463 = vadd.xlane.f32.xlu0 %v8462
      %v8464 = vpop.xlane.xlu0 %8463
      %v8465 = vsel %vm562, %v8433, 0.0
      %8466 = vadd.xlane.f32.xlu0 %v8465
      %v8467 = vpop.xlane.xlu0 %8466
      %v8468 = vsel %vm562, %v8435, 0.0
      %8469 = vadd.xlane.f32.xlu0 %v8468
      %v8470 = vpop.xlane.xlu0 %8469
      %v8471 = vsel %vm562, %v8437, 0.0
      %8472 = vadd.xlane.f32.xlu0 %v8471
      %v8473 = vpop.xlane.xlu0 %8472
      %v8474 = vsel %vm562, %v8439, 0.0
      %8475 = vadd.xlane.f32.xlu0 %v8474
      %v8476 = vpop.xlane.xlu0 %8475
      %v8477 = vsel %vm562, %v8441, 0.0
      %8478 = vadd.xlane.f32.xlu0 %v8477
      %v8479 = vpop.xlane.xlu0 %8478
      %v8480 = vsel %vm562, %v8443, 0.0
      %8481 = vadd.xlane.f32.xlu0 %v8480
      %v8482 = vpop.xlane.xlu0 %8481
      %v8483 = vsel %vm562, %v8445, 0.0
      %8484 = vadd.xlane.f32.xlu0 %v8483
      %v8485 = vpop.xlane.xlu0 %8484
      %v8486 = vsel %vm562, %v8447, 0.0
      %8487 = vadd.xlane.f32.xlu0 %v8486
      %v8488 = vpop.xlane.xlu0 %8487
      %v8489 = vsel %vm562, %v8449, 0.0
      %8490 = vadd.xlane.f32.xlu0 %v8489
      %v8491 = vpop.xlane.xlu0 %8490
      %v8492 = vsel %vm562, %v8451, 0.0
      %8493 = vadd.xlane.f32.xlu0 %v8492
      %v8494 = vpop.xlane.xlu0 %8493
      %v8495 = vsel %vm562, %v8453, 0.0
      %8496 = vadd.xlane.f32.xlu0 %v8495
      %v8497 = vpop.xlane.xlu0 %8496
      %v8498 = vsel %vm562, %v8455, 0.0
      %8499 = vadd.xlane.f32.xlu0 %v8498
      %v8500 = vpop.xlane.xlu0 %8499
      %v8501 = vsel %vm562, %v8457, 0.0
      %8502 = vadd.xlane.f32.xlu0 %v8501
      %v8503 = vpop.xlane.xlu0 %8502
      %v8504 = vsel %vm562, %v8459, 0.0
      %8505 = vadd.xlane.f32.xlu0 %v8504
      %v8506 = vpop.xlane.xlu0 %8505
      %v8507 = vsel %vm562, %v8461, 0.0
      %8508 = vadd.xlane.f32.xlu0 %v8507
      %v8509 = vpop.xlane.xlu0 %8508
      %v8510 = vrcp.pop %v8464
      %v8511 = vmul.f32 %v8464, %v8510
      %v8512 = vsub.f32 1.0, %v8511
      %v8513 = vmul.f32 %v8510, %v8512
      %v8514 = vadd.f32 %v8510, %v8513
      %vm8515 = vweird.f32 %v8464
      %vm8516 = vweird.f32 %v8510
      %vm8517 = vmor %vm8515, %vm8516
      %v8518 = vsel %vm8517, %v8510, %v8514
      %v8519 = vand.u32 2147483647, %v8464
      %vm8520 = vcmp.eq.f32.partialorder %v8519, 8.507059e+37
      %v8521 = vand.u32 %v8464, 2147483648
      %v8522 = vor.u32 1.1754944e-38, %v8521
      %v8523 = vsel %vm8520, %v8522, %v8518
      %v8524 = vmul.f32 %v8431, %v8523
      %v8525 = vrcp.pop %v8467
      %v8526 = vmul.f32 %v8467, %v8525
      %v8527 = vsub.f32 1.0, %v8526
      %v8528 = vmul.f32 %v8525, %v8527
      %v8529 = vadd.f32 %v8525, %v8528
      %vm8530 = vweird.f32 %v8467
      %vm8531 = vweird.f32 %v8525
      %vm8532 = vmor %vm8530, %vm8531
      %v8533 = vsel %vm8532, %v8525, %v8529
      %v8534 = vand.u32 2147483647, %v8467
      %vm8535 = vcmp.eq.f32.partialorder %v8534, 8.507059e+37
      %v8536 = vand.u32 %v8467, 2147483648
      %v8537 = vor.u32 1.1754944e-38, %v8536
      %v8538 = vsel %vm8535, %v8537, %v8533
      %v8539 = vmul.f32 %v8433, %v8538
      %v8540 = vrcp.pop %v8470
      %v8541 = vmul.f32 %v8470, %v8540
      %v8542 = vsub.f32 1.0, %v8541
      %v8543 = vmul.f32 %v8540, %v8542
      %v8544 = vadd.f32 %v8540, %v8543
      %vm8545 = vweird.f32 %v8470
      %vm8546 = vweird.f32 %v8540
      %vm8547 = vmor %vm8545, %vm8546
      %v8548 = vsel %vm8547, %v8540, %v8544
      %v8549 = vand.u32 2147483647, %v8470
      %vm8550 = vcmp.eq.f32.partialorder %v8549, 8.507059e+37
      %v8551 = vand.u32 %v8470, 2147483648
      %v8552 = vor.u32 1.1754944e-38, %v8551
      %v8553 = vsel %vm8550, %v8552, %v8548
      %v8554 = vmul.f32 %v8435, %v8553
      %v8555 = vrcp.pop %v8473
      %v8556 = vmul.f32 %v8473, %v8555
      %v8557 = vsub.f32 1.0, %v8556
      %v8558 = vmul.f32 %v8555, %v8557
      %v8559 = vadd.f32 %v8555, %v8558
      %vm8560 = vweird.f32 %v8473
      %vm8561 = vweird.f32 %v8555
      %vm8562 = vmor %vm8560, %vm8561
      %v8563 = vsel %vm8562, %v8555, %v8559
      %v8564 = vand.u32 2147483647, %v8473
      %vm8565 = vcmp.eq.f32.partialorder %v8564, 8.507059e+37
      %v8566 = vand.u32 %v8473, 2147483648
      %v8567 = vor.u32 1.1754944e-38, %v8566
      %v8568 = vsel %vm8565, %v8567, %v8563
      %v8569 = vmul.f32 %v8437, %v8568
      %v8570 = vrcp.pop %v8476
      %v8571 = vmul.f32 %v8476, %v8570
      %v8572 = vsub.f32 1.0, %v8571
      %v8573 = vmul.f32 %v8570, %v8572
      %v8574 = vadd.f32 %v8570, %v8573
      %vm8575 = vweird.f32 %v8476
      %vm8576 = vweird.f32 %v8570
      %vm8577 = vmor %vm8575, %vm8576
      %v8578 = vsel %vm8577, %v8570, %v8574
      %v8579 = vand.u32 2147483647, %v8476
      %vm8580 = vcmp.eq.f32.partialorder %v8579, 8.507059e+37
      %v8581 = vand.u32 %v8476, 2147483648
      %v8582 = vor.u32 1.1754944e-38, %v8581
      %v8583 = vsel %vm8580, %v8582, %v8578
      %v8584 = vmul.f32 %v8439, %v8583
      %v8585 = vrcp.pop %v8479
      %v8586 = vmul.f32 %v8479, %v8585
      %v8587 = vsub.f32 1.0, %v8586
      %v8588 = vmul.f32 %v8585, %v8587
      %v8589 = vadd.f32 %v8585, %v8588
      %vm8590 = vweird.f32 %v8479
      %vm8591 = vweird.f32 %v8585
      %vm8592 = vmor %vm8590, %vm8591
      %v8593 = vsel %vm8592, %v8585, %v8589
      %v8594 = vand.u32 2147483647, %v8479
      %vm8595 = vcmp.eq.f32.partialorder %v8594, 8.507059e+37
      %v8596 = vand.u32 %v8479, 2147483648
      %v8597 = vor.u32 1.1754944e-38, %v8596
      %v8598 = vsel %vm8595, %v8597, %v8593
      %v8599 = vmul.f32 %v8441, %v8598
      %v8600 = vrcp.pop %v8482
      %v8601 = vmul.f32 %v8482, %v8600
      %v8602 = vsub.f32 1.0, %v8601
      %v8603 = vmul.f32 %v8600, %v8602
      %v8604 = vadd.f32 %v8600, %v8603
      %vm8605 = vweird.f32 %v8482
      %vm8606 = vweird.f32 %v8600
      %vm8607 = vmor %vm8605, %vm8606
      %v8608 = vsel %vm8607, %v8600, %v8604
      %v8609 = vand.u32 2147483647, %v8482
      %vm8610 = vcmp.eq.f32.partialorder %v8609, 8.507059e+37
      %v8611 = vand.u32 %v8482, 2147483648
      %v8612 = vor.u32 1.1754944e-38, %v8611
      %v8613 = vsel %vm8610, %v8612, %v8608
      %v8614 = vmul.f32 %v8443, %v8613
      %v8615 = vrcp.pop %v8485
      %v8616 = vmul.f32 %v8485, %v8615
      %v8617 = vsub.f32 1.0, %v8616
      %v8618 = vmul.f32 %v8615, %v8617
      %v8619 = vadd.f32 %v8615, %v8618
      %vm8620 = vweird.f32 %v8485
      %vm8621 = vweird.f32 %v8615
      %vm8622 = vmor %vm8620, %vm8621
      %v8623 = vsel %vm8622, %v8615, %v8619
      %v8624 = vand.u32 2147483647, %v8485
      %vm8625 = vcmp.eq.f32.partialorder %v8624, 8.507059e+37
      %v8626 = vand.u32 %v8485, 2147483648
      %v8627 = vor.u32 1.1754944e-38, %v8626
      %v8628 = vsel %vm8625, %v8627, %v8623
      %v8629 = vmul.f32 %v8445, %v8628
      %v8630 = vrcp.pop %v8488
      %v8631 = vmul.f32 %v8488, %v8630
      %v8632 = vsub.f32 1.0, %v8631
      %v8633 = vmul.f32 %v8630, %v8632
      %v8634 = vadd.f32 %v8630, %v8633
      %vm8635 = vweird.f32 %v8488
      %vm8636 = vweird.f32 %v8630
      %vm8637 = vmor %vm8635, %vm8636
      %v8638 = vsel %vm8637, %v8630, %v8634
      %v8639 = vand.u32 2147483647, %v8488
      %vm8640 = vcmp.eq.f32.partialorder %v8639, 8.507059e+37
      %v8641 = vand.u32 %v8488, 2147483648
      %v8642 = vor.u32 1.1754944e-38, %v8641
      %v8643 = vsel %vm8640, %v8642, %v8638
      %v8644 = vmul.f32 %v8447, %v8643
      %v8645 = vrcp.pop %v8491
      %v8646 = vmul.f32 %v8491, %v8645
      %v8647 = vsub.f32 1.0, %v8646
      %v8648 = vmul.f32 %v8645, %v8647
      %v8649 = vadd.f32 %v8645, %v8648
      %vm8650 = vweird.f32 %v8491
      %vm8651 = vweird.f32 %v8645
      %vm8652 = vmor %vm8650, %vm8651
      %v8653 = vsel %vm8652, %v8645, %v8649
      %v8654 = vand.u32 2147483647, %v8491
      %vm8655 = vcmp.eq.f32.partialorder %v8654, 8.507059e+37
      %v8656 = vand.u32 %v8491, 2147483648
      %v8657 = vor.u32 1.1754944e-38, %v8656
      %v8658 = vsel %vm8655, %v8657, %v8653
      %v8659 = vmul.f32 %v8449, %v8658
      %v8660 = vrcp.pop %v8494
      %v8661 = vmul.f32 %v8494, %v8660
      %v8662 = vsub.f32 1.0, %v8661
      %v8663 = vmul.f32 %v8660, %v8662
      %v8664 = vadd.f32 %v8660, %v8663
      %vm8665 = vweird.f32 %v8494
      %vm8666 = vweird.f32 %v8660
      %vm8667 = vmor %vm8665, %vm8666
      %v8668 = vsel %vm8667, %v8660, %v8664
      %v8669 = vand.u32 2147483647, %v8494
      %vm8670 = vcmp.eq.f32.partialorder %v8669, 8.507059e+37
      %v8671 = vand.u32 %v8494, 2147483648
      %v8672 = vor.u32 1.1754944e-38, %v8671
      %v8673 = vsel %vm8670, %v8672, %v8668
      %v8674 = vmul.f32 %v8451, %v8673
      %v8675 = vrcp.pop %v8497
      %v8676 = vmul.f32 %v8497, %v8675
      %v8677 = vsub.f32 1.0, %v8676
      %v8678 = vmul.f32 %v8675, %v8677
      %v8679 = vadd.f32 %v8675, %v8678
      %vm8680 = vweird.f32 %v8497
      %vm8681 = vweird.f32 %v8675
      %vm8682 = vmor %vm8680, %vm8681
      %v8683 = vsel %vm8682, %v8675, %v8679
      %v8684 = vand.u32 2147483647, %v8497
      %vm8685 = vcmp.eq.f32.partialorder %v8684, 8.507059e+37
      %v8686 = vand.u32 %v8497, 2147483648
      %v8687 = vor.u32 1.1754944e-38, %v8686
      %v8688 = vsel %vm8685, %v8687, %v8683
      %v8689 = vmul.f32 %v8453, %v8688
      %v8690 = vrcp.pop %v8500
      %v8691 = vmul.f32 %v8500, %v8690
      %v8692 = vsub.f32 1.0, %v8691
      %v8693 = vmul.f32 %v8690, %v8692
      %v8694 = vadd.f32 %v8690, %v8693
      %vm8695 = vweird.f32 %v8500
      %vm8696 = vweird.f32 %v8690
      %vm8697 = vmor %vm8695, %vm8696
      %v8698 = vsel %vm8697, %v8690, %v8694
      %v8699 = vand.u32 2147483647, %v8500
      %vm8700 = vcmp.eq.f32.partialorder %v8699, 8.507059e+37
      %v8701 = vand.u32 %v8500, 2147483648
      %v8702 = vor.u32 1.1754944e-38, %v8701
      %v8703 = vsel %vm8700, %v8702, %v8698
      %v8704 = vmul.f32 %v8455, %v8703
      %v8705 = vrcp.pop %v8503
      %v8706 = vmul.f32 %v8503, %v8705
      %v8707 = vsub.f32 1.0, %v8706
      %v8708 = vmul.f32 %v8705, %v8707
      %v8709 = vadd.f32 %v8705, %v8708
      %vm8710 = vweird.f32 %v8503
      %vm8711 = vweird.f32 %v8705
      %vm8712 = vmor %vm8710, %vm8711
      %v8713 = vsel %vm8712, %v8705, %v8709
      %v8714 = vand.u32 2147483647, %v8503
      %vm8715 = vcmp.eq.f32.partialorder %v8714, 8.507059e+37
      %v8716 = vand.u32 %v8503, 2147483648
      %v8717 = vor.u32 1.1754944e-38, %v8716
      %v8718 = vsel %vm8715, %v8717, %v8713
      %v8719 = vmul.f32 %v8457, %v8718
      %v8720 = vrcp.pop %v8506
      %v8721 = vmul.f32 %v8506, %v8720
      %v8722 = vsub.f32 1.0, %v8721
      %v8723 = vmul.f32 %v8720, %v8722
      %v8724 = vadd.f32 %v8720, %v8723
      %vm8725 = vweird.f32 %v8506
      %vm8726 = vweird.f32 %v8720
      %vm8727 = vmor %vm8725, %vm8726
      %v8728 = vsel %vm8727, %v8720, %v8724
      %v8729 = vand.u32 2147483647, %v8506
      %vm8730 = vcmp.eq.f32.partialorder %v8729, 8.507059e+37
      %v8731 = vand.u32 %v8506, 2147483648
      %v8732 = vor.u32 1.1754944e-38, %v8731
      %v8733 = vsel %vm8730, %v8732, %v8728
      %v8734 = vmul.f32 %v8459, %v8733
      %v8735 = vrcp.pop %v8509
      %v8736 = vmul.f32 %v8509, %v8735
      %v8737 = vsub.f32 1.0, %v8736
      %v8738 = vmul.f32 %v8735, %v8737
      %v8739 = vadd.f32 %v8735, %v8738
      %vm8740 = vweird.f32 %v8509
      %vm8741 = vweird.f32 %v8735
      %vm8742 = vmor %vm8740, %vm8741
      %v8743 = vsel %vm8742, %v8735, %v8739
      %v8744 = vand.u32 2147483647, %v8509
      %vm8745 = vcmp.eq.f32.partialorder %v8744, 8.507059e+37
      %v8746 = vand.u32 %v8509, 2147483648
      %v8747 = vor.u32 1.1754944e-38, %v8746
      %v8748 = vsel %vm8745, %v8747, %v8743
      %v8749 = vmul.f32 %v8461, %v8748
      %v8750 = vpack.c.bf16 %v8524, %v8524
      %v8751 = vpack.c.bf16 %v8539, %v8539
      %v8752 = vpack.c.bf16 %v8554, %v8554
      %v8753 = vpack.c.bf16 %v8569, %v8569
      %v8754 = vpack.c.bf16 %v8584, %v8584
      %v8755 = vpack.c.bf16 %v8599, %v8599
      %v8756 = vpack.c.bf16 %v8614, %v8614
      %v8757 = vpack.c.bf16 %v8629, %v8629
      %v8758 = vpack.c.bf16 %v8644, %v8644
      %v8759 = vpack.c.bf16 %v8659, %v8659
      %v8760 = vpack.c.bf16 %v8674, %v8674
      %v8761 = vpack.c.bf16 %v8689, %v8689
      %v8762 = vpack.c.bf16 %v8704, %v8704
      %v8763 = vpack.c.bf16 %v8719, %v8719
      %v8764 = vpack.c.bf16 %v8734, %v8734
      %v8765 = vpack.c.bf16 %v8749, %v8749
      %v8770 = vunpack.c.l.b16 %v8750
      %v8771 = vunpack.c.l.b16 %v8751
      %v8772 = vunpack.c.l.b16 %v8752
      %v8773 = vunpack.c.l.b16 %v8753
      %v8774 = vpack.c.b16 %v8771, %v8770
      %v8775 = vpack.c.b16 %v8773, %v8772
      %8776 = vrot.lane.b32.xlu0 %v6034, 40
      %v8777 = vpop.permute.xlu0 %8776
      %8778 = vrot.lane.b32.xlu0 %v6035, 40
      %v8779 = vpop.permute.xlu0 %8778
      %v8783 = vsel %vm562, %v8774, 0
      %v8786 = vsel %vm562, %v8775, 0
      %8788 = vmatpush.bf16.msra.mxu0 0
      %8789 = vmatpush.bf16.msra.mxu0 0
      %8790 = vmatpush.bf16.msra.mxu0 0
      %8791 = vmatpush.bf16.msra.mxu0 0
      %8792 = vmatpush.bf16.msra.mxu0 0
      %8793 = vmatpush.bf16.msra.mxu0 0
      %8794 = vmatpush.bf16.msra.mxu0 %v8779
      %8795 = vmatpush.bf16.msra.mxu0 %v8777
      %8796 = vmatmul.bf16.gmra.mxu0 %v8783
      %v8797 = vpop.f32.mrf.mxu0
      %v8798 = vadd.f32 0.0, %v8797
      %v8799 = vpop.f32.mrf.mxu0
      %v8800 = vadd.f32 0.0, %v8799
      %8801 = vmatmul.bf16.gmra.mxu0 %v8786
      %v8802 = vpop.f32.mrf.mxu0
      %v8803 = vadd.f32 0.0, %v8802
      %v8804 = vpop.f32.mrf.mxu0
      %v8805 = vadd.f32 0.0, %v8804
      %8806 = vdwg.mxu0
      %v8811 = vunpack.c.l.b16 %v8754
      %v8812 = vunpack.c.l.b16 %v8755
      %v8813 = vunpack.c.l.b16 %v8756
      %v8814 = vunpack.c.l.b16 %v8757
      %v8815 = vpack.c.b16 %v8812, %v8811
      %v8816 = vpack.c.b16 %v8814, %v8813
      %8817 = vrot.lane.b32.xlu0 %v6079, 40
      %v8818 = vpop.permute.xlu0 %8817
      %8819 = vrot.lane.b32.xlu0 %v6080, 40
      %v8820 = vpop.permute.xlu0 %8819
      %v8824 = vsel %vm562, %v8815, 0
      %v8827 = vsel %vm562, %v8816, 0
      %8829 = vmatpush.bf16.msra.mxu0 0
      %8830 = vmatpush.bf16.msra.mxu0 0
      %8831 = vmatpush.bf16.msra.mxu0 0
      %8832 = vmatpush.bf16.msra.mxu0 0
      %8833 = vmatpush.bf16.msra.mxu0 0
      %8834 = vmatpush.bf16.msra.mxu0 0
      %8835 = vmatpush.bf16.msra.mxu0 %v8820
      %8836 = vmatpush.bf16.msra.mxu0 %v8818
      %8837 = vmatmul.bf16.gmra.mxu0 %v8824
      %v8838 = vpop.f32.mrf.mxu0
      %v8839 = vadd.f32 0.0, %v8838
      %v8840 = vpop.f32.mrf.mxu0
      %v8841 = vadd.f32 0.0, %v8840
      %8842 = vmatmul.bf16.gmra.mxu0 %v8827
      %v8843 = vpop.f32.mrf.mxu0
      %v8844 = vadd.f32 0.0, %v8843
      %v8845 = vpop.f32.mrf.mxu0
      %v8846 = vadd.f32 0.0, %v8845
      %8847 = vdwg.mxu0
      %v8852 = vunpack.c.l.b16 %v8758
      %v8853 = vunpack.c.l.b16 %v8759
      %v8854 = vunpack.c.l.b16 %v8760
      %v8855 = vunpack.c.l.b16 %v8761
      %v8856 = vpack.c.b16 %v8853, %v8852
      %v8857 = vpack.c.b16 %v8855, %v8854
      %8858 = vrot.lane.b32.xlu0 %v6124, 40
      %v8859 = vpop.permute.xlu0 %8858
      %8860 = vrot.lane.b32.xlu0 %v6125, 40
      %v8861 = vpop.permute.xlu0 %8860
      %v8865 = vsel %vm562, %v8856, 0
      %v8868 = vsel %vm562, %v8857, 0
      %8870 = vmatpush.bf16.msra.mxu0 0
      %8871 = vmatpush.bf16.msra.mxu0 0
      %8872 = vmatpush.bf16.msra.mxu0 0
      %8873 = vmatpush.bf16.msra.mxu0 0
      %8874 = vmatpush.bf16.msra.mxu0 0
      %8875 = vmatpush.bf16.msra.mxu0 0
      %8876 = vmatpush.bf16.msra.mxu0 %v8861
      %8877 = vmatpush.bf16.msra.mxu0 %v8859
      %8878 = vmatmul.bf16.gmra.mxu0 %v8865
      %v8879 = vpop.f32.mrf.mxu0
      %v8880 = vadd.f32 0.0, %v8879
      %v8881 = vpop.f32.mrf.mxu0
      %v8882 = vadd.f32 0.0, %v8881
      %8883 = vmatmul.bf16.gmra.mxu0 %v8868
      %v8884 = vpop.f32.mrf.mxu0
      %v8885 = vadd.f32 0.0, %v8884
      %v8886 = vpop.f32.mrf.mxu0
      %v8887 = vadd.f32 0.0, %v8886
      %8888 = vdwg.mxu0
      %v8893 = vunpack.c.l.b16 %v8762
      %v8894 = vunpack.c.l.b16 %v8763
      %v8895 = vunpack.c.l.b16 %v8764
      %v8896 = vunpack.c.l.b16 %v8765
      %v8897 = vpack.c.b16 %v8894, %v8893
      %v8898 = vpack.c.b16 %v8896, %v8895
      %8899 = vrot.lane.b32.xlu0 %v6169, 40
      %v8900 = vpop.permute.xlu0 %8899
      %8901 = vrot.lane.b32.xlu0 %v6170, 40
      %v8902 = vpop.permute.xlu0 %8901
      %v8906 = vsel %vm562, %v8897, 0
      %v8909 = vsel %vm562, %v8898, 0
      %8911 = vmatpush.bf16.msra.mxu0 0
      %8912 = vmatpush.bf16.msra.mxu0 0
      %8913 = vmatpush.bf16.msra.mxu0 0
      %8914 = vmatpush.bf16.msra.mxu0 0
      %8915 = vmatpush.bf16.msra.mxu0 0
      %8916 = vmatpush.bf16.msra.mxu0 0
      %8917 = vmatpush.bf16.msra.mxu0 %v8902
      %8918 = vmatpush.bf16.msra.mxu0 %v8900
      %8919 = vmatmul.bf16.gmra.mxu0 %v8906
      %v8920 = vpop.f32.mrf.mxu0
      %v8921 = vadd.f32 0.0, %v8920
      %v8922 = vpop.f32.mrf.mxu0
      %v8923 = vadd.f32 0.0, %v8922
      %8924 = vmatmul.bf16.gmra.mxu0 %v8909
      %v8925 = vpop.f32.mrf.mxu0
      %v8926 = vadd.f32 0.0, %v8925
      %v8927 = vpop.f32.mrf.mxu0
      %v8928 = vadd.f32 0.0, %v8927
      %8929 = vdwg.mxu0
      %8946 = vrot.lane.b32.xlu0 %v7358, 8
      %v8947 = vpop.permute.xlu0 %8946
      %8948 = vrot.lane.b32.xlu0 %v7360, 8
      %v8949 = vpop.permute.xlu0 %8948
      %8950 = vrot.lane.b32.xlu0 %v7363, 8
      %v8951 = vpop.permute.xlu0 %8950
      %8952 = vrot.lane.b32.xlu0 %v7365, 8
      %v8953 = vpop.permute.xlu0 %8952
      %8954 = vrot.lane.b32.xlu0 %v7399, 8
      %v8955 = vpop.permute.xlu0 %8954
      %8956 = vrot.lane.b32.xlu0 %v7401, 8
      %v8957 = vpop.permute.xlu0 %8956
      %8958 = vrot.lane.b32.xlu0 %v7404, 8
      %v8959 = vpop.permute.xlu0 %8958
      %8960 = vrot.lane.b32.xlu0 %v7406, 8
      %v8961 = vpop.permute.xlu0 %8960
      %8962 = vrot.lane.b32.xlu0 %v7440, 8
      %v8963 = vpop.permute.xlu0 %8962
      %8964 = vrot.lane.b32.xlu0 %v7442, 8
      %v8965 = vpop.permute.xlu0 %8964
      %8966 = vrot.lane.b32.xlu0 %v7445, 8
      %v8967 = vpop.permute.xlu0 %8966
      %8968 = vrot.lane.b32.xlu0 %v7447, 8
      %v8969 = vpop.permute.xlu0 %8968
      %8970 = vrot.lane.b32.xlu0 %v7481, 8
      %v8971 = vpop.permute.xlu0 %8970
      %8972 = vrot.lane.b32.xlu0 %v7483, 8
      %v8973 = vpop.permute.xlu0 %8972
      %8974 = vrot.lane.b32.xlu0 %v7486, 8
      %v8975 = vpop.permute.xlu0 %8974
      %8976 = vrot.lane.b32.xlu0 %v7488, 8
      %v8977 = vpop.permute.xlu0 %8976
      %9010 = vrot.lane.b32.xlu0 %v8078, 16
      %v9011 = vpop.permute.xlu0 %9010
      %9012 = vrot.lane.b32.xlu0 %v8080, 16
      %v9013 = vpop.permute.xlu0 %9012
      %9014 = vrot.lane.b32.xlu0 %v8083, 16
      %v9015 = vpop.permute.xlu0 %9014
      %9016 = vrot.lane.b32.xlu0 %v8085, 16
      %v9017 = vpop.permute.xlu0 %9016
      %9018 = vrot.lane.b32.xlu0 %v8119, 16
      %v9019 = vpop.permute.xlu0 %9018
      %9020 = vrot.lane.b32.xlu0 %v8121, 16
      %v9021 = vpop.permute.xlu0 %9020
      %9022 = vrot.lane.b32.xlu0 %v8124, 16
      %v9023 = vpop.permute.xlu0 %9022
      %9024 = vrot.lane.b32.xlu0 %v8126, 16
      %v9025 = vpop.permute.xlu0 %9024
      %9026 = vrot.lane.b32.xlu0 %v8160, 16
      %v9027 = vpop.permute.xlu0 %9026
      %9028 = vrot.lane.b32.xlu0 %v8162, 16
      %v9029 = vpop.permute.xlu0 %9028
      %9030 = vrot.lane.b32.xlu0 %v8165, 16
      %v9031 = vpop.permute.xlu0 %9030
      %9032 = vrot.lane.b32.xlu0 %v8167, 16
      %v9033 = vpop.permute.xlu0 %9032
      %9034 = vrot.lane.b32.xlu0 %v8201, 16
      %v9035 = vpop.permute.xlu0 %9034
      %9036 = vrot.lane.b32.xlu0 %v8203, 16
      %v9037 = vpop.permute.xlu0 %9036
      %9038 = vrot.lane.b32.xlu0 %v8206, 16
      %v9039 = vpop.permute.xlu0 %9038
      %9040 = vrot.lane.b32.xlu0 %v8208, 16
      %v9041 = vpop.permute.xlu0 %9040
      %9074 = vrot.lane.b32.xlu0 %v8798, 24
      %v9075 = vpop.permute.xlu0 %9074
      %9076 = vrot.lane.b32.xlu0 %v8800, 24
      %v9077 = vpop.permute.xlu0 %9076
      %9078 = vrot.lane.b32.xlu0 %v8803, 24
      %v9079 = vpop.permute.xlu0 %9078
      %9080 = vrot.lane.b32.xlu0 %v8805, 24
      %v9081 = vpop.permute.xlu0 %9080
      %9082 = vrot.lane.b32.xlu0 %v8839, 24
      %v9083 = vpop.permute.xlu0 %9082
      %9084 = vrot.lane.b32.xlu0 %v8841, 24
      %v9085 = vpop.permute.xlu0 %9084
      %9086 = vrot.lane.b32.xlu0 %v8844, 24
      %v9087 = vpop.permute.xlu0 %9086
      %9088 = vrot.lane.b32.xlu0 %v8846, 24
      %v9089 = vpop.permute.xlu0 %9088
      %9090 = vrot.lane.b32.xlu0 %v8880, 24
      %v9091 = vpop.permute.xlu0 %9090
      %9092 = vrot.lane.b32.xlu0 %v8882, 24
      %v9093 = vpop.permute.xlu0 %9092
      %9094 = vrot.lane.b32.xlu0 %v8885, 24
      %v9095 = vpop.permute.xlu0 %9094
      %9096 = vrot.lane.b32.xlu0 %v8887, 24
      %v9097 = vpop.permute.xlu0 %9096
      %9098 = vrot.lane.b32.xlu0 %v8921, 24
      %v9099 = vpop.permute.xlu0 %9098
      %9100 = vrot.lane.b32.xlu0 %v8923, 24
      %v9101 = vpop.permute.xlu0 %9100
      %9102 = vrot.lane.b32.xlu0 %v8926, 24
      %v9103 = vpop.permute.xlu0 %9102
      %9104 = vrot.lane.b32.xlu0 %v8928, 24
      %v9105 = vpop.permute.xlu0 %9104
      %v9122 = vsel %vm1473, %v6638, %v8947
      %v9123 = vsel %vm1473, %v6640, %v8949
      %v9124 = vsel %vm1473, %v6643, %v8951
      %v9125 = vsel %vm1473, %v6645, %v8953
      %v9126 = vsel %vm1473, %v6679, %v8955
      %v9127 = vsel %vm1473, %v6681, %v8957
      %v9128 = vsel %vm1473, %v6684, %v8959
      %v9129 = vsel %vm1473, %v6686, %v8961
      %v9130 = vsel %vm1473, %v6720, %v8963
      %v9131 = vsel %vm1473, %v6722, %v8965
      %v9132 = vsel %vm1473, %v6725, %v8967
      %v9133 = vsel %vm1473, %v6727, %v8969
      %v9134 = vsel %vm1473, %v6761, %v8971
      %v9135 = vsel %vm1473, %v6763, %v8973
      %v9136 = vsel %vm1473, %v6766, %v8975
      %v9137 = vsel %vm1473, %v6768, %v8977
      %v9138 = vsel %vm4572, %v9122, %v9011
      %v9139 = vsel %vm4572, %v9123, %v9013
      %v9140 = vsel %vm4572, %v9124, %v9015
      %v9141 = vsel %vm4572, %v9125, %v9017
      %v9142 = vsel %vm4572, %v9126, %v9019
      %v9143 = vsel %vm4572, %v9127, %v9021
      %v9144 = vsel %vm4572, %v9128, %v9023
      %v9145 = vsel %vm4572, %v9129, %v9025
      %v9146 = vsel %vm4572, %v9130, %v9027
      %v9147 = vsel %vm4572, %v9131, %v9029
      %v9148 = vsel %vm4572, %v9132, %v9031
      %v9149 = vsel %vm4572, %v9133, %v9033
      %v9150 = vsel %vm4572, %v9134, %v9035
      %v9151 = vsel %vm4572, %v9135, %v9037
      %v9152 = vsel %vm4572, %v9136, %v9039
      %v9153 = vsel %vm4572, %v9137, %v9041
      %v9154 = vsel %vm4589, %v9138, %v9075
      %v9155 = vsel %vm4589, %v9139, %v9077
      %v9156 = vsel %vm4589, %v9140, %v9079
      %v9157 = vsel %vm4589, %v9141, %v9081
      %v9158 = vsel %vm4589, %v9142, %v9083
      %v9159 = vsel %vm4589, %v9143, %v9085
      %v9160 = vsel %vm4589, %v9144, %v9087
      %v9161 = vsel %vm4589, %v9145, %v9089
      %v9162 = vsel %vm4589, %v9146, %v9091
      %v9163 = vsel %vm4589, %v9147, %v9093
      %v9164 = vsel %vm4589, %v9148, %v9095
      %v9165 = vsel %vm4589, %v9149, %v9097
      %v9166 = vsel %vm4589, %v9150, %v9099
      %v9167 = vsel %vm4589, %v9151, %v9101
      %v9168 = vsel %vm4589, %v9152, %v9103
      %v9169 = vsel %vm4589, %v9153, %v9105
      %v9170 = vld [vmem:[%s1 + $0x70] sm:$0xf]
      %v9171 = vld [vmem:[%s1 + $0x74] sm:$0xf]
      %v9172 = vld [vmem:[%s1 + $0x78] sm:$0xf]
      %v9173 = vld [vmem:[%s1 + $0x7c] sm:$0xf]
      %v9174 = vpack.c.bf16 %v9155, %v9154
      %v9175 = vpack.c.bf16 %v9157, %v9156
      %v9176 = vpack.c.bf16 %v9159, %v9158
      %v9177 = vpack.c.bf16 %v9161, %v9160
      %v9178 = vpack.c.bf16 %v9163, %v9162
      %v9179 = vpack.c.bf16 %v9165, %v9164
      %v9180 = vpack.c.bf16 %v9167, %v9166
      %v9181 = vpack.c.bf16 %v9169, %v9168
      %v9186 = vunpack.c.l.b16 %v9170
      %v9187 = vunpack.c.l.b16 %v9171
      %v9188 = vunpack.c.l.b16 %v9172
      %v9189 = vunpack.c.l.b16 %v9173
      %v9190 = vpack.c.b16 %v9187, %v9186
      %v9191 = vpack.c.b16 %v9189, %v9188
      %v9195 = vsel %vm562, %v9174, 0
      %v9198 = vsel %vm562, %v9175, 0
      %v9201 = vsel %vm562, %v9176, 0
      %v9204 = vsel %vm562, %v9177, 0
      %v9207 = vsel %vm562, %v9178, 0
      %v9210 = vsel %vm562, %v9179, 0
      %v9213 = vsel %vm562, %v9180, 0
      %v9216 = vsel %vm562, %v9181, 0
      %9218 = vmatpush.bf16.msra.mxu0 0
      %9219 = vmatpush.bf16.msra.mxu0 0
      %9220 = vmatpush.bf16.msra.mxu0 0
      %9221 = vmatpush.bf16.msra.mxu0 0
      %9222 = vmatpush.bf16.msra.mxu0 0
      %9223 = vmatpush.bf16.msra.mxu0 0
      %9224 = vmatpush.bf16.msra.mxu0 %v9191
      %9225 = vmatpush.bf16.msra.mxu0 %v9190
      %9226 = vmatmul.bf16.gmra.mxu0 %v9195
      %v9227 = vpop.f32.mrf.mxu0
      %v9228 = vadd.f32 0.0, %v9227
      %v9229 = vpop.f32.mrf.mxu0
      %v9230 = vadd.f32 0.0, %v9229
      %9231 = vmatmul.bf16.gmra.mxu0 %v9198
      %v9232 = vpop.f32.mrf.mxu0
      %v9233 = vadd.f32 0.0, %v9232
      %v9234 = vpop.f32.mrf.mxu0
      %v9235 = vadd.f32 0.0, %v9234
      %9236 = vmatmul.bf16.gmra.mxu0 %v9201
      %v9237 = vpop.f32.mrf.mxu0
      %v9238 = vadd.f32 0.0, %v9237
      %v9239 = vpop.f32.mrf.mxu0
      %v9240 = vadd.f32 0.0, %v9239
      %9241 = vmatmul.bf16.gmra.mxu0 %v9204
      %v9242 = vpop.f32.mrf.mxu0
      %v9243 = vadd.f32 0.0, %v9242
      %v9244 = vpop.f32.mrf.mxu0
      %v9245 = vadd.f32 0.0, %v9244
      %9246 = vmatmul.bf16.gmra.mxu0 %v9207
      %v9247 = vpop.f32.mrf.mxu0
      %v9248 = vadd.f32 0.0, %v9247
      %v9249 = vpop.f32.mrf.mxu0
      %v9250 = vadd.f32 0.0, %v9249
      %9251 = vmatmul.bf16.gmra.mxu0 %v9210
      %v9252 = vpop.f32.mrf.mxu0
      %v9253 = vadd.f32 0.0, %v9252
      %v9254 = vpop.f32.mrf.mxu0
      %v9255 = vadd.f32 0.0, %v9254
      %9256 = vmatmul.bf16.gmra.mxu0 %v9213
      %v9257 = vpop.f32.mrf.mxu0
      %v9258 = vadd.f32 0.0, %v9257
      %v9259 = vpop.f32.mrf.mxu0
      %v9260 = vadd.f32 0.0, %v9259
      %9261 = vmatmul.bf16.gmra.mxu0 %v9216
      %v9262 = vpop.f32.mrf.mxu0
      %v9263 = vadd.f32 0.0, %v9262
      %v9264 = vpop.f32.mrf.mxu0
      %v9265 = vadd.f32 0.0, %v9264
      %9266 = vdwg.mxu0
      %v9267 = vadd.f32 %v5507, %v9228
      %v9268 = vadd.f32 %v5508, %v9230
      %v9269 = vadd.f32 %v5509, %v9233
      %v9270 = vadd.f32 %v5510, %v9235
      %v9271 = vadd.f32 %v5511, %v9238
      %v9272 = vadd.f32 %v5512, %v9240
      %v9273 = vadd.f32 %v5513, %v9243
      %v9274 = vadd.f32 %v5514, %v9245
      %v9275 = vadd.f32 %v5515, %v9248
      %v9276 = vadd.f32 %v5516, %v9250
      %v9277 = vadd.f32 %v5517, %v9253
      %v9278 = vadd.f32 %v5518, %v9255
      %v9279 = vadd.f32 %v5519, %v9258
      %v9280 = vadd.f32 %v5520, %v9260
      %v9281 = vadd.f32 %v5521, %v9263
      %v9282 = vadd.f32 %v5522, %v9265
      %v9283 = vld [vmem:[%s3 + $0x2e] sm:$0x1]
      %v9284 = vperm.slane %v9283, 0
      %v9285 = vadd.f32 %v9267, %v9284
      %v9286 = vadd.f32 %v9268, %v9284
      %v9287 = vadd.f32 %v9269, %v9284
      %v9288 = vadd.f32 %v9270, %v9284
      %v9289 = vadd.f32 %v9271, %v9284
      %v9290 = vadd.f32 %v9272, %v9284
      %v9291 = vadd.f32 %v9273, %v9284
      %v9292 = vadd.f32 %v9274, %v9284
      %v9293 = vadd.f32 %v9275, %v9284
      %v9294 = vadd.f32 %v9276, %v9284
      %v9295 = vadd.f32 %v9277, %v9284
      %v9296 = vadd.f32 %v9278, %v9284
      %v9297 = vadd.f32 %v9279, %v9284
      %v9298 = vadd.f32 %v9280, %v9284
      %v9299 = vadd.f32 %v9281, %v9284
      %v9300 = vadd.f32 %v9282, %v9284
      %v9301 = vld [vmem:[%s3 + $0x2c] sm:$0x1]
      %v9302 = vld [vmem:[%s3 + $0x2d] sm:$0x1]
      %v9303 = vsel %vm562, %v9285, 0.0
      %9304 = vadd.xlane.f32.xlu0 %v9303
      %v9305 = vpop.xlane.xlu0 %9304
      %v9306 = vsel %vm562, %v9286, 0.0
      %9307 = vadd.xlane.f32.xlu0 %v9306
      %v9308 = vpop.xlane.xlu0 %9307
      %v9309 = vsel %vm562, %v9287, 0.0
      %9310 = vadd.xlane.f32.xlu0 %v9309
      %v9311 = vpop.xlane.xlu0 %9310
      %v9312 = vsel %vm562, %v9288, 0.0
      %9313 = vadd.xlane.f32.xlu0 %v9312
      %v9314 = vpop.xlane.xlu0 %9313
      %v9315 = vsel %vm562, %v9289, 0.0
      %9316 = vadd.xlane.f32.xlu0 %v9315
      %v9317 = vpop.xlane.xlu0 %9316
      %v9318 = vsel %vm562, %v9290, 0.0
      %9319 = vadd.xlane.f32.xlu0 %v9318
      %v9320 = vpop.xlane.xlu0 %9319
      %v9321 = vsel %vm562, %v9291, 0.0
      %9322 = vadd.xlane.f32.xlu0 %v9321
      %v9323 = vpop.xlane.xlu0 %9322
      %v9324 = vsel %vm562, %v9292, 0.0
      %9325 = vadd.xlane.f32.xlu0 %v9324
      %v9326 = vpop.xlane.xlu0 %9325
      %v9327 = vsel %vm562, %v9293, 0.0
      %9328 = vadd.xlane.f32.xlu0 %v9327
      %v9329 = vpop.xlane.xlu0 %9328
      %v9330 = vsel %vm562, %v9294, 0.0
      %9331 = vadd.xlane.f32.xlu0 %v9330
      %v9332 = vpop.xlane.xlu0 %9331
      %v9333 = vsel %vm562, %v9295, 0.0
      %9334 = vadd.xlane.f32.xlu0 %v9333
      %v9335 = vpop.xlane.xlu0 %9334
      %v9336 = vsel %vm562, %v9296, 0.0
      %9337 = vadd.xlane.f32.xlu0 %v9336
      %v9338 = vpop.xlane.xlu0 %9337
      %v9339 = vsel %vm562, %v9297, 0.0
      %9340 = vadd.xlane.f32.xlu0 %v9339
      %v9341 = vpop.xlane.xlu0 %9340
      %v9342 = vsel %vm562, %v9298, 0.0
      %9343 = vadd.xlane.f32.xlu0 %v9342
      %v9344 = vpop.xlane.xlu0 %9343
      %v9345 = vsel %vm562, %v9299, 0.0
      %9346 = vadd.xlane.f32.xlu0 %v9345
      %v9347 = vpop.xlane.xlu0 %9346
      %v9348 = vsel %vm562, %v9300, 0.0
      %9349 = vadd.xlane.f32.xlu0 %v9348
      %v9350 = vpop.xlane.xlu0 %9349
      %v9351 = vmul.f32 %v9305, %v617
      %v9352 = vmul.f32 %v9308, %v617
      %v9353 = vmul.f32 %v9311, %v617
      %v9354 = vmul.f32 %v9314, %v617
      %v9355 = vmul.f32 %v9317, %v617
      %v9356 = vmul.f32 %v9320, %v617
      %v9357 = vmul.f32 %v9323, %v617
      %v9358 = vmul.f32 %v9326, %v617
      %v9359 = vmul.f32 %v9329, %v617
      %v9360 = vmul.f32 %v9332, %v617
      %v9361 = vmul.f32 %v9335, %v617
      %v9362 = vmul.f32 %v9338, %v617
      %v9363 = vmul.f32 %v9341, %v617
      %v9364 = vmul.f32 %v9344, %v617
      %v9365 = vmul.f32 %v9347, %v617
      %v9366 = vmul.f32 %v9350, %v617
      %v9367 = vsub.f32 %v9285, %v9351
      %v9368 = vsub.f32 %v9286, %v9352
      %v9369 = vsub.f32 %v9287, %v9353
      %v9370 = vsub.f32 %v9288, %v9354
      %v9371 = vsub.f32 %v9289, %v9355
      %v9372 = vsub.f32 %v9290, %v9356
      %v9373 = vsub.f32 %v9291, %v9357
      %v9374 = vsub.f32 %v9292, %v9358
      %v9375 = vsub.f32 %v9293, %v9359
      %v9376 = vsub.f32 %v9294, %v9360
      %v9377 = vsub.f32 %v9295, %v9361
      %v9378 = vsub.f32 %v9296, %v9362
      %v9379 = vsub.f32 %v9297, %v9363
      %v9380 = vsub.f32 %v9298, %v9364
      %v9381 = vsub.f32 %v9299, %v9365
      %v9382 = vsub.f32 %v9300, %v9366
      %v9383 = vmul.f32 %v9367, %v9367
      %v9384 = vmul.f32 %v9368, %v9368
      %v9385 = vmul.f32 %v9369, %v9369
      %v9386 = vmul.f32 %v9370, %v9370
      %v9387 = vmul.f32 %v9371, %v9371
      %v9388 = vmul.f32 %v9372, %v9372
      %v9389 = vmul.f32 %v9373, %v9373
      %v9390 = vmul.f32 %v9374, %v9374
      %v9391 = vmul.f32 %v9375, %v9375
      %v9392 = vmul.f32 %v9376, %v9376
      %v9393 = vmul.f32 %v9377, %v9377
      %v9394 = vmul.f32 %v9378, %v9378
      %v9395 = vmul.f32 %v9379, %v9379
      %v9396 = vmul.f32 %v9380, %v9380
      %v9397 = vmul.f32 %v9381, %v9381
      %v9398 = vmul.f32 %v9382, %v9382
      %v9399 = vsel %vm562, %v9383, 0.0
      %9400 = vadd.xlane.f32.xlu0 %v9399
      %v9401 = vpop.xlane.xlu0 %9400
      %v9402 = vsel %vm562, %v9384, 0.0
      %9403 = vadd.xlane.f32.xlu0 %v9402
      %v9404 = vpop.xlane.xlu0 %9403
      %v9405 = vsel %vm562, %v9385, 0.0
      %9406 = vadd.xlane.f32.xlu0 %v9405
      %v9407 = vpop.xlane.xlu0 %9406
      %v9408 = vsel %vm562, %v9386, 0.0
      %9409 = vadd.xlane.f32.xlu0 %v9408
      %v9410 = vpop.xlane.xlu0 %9409
      %v9411 = vsel %vm562, %v9387, 0.0
      %9412 = vadd.xlane.f32.xlu0 %v9411
      %v9413 = vpop.xlane.xlu0 %9412
      %v9414 = vsel %vm562, %v9388, 0.0
      %9415 = vadd.xlane.f32.xlu0 %v9414
      %v9416 = vpop.xlane.xlu0 %9415
      %v9417 = vsel %vm562, %v9389, 0.0
      %9418 = vadd.xlane.f32.xlu0 %v9417
      %v9419 = vpop.xlane.xlu0 %9418
      %v9420 = vsel %vm562, %v9390, 0.0
      %9421 = vadd.xlane.f32.xlu0 %v9420
      %v9422 = vpop.xlane.xlu0 %9421
      %v9423 = vsel %vm562, %v9391, 0.0
      %9424 = vadd.xlane.f32.xlu0 %v9423
      %v9425 = vpop.xlane.xlu0 %9424
      %v9426 = vsel %vm562, %v9392, 0.0
      %9427 = vadd.xlane.f32.xlu0 %v9426
      %v9428 = vpop.xlane.xlu0 %9427
      %v9429 = vsel %vm562, %v9393, 0.0
      %9430 = vadd.xlane.f32.xlu0 %v9429
      %v9431 = vpop.xlane.xlu0 %9430
      %v9432 = vsel %vm562, %v9394, 0.0
      %9433 = vadd.xlane.f32.xlu0 %v9432
      %v9434 = vpop.xlane.xlu0 %9433
      %v9435 = vsel %vm562, %v9395, 0.0
      %9436 = vadd.xlane.f32.xlu0 %v9435
      %v9437 = vpop.xlane.xlu0 %9436
      %v9438 = vsel %vm562, %v9396, 0.0
      %9439 = vadd.xlane.f32.xlu0 %v9438
      %v9440 = vpop.xlane.xlu0 %9439
      %v9441 = vsel %vm562, %v9397, 0.0
      %9442 = vadd.xlane.f32.xlu0 %v9441
      %v9443 = vpop.xlane.xlu0 %9442
      %v9444 = vsel %vm562, %v9398, 0.0
      %9445 = vadd.xlane.f32.xlu0 %v9444
      %v9446 = vpop.xlane.xlu0 %9445
      %v9447 = vmul.f32 %v9401, %v617
      %v9448 = vmul.f32 %v9404, %v617
      %v9449 = vmul.f32 %v9407, %v617
      %v9450 = vmul.f32 %v9410, %v617
      %v9451 = vmul.f32 %v9413, %v617
      %v9452 = vmul.f32 %v9416, %v617
      %v9453 = vmul.f32 %v9419, %v617
      %v9454 = vmul.f32 %v9422, %v617
      %v9455 = vmul.f32 %v9425, %v617
      %v9456 = vmul.f32 %v9428, %v617
      %v9457 = vmul.f32 %v9431, %v617
      %v9458 = vmul.f32 %v9434, %v617
      %v9459 = vmul.f32 %v9437, %v617
      %v9460 = vmul.f32 %v9440, %v617
      %v9461 = vmul.f32 %v9443, %v617
      %v9462 = vmul.f32 %v9446, %v617
      %v9463 = vadd.f32 %v9447, 1e-05
      %v9464 = vadd.f32 %v9448, 1e-05
      %v9465 = vadd.f32 %v9449, 1e-05
      %v9466 = vadd.f32 %v9450, 1e-05
      %v9467 = vadd.f32 %v9451, 1e-05
      %v9468 = vadd.f32 %v9452, 1e-05
      %v9469 = vadd.f32 %v9453, 1e-05
      %v9470 = vadd.f32 %v9454, 1e-05
      %v9471 = vadd.f32 %v9455, 1e-05
      %v9472 = vadd.f32 %v9456, 1e-05
      %v9473 = vadd.f32 %v9457, 1e-05
      %v9474 = vadd.f32 %v9458, 1e-05
      %v9475 = vadd.f32 %v9459, 1e-05
      %v9476 = vadd.f32 %v9460, 1e-05
      %v9477 = vadd.f32 %v9461, 1e-05
      %v9478 = vadd.f32 %v9462, 1e-05
      %v9479 = vrsqrt.pop %v9463
      %v9480 = vmul.f32 %v9479, %v9463
      %v9481 = vmul.f32 %v9480, %v9479
      %v9482 = vmul.f32 0.5, %v9481
      %v9483 = vsub.f32 1.5, %v9482
      %v9484 = vmul.f32 %v9479, %v9483
      %vm9485 = vweird.f32 %v9463
      %vm9486 = vweird.f32 %v9479
      %vm9487 = vmor %vm9485, %vm9486
      %v9488 = vsel %vm9487, %v9479, %v9484
      %v9489 = vrsqrt.pop %v9464
      %v9490 = vmul.f32 %v9489, %v9464
      %v9491 = vmul.f32 %v9490, %v9489
      %v9492 = vmul.f32 0.5, %v9491
      %v9493 = vsub.f32 1.5, %v9492
      %v9494 = vmul.f32 %v9489, %v9493
      %vm9495 = vweird.f32 %v9464
      %vm9496 = vweird.f32 %v9489
      %vm9497 = vmor %vm9495, %vm9496
      %v9498 = vsel %vm9497, %v9489, %v9494
      %v9499 = vrsqrt.pop %v9465
      %v9500 = vmul.f32 %v9499, %v9465
      %v9501 = vmul.f32 %v9500, %v9499
      %v9502 = vmul.f32 0.5, %v9501
      %v9503 = vsub.f32 1.5, %v9502
      %v9504 = vmul.f32 %v9499, %v9503
      %vm9505 = vweird.f32 %v9465
      %vm9506 = vweird.f32 %v9499
      %vm9507 = vmor %vm9505, %vm9506
      %v9508 = vsel %vm9507, %v9499, %v9504
      %v9509 = vrsqrt.pop %v9466
      %v9510 = vmul.f32 %v9509, %v9466
      %v9511 = vmul.f32 %v9510, %v9509
      %v9512 = vmul.f32 0.5, %v9511
      %v9513 = vsub.f32 1.5, %v9512
      %v9514 = vmul.f32 %v9509, %v9513
      %vm9515 = vweird.f32 %v9466
      %vm9516 = vweird.f32 %v9509
      %vm9517 = vmor %vm9515, %vm9516
      %v9518 = vsel %vm9517, %v9509, %v9514
      %v9519 = vrsqrt.pop %v9467
      %v9520 = vmul.f32 %v9519, %v9467
      %v9521 = vmul.f32 %v9520, %v9519
      %v9522 = vmul.f32 0.5, %v9521
      %v9523 = vsub.f32 1.5, %v9522
      %v9524 = vmul.f32 %v9519, %v9523
      %vm9525 = vweird.f32 %v9467
      %vm9526 = vweird.f32 %v9519
      %vm9527 = vmor %vm9525, %vm9526
      %v9528 = vsel %vm9527, %v9519, %v9524
      %v9529 = vrsqrt.pop %v9468
      %v9530 = vmul.f32 %v9529, %v9468
      %v9531 = vmul.f32 %v9530, %v9529
      %v9532 = vmul.f32 0.5, %v9531
      %v9533 = vsub.f32 1.5, %v9532
      %v9534 = vmul.f32 %v9529, %v9533
      %vm9535 = vweird.f32 %v9468
      %vm9536 = vweird.f32 %v9529
      %vm9537 = vmor %vm9535, %vm9536
      %v9538 = vsel %vm9537, %v9529, %v9534
      %v9539 = vrsqrt.pop %v9469
      %v9540 = vmul.f32 %v9539, %v9469
      %v9541 = vmul.f32 %v9540, %v9539
      %v9542 = vmul.f32 0.5, %v9541
      %v9543 = vsub.f32 1.5, %v9542
      %v9544 = vmul.f32 %v9539, %v9543
      %vm9545 = vweird.f32 %v9469
      %vm9546 = vweird.f32 %v9539
      %vm9547 = vmor %vm9545, %vm9546
      %v9548 = vsel %vm9547, %v9539, %v9544
      %v9549 = vrsqrt.pop %v9470
      %v9550 = vmul.f32 %v9549, %v9470
      %v9551 = vmul.f32 %v9550, %v9549
      %v9552 = vmul.f32 0.5, %v9551
      %v9553 = vsub.f32 1.5, %v9552
      %v9554 = vmul.f32 %v9549, %v9553
      %vm9555 = vweird.f32 %v9470
      %vm9556 = vweird.f32 %v9549
      %vm9557 = vmor %vm9555, %vm9556
      %v9558 = vsel %vm9557, %v9549, %v9554
      %v9559 = vrsqrt.pop %v9471
      %v9560 = vmul.f32 %v9559, %v9471
      %v9561 = vmul.f32 %v9560, %v9559
      %v9562 = vmul.f32 0.5, %v9561
      %v9563 = vsub.f32 1.5, %v9562
      %v9564 = vmul.f32 %v9559, %v9563
      %vm9565 = vweird.f32 %v9471
      %vm9566 = vweird.f32 %v9559
      %vm9567 = vmor %vm9565, %vm9566
      %v9568 = vsel %vm9567, %v9559, %v9564
      %v9569 = vrsqrt.pop %v9472
      %v9570 = vmul.f32 %v9569, %v9472
      %v9571 = vmul.f32 %v9570, %v9569
      %v9572 = vmul.f32 0.5, %v9571
      %v9573 = vsub.f32 1.5, %v9572
      %v9574 = vmul.f32 %v9569, %v9573
      %vm9575 = vweird.f32 %v9472
      %vm9576 = vweird.f32 %v9569
      %vm9577 = vmor %vm9575, %vm9576
      %v9578 = vsel %vm9577, %v9569, %v9574
      %v9579 = vrsqrt.pop %v9473
      %v9580 = vmul.f32 %v9579, %v9473
      %v9581 = vmul.f32 %v9580, %v9579
      %v9582 = vmul.f32 0.5, %v9581
      %v9583 = vsub.f32 1.5, %v9582
      %v9584 = vmul.f32 %v9579, %v9583
      %vm9585 = vweird.f32 %v9473
      %vm9586 = vweird.f32 %v9579
      %vm9587 = vmor %vm9585, %vm9586
      %v9588 = vsel %vm9587, %v9579, %v9584
      %v9589 = vrsqrt.pop %v9474
      %v9590 = vmul.f32 %v9589, %v9474
      %v9591 = vmul.f32 %v9590, %v9589
      %v9592 = vmul.f32 0.5, %v9591
      %v9593 = vsub.f32 1.5, %v9592
      %v9594 = vmul.f32 %v9589, %v9593
      %vm9595 = vweird.f32 %v9474
      %vm9596 = vweird.f32 %v9589
      %vm9597 = vmor %vm9595, %vm9596
      %v9598 = vsel %vm9597, %v9589, %v9594
      %v9599 = vrsqrt.pop %v9475
      %v9600 = vmul.f32 %v9599, %v9475
      %v9601 = vmul.f32 %v9600, %v9599
      %v9602 = vmul.f32 0.5, %v9601
      %v9603 = vsub.f32 1.5, %v9602
      %v9604 = vmul.f32 %v9599, %v9603
      %vm9605 = vweird.f32 %v9475
      %vm9606 = vweird.f32 %v9599
      %vm9607 = vmor %vm9605, %vm9606
      %v9608 = vsel %vm9607, %v9599, %v9604
      %v9609 = vrsqrt.pop %v9476
      %v9610 = vmul.f32 %v9609, %v9476
      %v9611 = vmul.f32 %v9610, %v9609
      %v9612 = vmul.f32 0.5, %v9611
      %v9613 = vsub.f32 1.5, %v9612
      %v9614 = vmul.f32 %v9609, %v9613
      %vm9615 = vweird.f32 %v9476
      %vm9616 = vweird.f32 %v9609
      %vm9617 = vmor %vm9615, %vm9616
      %v9618 = vsel %vm9617, %v9609, %v9614
      %v9619 = vrsqrt.pop %v9477
      %v9620 = vmul.f32 %v9619, %v9477
      %v9621 = vmul.f32 %v9620, %v9619
      %v9622 = vmul.f32 0.5, %v9621
      %v9623 = vsub.f32 1.5, %v9622
      %v9624 = vmul.f32 %v9619, %v9623
      %vm9625 = vweird.f32 %v9477
      %vm9626 = vweird.f32 %v9619
      %vm9627 = vmor %vm9625, %vm9626
      %v9628 = vsel %vm9627, %v9619, %v9624
      %v9629 = vrsqrt.pop %v9478
      %v9630 = vmul.f32 %v9629, %v9478
      %v9631 = vmul.f32 %v9630, %v9629
      %v9632 = vmul.f32 0.5, %v9631
      %v9633 = vsub.f32 1.5, %v9632
      %v9634 = vmul.f32 %v9629, %v9633
      %vm9635 = vweird.f32 %v9478
      %vm9636 = vweird.f32 %v9629
      %vm9637 = vmor %vm9635, %vm9636
      %v9638 = vsel %vm9637, %v9629, %v9634
      %v9639 = vmul.f32 %v9367, %v9488
      %v9640 = vmul.f32 %v9368, %v9498
      %v9641 = vmul.f32 %v9369, %v9508
      %v9642 = vmul.f32 %v9370, %v9518
      %v9643 = vmul.f32 %v9371, %v9528
      %v9644 = vmul.f32 %v9372, %v9538
      %v9645 = vmul.f32 %v9373, %v9548
      %v9646 = vmul.f32 %v9374, %v9558
      %v9647 = vmul.f32 %v9375, %v9568
      %v9648 = vmul.f32 %v9376, %v9578
      %v9649 = vmul.f32 %v9377, %v9588
      %v9650 = vmul.f32 %v9378, %v9598
      %v9651 = vmul.f32 %v9379, %v9608
      %v9652 = vmul.f32 %v9380, %v9618
      %v9653 = vmul.f32 %v9381, %v9628
      %v9654 = vmul.f32 %v9382, %v9638
      %v9655 = vperm.slane %v9301, 0
      %v9656 = vmul.f32 %v9639, %v9655
      %v9657 = vmul.f32 %v9640, %v9655
      %v9658 = vmul.f32 %v9641, %v9655
      %v9659 = vmul.f32 %v9642, %v9655
      %v9660 = vmul.f32 %v9643, %v9655
      %v9661 = vmul.f32 %v9644, %v9655
      %v9662 = vmul.f32 %v9645, %v9655
      %v9663 = vmul.f32 %v9646, %v9655
      %v9664 = vmul.f32 %v9647, %v9655
      %v9665 = vmul.f32 %v9648, %v9655
      %v9666 = vmul.f32 %v9649, %v9655
      %v9667 = vmul.f32 %v9650, %v9655
      %v9668 = vmul.f32 %v9651, %v9655
      %v9669 = vmul.f32 %v9652, %v9655
      %v9670 = vmul.f32 %v9653, %v9655
      %v9671 = vmul.f32 %v9654, %v9655
      %v9672 = vperm.slane %v9302, 0
      %v9673 = vadd.f32 %v9656, %v9672
      %v9674 = vadd.f32 %v9657, %v9672
      %v9675 = vadd.f32 %v9658, %v9672
      %v9676 = vadd.f32 %v9659, %v9672
      %v9677 = vadd.f32 %v9660, %v9672
      %v9678 = vadd.f32 %v9661, %v9672
      %v9679 = vadd.f32 %v9662, %v9672
      %v9680 = vadd.f32 %v9663, %v9672
      %v9681 = vadd.f32 %v9664, %v9672
      %v9682 = vadd.f32 %v9665, %v9672
      %v9683 = vadd.f32 %v9666, %v9672
      %v9684 = vadd.f32 %v9667, %v9672
      %v9685 = vadd.f32 %v9668, %v9672
      %v9686 = vadd.f32 %v9669, %v9672
      %v9687 = vadd.f32 %v9670, %v9672
      %v9688 = vadd.f32 %v9671, %v9672
      %v9689 = vld [vmem:[%s2 + $0x30] sm:$0xf]
      %v9690 = vld [vmem:[%s2 + $0x34] sm:$0xf]
      %v9691 = vld [vmem:[%s2 + $0x38] sm:$0xf]
      %v9692 = vld [vmem:[%s2 + $0x3c] sm:$0xf]
      %v9693 = vpack.c.bf16 %v9674, %v9673
      %v9694 = vpack.c.bf16 %v9676, %v9675
      %v9695 = vpack.c.bf16 %v9678, %v9677
      %v9696 = vpack.c.bf16 %v9680, %v9679
      %v9697 = vpack.c.bf16 %v9682, %v9681
      %v9698 = vpack.c.bf16 %v9684, %v9683
      %v9699 = vpack.c.bf16 %v9686, %v9685
      %v9700 = vpack.c.bf16 %v9688, %v9687
      %v9701 = vld [vmem:[%s4 + $0x3] sm:$0x1]
      %v9702 = vperm.slane %v9701, 0
      %v9707 = vunpack.c.l.b16 %v9689
      %v9708 = vunpack.c.l.b16 %v9690
      %v9709 = vunpack.c.l.b16 %v9691
      %v9710 = vunpack.c.l.b16 %v9692
      %v9711 = vpack.c.b16 %v9708, %v9707
      %v9712 = vpack.c.b16 %v9710, %v9709
      %v9716 = vsel %vm562, %v9693, 0
      %v9719 = vsel %vm562, %v9694, 0
      %v9722 = vsel %vm562, %v9695, 0
      %v9725 = vsel %vm562, %v9696, 0
      %v9728 = vsel %vm562, %v9697, 0
      %v9731 = vsel %vm562, %v9698, 0
      %v9734 = vsel %vm562, %v9699, 0
      %v9737 = vsel %vm562, %v9700, 0
      %9739 = vmatpush.bf16.msra.mxu0 0
      %9740 = vmatpush.bf16.msra.mxu0 0
      %9741 = vmatpush.bf16.msra.mxu0 0
      %9742 = vmatpush.bf16.msra.mxu0 0
      %9743 = vmatpush.bf16.msra.mxu0 0
      %9744 = vmatpush.bf16.msra.mxu0 0
      %9745 = vmatpush.bf16.msra.mxu0 %v9712
      %9746 = vmatpush.bf16.msra.mxu0 %v9711
      %9747 = vmatmul.bf16.gmra.mxu0 %v9716
      %v9748 = vpop.f32.mrf.mxu0
      %v9749 = vadd.f32 %v9702, %v9748
      %v9750 = vpop.f32.mrf.mxu0
      %v9751 = vadd.f32 %v9702, %v9750
      %9752 = vmatmul.bf16.gmra.mxu0 %v9719
      %v9753 = vpop.f32.mrf.mxu0
      %v9754 = vadd.f32 %v9702, %v9753
      %v9755 = vpop.f32.mrf.mxu0
      %v9756 = vadd.f32 %v9702, %v9755
      %9757 = vmatmul.bf16.gmra.mxu0 %v9722
      %v9758 = vpop.f32.mrf.mxu0
      %v9759 = vadd.f32 %v9702, %v9758
      %v9760 = vpop.f32.mrf.mxu0
      %v9761 = vadd.f32 %v9702, %v9760
      %9762 = vmatmul.bf16.gmra.mxu0 %v9725
      %v9763 = vpop.f32.mrf.mxu0
      %v9764 = vadd.f32 %v9702, %v9763
      %v9765 = vpop.f32.mrf.mxu0
      %v9766 = vadd.f32 %v9702, %v9765
      %9767 = vmatmul.bf16.gmra.mxu0 %v9728
      %v9768 = vpop.f32.mrf.mxu0
      %v9769 = vadd.f32 %v9702, %v9768
      %v9770 = vpop.f32.mrf.mxu0
      %v9771 = vadd.f32 %v9702, %v9770
      %9772 = vmatmul.bf16.gmra.mxu0 %v9731
      %v9773 = vpop.f32.mrf.mxu0
      %v9774 = vadd.f32 %v9702, %v9773
      %v9775 = vpop.f32.mrf.mxu0
      %v9776 = vadd.f32 %v9702, %v9775
      %9777 = vmatmul.bf16.gmra.mxu0 %v9734
      %v9778 = vpop.f32.mrf.mxu0
      %v9779 = vadd.f32 %v9702, %v9778
      %v9780 = vpop.f32.mrf.mxu0
      %v9781 = vadd.f32 %v9702, %v9780
      %9782 = vmatmul.bf16.gmra.mxu0 %v9737
      %v9783 = vpop.f32.mrf.mxu0
      %v9784 = vadd.f32 %v9702, %v9783
      %v9785 = vpop.f32.mrf.mxu0
      %v9786 = vadd.f32 %v9702, %v9785
      %9787 = vdwg.mxu0
      %v9788 = vmul.f32 %v9749, %v9749
      %v9789 = vmul.f32 %v9751, %v9751
      %v9790 = vmul.f32 %v9754, %v9754
      %v9791 = vmul.f32 %v9756, %v9756
      %v9792 = vmul.f32 %v9759, %v9759
      %v9793 = vmul.f32 %v9761, %v9761
      %v9794 = vmul.f32 %v9764, %v9764
      %v9795 = vmul.f32 %v9766, %v9766
      %v9796 = vmul.f32 %v9769, %v9769
      %v9797 = vmul.f32 %v9771, %v9771
      %v9798 = vmul.f32 %v9774, %v9774
      %v9799 = vmul.f32 %v9776, %v9776
      %v9800 = vmul.f32 %v9779, %v9779
      %v9801 = vmul.f32 %v9781, %v9781
      %v9802 = vmul.f32 %v9784, %v9784
      %v9803 = vmul.f32 %v9786, %v9786
      %v9804 = vmul.f32 %v9749, %v9788
      %v9805 = vmul.f32 %v9751, %v9789
      %v9806 = vmul.f32 %v9754, %v9790
      %v9807 = vmul.f32 %v9756, %v9791
      %v9808 = vmul.f32 %v9759, %v9792
      %v9809 = vmul.f32 %v9761, %v9793
      %v9810 = vmul.f32 %v9764, %v9794
      %v9811 = vmul.f32 %v9766, %v9795
      %v9812 = vmul.f32 %v9769, %v9796
      %v9813 = vmul.f32 %v9771, %v9797
      %v9814 = vmul.f32 %v9774, %v9798
      %v9815 = vmul.f32 %v9776, %v9799
      %v9816 = vmul.f32 %v9779, %v9800
      %v9817 = vmul.f32 %v9781, %v9801
      %v9818 = vmul.f32 %v9784, %v9802
      %v9819 = vmul.f32 %v9786, %v9803
      %v9820 = vmul.f32 %v9804, 0.044715
      %v9821 = vmul.f32 %v9805, 0.044715
      %v9822 = vmul.f32 %v9806, 0.044715
      %v9823 = vmul.f32 %v9807, 0.044715
      %v9824 = vmul.f32 %v9808, 0.044715
      %v9825 = vmul.f32 %v9809, 0.044715
      %v9826 = vmul.f32 %v9810, 0.044715
      %v9827 = vmul.f32 %v9811, 0.044715
      %v9828 = vmul.f32 %v9812, 0.044715
      %v9829 = vmul.f32 %v9813, 0.044715
      %v9830 = vmul.f32 %v9814, 0.044715
      %v9831 = vmul.f32 %v9815, 0.044715
      %v9832 = vmul.f32 %v9816, 0.044715
      %v9833 = vmul.f32 %v9817, 0.044715
      %v9834 = vmul.f32 %v9818, 0.044715
      %v9835 = vmul.f32 %v9819, 0.044715
      %v9836 = vadd.f32 %v9749, %v9820
      %v9837 = vadd.f32 %v9751, %v9821
      %v9838 = vadd.f32 %v9754, %v9822
      %v9839 = vadd.f32 %v9756, %v9823
      %v9840 = vadd.f32 %v9759, %v9824
      %v9841 = vadd.f32 %v9761, %v9825
      %v9842 = vadd.f32 %v9764, %v9826
      %v9843 = vadd.f32 %v9766, %v9827
      %v9844 = vadd.f32 %v9769, %v9828
      %v9845 = vadd.f32 %v9771, %v9829
      %v9846 = vadd.f32 %v9774, %v9830
      %v9847 = vadd.f32 %v9776, %v9831
      %v9848 = vadd.f32 %v9779, %v9832
      %v9849 = vadd.f32 %v9781, %v9833
      %v9850 = vadd.f32 %v9784, %v9834
      %v9851 = vadd.f32 %v9786, %v9835
      %v9852 = vmul.f32 %v9836, 0.7978846
      %v9853 = vmul.f32 %v9837, 0.7978846
      %v9854 = vmul.f32 %v9838, 0.7978846
      %v9855 = vmul.f32 %v9839, 0.7978846
      %v9856 = vmul.f32 %v9840, 0.7978846
      %v9857 = vmul.f32 %v9841, 0.7978846
      %v9858 = vmul.f32 %v9842, 0.7978846
      %v9859 = vmul.f32 %v9843, 0.7978846
      %v9860 = vmul.f32 %v9844, 0.7978846
      %v9861 = vmul.f32 %v9845, 0.7978846
      %v9862 = vmul.f32 %v9846, 0.7978846
      %v9863 = vmul.f32 %v9847, 0.7978846
      %v9864 = vmul.f32 %v9848, 0.7978846
      %v9865 = vmul.f32 %v9849, 0.7978846
      %v9866 = vmul.f32 %v9850, 0.7978846
      %v9867 = vmul.f32 %v9851, 0.7978846
      %v9868 = vtanh.pop %v9852
      %v9869 = vtanh.pop %v9853
      %v9870 = vtanh.pop %v9854
      %v9871 = vtanh.pop %v9855
      %v9872 = vtanh.pop %v9856
      %v9873 = vtanh.pop %v9857
      %v9874 = vtanh.pop %v9858
      %v9875 = vtanh.pop %v9859
      %v9876 = vtanh.pop %v9860
      %v9877 = vtanh.pop %v9861
      %v9878 = vtanh.pop %v9862
      %v9879 = vtanh.pop %v9863
      %v9880 = vtanh.pop %v9864
      %v9881 = vtanh.pop %v9865
      %v9882 = vtanh.pop %v9866
      %v9883 = vtanh.pop %v9867
      %v9884 = vadd.f32 %v9868, 1.0
      %v9885 = vadd.f32 %v9869, 1.0
      %v9886 = vadd.f32 %v9870, 1.0
      %v9887 = vadd.f32 %v9871, 1.0
      %v9888 = vadd.f32 %v9872, 1.0
      %v9889 = vadd.f32 %v9873, 1.0
      %v9890 = vadd.f32 %v9874, 1.0
      %v9891 = vadd.f32 %v9875, 1.0
      %v9892 = vadd.f32 %v9876, 1.0
      %v9893 = vadd.f32 %v9877, 1.0
      %v9894 = vadd.f32 %v9878, 1.0
      %v9895 = vadd.f32 %v9879, 1.0
      %v9896 = vadd.f32 %v9880, 1.0
      %v9897 = vadd.f32 %v9881, 1.0
      %v9898 = vadd.f32 %v9882, 1.0
      %v9899 = vadd.f32 %v9883, 1.0
      %v9900 = vmul.f32 %v9884, 0.5
      %v9901 = vmul.f32 %v9885, 0.5
      %v9902 = vmul.f32 %v9886, 0.5
      %v9903 = vmul.f32 %v9887, 0.5
      %v9904 = vmul.f32 %v9888, 0.5
      %v9905 = vmul.f32 %v9889, 0.5
      %v9906 = vmul.f32 %v9890, 0.5
      %v9907 = vmul.f32 %v9891, 0.5
      %v9908 = vmul.f32 %v9892, 0.5
      %v9909 = vmul.f32 %v9893, 0.5
      %v9910 = vmul.f32 %v9894, 0.5
      %v9911 = vmul.f32 %v9895, 0.5
      %v9912 = vmul.f32 %v9896, 0.5
      %v9913 = vmul.f32 %v9897, 0.5
      %v9914 = vmul.f32 %v9898, 0.5
      %v9915 = vmul.f32 %v9899, 0.5
      %v9916 = vmul.f32 %v9749, %v9900
      %v9917 = vmul.f32 %v9751, %v9901
      %v9918 = vmul.f32 %v9754, %v9902
      %v9919 = vmul.f32 %v9756, %v9903
      %v9920 = vmul.f32 %v9759, %v9904
      %v9921 = vmul.f32 %v9761, %v9905
      %v9922 = vmul.f32 %v9764, %v9906
      %v9923 = vmul.f32 %v9766, %v9907
      %v9924 = vmul.f32 %v9769, %v9908
      %v9925 = vmul.f32 %v9771, %v9909
      %v9926 = vmul.f32 %v9774, %v9910
      %v9927 = vmul.f32 %v9776, %v9911
      %v9928 = vmul.f32 %v9779, %v9912
      %v9929 = vmul.f32 %v9781, %v9913
      %v9930 = vmul.f32 %v9784, %v9914
      %v9931 = vmul.f32 %v9786, %v9915
      %v9932 = vld [vmem:[%s1 + $0xc0] sm:$0xf]
      %v9933 = vld [vmem:[%s1 + $0xc4] sm:$0xf]
      %v9934 = vld [vmem:[%s1 + $0xc8] sm:$0xf]
      %v9935 = vld [vmem:[%s1 + $0xcc] sm:$0xf]
      %v9936 = vld [vmem:[%s1 + $0xd0] sm:$0xf]
      %v9937 = vld [vmem:[%s1 + $0xd4] sm:$0xf]
      %v9938 = vld [vmem:[%s1 + $0xd8] sm:$0xf]
      %v9939 = vld [vmem:[%s1 + $0xdc] sm:$0xf]
      %v9940 = vld [vmem:[%s1 + $0xe0] sm:$0xf]
      %v9941 = vld [vmem:[%s1 + $0xe4] sm:$0xf]
      %v9942 = vld [vmem:[%s1 + $0xe8] sm:$0xf]
      %v9943 = vld [vmem:[%s1 + $0xec] sm:$0xf]
      %v9944 = vld [vmem:[%s1 + $0xf0] sm:$0xf]
      %v9945 = vld [vmem:[%s1 + $0xf4] sm:$0xf]
      %v9946 = vld [vmem:[%s1 + $0xf8] sm:$0xf]
      %v9947 = vld [vmem:[%s1 + $0xfc] sm:$0xf]
      %v9948 = vpack.c.bf16 %v9917, %v9916
      %v9949 = vpack.c.bf16 %v9919, %v9918
      %v9950 = vpack.c.bf16 %v9921, %v9920
      %v9951 = vpack.c.bf16 %v9923, %v9922
      %v9952 = vpack.c.bf16 %v9925, %v9924
      %v9953 = vpack.c.bf16 %v9927, %v9926
      %v9954 = vpack.c.bf16 %v9929, %v9928
      %v9955 = vpack.c.bf16 %v9931, %v9930
      %v9972 = vunpack.c.l.b16 %v9932
      %v9973 = vunpack.c.l.b16 %v9933
      %v9974 = vunpack.c.l.b16 %v9934
      %v9975 = vunpack.c.l.b16 %v9935
      %v9976 = vunpack.c.l.b16 %v9936
      %v9977 = vunpack.c.l.b16 %v9937
      %v9978 = vunpack.c.l.b16 %v9938
      %v9979 = vunpack.c.l.b16 %v9939
      %v9980 = vunpack.c.l.b16 %v9940
      %v9981 = vunpack.c.l.b16 %v9941
      %v9982 = vunpack.c.l.b16 %v9942
      %v9983 = vunpack.c.l.b16 %v9943
      %v9984 = vunpack.c.l.b16 %v9944
      %v9985 = vunpack.c.l.b16 %v9945
      %v9986 = vunpack.c.l.b16 %v9946
      %v9987 = vunpack.c.l.b16 %v9947
      %v9988 = vpack.c.b16 %v9973, %v9972
      %v9989 = vpack.c.b16 %v9975, %v9974
      %v9990 = vpack.c.b16 %v9977, %v9976
      %v9991 = vpack.c.b16 %v9979, %v9978
      %v9992 = vpack.c.b16 %v9981, %v9980
      %v9993 = vpack.c.b16 %v9983, %v9982
      %v9994 = vpack.c.b16 %v9985, %v9984
      %v9995 = vpack.c.b16 %v9987, %v9986
      %10004 = vmatpush.bf16.msra.mxu0 %v9995
      %10005 = vmatpush.bf16.msra.mxu0 %v9994
      %10006 = vmatpush.bf16.msra.mxu0 %v9993
      %10007 = vmatpush.bf16.msra.mxu0 %v9992
      %10008 = vmatpush.bf16.msra.mxu0 %v9991
      %10009 = vmatpush.bf16.msra.mxu0 %v9990
      %10010 = vmatpush.bf16.msra.mxu0 %v9989
      %10011 = vmatpush.bf16.msra.mxu0 %v9988
      %10012 = vmatmul.bf16.gmra.mxu0 %v9948
      %v10013 = vpop.f32.mrf.mxu0
      %v10014 = vadd.f32 0.0, %v10013
      %v10015 = vpop.f32.mrf.mxu0
      %10016 = vmatmul.bf16.gmra.mxu0 %v9949
      %v10017 = vpop.f32.mrf.mxu0
      %v10018 = vpop.f32.mrf.mxu0
      %10019 = vmatmul.bf16.gmra.mxu0 %v9950
      %v10020 = vpop.f32.mrf.mxu0
      %v10021 = vadd.f32 0.0, %v10020
      %v10022 = vpop.f32.mrf.mxu0
      %10023 = vmatmul.bf16.gmra.mxu0 %v9951
      %v10024 = vpop.f32.mrf.mxu0
      %v10025 = vpop.f32.mrf.mxu0
      %10026 = vmatmul.bf16.gmra.mxu0 %v9952
      %v10027 = vpop.f32.mrf.mxu0
      %v10028 = vadd.f32 0.0, %v10027
      %v10029 = vpop.f32.mrf.mxu0
      %10030 = vmatmul.bf16.gmra.mxu0 %v9953
      %v10031 = vpop.f32.mrf.mxu0
      %v10032 = vpop.f32.mrf.mxu0
      %10033 = vmatmul.bf16.gmra.mxu0 %v9954
      %v10034 = vpop.f32.mrf.mxu0
      %v10035 = vadd.f32 0.0, %v10034
      %v10036 = vpop.f32.mrf.mxu0
      %10037 = vmatmul.bf16.gmra.mxu0 %v9955
      %v10038 = vpop.f32.mrf.mxu0
      %v10039 = vpop.f32.mrf.mxu0
      %10040 = vdwg.mxu0
      %v10041 = vadd.f32 %v9285, %v10014
      %v10042 = vadd.f32 %v9289, %v10021
      %v10043 = vadd.f32 %v9293, %v10028
      %v10044 = vadd.f32 %v9297, %v10035
      %v10045 = vld [vmem:[%s3 + $0x2f] sm:$0x1]
      %v10046 = vperm.slane %v10045, 0
      %v10047 = vadd.f32 %v10041, %v10046
      %v10048 = vadd.f32 %v10042, %v10046
      %v10049 = vadd.f32 %v10043, %v10046
      %v10050 = vadd.f32 %v10044, %v10046
      %v10052 = vrot.slane %v10048, 7
      %v10055 = vrot.slane %v10049, 6
      %v10058 = vrot.slane %v10050, 5
      %vm10060 = vcmask 1040384
      %v10061 = vsel %vm10060, %v10047, %v10052
      %vm10062 = vcmask 1041408
      %v10063 = vsel %vm10062, %v10061, %v10055
      %vm10064 = vcmask 1042432
      %v10065 = vsel %vm10064, %v10063, %v10058
      %v10066 = vld [vmem:[%s3 + $0x22] sm:$0x1]
      %v10067 = vld [vmem:[%s3 + $0x23] sm:$0x1]
      %vm10068 = vcmask 257024
      %v10069 = vsel %vm10068, %v10065, 0.0
      %10070 = vadd.xlane.f32.xlu0 %v10069
      %v10071 = vpop.xlane.xlu0 %10070
      %v10072 = vmul.f32 %v10071, %v617
      %v10073 = vsub.f32 %v10065, %v10072
      %v10074 = vmul.f32 %v10073, %v10073
      %v10075 = vsel %vm10068, %v10074, 0.0
      %10076 = vadd.xlane.f32.xlu0 %v10075
      %v10077 = vpop.xlane.xlu0 %10076
      %v10078 = vmul.f32 %v10077, %v617
      %v10079 = vadd.f32 %v10078, 1e-05
      %v10080 = vrsqrt.pop %v10079
      %v10081 = vmul.f32 %v10080, %v10079
      %v10082 = vmul.f32 %v10081, %v10080
      %v10083 = vmul.f32 0.5, %v10082
      %v10084 = vsub.f32 1.5, %v10083
      %v10085 = vmul.f32 %v10080, %v10084
      %vm10086 = vweird.f32 %v10079
      %vm10087 = vweird.f32 %v10080
      %vm10088 = vmor %vm10086, %vm10087
      %v10089 = vsel %vm10088, %v10080, %v10085
      %v10090 = vmul.f32 %v10073, %v10089
      %v10091 = vperm.slane %v10066, 0
      %v10092 = vmul.f32 %v10090, %v10091
      %v10093 = vperm.slane %v10067, 0
      %v10094 = vadd.f32 %v10092, %v10093
      %v10095 = vld [vmem:[%s1 + $0x100] sm:$0xf]
      %v10096 = vld [vmem:[%s1 + $0x104] sm:$0xf]
      %v10097 = vld [vmem:[%s1 + $0x108] sm:$0xf]
      %v10098 = vld [vmem:[%s1 + $0x10c] sm:$0xf]
      %v10099 = vpack.c.bf16 %v10094, %v10094
      %v10104 = vunpack.c.l.b16 %v10095
      %v10105 = vunpack.c.l.b16 %v10096
      %v10106 = vunpack.c.l.b16 %v10097
      %v10107 = vunpack.c.l.b16 %v10098
      %v10108 = vpack.c.b16 %v10105, %v10104
      %v10109 = vpack.c.b16 %v10107, %v10106
      %v10113 = vsel %vm562, %v10099, 0
      %10115 = vmatpush.bf16.msra.mxu0 0
      %10116 = vmatpush.bf16.msra.mxu0 0
      %10117 = vmatpush.bf16.msra.mxu0 0
      %10118 = vmatpush.bf16.msra.mxu0 0
      %10119 = vmatpush.bf16.msra.mxu0 0
      %10120 = vmatpush.bf16.msra.mxu0 0
      %10121 = vmatpush.bf16.msra.mxu0 %v10109
      %10122 = vmatpush.bf16.msra.mxu0 %v10108
      %10123 = vmatmul.bf16.gmra.mxu0 %v10113
      %v10124 = vpop.f32.mrf.mxu0
      %v10125 = vadd.f32 0.0, %v10124
      %v10126 = vpop.f32.mrf.mxu0
      %10127 = vdwg.mxu0
      %v10128 = vmul.f32 %v10125, %v10125
      %v10129 = vsel %vm10068, %v10128, 0.0
      %10130 = vadd.xlane.f32.xlu0 %v10129
      %v10131 = vpop.xlane.xlu0 %10130
      %v10132 = vrsqrt.pop %v10131
      %v10133 = vmul.f32 %v10132, %v10131
      %v10134 = vmul.f32 %v10133, %v10132
      %v10135 = vmul.f32 0.5, %v10134
      %v10136 = vsub.f32 1.5, %v10135
      %v10137 = vmul.f32 %v10132, %v10136
      %v10138 = vmul.f32 %v10131, %v10137
      %vm10139 = vcmp.eq.f32.partialorder %v10131, inf
      %v10140 = vsel %vm10139, %v10131, %v10138
      %vm10141 = vcmp.eq.f32.partialorder %v10131, 0.0
      %v10142 = vand.u32 %v10131, 2147483648
      %v10143 = vsel %vm10141, %v10142, %v10140
      %v10144 = vrcp.pop %v10143
      %v10145 = vmul.f32 %v10143, %v10144
      %v10146 = vsub.f32 1.0, %v10145
      %v10147 = vmul.f32 %v10144, %v10146
      %v10148 = vadd.f32 %v10144, %v10147
      %vm10149 = vweird.f32 %v10143
      %vm10150 = vweird.f32 %v10144
      %vm10151 = vmor %vm10149, %vm10150
      %v10152 = vsel %vm10151, %v10144, %v10148
      %v10153 = vand.u32 2147483647, %v10143
      %vm10154 = vcmp.eq.f32.partialorder %v10153, 8.507059e+37
      %v10155 = vand.u32 %v10143, 2147483648
      %v10156 = vor.u32 1.1754944e-38, %v10155
      %v10157 = vsel %vm10154, %v10156, %v10152
      %v10158 = vmul.f32 %v10125, %v10157
      %v10159 = vld [vmem:[%s2 + $0x40] sm:$0xf]
      %v10160 = vld [vmem:[%s2 + $0x44] sm:$0xf]
      %v10161 = vld [vmem:[%s2 + $0x48] sm:$0xf]
      %v10162 = vld [vmem:[%s2 + $0x4c] sm:$0xf]
      %v10163 = vpack.c.bf16 %v10158, %v10158
      %v10164 = vld [vmem:[%s4 + $0x4] sm:$0x1]
      %v10165 = vperm.slane %v10164, 0
      %v10170 = vunpack.c.l.b16 %v10159
      %v10171 = vunpack.c.l.b16 %v10160
      %v10172 = vunpack.c.l.b16 %v10161
      %v10173 = vunpack.c.l.b16 %v10162
      %v10174 = vpack.c.b16 %v10171, %v10170
      %v10175 = vpack.c.b16 %v10173, %v10172
      %v10179 = vsel %vm562, %v10163, 0
      %10181 = vmatpush.bf16.msra.mxu0 0
      %10182 = vmatpush.bf16.msra.mxu0 0
      %10183 = vmatpush.bf16.msra.mxu0 0
      %10184 = vmatpush.bf16.msra.mxu0 0
      %10185 = vmatpush.bf16.msra.mxu0 0
      %10186 = vmatpush.bf16.msra.mxu0 0
      %10187 = vmatpush.bf16.msra.mxu0 %v10175
      %10188 = vmatpush.bf16.msra.mxu0 %v10174
      %10189 = vmatmul.bf16.gmra.mxu0 %v10179
      %v10190 = vpop.f32.mrf.mxu0
      %v10191 = vadd.f32 %v10165, %v10190
      %v10192 = vpop.f32.mrf.mxu0
      %10193 = vdwg.mxu0
      %10194 = vst [vmem:[%s227] sm:$0xf] %v10191
      %p10195 = scmp.lt.s32.totalorder %s16, 1
      %s10196 = scalar_select %p10195, %s16, 1
      %s10197 = smul.addr %s10196, 4
      %s10198 = scalar_lea.vmem %s5, %s10197
      // Predicated region
      $region41: #{prompt_tuned_clip_forward.1} parent=39 // pred_check
        %p10199 = pneg %p144
      $region42: #{prompt_tuned_clip_forward.1} parent=39 // pred_check_branch
        %10201 = sbr.rel (%p10199) target = $region44
      $region43: #{prompt_tuned_clip_forward.1} parent=39 // pred_region
        _
      $region44: #{prompt_tuned_clip_forward.1} parent=39 // pred_fallthru
        _
    $region40: #{prompt_tuned_clip_forward.1} parent=5 // pred_fallthru
      _
    %p10202 = scmp.le.s32.totalorder 2, %s11
    // Predicated region
    $region45: #{prompt_tuned_clip_forward.1} parent=5 // pred_check
      %p10203 = pneg %p10202
    $region46: #{prompt_tuned_clip_forward.1} parent=5 // pred_check_branch
      %10205 = sbr.rel (%p10203) target = $region48
    $region47: #{prompt_tuned_clip_forward.1} parent=5 // pred_region
      %s10206 = ssub.s32 %s11, 2
      // Predicated region
      $region49: #{prompt_tuned_clip_forward.1} parent=47 // pred_check
        %p10207 = pneg %p150
      $region50: #{prompt_tuned_clip_forward.1} parent=47 // pred_check_branch
        %10209 = sbr.rel (%p10207) target = $region52
      $region51: #{prompt_tuned_clip_forward.1} parent=47 // pred_region
        %p10210 = scmp.lt.s32.totalorder %s17, 1
        %s10211 = scalar_select %p10210, %s17, 1
        %s10212 = smul.addr %s10211, 4
        %s10213 = scalar_lea.vmem %s5, %s10212
      $region52: #{prompt_tuned_clip_forward.1} parent=47 // pred_fallthru
        _
    $region48: #{prompt_tuned_clip_forward.1} parent=5 // pred_fallthru
      _
  $region6: #{prompt_tuned_clip_forward.1} parent=0 // loop_footer
    %s15 = sadd.s32 1, %s11
  $region7: #{prompt_tuned_clip_forward.1} parent=0 // loop_footer_branch
    %10 = sbr.rel target = $region3
  $region8: #{prompt_tuned_clip_forward.1} parent=0 // loop_exit
    _

</llo_original>
